<compile_context>
chip_gen: v7x
topology: tpu7x:2x2x1
jax: 0.10.0
libtpu: 0.0.40
codegen_flags: <defaults>
</compile_context>

<pallas_src>
import math

import jax
import jax.numpy as jnp
from jax.experimental import pallas as pl
from jax.experimental.pallas import tpu as pltpu

BN_EPS = 1e-5
LRELU_SLOPE = 0.02
NUM_HIDDEN_LAYERS = 4
VMEM_LIMIT_BYTES = 32 * 1024 * 1024


# ---------------------------------------------------------------------------
# Shared in-kernel pieces
# ---------------------------------------------------------------------------
def _bn_lrelu(h, gb):
    """Training-mode BatchNorm1d over rows (axis 0) + LeakyReLU(0.02), in f32.

    One-pass stats: var = E[h^2] - mean^2 (single sweep over h instead of a
    second (h - mu)^2 pass).  gb is [2, N]: row 0 = gamma (folded into the
    rsqrt scale), row 1 = beta.  The linear bias is omitted upstream because
    training-mode BN's mean subtraction cancels it exactly.
    """
    inv_m = 1.0 / h.shape[0]
    mu = jnp.sum(h, axis=0, keepdims=True) * inv_m
    msq = jnp.sum(h * h, axis=0, keepdims=True) * inv_m
    var = msq - mu * mu
    scale = gb[0:1, :] * jax.lax.rsqrt(var + BN_EPS)
    hn = (h - mu) * scale + gb[1:2, :]
    # LeakyReLU(slope in (0,1)) == max(x, slope*x): no cmp+select pass.
    return jnp.maximum(hn, LRELU_SLOPE * hn)


def _run_stack(h, w_vmem, w_cps, gb1, gb2):
    """4 hidden layers + output layer; wait each weight DMA just in time."""
    num_w = len(w_vmem)
    for i in range(num_w - 1):
        w_cps[i].wait()
        h = jnp.dot(h.astype(jnp.bfloat16), w_vmem[i][...],
                    preferred_element_type=jnp.float32)
        h = _bn_lrelu(h, gb1)
        # TODO(synk): F.dropout(p=0.5, training=True) is stochastic in torch
        # (2x scaling of survivors); treated as identity so the kernel stays
        # deterministic.
    w_cps[-1].wait()
    h = jnp.dot(h.astype(jnp.bfloat16), w_vmem[-1][...],
                preferred_element_type=jnp.float32)
    return _bn_lrelu(h, gb2)


def _cost_estimate(m_rows, ws):
    flops = 2 * m_rows * sum(w.shape[0] * w.shape[1] for w in ws)
    transcendentals = sum(w.shape[1] for w in ws) + m_rows        # rsqrt + sqrt
    bytes_accessed = (m_rows * ws[0].shape[0] * 4                 # f32 activations
                      + sum(int(w.size) for w in ws) * 2          # bf16 weights
                      + m_rows * ws[-1].shape[1] * 4              # fused output
                      + m_rows * 4)                               # norm outputs
    return pl.CostEstimate(flops=flops, transcendentals=transcendentals,
                           bytes_accessed=bytes_accessed)


# ---------------------------------------------------------------------------
# MLP1: whole-slab fused MLP + per-(B,T) mean row norm
# ---------------------------------------------------------------------------
def _make_mlp1_kernel(num_w, n_groups, win):
    def kernel(*refs):
        k = 0
        x_hbm = refs[k]; k += 1                   # [M, in_f] f32, HBM
        w_hbm = refs[k:k + num_w]; k += num_w     # [K, N] bf16, HBM
        gb1_ref = refs[k]; k += 1                 # [2, hid] f32, VMEM
        gb2_ref = refs[k]; k += 1                 # [2, out_f] f32, VMEM
        o_ref = refs[k]; k += 1                   # [n_groups, win, out_f] f32
        gmean_ref = refs[k]; k += 1               # [n_groups, 1] f32
        x_vmem = refs[k]; k += 1                  # [M, in_f] f32 scratch
        w_vmem = refs[k:k + num_w]; k += num_w    # weight VMEM scratch
        sem = refs[k]                             # DMA sems (num_w + 1,)

        # Issue DMAs in need-order: w0 (gates the first matmul) and the
        # activation slab first; w1..w4 queue behind them.
        w_cps = []
        cp0 = pltpu.make_async_copy(w_hbm[0], w_vmem[0], sem.at[0])
        cp0.start()
        w_cps.append(cp0)
        x_cp = pltpu.make_async_copy(x_hbm, x_vmem, sem.at[num_w])
        x_cp.start()
        for i in range(1, num_w):
            cp = pltpu.make_async_copy(w_hbm[i], w_vmem[i], sem.at[i])
            cp.start()
            w_cps.append(cp)

        gb1 = gb1_ref[...]
        gb2 = gb2_ref[...]

        x_cp.wait()
        h = _run_stack(x_vmem[...], w_vmem, w_cps, gb1, gb2)   # [M, out_f] f32

        out_f = h.shape[-1]
        h3 = h.reshape(n_groups, win, out_f)                    # tile-aligned
        o_ref[...] = h3
        # Per-row L2 norm, then mean over each window group -> [n_groups, 1]
        # (the avg_magnitude used for the frame top-k; no JAX-side sqrt/mean).
        norms = jnp.sqrt(jnp.sum(h3 * h3, axis=-1))             # [n_groups, win]
        gmean_ref[...] = jnp.mean(norms, axis=-1, keepdims=True)

    return kernel


def mlp1_forward(x2d, p, win):
    """x2d: [M, in_f] f32.  Returns (out [M//win, win, out_f] f32,
    per-group mean row norms [M//win, 1] f32)."""
    M, in_f = x2d.shape
    ws = p['ws']
    num_w = len(ws)
    hid = ws[0].shape[1]
    out_f = ws[-1].shape[1]
    n_groups = M // win

    kernel = _make_mlp1_kernel(num_w, n_groups, win)
    return pl.pallas_call(
        kernel,
        out_shape=(jax.ShapeDtypeStruct((n_groups, win, out_f), jnp.float32),
                   jax.ShapeDtypeStruct((n_groups, 1), jnp.float32)),
        grid=(1,),
        in_specs=([pl.BlockSpec(memory_space=pl.ANY)] * (1 + num_w)
                  + [pl.BlockSpec((2, hid), lambda i: (0, 0)),
                     pl.BlockSpec((2, out_f), lambda i: (0, 0))]),
        out_specs=(pl.BlockSpec((n_groups, win, out_f), lambda i: (0, 0, 0)),
                   pl.BlockSpec((n_groups, 1), lambda i: (0, 0))),
        scratch_shapes=([pltpu.VMEM((M, in_f), jnp.float32)]
                        + [pltpu.VMEM(w.shape, w.dtype) for w in ws]
                        + [pltpu.SemaphoreType.DMA((num_w + 1,))]),
        compiler_params=pltpu.CompilerParams(
            dimension_semantics=("arbitrary",),
            vmem_limit_bytes=VMEM_LIMIT_BYTES),
        cost_estimate=_cost_estimate(M, ws),
    )(x2d, *ws, p['gb1'], p['gb2'])


# ---------------------------------------------------------------------------
# MLP2: scalar-prefetch DMA gather of the selected frames + fused MLP
# ---------------------------------------------------------------------------
def _make_mlp2_kernel(num_w, nsel, win):
    def kernel(*refs):
        k = 0
        idx_ref = refs[k]; k += 1                 # [nsel] int32, SMEM prefetch
        src_hbm = refs[k]; k += 1                 # [n_frames, win, src_f] f32, HBM
        w_hbm = refs[k:k + num_w]; k += num_w
        gb1_ref = refs[k]; k += 1
        gb2_ref = refs[k]; k += 1
        o_ref = refs[k]; k += 1                   # [nsel, win, out_f] f32
        norm_ref = refs[k]; k += 1                # [nsel, win] f32
        x_vmem = refs[k]; k += 1                  # [nsel, win, src_f] f32
        w_vmem = refs[k:k + num_w]; k += num_w
        sem_g = refs[k]; k += 1                   # gather sems (nsel,)
        sem_w = refs[k]                           # weight sems (num_w,)

        # DMA-gather the selected frames (each a contiguous [win, src_f] block
        # of MLP1's output) straight from HBM, overlapped with the weight DMAs.
        g_cps = []
        for g in range(nsel):
            cp = pltpu.make_async_copy(src_hbm.at[idx_ref[g]], x_vmem.at[g],
                                       sem_g.at[g])
            cp.start()
            g_cps.append(cp)
        w_cps = []
        for i in range(num_w):
            cp = pltpu.make_async_copy(w_hbm[i], w_vmem[i], sem_w.at[i])
            cp.start()
            w_cps.append(cp)

        gb1 = gb1_ref[...]
        gb2 = gb2_ref[...]
        for cp in g_cps:
            cp.wait()

        src_f = x_vmem.shape[-1]
        h = _run_stack(x_vmem[...].reshape(nsel * win, src_f),
                       w_vmem, w_cps, gb1, gb2)                 # [nsel*win, out_f]

        out_f = h.shape[-1]
        h3 = h.reshape(nsel, win, out_f)
        o_ref[...] = h3
        # Per-row L2 norms grouped by selected frame (drives the window top-k).
        norm_ref[...] = jnp.sqrt(jnp.sum(h3 * h3, axis=-1))     # [nsel, win]

    return kernel


def mlp2_forward(flat_idx, src, p, win):
    """flat_idx: [nsel] int32 frame indices into src's leading axis.
    src: [n_frames, win, src_f] f32 (MLP1's output, left in HBM).
    Returns (out [nsel, win, out_f] f32, per-row norms [nsel, win] f32)."""
    nsel = flat_idx.shape[0]
    src_f = src.shape[-1]
    ws = p['ws']
    num_w = len(ws)
    hid = ws[0].shape[1]
    out_f = ws[-1].shape[1]
    m2 = nsel * win

    # TODO(synk): P10 cross-call future (prefetch these weights during MLP1's
    # pallas_call / keep both weight sets VMEM-resident across invocations)
    # would hide the remaining ~0.2 MiB weight fetch entirely.
    kernel = _make_mlp2_kernel(num_w, nsel, win)
    grid_spec = pltpu.PrefetchScalarGridSpec(
        num_scalar_prefetch=1,
        grid=(1,),
        in_specs=([pl.BlockSpec(memory_space=pl.ANY)] * (1 + num_w)
                  + [pl.BlockSpec((2, hid), lambda i, idx: (0, 0)),
                     pl.BlockSpec((2, out_f), lambda i, idx: (0, 0))]),
        out_specs=(pl.BlockSpec((nsel, win, out_f), lambda i, idx: (0, 0, 0)),
                   pl.BlockSpec((nsel, win), lambda i, idx: (0, 0))),
        scratch_shapes=([pltpu.VMEM((nsel, win, src_f), jnp.float32)]
                        + [pltpu.VMEM(w.shape, w.dtype) for w in ws]
                        + [pltpu.SemaphoreType.DMA((nsel,)),
                           pltpu.SemaphoreType.DMA((num_w,))]),
    )
    return pl.pallas_call(
        kernel,
        out_shape=(jax.ShapeDtypeStruct((nsel, win, out_f), jnp.float32),
                   jax.ShapeDtypeStruct((nsel, win), jnp.float32)),
        grid_spec=grid_spec,
        compiler_params=pltpu.CompilerParams(
            dimension_semantics=("arbitrary",),
            vmem_limit_bytes=VMEM_LIMIT_BYTES),
        cost_estimate=_cost_estimate(m2, ws),
    )(flat_idx, src, *ws, p['gb1'], p['gb2'])


# ---------------------------------------------------------------------------
# Parameter construction (deterministic, mirrors torch init)
# ---------------------------------------------------------------------------
def _xavier_uniform_kn(key, fan_in, fan_out):
    a = math.sqrt(6.0 / (fan_in + fan_out))
    return jax.random.uniform(key, (fan_in, fan_out), minval=-a, maxval=a,
                              dtype=jnp.float32)


def init_mlp_params(key, in_f, hid_f, out_f, num_layers=NUM_HIDDEN_LAYERS):
    keys = jax.random.split(key, num_layers + 1)
    ws = []
    fin = in_f
    for i in range(num_layers):
        ws.append(_xavier_uniform_kn(keys[i], fin, hid_f).astype(jnp.bfloat16))
        fin = hid_f
    ws.append(_xavier_uniform_kn(keys[-1], hid_f, out_f).astype(jnp.bfloat16))
    # BatchNorm affine params (row 0 = gamma, row 1 = beta), torch defaults.
    gb1 = jnp.concatenate([jnp.ones((1, hid_f), jnp.float32),
                           jnp.zeros((1, hid_f), jnp.float32)], axis=0)
    gb2 = jnp.concatenate([jnp.ones((1, out_f), jnp.float32),
                           jnp.zeros((1, out_f), jnp.float32)], axis=0)
    # NOTE: nn.Linear biases omitted — init.zeros_ makes them 0 and training-
    # mode BatchNorm's mean subtraction cancels them exactly anyway.
    return dict(ws=ws, gb1=gb1, gb2=gb2)


# ---------------------------------------------------------------------------
# Model forward (glue in plain JAX, hot paths fully inside the two kernels)
# ---------------------------------------------------------------------------
def model_forward(x, params):
    B, T, W, in_f = x.shape
    # First MLP: [B*T, W, 256] output + per-(B,T) mean row norm, one kernel.
    out_fr, gmean = mlp1_forward(x.reshape(B * T * W, in_f), params['mlp'], W)
    avg_mag = gmean.reshape(B, T)                                # [B, T]
    top_idx = jax.lax.top_k(avg_mag, 3)[1]                       # [B, 3]
    # Flat frame indices (b*T + t) for the in-kernel gather of MLP2's input.
    flat_idx = (jnp.arange(B, dtype=jnp.int32)[:, None] * T
                + top_idx.astype(jnp.int32)).reshape(-1)         # [B*3]

    # Second MLP pulls the selected frames straight from MLP1's HBM output
    # via scalar-prefetch DMA gather (no take_along_axis materialization).
    out_sel, norms2 = mlp2_forward(flat_idx, out_fr, params['mlp2'], W)
    out_sel4 = out_sel.reshape(B, 3, W, out_sel.shape[-1])       # [B,3,W,out2]
    idx2 = jax.lax.top_k(norms2.reshape(B, 3, W), 3)[1]          # [B,3,3]
    out2 = jnp.take_along_axis(out_sel4, idx2[..., None], axis=2)  # [B,3,3,out2]

    out = out_fr.reshape(B, T, W, out_fr.shape[-1])              # [B,T,W,256]
    return out2, out


# ---------------------------------------------------------------------------
if __name__ == "__main__":
    key = jax.random.PRNGKey(0)
    k_x, k_m1, k_m2 = jax.random.split(key, 3)

    # Small shapes consistent with the module's forward contract
    # ([B, T, W, in_feature]); feature dims follow the module defaults.
    B, T, NW = 2, 4, 8
    IN_F, HID_F, OUT_F, HID2, OUT2 = 1024, 512, 256, 128, 64

    params = dict(
        mlp=init_mlp_params(k_m1, IN_F, HID_F, OUT_F),
        mlp2=init_mlp_params(k_m2, OUT_F, HID2, OUT2),
    )
    x = jax.random.normal(k_x, (B, T, NW, IN_F), dtype=jnp.float32)

    fwd = jax.jit(model_forward)
    out2, out = fwd(x, params)
    jax.block_until_ready((out2, out))

    assert out.shape == (B, T, NW, OUT_F), out.shape
    assert out2.shape == (B, 3, 3, OUT2), out2.shape
    assert bool(jnp.all(jnp.isfinite(out))) and bool(jnp.all(jnp.isfinite(out2)))
    print("KERNEL_OK")
</pallas_src>

<mosaic_0001>
module attributes {stable_mosaic.version = 11 : i64} {
  func.func @kernel(%arg0: i32, %arg1: memref<64x1024xf32, #tpu.memory_space<any>>, %arg2: memref<1024x512xbf16, #tpu.memory_space<any>>, %arg3: memref<512x512xbf16, #tpu.memory_space<any>>, %arg4: memref<512x512xbf16, #tpu.memory_space<any>>, %arg5: memref<512x512xbf16, #tpu.memory_space<any>>, %arg6: memref<512x256xbf16, #tpu.memory_space<any>>, %arg7: memref<2x512xf32, #tpu.memory_space<vmem>>, %arg8: memref<2x256xf32, #tpu.memory_space<vmem>>, %arg9: memref<8x8x256xf32, #tpu.memory_space<vmem>>, %arg10: memref<8x1xf32, #tpu.memory_space<vmem>>, %arg11: memref<64x1024xf32, #tpu.memory_space<vmem>>, %arg12: memref<1024x512xbf16, #tpu.memory_space<vmem>>, %arg13: memref<512x512xbf16, #tpu.memory_space<vmem>>, %arg14: memref<512x512xbf16, #tpu.memory_space<vmem>>, %arg15: memref<512x512xbf16, #tpu.memory_space<vmem>>, %arg16: memref<512x256xbf16, #tpu.memory_space<vmem>>, %arg17: memref<6x!tpu.dma_semaphore, #tpu.memory_space<semaphore_mem>>) attributes {dimension_semantics = [#tpu.dimension_semantics<arbitrary>], iteration_bounds = array<i64: 1>, scalar_prefetch = 0 : i64, scratch_operands = 7 : i64, tpu.core_type = #tpu.core_type<tc>, window_params = [{}, {}, {}, {}, {}, {}, {pipeline_mode = #tpu.pipeline_mode<synchronous>, transform_indices = @transform_6, window_bounds = array<i64: 2, 512>}, {pipeline_mode = #tpu.pipeline_mode<synchronous>, transform_indices = @transform_7, window_bounds = array<i64: 2, 256>}, {pipeline_mode = #tpu.pipeline_mode<synchronous>, transform_indices = @transform_8, window_bounds = array<i64: 8, 8, 256>}, {pipeline_mode = #tpu.pipeline_mode<synchronous>, transform_indices = @transform_9, window_bounds = array<i64: 8, 1>}]} {
    %c0_i32 = arith.constant 0 : i32
    %0 = tpu.memref_slice %arg17[%c0_i32] : memref<6x!tpu.dma_semaphore, #tpu.memory_space<semaphore_mem>> -> memref<1x!tpu.dma_semaphore, #tpu.memory_space<semaphore_mem>>
    %1 = tpu.memref_squeeze %0 : memref<1x!tpu.dma_semaphore, #tpu.memory_space<semaphore_mem>> -> memref<!tpu.dma_semaphore, #tpu.memory_space<semaphore_mem>>
    tpu.enqueue_dma source(%arg2 : memref<1024x512xbf16, #tpu.memory_space<any>>) target(%arg12 : memref<1024x512xbf16, #tpu.memory_space<vmem>>) target_semaphore(%1 : memref<!tpu.dma_semaphore, #tpu.memory_space<semaphore_mem>>)
    %c5_i32 = arith.constant 5 : i32
    %2 = tpu.memref_slice %arg17[%c5_i32] : memref<6x!tpu.dma_semaphore, #tpu.memory_space<semaphore_mem>> -> memref<1x!tpu.dma_semaphore, #tpu.memory_space<semaphore_mem>>
    %3 = tpu.memref_squeeze %2 : memref<1x!tpu.dma_semaphore, #tpu.memory_space<semaphore_mem>> -> memref<!tpu.dma_semaphore, #tpu.memory_space<semaphore_mem>>
    tpu.enqueue_dma source(%arg1 : memref<64x1024xf32, #tpu.memory_space<any>>) target(%arg11 : memref<64x1024xf32, #tpu.memory_space<vmem>>) target_semaphore(%3 : memref<!tpu.dma_semaphore, #tpu.memory_space<semaphore_mem>>)
    %c1_i32 = arith.constant 1 : i32
    %4 = tpu.memref_slice %arg17[%c1_i32] : memref<6x!tpu.dma_semaphore, #tpu.memory_space<semaphore_mem>> -> memref<1x!tpu.dma_semaphore, #tpu.memory_space<semaphore_mem>>
    %5 = tpu.memref_squeeze %4 : memref<1x!tpu.dma_semaphore, #tpu.memory_space<semaphore_mem>> -> memref<!tpu.dma_semaphore, #tpu.memory_space<semaphore_mem>>
    tpu.enqueue_dma source(%arg3 : memref<512x512xbf16, #tpu.memory_space<any>>) target(%arg13 : memref<512x512xbf16, #tpu.memory_space<vmem>>) target_semaphore(%5 : memref<!tpu.dma_semaphore, #tpu.memory_space<semaphore_mem>>)
    %c2_i32 = arith.constant 2 : i32
    %6 = tpu.memref_slice %arg17[%c2_i32] : memref<6x!tpu.dma_semaphore, #tpu.memory_space<semaphore_mem>> -> memref<1x!tpu.dma_semaphore, #tpu.memory_space<semaphore_mem>>
    %7 = tpu.memref_squeeze %6 : memref<1x!tpu.dma_semaphore, #tpu.memory_space<semaphore_mem>> -> memref<!tpu.dma_semaphore, #tpu.memory_space<semaphore_mem>>
    tpu.enqueue_dma source(%arg4 : memref<512x512xbf16, #tpu.memory_space<any>>) target(%arg14 : memref<512x512xbf16, #tpu.memory_space<vmem>>) target_semaphore(%7 : memref<!tpu.dma_semaphore, #tpu.memory_space<semaphore_mem>>)
    %c3_i32 = arith.constant 3 : i32
    %8 = tpu.memref_slice %arg17[%c3_i32] : memref<6x!tpu.dma_semaphore, #tpu.memory_space<semaphore_mem>> -> memref<1x!tpu.dma_semaphore, #tpu.memory_space<semaphore_mem>>
    %9 = tpu.memref_squeeze %8 : memref<1x!tpu.dma_semaphore, #tpu.memory_space<semaphore_mem>> -> memref<!tpu.dma_semaphore, #tpu.memory_space<semaphore_mem>>
    tpu.enqueue_dma source(%arg5 : memref<512x512xbf16, #tpu.memory_space<any>>) target(%arg15 : memref<512x512xbf16, #tpu.memory_space<vmem>>) target_semaphore(%9 : memref<!tpu.dma_semaphore, #tpu.memory_space<semaphore_mem>>)
    %c4_i32 = arith.constant 4 : i32
    %10 = tpu.memref_slice %arg17[%c4_i32] : memref<6x!tpu.dma_semaphore, #tpu.memory_space<semaphore_mem>> -> memref<1x!tpu.dma_semaphore, #tpu.memory_space<semaphore_mem>>
    %11 = tpu.memref_squeeze %10 : memref<1x!tpu.dma_semaphore, #tpu.memory_space<semaphore_mem>> -> memref<!tpu.dma_semaphore, #tpu.memory_space<semaphore_mem>>
    tpu.enqueue_dma source(%arg6 : memref<512x256xbf16, #tpu.memory_space<any>>) target(%arg16 : memref<512x256xbf16, #tpu.memory_space<vmem>>) target_semaphore(%11 : memref<!tpu.dma_semaphore, #tpu.memory_space<semaphore_mem>>)
    %c0 = arith.constant 0 : index
    %c0_0 = arith.constant 0 : index
    %12 = vector.load %arg7[%c0, %c0_0] : memref<2x512xf32, #tpu.memory_space<vmem>>, vector<2x512xf32>
    %c0_1 = arith.constant 0 : index
    %c0_2 = arith.constant 0 : index
    %13 = vector.load %arg8[%c0_1, %c0_2] : memref<2x256xf32, #tpu.memory_space<vmem>>, vector<2x256xf32>
    %c5_i32_3 = arith.constant 5 : i32
    %14 = tpu.memref_slice %arg17[%c5_i32_3] : memref<6x!tpu.dma_semaphore, #tpu.memory_space<semaphore_mem>> -> memref<1x!tpu.dma_semaphore, #tpu.memory_space<semaphore_mem>>
    %15 = tpu.memref_squeeze %14 : memref<1x!tpu.dma_semaphore, #tpu.memory_space<semaphore_mem>> -> memref<!tpu.dma_semaphore, #tpu.memory_space<semaphore_mem>>
    tpu.wait_dma2 semaphore(%15 : memref<!tpu.dma_semaphore, #tpu.memory_space<semaphore_mem>>) src(%arg1 : memref<64x1024xf32, #tpu.memory_space<any>>) dst(%arg11 : memref<64x1024xf32, #tpu.memory_space<vmem>>)
    %c0_4 = arith.constant 0 : index
    %c0_5 = arith.constant 0 : index
    %16 = vector.load %arg11[%c0_4, %c0_5] : memref<64x1024xf32, #tpu.memory_space<vmem>>, vector<64x1024xf32>
    %c0_i32_6 = arith.constant 0 : i32
    %17 = tpu.memref_slice %arg17[%c0_i32_6] : memref<6x!tpu.dma_semaphore, #tpu.memory_space<semaphore_mem>> -> memref<1x!tpu.dma_semaphore, #tpu.memory_space<semaphore_mem>>
    %18 = tpu.memref_squeeze %17 : memref<1x!tpu.dma_semaphore, #tpu.memory_space<semaphore_mem>> -> memref<!tpu.dma_semaphore, #tpu.memory_space<semaphore_mem>>
    tpu.wait_dma2 semaphore(%18 : memref<!tpu.dma_semaphore, #tpu.memory_space<semaphore_mem>>) src(%arg2 : memref<1024x512xbf16, #tpu.memory_space<any>>) dst(%arg12 : memref<1024x512xbf16, #tpu.memory_space<vmem>>)
    %19 = arith.truncf %16 : vector<64x1024xf32> to vector<64x1024xbf16>
    %c0_7 = arith.constant 0 : index
    %c0_8 = arith.constant 0 : index
    %20 = vector.load %arg12[%c0_7, %c0_8] : memref<1024x512xbf16, #tpu.memory_space<vmem>>, vector<1024x512xbf16>
    %cst = arith.constant dense<0.000000e+00> : vector<64x512xf32>
    %21 = tpu.matmul %19, %20, %cst {dimension_numbers = #tpu.dot_dimension_numbers<[1], [0], [0], [1], [0, 0, 1, 1], [], []>} : vector<64x1024xbf16>, vector<1024x512xbf16>, vector<64x512xf32> -> vector<64x512xf32>
    %cst_9 = arith.constant dense<0.000000e+00> : vector<512xf32>
    %22 = vector.multi_reduction <add>, %21, %cst_9 [0] : vector<64x512xf32> to vector<512xf32>
    %23 = vector.shape_cast %22 : vector<512xf32> to vector<1x512xf32>
    %cst_10 = arith.constant 1.562500e-02 : f32
    %24 = vector.broadcast %cst_10 : f32 to vector<1x512xf32>
    %25 = arith.mulf %23, %24 : vector<1x512xf32>
    %26 = arith.mulf %21, %21 : vector<64x512xf32>
    %cst_11 = arith.constant dense<0.000000e+00> : vector<512xf32>
    %27 = vector.multi_reduction <add>, %26, %cst_11 [0] : vector<64x512xf32> to vector<512xf32>
    %28 = vector.shape_cast %27 : vector<512xf32> to vector<1x512xf32>
    %cst_12 = arith.constant 1.562500e-02 : f32
    %29 = vector.broadcast %cst_12 : f32 to vector<1x512xf32>
    %30 = arith.mulf %28, %29 : vector<1x512xf32>
    %31 = arith.mulf %25, %25 : vector<1x512xf32>
    %32 = arith.subf %30, %31 : vector<1x512xf32>
    %33 = vector.extract_strided_slice %12 {offsets = [0, 0], sizes = [1, 512], strides = [1, 1]} : vector<2x512xf32> to vector<1x512xf32>
    %cst_13 = arith.constant 9.99999974E-6 : f32
    %34 = vector.broadcast %cst_13 : f32 to vector<1x512xf32>
    %35 = arith.addf %32, %34 : vector<1x512xf32>
    %36 = math.rsqrt %35 : vector<1x512xf32>
    %37 = arith.mulf %33, %36 : vector<1x512xf32>
    %38 = vector.broadcast %25 : vector<1x512xf32> to vector<64x512xf32>
    %39 = arith.subf %21, %38 : vector<64x512xf32>
    %40 = vector.broadcast %37 : vector<1x512xf32> to vector<64x512xf32>
    %41 = arith.mulf %39, %40 : vector<64x512xf32>
    %42 = vector.extract_strided_slice %12 {offsets = [1, 0], sizes = [1, 512], strides = [1, 1]} : vector<2x512xf32> to vector<1x512xf32>
    %43 = vector.broadcast %42 : vector<1x512xf32> to vector<64x512xf32>
    %44 = arith.addf %41, %43 : vector<64x512xf32>
    %cst_14 = arith.constant 2.000000e-02 : f32
    %45 = vector.broadcast %cst_14 : f32 to vector<64x512xf32>
    %46 = arith.mulf %45, %44 : vector<64x512xf32>
    %47 = arith.maximumf %44, %46 : vector<64x512xf32>
    %c1_i32_15 = arith.constant 1 : i32
    %48 = tpu.memref_slice %arg17[%c1_i32_15] : memref<6x!tpu.dma_semaphore, #tpu.memory_space<semaphore_mem>> -> memref<1x!tpu.dma_semaphore, #tpu.memory_space<semaphore_mem>>
    %49 = tpu.memref_squeeze %48 : memref<1x!tpu.dma_semaphore, #tpu.memory_space<semaphore_mem>> -> memref<!tpu.dma_semaphore, #tpu.memory_space<semaphore_mem>>
    tpu.wait_dma2 semaphore(%49 : memref<!tpu.dma_semaphore, #tpu.memory_space<semaphore_mem>>) src(%arg3 : memref<512x512xbf16, #tpu.memory_space<any>>) dst(%arg13 : memref<512x512xbf16, #tpu.memory_space<vmem>>)
    %50 = arith.truncf %47 : vector<64x512xf32> to vector<64x512xbf16>
    %c0_16 = arith.constant 0 : index
    %c0_17 = arith.constant 0 : index
    %51 = vector.load %arg13[%c0_16, %c0_17] : memref<512x512xbf16, #tpu.memory_space<vmem>>, vector<512x512xbf16>
    %cst_18 = arith.constant dense<0.000000e+00> : vector<64x512xf32>
    %52 = tpu.matmul %50, %51, %cst_18 {dimension_numbers = #tpu.dot_dimension_numbers<[1], [0], [0], [1], [0, 0, 1, 1], [], []>} : vector<64x512xbf16>, vector<512x512xbf16>, vector<64x512xf32> -> vector<64x512xf32>
    %cst_19 = arith.constant dense<0.000000e+00> : vector<512xf32>
    %53 = vector.multi_reduction <add>, %52, %cst_19 [0] : vector<64x512xf32> to vector<512xf32>
    %54 = vector.shape_cast %53 : vector<512xf32> to vector<1x512xf32>
    %cst_20 = arith.constant 1.562500e-02 : f32
    %55 = vector.broadcast %cst_20 : f32 to vector<1x512xf32>
    %56 = arith.mulf %54, %55 : vector<1x512xf32>
    %57 = arith.mulf %52, %52 : vector<64x512xf32>
    %cst_21 = arith.constant dense<0.000000e+00> : vector<512xf32>
    %58 = vector.multi_reduction <add>, %57, %cst_21 [0] : vector<64x512xf32> to vector<512xf32>
    %59 = vector.shape_cast %58 : vector<512xf32> to vector<1x512xf32>
    %cst_22 = arith.constant 1.562500e-02 : f32
    %60 = vector.broadcast %cst_22 : f32 to vector<1x512xf32>
    %61 = arith.mulf %59, %60 : vector<1x512xf32>
    %62 = arith.mulf %56, %56 : vector<1x512xf32>
    %63 = arith.subf %61, %62 : vector<1x512xf32>
    %64 = vector.extract_strided_slice %12 {offsets = [0, 0], sizes = [1, 512], strides = [1, 1]} : vector<2x512xf32> to vector<1x512xf32>
    %cst_23 = arith.constant 9.99999974E-6 : f32
    %65 = vector.broadcast %cst_23 : f32 to vector<1x512xf32>
    %66 = arith.addf %63, %65 : vector<1x512xf32>
    %67 = math.rsqrt %66 : vector<1x512xf32>
    %68 = arith.mulf %64, %67 : vector<1x512xf32>
    %69 = vector.broadcast %56 : vector<1x512xf32> to vector<64x512xf32>
    %70 = arith.subf %52, %69 : vector<64x512xf32>
    %71 = vector.broadcast %68 : vector<1x512xf32> to vector<64x512xf32>
    %72 = arith.mulf %70, %71 : vector<64x512xf32>
    %73 = vector.extract_strided_slice %12 {offsets = [1, 0], sizes = [1, 512], strides = [1, 1]} : vector<2x512xf32> to vector<1x512xf32>
    %74 = vector.broadcast %73 : vector<1x512xf32> to vector<64x512xf32>
    %75 = arith.addf %72, %74 : vector<64x512xf32>
    %cst_24 = arith.constant 2.000000e-02 : f32
    %76 = vector.broadcast %cst_24 : f32 to vector<64x512xf32>
    %77 = arith.mulf %76, %75 : vector<64x512xf32>
    %78 = arith.maximumf %75, %77 : vector<64x512xf32>
    %c2_i32_25 = arith.constant 2 : i32
    %79 = tpu.memref_slice %arg17[%c2_i32_25] : memref<6x!tpu.dma_semaphore, #tpu.memory_space<semaphore_mem>> -> memref<1x!tpu.dma_semaphore, #tpu.memory_space<semaphore_mem>>
    %80 = tpu.memref_squeeze %79 : memref<1x!tpu.dma_semaphore, #tpu.memory_space<semaphore_mem>> -> memref<!tpu.dma_semaphore, #tpu.memory_space<semaphore_mem>>
    tpu.wait_dma2 semaphore(%80 : memref<!tpu.dma_semaphore, #tpu.memory_space<semaphore_mem>>) src(%arg4 : memref<512x512xbf16, #tpu.memory_space<any>>) dst(%arg14 : memref<512x512xbf16, #tpu.memory_space<vmem>>)
    %81 = arith.truncf %78 : vector<64x512xf32> to vector<64x512xbf16>
    %c0_26 = arith.constant 0 : index
    %c0_27 = arith.constant 0 : index
    %82 = vector.load %arg14[%c0_26, %c0_27] : memref<512x512xbf16, #tpu.memory_space<vmem>>, vector<512x512xbf16>
    %cst_28 = arith.constant dense<0.000000e+00> : vector<64x512xf32>
    %83 = tpu.matmul %81, %82, %cst_28 {dimension_numbers = #tpu.dot_dimension_numbers<[1], [0], [0], [1], [0, 0, 1, 1], [], []>} : vector<64x512xbf16>, vector<512x512xbf16>, vector<64x512xf32> -> vector<64x512xf32>
    %cst_29 = arith.constant dense<0.000000e+00> : vector<512xf32>
    %84 = vector.multi_reduction <add>, %83, %cst_29 [0] : vector<64x512xf32> to vector<512xf32>
    %85 = vector.shape_cast %84 : vector<512xf32> to vector<1x512xf32>
    %cst_30 = arith.constant 1.562500e-02 : f32
    %86 = vector.broadcast %cst_30 : f32 to vector<1x512xf32>
    %87 = arith.mulf %85, %86 : vector<1x512xf32>
    %88 = arith.mulf %83, %83 : vector<64x512xf32>
    %cst_31 = arith.constant dense<0.000000e+00> : vector<512xf32>
    %89 = vector.multi_reduction <add>, %88, %cst_31 [0] : vector<64x512xf32> to vector<512xf32>
    %90 = vector.shape_cast %89 : vector<512xf32> to vector<1x512xf32>
    %cst_32 = arith.constant 1.562500e-02 : f32
    %91 = vector.broadcast %cst_32 : f32 to vector<1x512xf32>
    %92 = arith.mulf %90, %91 : vector<1x512xf32>
    %93 = arith.mulf %87, %87 : vector<1x512xf32>
    %94 = arith.subf %92, %93 : vector<1x512xf32>
    %95 = vector.extract_strided_slice %12 {offsets = [0, 0], sizes = [1, 512], strides = [1, 1]} : vector<2x512xf32> to vector<1x512xf32>
    %cst_33 = arith.constant 9.99999974E-6 : f32
    %96 = vector.broadcast %cst_33 : f32 to vector<1x512xf32>
    %97 = arith.addf %94, %96 : vector<1x512xf32>
    %98 = math.rsqrt %97 : vector<1x512xf32>
    %99 = arith.mulf %95, %98 : vector<1x512xf32>
    %100 = vector.broadcast %87 : vector<1x512xf32> to vector<64x512xf32>
    %101 = arith.subf %83, %100 : vector<64x512xf32>
    %102 = vector.broadcast %99 : vector<1x512xf32> to vector<64x512xf32>
    %103 = arith.mulf %101, %102 : vector<64x512xf32>
    %104 = vector.extract_strided_slice %12 {offsets = [1, 0], sizes = [1, 512], strides = [1, 1]} : vector<2x512xf32> to vector<1x512xf32>
    %105 = vector.broadcast %104 : vector<1x512xf32> to vector<64x512xf32>
    %106 = arith.addf %103, %105 : vector<64x512xf32>
    %cst_34 = arith.constant 2.000000e-02 : f32
    %107 = vector.broadcast %cst_34 : f32 to vector<64x512xf32>
    %108 = arith.mulf %107, %106 : vector<64x512xf32>
    %109 = arith.maximumf %106, %108 : vector<64x512xf32>
    %c3_i32_35 = arith.constant 3 : i32
    %110 = tpu.memref_slice %arg17[%c3_i32_35] : memref<6x!tpu.dma_semaphore, #tpu.memory_space<semaphore_mem>> -> memref<1x!tpu.dma_semaphore, #tpu.memory_space<semaphore_mem>>
    %111 = tpu.memref_squeeze %110 : memref<1x!tpu.dma_semaphore, #tpu.memory_space<semaphore_mem>> -> memref<!tpu.dma_semaphore, #tpu.memory_space<semaphore_mem>>
    tpu.wait_dma2 semaphore(%111 : memref<!tpu.dma_semaphore, #tpu.memory_space<semaphore_mem>>) src(%arg5 : memref<512x512xbf16, #tpu.memory_space<any>>) dst(%arg15 : memref<512x512xbf16, #tpu.memory_space<vmem>>)
    %112 = arith.truncf %109 : vector<64x512xf32> to vector<64x512xbf16>
    %c0_36 = arith.constant 0 : index
    %c0_37 = arith.constant 0 : index
    %113 = vector.load %arg15[%c0_36, %c0_37] : memref<512x512xbf16, #tpu.memory_space<vmem>>, vector<512x512xbf16>
    %cst_38 = arith.constant dense<0.000000e+00> : vector<64x512xf32>
    %114 = tpu.matmul %112, %113, %cst_38 {dimension_numbers = #tpu.dot_dimension_numbers<[1], [0], [0], [1], [0, 0, 1, 1], [], []>} : vector<64x512xbf16>, vector<512x512xbf16>, vector<64x512xf32> -> vector<64x512xf32>
    %cst_39 = arith.constant dense<0.000000e+00> : vector<512xf32>
    %115 = vector.multi_reduction <add>, %114, %cst_39 [0] : vector<64x512xf32> to vector<512xf32>
    %116 = vector.shape_cast %115 : vector<512xf32> to vector<1x512xf32>
    %cst_40 = arith.constant 1.562500e-02 : f32
    %117 = vector.broadcast %cst_40 : f32 to vector<1x512xf32>
    %118 = arith.mulf %116, %117 : vector<1x512xf32>
    %119 = arith.mulf %114, %114 : vector<64x512xf32>
    %cst_41 = arith.constant dense<0.000000e+00> : vector<512xf32>
    %120 = vector.multi_reduction <add>, %119, %cst_41 [0] : vector<64x512xf32> to vector<512xf32>
    %121 = vector.shape_cast %120 : vector<512xf32> to vector<1x512xf32>
    %cst_42 = arith.constant 1.562500e-02 : f32
    %122 = vector.broadcast %cst_42 : f32 to vector<1x512xf32>
    %123 = arith.mulf %121, %122 : vector<1x512xf32>
    %124 = arith.mulf %118, %118 : vector<1x512xf32>
    %125 = arith.subf %123, %124 : vector<1x512xf32>
    %126 = vector.extract_strided_slice %12 {offsets = [0, 0], sizes = [1, 512], strides = [1, 1]} : vector<2x512xf32> to vector<1x512xf32>
    %cst_43 = arith.constant 9.99999974E-6 : f32
    %127 = vector.broadcast %cst_43 : f32 to vector<1x512xf32>
    %128 = arith.addf %125, %127 : vector<1x512xf32>
    %129 = math.rsqrt %128 : vector<1x512xf32>
    %130 = arith.mulf %126, %129 : vector<1x512xf32>
    %131 = vector.broadcast %118 : vector<1x512xf32> to vector<64x512xf32>
    %132 = arith.subf %114, %131 : vector<64x512xf32>
    %133 = vector.broadcast %130 : vector<1x512xf32> to vector<64x512xf32>
    %134 = arith.mulf %132, %133 : vector<64x512xf32>
    %135 = vector.extract_strided_slice %12 {offsets = [1, 0], sizes = [1, 512], strides = [1, 1]} : vector<2x512xf32> to vector<1x512xf32>
    %136 = vector.broadcast %135 : vector<1x512xf32> to vector<64x512xf32>
    %137 = arith.addf %134, %136 : vector<64x512xf32>
    %cst_44 = arith.constant 2.000000e-02 : f32
    %138 = vector.broadcast %cst_44 : f32 to vector<64x512xf32>
    %139 = arith.mulf %138, %137 : vector<64x512xf32>
    %140 = arith.maximumf %137, %139 : vector<64x512xf32>
    %c4_i32_45 = arith.constant 4 : i32
    %141 = tpu.memref_slice %arg17[%c4_i32_45] : memref<6x!tpu.dma_semaphore, #tpu.memory_space<semaphore_mem>> -> memref<1x!tpu.dma_semaphore, #tpu.memory_space<semaphore_mem>>
    %142 = tpu.memref_squeeze %141 : memref<1x!tpu.dma_semaphore, #tpu.memory_space<semaphore_mem>> -> memref<!tpu.dma_semaphore, #tpu.memory_space<semaphore_mem>>
    tpu.wait_dma2 semaphore(%142 : memref<!tpu.dma_semaphore, #tpu.memory_space<semaphore_mem>>) src(%arg6 : memref<512x256xbf16, #tpu.memory_space<any>>) dst(%arg16 : memref<512x256xbf16, #tpu.memory_space<vmem>>)
    %143 = arith.truncf %140 : vector<64x512xf32> to vector<64x512xbf16>
    %c0_46 = arith.constant 0 : index
    %c0_47 = arith.constant 0 : index
    %144 = vector.load %arg16[%c0_46, %c0_47] : memref<512x256xbf16, #tpu.memory_space<vmem>>, vector<512x256xbf16>
    %cst_48 = arith.constant dense<0.000000e+00> : vector<64x256xf32>
    %145 = tpu.matmul %143, %144, %cst_48 {dimension_numbers = #tpu.dot_dimension_numbers<[1], [0], [0], [1], [0, 0, 1, 1], [], []>} : vector<64x512xbf16>, vector<512x256xbf16>, vector<64x256xf32> -> vector<64x256xf32>
    %cst_49 = arith.constant dense<0.000000e+00> : vector<256xf32>
    %146 = vector.multi_reduction <add>, %145, %cst_49 [0] : vector<64x256xf32> to vector<256xf32>
    %147 = vector.shape_cast %146 : vector<256xf32> to vector<1x256xf32>
    %cst_50 = arith.constant 1.562500e-02 : f32
    %148 = vector.broadcast %cst_50 : f32 to vector<1x256xf32>
    %149 = arith.mulf %147, %148 : vector<1x256xf32>
    %150 = arith.mulf %145, %145 : vector<64x256xf32>
    %cst_51 = arith.constant dense<0.000000e+00> : vector<256xf32>
    %151 = vector.multi_reduction <add>, %150, %cst_51 [0] : vector<64x256xf32> to vector<256xf32>
    %152 = vector.shape_cast %151 : vector<256xf32> to vector<1x256xf32>
    %cst_52 = arith.constant 1.562500e-02 : f32
    %153 = vector.broadcast %cst_52 : f32 to vector<1x256xf32>
    %154 = arith.mulf %152, %153 : vector<1x256xf32>
    %155 = arith.mulf %149, %149 : vector<1x256xf32>
    %156 = arith.subf %154, %155 : vector<1x256xf32>
    %157 = vector.extract_strided_slice %13 {offsets = [0, 0], sizes = [1, 256], strides = [1, 1]} : vector<2x256xf32> to vector<1x256xf32>
    %cst_53 = arith.constant 9.99999974E-6 : f32
    %158 = vector.broadcast %cst_53 : f32 to vector<1x256xf32>
    %159 = arith.addf %156, %158 : vector<1x256xf32>
    %160 = math.rsqrt %159 : vector<1x256xf32>
    %161 = arith.mulf %157, %160 : vector<1x256xf32>
    %162 = vector.broadcast %149 : vector<1x256xf32> to vector<64x256xf32>
    %163 = arith.subf %145, %162 : vector<64x256xf32>
    %164 = vector.broadcast %161 : vector<1x256xf32> to vector<64x256xf32>
    %165 = arith.mulf %163, %164 : vector<64x256xf32>
    %166 = vector.extract_strided_slice %13 {offsets = [1, 0], sizes = [1, 256], strides = [1, 1]} : vector<2x256xf32> to vector<1x256xf32>
    %167 = vector.broadcast %166 : vector<1x256xf32> to vector<64x256xf32>
    %168 = arith.addf %165, %167 : vector<64x256xf32>
    %cst_54 = arith.constant 2.000000e-02 : f32
    %169 = vector.broadcast %cst_54 : f32 to vector<64x256xf32>
    %170 = arith.mulf %169, %168 : vector<64x256xf32>
    %171 = arith.maximumf %168, %170 : vector<64x256xf32>
    %172 = vector.shape_cast %171 : vector<64x256xf32> to vector<8x8x256xf32>
    %c0_55 = arith.constant 0 : index
    %c0_56 = arith.constant 0 : index
    %c0_57 = arith.constant 0 : index
    %173 = vector.load %arg9[%c0_55, %c0_56, %c0_57] : memref<8x8x256xf32, #tpu.memory_space<vmem>>, vector<8x8x256xf32>
    tpu.vector_store %arg9[%c0_55, %c0_56, %c0_57], %172 {strides = array<i32>} : memref<8x8x256xf32, #tpu.memory_space<vmem>>, vector<8x8x256xf32>,
    %174 = arith.mulf %172, %172 : vector<8x8x256xf32>
    %cst_58 = arith.constant dense<0.000000e+00> : vector<8x8xf32>
    %175 = vector.multi_reduction <add>, %174, %cst_58 [2] : vector<8x8x256xf32> to vector<8x8xf32>
    %176 = math.sqrt %175 : vector<8x8xf32>
    %cst_59 = arith.constant dense<0.000000e+00> : vector<8xf32>
    %177 = vector.multi_reduction <add>, %176, %cst_59 [1] : vector<8x8xf32> to vector<8xf32>
    %178 = vector.shape_cast %177 : vector<8xf32> to vector<8x1xf32>
    %cst_60 = arith.constant 8.000000e+00 : f32
    %179 = vector.broadcast %cst_60 : f32 to vector<8x1xf32>
    %180 = arith.divf %178, %179 : vector<8x1xf32>
    %c0_61 = arith.constant 0 : index
    %c0_62 = arith.constant 0 : index
    %181 = vector.load %arg10[%c0_61, %c0_62] : memref<8x1xf32, #tpu.memory_space<vmem>>, vector<8x1xf32>
    tpu.vector_store %arg10[%c0_61, %c0_62], %180 {strides = array<i32>} : memref<8x1xf32, #tpu.memory_space<vmem>>, vector<8x1xf32>,
    return
  }
  func.func @transform_6(%arg0: i32) -> (i32, i32) {
    %c0_i32 = arith.constant 0 : i32
    %c0_i32_0 = arith.constant 0 : i32
    %c0_i32_1 = arith.constant 0 : i32
    return %c0_i32, %c0_i32_0 : i32, i32
  }
  func.func @transform_7(%arg0: i32) -> (i32, i32) {
    %c0_i32 = arith.constant 0 : i32
    %c0_i32_0 = arith.constant 0 : i32
    %c0_i32_1 = arith.constant 0 : i32
    return %c0_i32, %c0_i32_0 : i32, i32
  }
  func.func @transform_8(%arg0: i32) -> (i32, i32, i32) {
    %c0_i32 = arith.constant 0 : i32
    %c0_i32_0 = arith.constant 0 : i32
    %c0_i32_1 = arith.constant 0 : i32
    %c0_i32_2 = arith.constant 0 : i32
    return %c0_i32, %c0_i32_0, %c0_i32_1 : i32, i32, i32
  }
  func.func @transform_9(%arg0: i32) -> (i32, i32) {
    %c0_i32 = arith.constant 0 : i32
    %c0_i32_0 = arith.constant 0 : i32
    %c0_i32_1 = arith.constant 0 : i32
    return %c0_i32, %c0_i32_0 : i32, i32
  }
}

module attributes {stable_mosaic.version = 11 : i64} {
  func.func @kernel(%arg0: i32, %arg1: memref<6xi32, #tpu.memory_space<smem>>, %arg2: memref<8x8x256xf32, #tpu.memory_space<any>>, %arg3: memref<256x128xbf16, #tpu.memory_space<any>>, %arg4: memref<128x128xbf16, #tpu.memory_space<any>>, %arg5: memref<128x128xbf16, #tpu.memory_space<any>>, %arg6: memref<128x128xbf16, #tpu.memory_space<any>>, %arg7: memref<128x64xbf16, #tpu.memory_space<any>>, %arg8: memref<2x128xf32, #tpu.memory_space<vmem>>, %arg9: memref<2x64xf32, #tpu.memory_space<vmem>>, %arg10: memref<6x8x64xf32, #tpu.memory_space<vmem>>, %arg11: memref<6x8xf32, #tpu.memory_space<vmem>>, %arg12: memref<6x8x256xf32, #tpu.memory_space<vmem>>, %arg13: memref<256x128xbf16, #tpu.memory_space<vmem>>, %arg14: memref<128x128xbf16, #tpu.memory_space<vmem>>, %arg15: memref<128x128xbf16, #tpu.memory_space<vmem>>, %arg16: memref<128x128xbf16, #tpu.memory_space<vmem>>, %arg17: memref<128x64xbf16, #tpu.memory_space<vmem>>, %arg18: memref<6x!tpu.dma_semaphore, #tpu.memory_space<semaphore_mem>>, %arg19: memref<5x!tpu.dma_semaphore, #tpu.memory_space<semaphore_mem>>) attributes {dimension_semantics = [#tpu.dimension_semantics<arbitrary>], iteration_bounds = array<i64: 1>, scalar_prefetch = 1 : i64, scratch_operands = 8 : i64, tpu.core_type = #tpu.core_type<tc>, window_params = [{}, {}, {}, {}, {}, {}, {pipeline_mode = #tpu.pipeline_mode<synchronous>, transform_indices = @transform_6, window_bounds = array<i64: 2, 128>}, {pipeline_mode = #tpu.pipeline_mode<synchronous>, transform_indices = @transform_7, window_bounds = array<i64: 2, 64>}, {pipeline_mode = #tpu.pipeline_mode<synchronous>, transform_indices = @transform_8, window_bounds = array<i64: 6, 8, 64>}, {pipeline_mode = #tpu.pipeline_mode<synchronous>, transform_indices = @transform_9, window_bounds = array<i64: 6, 8>}]} {
    %c0 = arith.constant 0 : index
    %0 = memref.load %arg1[%c0] : memref<6xi32, #tpu.memory_space<smem>>
    %c0_i32 = arith.constant 0 : i32
    %c0_i32_0 = arith.constant 0 : i32
    %c0_i32_1 = arith.constant 0 : i32
    %c0_i32_2 = arith.constant 0 : i32
    %1 = tpu.memref_slice %arg2[%0, %c0_i32_1, %c0_i32_2] : memref<8x8x256xf32, #tpu.memory_space<any>> -> memref<1x8x256xf32, #tpu.memory_space<any>>
    %2 = tpu.memref_squeeze %1 : memref<1x8x256xf32, #tpu.memory_space<any>> -> memref<8x256xf32, #tpu.memory_space<any>>
    %c0_i32_3 = arith.constant 0 : i32
    %c0_i32_4 = arith.constant 0 : i32
    %3 = tpu.memref_slice %arg12[%c0_i32, %c0_i32_3, %c0_i32_4] : memref<6x8x256xf32, #tpu.memory_space<vmem>> -> memref<1x8x256xf32, #tpu.memory_space<vmem>>
    %4 = tpu.memref_squeeze %3 : memref<1x8x256xf32, #tpu.memory_space<vmem>> -> memref<8x256xf32, #tpu.memory_space<vmem>>
    %5 = tpu.memref_slice %arg18[%c0_i32_0] : memref<6x!tpu.dma_semaphore, #tpu.memory_space<semaphore_mem>> -> memref<1x!tpu.dma_semaphore, #tpu.memory_space<semaphore_mem>>
    %6 = tpu.memref_squeeze %5 : memref<1x!tpu.dma_semaphore, #tpu.memory_space<semaphore_mem>> -> memref<!tpu.dma_semaphore, #tpu.memory_space<semaphore_mem>>
    tpu.enqueue_dma source(%2 : memref<8x256xf32, #tpu.memory_space<any>>) target(%4 : memref<8x256xf32, #tpu.memory_space<vmem>>) target_semaphore(%6 : memref<!tpu.dma_semaphore, #tpu.memory_space<semaphore_mem>>)
    %c1 = arith.constant 1 : index
    %7 = memref.load %arg1[%c1] : memref<6xi32, #tpu.memory_space<smem>>
    %c1_i32 = arith.constant 1 : i32
    %c1_i32_5 = arith.constant 1 : i32
    %c0_i32_6 = arith.constant 0 : i32
    %c0_i32_7 = arith.constant 0 : i32
    %8 = tpu.memref_slice %arg2[%7, %c0_i32_6, %c0_i32_7] : memref<8x8x256xf32, #tpu.memory_space<any>> -> memref<1x8x256xf32, #tpu.memory_space<any>>
    %9 = tpu.memref_squeeze %8 : memref<1x8x256xf32, #tpu.memory_space<any>> -> memref<8x256xf32, #tpu.memory_space<any>>
    %c0_i32_8 = arith.constant 0 : i32
    %c0_i32_9 = arith.constant 0 : i32
    %10 = tpu.memref_slice %arg12[%c1_i32, %c0_i32_8, %c0_i32_9] : memref<6x8x256xf32, #tpu.memory_space<vmem>> -> memref<1x8x256xf32, #tpu.memory_space<vmem>>
    %11 = tpu.memref_squeeze %10 : memref<1x8x256xf32, #tpu.memory_space<vmem>> -> memref<8x256xf32, #tpu.memory_space<vmem>>
    %12 = tpu.memref_slice %arg18[%c1_i32_5] : memref<6x!tpu.dma_semaphore, #tpu.memory_space<semaphore_mem>> -> memref<1x!tpu.dma_semaphore, #tpu.memory_space<semaphore_mem>>
    %13 = tpu.memref_squeeze %12 : memref<1x!tpu.dma_semaphore, #tpu.memory_space<semaphore_mem>> -> memref<!tpu.dma_semaphore, #tpu.memory_space<semaphore_mem>>
    tpu.enqueue_dma source(%9 : memref<8x256xf32, #tpu.memory_space<any>>) target(%11 : memref<8x256xf32, #tpu.memory_space<vmem>>) target_semaphore(%13 : memref<!tpu.dma_semaphore, #tpu.memory_space<semaphore_mem>>)
    %c2 = arith.constant 2 : index
    %14 = memref.load %arg1[%c2] : memref<6xi32, #tpu.memory_space<smem>>
    %c2_i32 = arith.constant 2 : i32
    %c2_i32_10 = arith.constant 2 : i32
    %c0_i32_11 = arith.constant 0 : i32
    %c0_i32_12 = arith.constant 0 : i32
    %15 = tpu.memref_slice %arg2[%14, %c0_i32_11, %c0_i32_12] : memref<8x8x256xf32, #tpu.memory_space<any>> -> memref<1x8x256xf32, #tpu.memory_space<any>>
    %16 = tpu.memref_squeeze %15 : memref<1x8x256xf32, #tpu.memory_space<any>> -> memref<8x256xf32, #tpu.memory_space<any>>
    %c0_i32_13 = arith.constant 0 : i32
    %c0_i32_14 = arith.constant 0 : i32
    %17 = tpu.memref_slice %arg12[%c2_i32, %c0_i32_13, %c0_i32_14] : memref<6x8x256xf32, #tpu.memory_space<vmem>> -> memref<1x8x256xf32, #tpu.memory_space<vmem>>
    %18 = tpu.memref_squeeze %17 : memref<1x8x256xf32, #tpu.memory_space<vmem>> -> memref<8x256xf32, #tpu.memory_space<vmem>>
    %19 = tpu.memref_slice %arg18[%c2_i32_10] : memref<6x!tpu.dma_semaphore, #tpu.memory_space<semaphore_mem>> -> memref<1x!tpu.dma_semaphore, #tpu.memory_space<semaphore_mem>>
    %20 = tpu.memref_squeeze %19 : memref<1x!tpu.dma_semaphore, #tpu.memory_space<semaphore_mem>> -> memref<!tpu.dma_semaphore, #tpu.memory_space<semaphore_mem>>
    tpu.enqueue_dma source(%16 : memref<8x256xf32, #tpu.memory_space<any>>) target(%18 : memref<8x256xf32, #tpu.memory_space<vmem>>) target_semaphore(%20 : memref<!tpu.dma_semaphore, #tpu.memory_space<semaphore_mem>>)
    %c3 = arith.constant 3 : index
    %21 = memref.load %arg1[%c3] : memref<6xi32, #tpu.memory_space<smem>>
    %c3_i32 = arith.constant 3 : i32
    %c3_i32_15 = arith.constant 3 : i32
    %c0_i32_16 = arith.constant 0 : i32
    %c0_i32_17 = arith.constant 0 : i32
    %22 = tpu.memref_slice %arg2[%21, %c0_i32_16, %c0_i32_17] : memref<8x8x256xf32, #tpu.memory_space<any>> -> memref<1x8x256xf32, #tpu.memory_space<any>>
    %23 = tpu.memref_squeeze %22 : memref<1x8x256xf32, #tpu.memory_space<any>> -> memref<8x256xf32, #tpu.memory_space<any>>
    %c0_i32_18 = arith.constant 0 : i32
    %c0_i32_19 = arith.constant 0 : i32
    %24 = tpu.memref_slice %arg12[%c3_i32, %c0_i32_18, %c0_i32_19] : memref<6x8x256xf32, #tpu.memory_space<vmem>> -> memref<1x8x256xf32, #tpu.memory_space<vmem>>
    %25 = tpu.memref_squeeze %24 : memref<1x8x256xf32, #tpu.memory_space<vmem>> -> memref<8x256xf32, #tpu.memory_space<vmem>>
    %26 = tpu.memref_slice %arg18[%c3_i32_15] : memref<6x!tpu.dma_semaphore, #tpu.memory_space<semaphore_mem>> -> memref<1x!tpu.dma_semaphore, #tpu.memory_space<semaphore_mem>>
    %27 = tpu.memref_squeeze %26 : memref<1x!tpu.dma_semaphore, #tpu.memory_space<semaphore_mem>> -> memref<!tpu.dma_semaphore, #tpu.memory_space<semaphore_mem>>
    tpu.enqueue_dma source(%23 : memref<8x256xf32, #tpu.memory_space<any>>) target(%25 : memref<8x256xf32, #tpu.memory_space<vmem>>) target_semaphore(%27 : memref<!tpu.dma_semaphore, #tpu.memory_space<semaphore_mem>>)
    %c4 = arith.constant 4 : index
    %28 = memref.load %arg1[%c4] : memref<6xi32, #tpu.memory_space<smem>>
    %c4_i32 = arith.constant 4 : i32
    %c4_i32_20 = arith.constant 4 : i32
    %c0_i32_21 = arith.constant 0 : i32
    %c0_i32_22 = arith.constant 0 : i32
    %29 = tpu.memref_slice %arg2[%28, %c0_i32_21, %c0_i32_22] : memref<8x8x256xf32, #tpu.memory_space<any>> -> memref<1x8x256xf32, #tpu.memory_space<any>>
    %30 = tpu.memref_squeeze %29 : memref<1x8x256xf32, #tpu.memory_space<any>> -> memref<8x256xf32, #tpu.memory_space<any>>
    %c0_i32_23 = arith.constant 0 : i32
    %c0_i32_24 = arith.constant 0 : i32
    %31 = tpu.memref_slice %arg12[%c4_i32, %c0_i32_23, %c0_i32_24] : memref<6x8x256xf32, #tpu.memory_space<vmem>> -> memref<1x8x256xf32, #tpu.memory_space<vmem>>
    %32 = tpu.memref_squeeze %31 : memref<1x8x256xf32, #tpu.memory_space<vmem>> -> memref<8x256xf32, #tpu.memory_space<vmem>>
    %33 = tpu.memref_slice %arg18[%c4_i32_20] : memref<6x!tpu.dma_semaphore, #tpu.memory_space<semaphore_mem>> -> memref<1x!tpu.dma_semaphore, #tpu.memory_space<semaphore_mem>>
    %34 = tpu.memref_squeeze %33 : memref<1x!tpu.dma_semaphore, #tpu.memory_space<semaphore_mem>> -> memref<!tpu.dma_semaphore, #tpu.memory_space<semaphore_mem>>
    tpu.enqueue_dma source(%30 : memref<8x256xf32, #tpu.memory_space<any>>) target(%32 : memref<8x256xf32, #tpu.memory_space<vmem>>) target_semaphore(%34 : memref<!tpu.dma_semaphore, #tpu.memory_space<semaphore_mem>>)
    %c5 = arith.constant 5 : index
    %35 = memref.load %arg1[%c5] : memref<6xi32, #tpu.memory_space<smem>>
    %c5_i32 = arith.constant 5 : i32
    %c5_i32_25 = arith.constant 5 : i32
    %c0_i32_26 = arith.constant 0 : i32
    %c0_i32_27 = arith.constant 0 : i32
    %36 = tpu.memref_slice %arg2[%35, %c0_i32_26, %c0_i32_27] : memref<8x8x256xf32, #tpu.memory_space<any>> -> memref<1x8x256xf32, #tpu.memory_space<any>>
    %37 = tpu.memref_squeeze %36 : memref<1x8x256xf32, #tpu.memory_space<any>> -> memref<8x256xf32, #tpu.memory_space<any>>
    %c0_i32_28 = arith.constant 0 : i32
    %c0_i32_29 = arith.constant 0 : i32
    %38 = tpu.memref_slice %arg12[%c5_i32, %c0_i32_28, %c0_i32_29] : memref<6x8x256xf32, #tpu.memory_space<vmem>> -> memref<1x8x256xf32, #tpu.memory_space<vmem>>
    %39 = tpu.memref_squeeze %38 : memref<1x8x256xf32, #tpu.memory_space<vmem>> -> memref<8x256xf32, #tpu.memory_space<vmem>>
    %40 = tpu.memref_slice %arg18[%c5_i32_25] : memref<6x!tpu.dma_semaphore, #tpu.memory_space<semaphore_mem>> -> memref<1x!tpu.dma_semaphore, #tpu.memory_space<semaphore_mem>>
    %41 = tpu.memref_squeeze %40 : memref<1x!tpu.dma_semaphore, #tpu.memory_space<semaphore_mem>> -> memref<!tpu.dma_semaphore, #tpu.memory_space<semaphore_mem>>
    tpu.enqueue_dma source(%37 : memref<8x256xf32, #tpu.memory_space<any>>) target(%39 : memref<8x256xf32, #tpu.memory_space<vmem>>) target_semaphore(%41 : memref<!tpu.dma_semaphore, #tpu.memory_space<semaphore_mem>>)
    %c0_i32_30 = arith.constant 0 : i32
    %42 = tpu.memref_slice %arg19[%c0_i32_30] : memref<5x!tpu.dma_semaphore, #tpu.memory_space<semaphore_mem>> -> memref<1x!tpu.dma_semaphore, #tpu.memory_space<semaphore_mem>>
    %43 = tpu.memref_squeeze %42 : memref<1x!tpu.dma_semaphore, #tpu.memory_space<semaphore_mem>> -> memref<!tpu.dma_semaphore, #tpu.memory_space<semaphore_mem>>
    tpu.enqueue_dma source(%arg3 : memref<256x128xbf16, #tpu.memory_space<any>>) target(%arg13 : memref<256x128xbf16, #tpu.memory_space<vmem>>) target_semaphore(%43 : memref<!tpu.dma_semaphore, #tpu.memory_space<semaphore_mem>>)
    %c1_i32_31 = arith.constant 1 : i32
    %44 = tpu.memref_slice %arg19[%c1_i32_31] : memref<5x!tpu.dma_semaphore, #tpu.memory_space<semaphore_mem>> -> memref<1x!tpu.dma_semaphore, #tpu.memory_space<semaphore_mem>>
    %45 = tpu.memref_squeeze %44 : memref<1x!tpu.dma_semaphore, #tpu.memory_space<semaphore_mem>> -> memref<!tpu.dma_semaphore, #tpu.memory_space<semaphore_mem>>
    tpu.enqueue_dma source(%arg4 : memref<128x128xbf16, #tpu.memory_space<any>>) target(%arg14 : memref<128x128xbf16, #tpu.memory_space<vmem>>) target_semaphore(%45 : memref<!tpu.dma_semaphore, #tpu.memory_space<semaphore_mem>>)
    %c2_i32_32 = arith.constant 2 : i32
    %46 = tpu.memref_slice %arg19[%c2_i32_32] : memref<5x!tpu.dma_semaphore, #tpu.memory_space<semaphore_mem>> -> memref<1x!tpu.dma_semaphore, #tpu.memory_space<semaphore_mem>>
    %47 = tpu.memref_squeeze %46 : memref<1x!tpu.dma_semaphore, #tpu.memory_space<semaphore_mem>> -> memref<!tpu.dma_semaphore, #tpu.memory_space<semaphore_mem>>
    tpu.enqueue_dma source(%arg5 : memref<128x128xbf16, #tpu.memory_space<any>>) target(%arg15 : memref<128x128xbf16, #tpu.memory_space<vmem>>) target_semaphore(%47 : memref<!tpu.dma_semaphore, #tpu.memory_space<semaphore_mem>>)
    %c3_i32_33 = arith.constant 3 : i32
    %48 = tpu.memref_slice %arg19[%c3_i32_33] : memref<5x!tpu.dma_semaphore, #tpu.memory_space<semaphore_mem>> -> memref<1x!tpu.dma_semaphore, #tpu.memory_space<semaphore_mem>>
    %49 = tpu.memref_squeeze %48 : memref<1x!tpu.dma_semaphore, #tpu.memory_space<semaphore_mem>> -> memref<!tpu.dma_semaphore, #tpu.memory_space<semaphore_mem>>
    tpu.enqueue_dma source(%arg6 : memref<128x128xbf16, #tpu.memory_space<any>>) target(%arg16 : memref<128x128xbf16, #tpu.memory_space<vmem>>) target_semaphore(%49 : memref<!tpu.dma_semaphore, #tpu.memory_space<semaphore_mem>>)
    %c4_i32_34 = arith.constant 4 : i32
    %50 = tpu.memref_slice %arg19[%c4_i32_34] : memref<5x!tpu.dma_semaphore, #tpu.memory_space<semaphore_mem>> -> memref<1x!tpu.dma_semaphore, #tpu.memory_space<semaphore_mem>>
    %51 = tpu.memref_squeeze %50 : memref<1x!tpu.dma_semaphore, #tpu.memory_space<semaphore_mem>> -> memref<!tpu.dma_semaphore, #tpu.memory_space<semaphore_mem>>
    tpu.enqueue_dma source(%arg7 : memref<128x64xbf16, #tpu.memory_space<any>>) target(%arg17 : memref<128x64xbf16, #tpu.memory_space<vmem>>) target_semaphore(%51 : memref<!tpu.dma_semaphore, #tpu.memory_space<semaphore_mem>>)
    %c0_35 = arith.constant 0 : index
    %c0_36 = arith.constant 0 : index
    %52 = vector.load %arg8[%c0_35, %c0_36] : memref<2x128xf32, #tpu.memory_space<vmem>>, vector<2x128xf32>
    %c0_37 = arith.constant 0 : index
    %c0_38 = arith.constant 0 : index
    %53 = vector.load %arg9[%c0_37, %c0_38] : memref<2x64xf32, #tpu.memory_space<vmem>>, vector<2x64xf32>
    %c0_i32_39 = arith.constant 0 : i32
    %c0_i32_40 = arith.constant 0 : i32
    %c0_i32_41 = arith.constant 0 : i32
    %c0_i32_42 = arith.constant 0 : i32
    %54 = tpu.memref_slice %arg2[%0, %c0_i32_41, %c0_i32_42] : memref<8x8x256xf32, #tpu.memory_space<any>> -> memref<1x8x256xf32, #tpu.memory_space<any>>
    %55 = tpu.memref_squeeze %54 : memref<1x8x256xf32, #tpu.memory_space<any>> -> memref<8x256xf32, #tpu.memory_space<any>>
    %c0_i32_43 = arith.constant 0 : i32
    %c0_i32_44 = arith.constant 0 : i32
    %56 = tpu.memref_slice %arg12[%c0_i32_39, %c0_i32_43, %c0_i32_44] : memref<6x8x256xf32, #tpu.memory_space<vmem>> -> memref<1x8x256xf32, #tpu.memory_space<vmem>>
    %57 = tpu.memref_squeeze %56 : memref<1x8x256xf32, #tpu.memory_space<vmem>> -> memref<8x256xf32, #tpu.memory_space<vmem>>
    %58 = tpu.memref_slice %arg18[%c0_i32_40] : memref<6x!tpu.dma_semaphore, #tpu.memory_space<semaphore_mem>> -> memref<1x!tpu.dma_semaphore, #tpu.memory_space<semaphore_mem>>
    %59 = tpu.memref_squeeze %58 : memref<1x!tpu.dma_semaphore, #tpu.memory_space<semaphore_mem>> -> memref<!tpu.dma_semaphore, #tpu.memory_space<semaphore_mem>>
    tpu.wait_dma2 semaphore(%59 : memref<!tpu.dma_semaphore, #tpu.memory_space<semaphore_mem>>) src(%55 : memref<8x256xf32, #tpu.memory_space<any>>) dst(%57 : memref<8x256xf32, #tpu.memory_space<vmem>>)
    %c1_i32_45 = arith.constant 1 : i32
    %c1_i32_46 = arith.constant 1 : i32
    %c0_i32_47 = arith.constant 0 : i32
    %c0_i32_48 = arith.constant 0 : i32
    %60 = tpu.memref_slice %arg2[%7, %c0_i32_47, %c0_i32_48] : memref<8x8x256xf32, #tpu.memory_space<any>> -> memref<1x8x256xf32, #tpu.memory_space<any>>
    %61 = tpu.memref_squeeze %60 : memref<1x8x256xf32, #tpu.memory_space<any>> -> memref<8x256xf32, #tpu.memory_space<any>>
    %c0_i32_49 = arith.constant 0 : i32
    %c0_i32_50 = arith.constant 0 : i32
    %62 = tpu.memref_slice %arg12[%c1_i32_45, %c0_i32_49, %c0_i32_50] : memref<6x8x256xf32, #tpu.memory_space<vmem>> -> memref<1x8x256xf32, #tpu.memory_space<vmem>>
    %63 = tpu.memref_squeeze %62 : memref<1x8x256xf32, #tpu.memory_space<vmem>> -> memref<8x256xf32, #tpu.memory_space<vmem>>
    %64 = tpu.memref_slice %arg18[%c1_i32_46] : memref<6x!tpu.dma_semaphore, #tpu.memory_space<semaphore_mem>> -> memref<1x!tpu.dma_semaphore, #tpu.memory_space<semaphore_mem>>
    %65 = tpu.memref_squeeze %64 : memref<1x!tpu.dma_semaphore, #tpu.memory_space<semaphore_mem>> -> memref<!tpu.dma_semaphore, #tpu.memory_space<semaphore_mem>>
    tpu.wait_dma2 semaphore(%65 : memref<!tpu.dma_semaphore, #tpu.memory_space<semaphore_mem>>) src(%61 : memref<8x256xf32, #tpu.memory_space<any>>) dst(%63 : memref<8x256xf32, #tpu.memory_space<vmem>>)
    %c2_i32_51 = arith.constant 2 : i32
    %c2_i32_52 = arith.constant 2 : i32
    %c0_i32_53 = arith.constant 0 : i32
    %c0_i32_54 = arith.constant 0 : i32
    %66 = tpu.memref_slice %arg2[%14, %c0_i32_53, %c0_i32_54] : memref<8x8x256xf32, #tpu.memory_space<any>> -> memref<1x8x256xf32, #tpu.memory_space<any>>
    %67 = tpu.memref_squeeze %66 : memref<1x8x256xf32, #tpu.memory_space<any>> -> memref<8x256xf32, #tpu.memory_space<any>>
    %c0_i32_55 = arith.constant 0 : i32
    %c0_i32_56 = arith.constant 0 : i32
    %68 = tpu.memref_slice %arg12[%c2_i32_51, %c0_i32_55, %c0_i32_56] : memref<6x8x256xf32, #tpu.memory_space<vmem>> -> memref<1x8x256xf32, #tpu.memory_space<vmem>>
    %69 = tpu.memref_squeeze %68 : memref<1x8x256xf32, #tpu.memory_space<vmem>> -> memref<8x256xf32, #tpu.memory_space<vmem>>
    %70 = tpu.memref_slice %arg18[%c2_i32_52] : memref<6x!tpu.dma_semaphore, #tpu.memory_space<semaphore_mem>> -> memref<1x!tpu.dma_semaphore, #tpu.memory_space<semaphore_mem>>
    %71 = tpu.memref_squeeze %70 : memref<1x!tpu.dma_semaphore, #tpu.memory_space<semaphore_mem>> -> memref<!tpu.dma_semaphore, #tpu.memory_space<semaphore_mem>>
    tpu.wait_dma2 semaphore(%71 : memref<!tpu.dma_semaphore, #tpu.memory_space<semaphore_mem>>) src(%67 : memref<8x256xf32, #tpu.memory_space<any>>) dst(%69 : memref<8x256xf32, #tpu.memory_space<vmem>>)
    %c3_i32_57 = arith.constant 3 : i32
    %c3_i32_58 = arith.constant 3 : i32
    %c0_i32_59 = arith.constant 0 : i32
    %c0_i32_60 = arith.constant 0 : i32
    %72 = tpu.memref_slice %arg2[%21, %c0_i32_59, %c0_i32_60] : memref<8x8x256xf32, #tpu.memory_space<any>> -> memref<1x8x256xf32, #tpu.memory_space<any>>
    %73 = tpu.memref_squeeze %72 : memref<1x8x256xf32, #tpu.memory_space<any>> -> memref<8x256xf32, #tpu.memory_space<any>>
    %c0_i32_61 = arith.constant 0 : i32
    %c0_i32_62 = arith.constant 0 : i32
    %74 = tpu.memref_slice %arg12[%c3_i32_57, %c0_i32_61, %c0_i32_62] : memref<6x8x256xf32, #tpu.memory_space<vmem>> -> memref<1x8x256xf32, #tpu.memory_space<vmem>>
    %75 = tpu.memref_squeeze %74 : memref<1x8x256xf32, #tpu.memory_space<vmem>> -> memref<8x256xf32, #tpu.memory_space<vmem>>
    %76 = tpu.memref_slice %arg18[%c3_i32_58] : memref<6x!tpu.dma_semaphore, #tpu.memory_space<semaphore_mem>> -> memref<1x!tpu.dma_semaphore, #tpu.memory_space<semaphore_mem>>
    %77 = tpu.memref_squeeze %76 : memref<1x!tpu.dma_semaphore, #tpu.memory_space<semaphore_mem>> -> memref<!tpu.dma_semaphore, #tpu.memory_space<semaphore_mem>>
    tpu.wait_dma2 semaphore(%77 : memref<!tpu.dma_semaphore, #tpu.memory_space<semaphore_mem>>) src(%73 : memref<8x256xf32, #tpu.memory_space<any>>) dst(%75 : memref<8x256xf32, #tpu.memory_space<vmem>>)
    %c4_i32_63 = arith.constant 4 : i32
    %c4_i32_64 = arith.constant 4 : i32
    %c0_i32_65 = arith.constant 0 : i32
    %c0_i32_66 = arith.constant 0 : i32
    %78 = tpu.memref_slice %arg2[%28, %c0_i32_65, %c0_i32_66] : memref<8x8x256xf32, #tpu.memory_space<any>> -> memref<1x8x256xf32, #tpu.memory_space<any>>
    %79 = tpu.memref_squeeze %78 : memref<1x8x256xf32, #tpu.memory_space<any>> -> memref<8x256xf32, #tpu.memory_space<any>>
    %c0_i32_67 = arith.constant 0 : i32
    %c0_i32_68 = arith.constant 0 : i32
    %80 = tpu.memref_slice %arg12[%c4_i32_63, %c0_i32_67, %c0_i32_68] : memref<6x8x256xf32, #tpu.memory_space<vmem>> -> memref<1x8x256xf32, #tpu.memory_space<vmem>>
    %81 = tpu.memref_squeeze %80 : memref<1x8x256xf32, #tpu.memory_space<vmem>> -> memref<8x256xf32, #tpu.memory_space<vmem>>
    %82 = tpu.memref_slice %arg18[%c4_i32_64] : memref<6x!tpu.dma_semaphore, #tpu.memory_space<semaphore_mem>> -> memref<1x!tpu.dma_semaphore, #tpu.memory_space<semaphore_mem>>
    %83 = tpu.memref_squeeze %82 : memref<1x!tpu.dma_semaphore, #tpu.memory_space<semaphore_mem>> -> memref<!tpu.dma_semaphore, #tpu.memory_space<semaphore_mem>>
    tpu.wait_dma2 semaphore(%83 : memref<!tpu.dma_semaphore, #tpu.memory_space<semaphore_mem>>) src(%79 : memref<8x256xf32, #tpu.memory_space<any>>) dst(%81 : memref<8x256xf32, #tpu.memory_space<vmem>>)
    %c5_i32_69 = arith.constant 5 : i32
    %c5_i32_70 = arith.constant 5 : i32
    %c0_i32_71 = arith.constant 0 : i32
    %c0_i32_72 = arith.constant 0 : i32
    %84 = tpu.memref_slice %arg2[%35, %c0_i32_71, %c0_i32_72] : memref<8x8x256xf32, #tpu.memory_space<any>> -> memref<1x8x256xf32, #tpu.memory_space<any>>
    %85 = tpu.memref_squeeze %84 : memref<1x8x256xf32, #tpu.memory_space<any>> -> memref<8x256xf32, #tpu.memory_space<any>>
    %c0_i32_73 = arith.constant 0 : i32
    %c0_i32_74 = arith.constant 0 : i32
    %86 = tpu.memref_slice %arg12[%c5_i32_69, %c0_i32_73, %c0_i32_74] : memref<6x8x256xf32, #tpu.memory_space<vmem>> -> memref<1x8x256xf32, #tpu.memory_space<vmem>>
    %87 = tpu.memref_squeeze %86 : memref<1x8x256xf32, #tpu.memory_space<vmem>> -> memref<8x256xf32, #tpu.memory_space<vmem>>
    %88 = tpu.memref_slice %arg18[%c5_i32_70] : memref<6x!tpu.dma_semaphore, #tpu.memory_space<semaphore_mem>> -> memref<1x!tpu.dma_semaphore, #tpu.memory_space<semaphore_mem>>
    %89 = tpu.memref_squeeze %88 : memref<1x!tpu.dma_semaphore, #tpu.memory_space<semaphore_mem>> -> memref<!tpu.dma_semaphore, #tpu.memory_space<semaphore_mem>>
    tpu.wait_dma2 semaphore(%89 : memref<!tpu.dma_semaphore, #tpu.memory_space<semaphore_mem>>) src(%85 : memref<8x256xf32, #tpu.memory_space<any>>) dst(%87 : memref<8x256xf32, #tpu.memory_space<vmem>>)
    %c0_75 = arith.constant 0 : index
    %c0_76 = arith.constant 0 : index
    %c0_77 = arith.constant 0 : index
    %90 = vector.load %arg12[%c0_75, %c0_76, %c0_77] : memref<6x8x256xf32, #tpu.memory_space<vmem>>, vector<6x8x256xf32>
    %91 = vector.shape_cast %90 : vector<6x8x256xf32> to vector<48x256xf32>
    %c0_i32_78 = arith.constant 0 : i32
    %92 = tpu.memref_slice %arg19[%c0_i32_78] : memref<5x!tpu.dma_semaphore, #tpu.memory_space<semaphore_mem>> -> memref<1x!tpu.dma_semaphore, #tpu.memory_space<semaphore_mem>>
    %93 = tpu.memref_squeeze %92 : memref<1x!tpu.dma_semaphore, #tpu.memory_space<semaphore_mem>> -> memref<!tpu.dma_semaphore, #tpu.memory_space<semaphore_mem>>
    tpu.wait_dma2 semaphore(%93 : memref<!tpu.dma_semaphore, #tpu.memory_space<semaphore_mem>>) src(%arg3 : memref<256x128xbf16, #tpu.memory_space<any>>) dst(%arg13 : memref<256x128xbf16, #tpu.memory_space<vmem>>)
    %94 = arith.truncf %91 : vector<48x256xf32> to vector<48x256xbf16>
    %c0_79 = arith.constant 0 : index
    %c0_80 = arith.constant 0 : index
    %95 = vector.load %arg13[%c0_79, %c0_80] : memref<256x128xbf16, #tpu.memory_space<vmem>>, vector<256x128xbf16>
    %cst = arith.constant dense<0.000000e+00> : vector<48x128xf32>
    %96 = tpu.matmul %94, %95, %cst {dimension_numbers = #tpu.dot_dimension_numbers<[1], [0], [0], [1], [0, 0, 1, 1], [], []>} : vector<48x256xbf16>, vector<256x128xbf16>, vector<48x128xf32> -> vector<48x128xf32>
    %cst_81 = arith.constant dense<0.000000e+00> : vector<128xf32>
    %97 = vector.multi_reduction <add>, %96, %cst_81 [0] : vector<48x128xf32> to vector<128xf32>
    %98 = vector.shape_cast %97 : vector<128xf32> to vector<1x128xf32>
    %cst_82 = arith.constant 0.020833334 : f32
    %99 = vector.broadcast %cst_82 : f32 to vector<1x128xf32>
    %100 = arith.mulf %98, %99 : vector<1x128xf32>
    %101 = arith.mulf %96, %96 : vector<48x128xf32>
    %cst_83 = arith.constant dense<0.000000e+00> : vector<128xf32>
    %102 = vector.multi_reduction <add>, %101, %cst_83 [0] : vector<48x128xf32> to vector<128xf32>
    %103 = vector.shape_cast %102 : vector<128xf32> to vector<1x128xf32>
    %cst_84 = arith.constant 0.020833334 : f32
    %104 = vector.broadcast %cst_84 : f32 to vector<1x128xf32>
    %105 = arith.mulf %103, %104 : vector<1x128xf32>
    %106 = arith.mulf %100, %100 : vector<1x128xf32>
    %107 = arith.subf %105, %106 : vector<1x128xf32>
    %108 = vector.extract_strided_slice %52 {offsets = [0, 0], sizes = [1, 128], strides = [1, 1]} : vector<2x128xf32> to vector<1x128xf32>
    %cst_85 = arith.constant 9.99999974E-6 : f32
    %109 = vector.broadcast %cst_85 : f32 to vector<1x128xf32>
    %110 = arith.addf %107, %109 : vector<1x128xf32>
    %111 = math.rsqrt %110 : vector<1x128xf32>
    %112 = arith.mulf %108, %111 : vector<1x128xf32>
    %113 = vector.broadcast %100 : vector<1x128xf32> to vector<48x128xf32>
    %114 = arith.subf %96, %113 : vector<48x128xf32>
    %115 = vector.broadcast %112 : vector<1x128xf32> to vector<48x128xf32>
    %116 = arith.mulf %114, %115 : vector<48x128xf32>
    %117 = vector.extract_strided_slice %52 {offsets = [1, 0], sizes = [1, 128], strides = [1, 1]} : vector<2x128xf32> to vector<1x128xf32>
    %118 = vector.broadcast %117 : vector<1x128xf32> to vector<48x128xf32>
    %119 = arith.addf %116, %118 : vector<48x128xf32>
    %cst_86 = arith.constant 2.000000e-02 : f32
    %120 = vector.broadcast %cst_86 : f32 to vector<48x128xf32>
    %121 = arith.mulf %120, %119 : vector<48x128xf32>
    %122 = arith.maximumf %119, %121 : vector<48x128xf32>
    %c1_i32_87 = arith.constant 1 : i32
    %123 = tpu.memref_slice %arg19[%c1_i32_87] : memref<5x!tpu.dma_semaphore, #tpu.memory_space<semaphore_mem>> -> memref<1x!tpu.dma_semaphore, #tpu.memory_space<semaphore_mem>>
    %124 = tpu.memref_squeeze %123 : memref<1x!tpu.dma_semaphore, #tpu.memory_space<semaphore_mem>> -> memref<!tpu.dma_semaphore, #tpu.memory_space<semaphore_mem>>
    tpu.wait_dma2 semaphore(%124 : memref<!tpu.dma_semaphore, #tpu.memory_space<semaphore_mem>>) src(%arg4 : memref<128x128xbf16, #tpu.memory_space<any>>) dst(%arg14 : memref<128x128xbf16, #tpu.memory_space<vmem>>)
    %125 = arith.truncf %122 : vector<48x128xf32> to vector<48x128xbf16>
    %c0_88 = arith.constant 0 : index
    %c0_89 = arith.constant 0 : index
    %126 = vector.load %arg14[%c0_88, %c0_89] : memref<128x128xbf16, #tpu.memory_space<vmem>>, vector<128x128xbf16>
    %cst_90 = arith.constant dense<0.000000e+00> : vector<48x128xf32>
    %127 = tpu.matmul %125, %126, %cst_90 {dimension_numbers = #tpu.dot_dimension_numbers<[1], [0], [0], [1], [0, 0, 1, 1], [], []>} : vector<48x128xbf16>, vector<128x128xbf16>, vector<48x128xf32> -> vector<48x128xf32>
    %cst_91 = arith.constant dense<0.000000e+00> : vector<128xf32>
    %128 = vector.multi_reduction <add>, %127, %cst_91 [0] : vector<48x128xf32> to vector<128xf32>
    %129 = vector.shape_cast %128 : vector<128xf32> to vector<1x128xf32>
    %cst_92 = arith.constant 0.020833334 : f32
    %130 = vector.broadcast %cst_92 : f32 to vector<1x128xf32>
    %131 = arith.mulf %129, %130 : vector<1x128xf32>
    %132 = arith.mulf %127, %127 : vector<48x128xf32>
    %cst_93 = arith.constant dense<0.000000e+00> : vector<128xf32>
    %133 = vector.multi_reduction <add>, %132, %cst_93 [0] : vector<48x128xf32> to vector<128xf32>
    %134 = vector.shape_cast %133 : vector<128xf32> to vector<1x128xf32>
    %cst_94 = arith.constant 0.020833334 : f32
    %135 = vector.broadcast %cst_94 : f32 to vector<1x128xf32>
    %136 = arith.mulf %134, %135 : vector<1x128xf32>
    %137 = arith.mulf %131, %131 : vector<1x128xf32>
    %138 = arith.subf %136, %137 : vector<1x128xf32>
    %139 = vector.extract_strided_slice %52 {offsets = [0, 0], sizes = [1, 128], strides = [1, 1]} : vector<2x128xf32> to vector<1x128xf32>
    %cst_95 = arith.constant 9.99999974E-6 : f32
    %140 = vector.broadcast %cst_95 : f32 to vector<1x128xf32>
    %141 = arith.addf %138, %140 : vector<1x128xf32>
    %142 = math.rsqrt %141 : vector<1x128xf32>
    %143 = arith.mulf %139, %142 : vector<1x128xf32>
    %144 = vector.broadcast %131 : vector<1x128xf32> to vector<48x128xf32>
    %145 = arith.subf %127, %144 : vector<48x128xf32>
    %146 = vector.broadcast %143 : vector<1x128xf32> to vector<48x128xf32>
    %147 = arith.mulf %145, %146 : vector<48x128xf32>
    %148 = vector.extract_strided_slice %52 {offsets = [1, 0], sizes = [1, 128], strides = [1, 1]} : vector<2x128xf32> to vector<1x128xf32>
    %149 = vector.broadcast %148 : vector<1x128xf32> to vector<48x128xf32>
    %150 = arith.addf %147, %149 : vector<48x128xf32>
    %cst_96 = arith.constant 2.000000e-02 : f32
    %151 = vector.broadcast %cst_96 : f32 to vector<48x128xf32>
    %152 = arith.mulf %151, %150 : vector<48x128xf32>
    %153 = arith.maximumf %150, %152 : vector<48x128xf32>
    %c2_i32_97 = arith.constant 2 : i32
    %154 = tpu.memref_slice %arg19[%c2_i32_97] : memref<5x!tpu.dma_semaphore, #tpu.memory_space<semaphore_mem>> -> memref<1x!tpu.dma_semaphore, #tpu.memory_space<semaphore_mem>>
    %155 = tpu.memref_squeeze %154 : memref<1x!tpu.dma_semaphore, #tpu.memory_space<semaphore_mem>> -> memref<!tpu.dma_semaphore, #tpu.memory_space<semaphore_mem>>
    tpu.wait_dma2 semaphore(%155 : memref<!tpu.dma_semaphore, #tpu.memory_space<semaphore_mem>>) src(%arg5 : memref<128x128xbf16, #tpu.memory_space<any>>) dst(%arg15 : memref<128x128xbf16, #tpu.memory_space<vmem>>)
    %156 = arith.truncf %153 : vector<48x128xf32> to vector<48x128xbf16>
    %c0_98 = arith.constant 0 : index
    %c0_99 = arith.constant 0 : index
    %157 = vector.load %arg15[%c0_98, %c0_99] : memref<128x128xbf16, #tpu.memory_space<vmem>>, vector<128x128xbf16>
    %cst_100 = arith.constant dense<0.000000e+00> : vector<48x128xf32>
    %158 = tpu.matmul %156, %157, %cst_100 {dimension_numbers = #tpu.dot_dimension_numbers<[1], [0], [0], [1], [0, 0, 1, 1], [], []>} : vector<48x128xbf16>, vector<128x128xbf16>, vector<48x128xf32> -> vector<48x128xf32>
    %cst_101 = arith.constant dense<0.000000e+00> : vector<128xf32>
    %159 = vector.multi_reduction <add>, %158, %cst_101 [0] : vector<48x128xf32> to vector<128xf32>
    %160 = vector.shape_cast %159 : vector<128xf32> to vector<1x128xf32>
    %cst_102 = arith.constant 0.020833334 : f32
    %161 = vector.broadcast %cst_102 : f32 to vector<1x128xf32>
    %162 = arith.mulf %160, %161 : vector<1x128xf32>
    %163 = arith.mulf %158, %158 : vector<48x128xf32>
    %cst_103 = arith.constant dense<0.000000e+00> : vector<128xf32>
    %164 = vector.multi_reduction <add>, %163, %cst_103 [0] : vector<48x128xf32> to vector<128xf32>
    %165 = vector.shape_cast %164 : vector<128xf32> to vector<1x128xf32>
    %cst_104 = arith.constant 0.020833334 : f32
    %166 = vector.broadcast %cst_104 : f32 to vector<1x128xf32>
    %167 = arith.mulf %165, %166 : vector<1x128xf32>
    %168 = arith.mulf %162, %162 : vector<1x128xf32>
    %169 = arith.subf %167, %168 : vector<1x128xf32>
    %170 = vector.extract_strided_slice %52 {offsets = [0, 0], sizes = [1, 128], strides = [1, 1]} : vector<2x128xf32> to vector<1x128xf32>
    %cst_105 = arith.constant 9.99999974E-6 : f32
    %171 = vector.broadcast %cst_105 : f32 to vector<1x128xf32>
    %172 = arith.addf %169, %171 : vector<1x128xf32>
    %173 = math.rsqrt %172 : vector<1x128xf32>
    %174 = arith.mulf %170, %173 : vector<1x128xf32>
    %175 = vector.broadcast %162 : vector<1x128xf32> to vector<48x128xf32>
    %176 = arith.subf %158, %175 : vector<48x128xf32>
    %177 = vector.broadcast %174 : vector<1x128xf32> to vector<48x128xf32>
    %178 = arith.mulf %176, %177 : vector<48x128xf32>
    %179 = vector.extract_strided_slice %52 {offsets = [1, 0], sizes = [1, 128], strides = [1, 1]} : vector<2x128xf32> to vector<1x128xf32>
    %180 = vector.broadcast %179 : vector<1x128xf32> to vector<48x128xf32>
    %181 = arith.addf %178, %180 : vector<48x128xf32>
    %cst_106 = arith.constant 2.000000e-02 : f32
    %182 = vector.broadcast %cst_106 : f32 to vector<48x128xf32>
    %183 = arith.mulf %182, %181 : vector<48x128xf32>
    %184 = arith.maximumf %181, %183 : vector<48x128xf32>
    %c3_i32_107 = arith.constant 3 : i32
    %185 = tpu.memref_slice %arg19[%c3_i32_107] : memref<5x!tpu.dma_semaphore, #tpu.memory_space<semaphore_mem>> -> memref<1x!tpu.dma_semaphore, #tpu.memory_space<semaphore_mem>>
    %186 = tpu.memref_squeeze %185 : memref<1x!tpu.dma_semaphore, #tpu.memory_space<semaphore_mem>> -> memref<!tpu.dma_semaphore, #tpu.memory_space<semaphore_mem>>
    tpu.wait_dma2 semaphore(%186 : memref<!tpu.dma_semaphore, #tpu.memory_space<semaphore_mem>>) src(%arg6 : memref<128x128xbf16, #tpu.memory_space<any>>) dst(%arg16 : memref<128x128xbf16, #tpu.memory_space<vmem>>)
    %187 = arith.truncf %184 : vector<48x128xf32> to vector<48x128xbf16>
    %c0_108 = arith.constant 0 : index
    %c0_109 = arith.constant 0 : index
    %188 = vector.load %arg16[%c0_108, %c0_109] : memref<128x128xbf16, #tpu.memory_space<vmem>>, vector<128x128xbf16>
    %cst_110 = arith.constant dense<0.000000e+00> : vector<48x128xf32>
    %189 = tpu.matmul %187, %188, %cst_110 {dimension_numbers = #tpu.dot_dimension_numbers<[1], [0], [0], [1], [0, 0, 1, 1], [], []>} : vector<48x128xbf16>, vector<128x128xbf16>, vector<48x128xf32> -> vector<48x128xf32>
    %cst_111 = arith.constant dense<0.000000e+00> : vector<128xf32>
    %190 = vector.multi_reduction <add>, %189, %cst_111 [0] : vector<48x128xf32> to vector<128xf32>
    %191 = vector.shape_cast %190 : vector<128xf32> to vector<1x128xf32>
    %cst_112 = arith.constant 0.020833334 : f32
    %192 = vector.broadcast %cst_112 : f32 to vector<1x128xf32>
    %193 = arith.mulf %191, %192 : vector<1x128xf32>
    %194 = arith.mulf %189, %189 : vector<48x128xf32>
    %cst_113 = arith.constant dense<0.000000e+00> : vector<128xf32>
    %195 = vector.multi_reduction <add>, %194, %cst_113 [0] : vector<48x128xf32> to vector<128xf32>
    %196 = vector.shape_cast %195 : vector<128xf32> to vector<1x128xf32>
    %cst_114 = arith.constant 0.020833334 : f32
    %197 = vector.broadcast %cst_114 : f32 to vector<1x128xf32>
    %198 = arith.mulf %196, %197 : vector<1x128xf32>
    %199 = arith.mulf %193, %193 : vector<1x128xf32>
    %200 = arith.subf %198, %199 : vector<1x128xf32>
    %201 = vector.extract_strided_slice %52 {offsets = [0, 0], sizes = [1, 128], strides = [1, 1]} : vector<2x128xf32> to vector<1x128xf32>
    %cst_115 = arith.constant 9.99999974E-6 : f32
    %202 = vector.broadcast %cst_115 : f32 to vector<1x128xf32>
    %203 = arith.addf %200, %202 : vector<1x128xf32>
    %204 = math.rsqrt %203 : vector<1x128xf32>
    %205 = arith.mulf %201, %204 : vector<1x128xf32>
    %206 = vector.broadcast %193 : vector<1x128xf32> to vector<48x128xf32>
    %207 = arith.subf %189, %206 : vector<48x128xf32>
    %208 = vector.broadcast %205 : vector<1x128xf32> to vector<48x128xf32>
    %209 = arith.mulf %207, %208 : vector<48x128xf32>
    %210 = vector.extract_strided_slice %52 {offsets = [1, 0], sizes = [1, 128], strides = [1, 1]} : vector<2x128xf32> to vector<1x128xf32>
    %211 = vector.broadcast %210 : vector<1x128xf32> to vector<48x128xf32>
    %212 = arith.addf %209, %211 : vector<48x128xf32>
    %cst_116 = arith.constant 2.000000e-02 : f32
    %213 = vector.broadcast %cst_116 : f32 to vector<48x128xf32>
    %214 = arith.mulf %213, %212 : vector<48x128xf32>
    %215 = arith.maximumf %212, %214 : vector<48x128xf32>
    %c4_i32_117 = arith.constant 4 : i32
    %216 = tpu.memref_slice %arg19[%c4_i32_117] : memref<5x!tpu.dma_semaphore, #tpu.memory_space<semaphore_mem>> -> memref<1x!tpu.dma_semaphore, #tpu.memory_space<semaphore_mem>>
    %217 = tpu.memref_squeeze %216 : memref<1x!tpu.dma_semaphore, #tpu.memory_space<semaphore_mem>> -> memref<!tpu.dma_semaphore, #tpu.memory_space<semaphore_mem>>
    tpu.wait_dma2 semaphore(%217 : memref<!tpu.dma_semaphore, #tpu.memory_space<semaphore_mem>>) src(%arg7 : memref<128x64xbf16, #tpu.memory_space<any>>) dst(%arg17 : memref<128x64xbf16, #tpu.memory_space<vmem>>)
    %218 = arith.truncf %215 : vector<48x128xf32> to vector<48x128xbf16>
    %c0_118 = arith.constant 0 : index
    %c0_119 = arith.constant 0 : index
    %219 = vector.load %arg17[%c0_118, %c0_119] : memref<128x64xbf16, #tpu.memory_space<vmem>>, vector<128x64xbf16>
    %cst_120 = arith.constant dense<0.000000e+00> : vector<48x64xf32>
    %220 = tpu.matmul %218, %219, %cst_120 {dimension_numbers = #tpu.dot_dimension_numbers<[1], [0], [0], [1], [0, 0, 1, 1], [], []>} : vector<48x128xbf16>, vector<128x64xbf16>, vector<48x64xf32> -> vector<48x64xf32>
    %cst_121 = arith.constant dense<0.000000e+00> : vector<64xf32>
    %221 = vector.multi_reduction <add>, %220, %cst_121 [0] : vector<48x64xf32> to vector<64xf32>
    %222 = vector.shape_cast %221 : vector<64xf32> to vector<1x64xf32>
    %cst_122 = arith.constant 0.020833334 : f32
    %223 = vector.broadcast %cst_122 : f32 to vector<1x64xf32>
    %224 = arith.mulf %222, %223 : vector<1x64xf32>
    %225 = arith.mulf %220, %220 : vector<48x64xf32>
    %cst_123 = arith.constant dense<0.000000e+00> : vector<64xf32>
    %226 = vector.multi_reduction <add>, %225, %cst_123 [0] : vector<48x64xf32> to vector<64xf32>
    %227 = vector.shape_cast %226 : vector<64xf32> to vector<1x64xf32>
    %cst_124 = arith.constant 0.020833334 : f32
    %228 = vector.broadcast %cst_124 : f32 to vector<1x64xf32>
    %229 = arith.mulf %227, %228 : vector<1x64xf32>
    %230 = arith.mulf %224, %224 : vector<1x64xf32>
    %231 = arith.subf %229, %230 : vector<1x64xf32>
    %232 = vector.extract_strided_slice %53 {offsets = [0, 0], sizes = [1, 64], strides = [1, 1]} : vector<2x64xf32> to vector<1x64xf32>
    %cst_125 = arith.constant 9.99999974E-6 : f32
    %233 = vector.broadcast %cst_125 : f32 to vector<1x64xf32>
    %234 = arith.addf %231, %233 : vector<1x64xf32>
    %235 = math.rsqrt %234 : vector<1x64xf32>
    %236 = arith.mulf %232, %235 : vector<1x64xf32>
    %237 = vector.broadcast %224 : vector<1x64xf32> to vector<48x64xf32>
    %238 = arith.subf %220, %237 : vector<48x64xf32>
    %239 = vector.broadcast %236 : vector<1x64xf32> to vector<48x64xf32>
    %240 = arith.mulf %238, %239 : vector<48x64xf32>
    %241 = vector.extract_strided_slice %53 {offsets = [1, 0], sizes = [1, 64], strides = [1, 1]} : vector<2x64xf32> to vector<1x64xf32>
    %242 = vector.broadcast %241 : vector<1x64xf32> to vector<48x64xf32>
    %243 = arith.addf %240, %242 : vector<48x64xf32>
    %cst_126 = arith.constant 2.000000e-02 : f32
    %244 = vector.broadcast %cst_126 : f32 to vector<48x64xf32>
    %245 = arith.mulf %244, %243 : vector<48x64xf32>
    %246 = arith.maximumf %243, %245 : vector<48x64xf32>
    %247 = vector.shape_cast %246 : vector<48x64xf32> to vector<6x8x64xf32>
    %c0_127 = arith.constant 0 : index
    %c0_128 = arith.constant 0 : index
    %c0_129 = arith.constant 0 : index
    %248 = vector.load %arg10[%c0_127, %c0_128, %c0_129] : memref<6x8x64xf32, #tpu.memory_space<vmem>>, vector<6x8x64xf32>
    tpu.vector_store %arg10[%c0_127, %c0_128, %c0_129], %247 {strides = array<i32>} : memref<6x8x64xf32, #tpu.memory_space<vmem>>, vector<6x8x64xf32>,
    %249 = arith.mulf %247, %247 : vector<6x8x64xf32>
    %cst_130 = arith.constant dense<0.000000e+00> : vector<6x8xf32>
    %250 = vector.multi_reduction <add>, %249, %cst_130 [2] : vector<6x8x64xf32> to vector<6x8xf32>
    %251 = math.sqrt %250 : vector<6x8xf32>
    %c0_131 = arith.constant 0 : index
    %c0_132 = arith.constant 0 : index
    %252 = vector.load %arg11[%c0_131, %c0_132] : memref<6x8xf32, #tpu.memory_space<vmem>>, vector<6x8xf32>
    tpu.vector_store %arg11[%c0_131, %c0_132], %251 {strides = array<i32>} : memref<6x8xf32, #tpu.memory_space<vmem>>, vector<6x8xf32>,
    return
  }
  func.func @transform_6(%arg0: i32, %arg1: memref<6xi32, #tpu.memory_space<smem>>) -> (i32, i32) {
    %c0_i32 = arith.constant 0 : i32
    %c0_i32_0 = arith.constant 0 : i32
    %c0_i32_1 = arith.constant 0 : i32
    return %c0_i32, %c0_i32_0 : i32, i32
  }
  func.func @transform_7(%arg0: i32, %arg1: memref<6xi32, #tpu.memory_space<smem>>) -> (i32, i32) {
    %c0_i32 = arith.constant 0 : i32
    %c0_i32_0 = arith.constant 0 : i32
    %c0_i32_1 = arith.constant 0 : i32
    return %c0_i32, %c0_i32_0 : i32, i32
  }
  func.func @transform_8(%arg0: i32, %arg1: memref<6xi32, #tpu.memory_space<smem>>) -> (i32, i32, i32) {
    %c0_i32 = arith.constant 0 : i32
    %c0_i32_0 = arith.constant 0 : i32
    %c0_i32_1 = arith.constant 0 : i32
    %c0_i32_2 = arith.constant 0 : i32
    return %c0_i32, %c0_i32_0, %c0_i32_1 : i32, i32, i32
  }
  func.func @transform_9(%arg0: i32, %arg1: memref<6xi32, #tpu.memory_space<smem>>) -> (i32, i32) {
    %c0_i32 = arith.constant 0 : i32
    %c0_i32_0 = arith.constant 0 : i32
    %c0_i32_1 = arith.constant 0 : i32
    return %c0_i32, %c0_i32_0 : i32, i32
  }
}

</mosaic_0001>

<llo_original>
// kernel: model_forward.3
$region0: #{model_forward.3}
  #allocation0 [shape = 'u32[]', space=smem, size = 0x4, offset = 0x4, fixed_abs, tag = 'smem constant byte address 0x4 - core index']
  #allocation1 [shape = 'u32[144,128]{1,0:T(1,128)}', space=vmem, size = 0x12000, scoped, tag = 'internal scratch']
  #allocation2 [shape = 'f32[6,8,256]{2,1,0:T(8,128)}', space=vmem, size = 0xc000, scoped, tag = 'scratch operand']
  #allocation3 [shape = 'bf16[256,128]{1,0:T(16,128)(2,1)}', space=vmem, size = 0x10000, scoped, tag = 'scratch operand']
  #allocation4 [shape = 'bf16[128,128]{1,0:T(16,128)(2,1)}', space=vmem, size = 0x8000, scoped, tag = 'scratch operand']
  #allocation5 [shape = 'bf16[128,128]{1,0:T(16,128)(2,1)}', space=vmem, size = 0x8000, scoped, tag = 'scratch operand']
  #allocation6 [shape = 'bf16[128,128]{1,0:T(16,128)(2,1)}', space=vmem, size = 0x8000, scoped, tag = 'scratch operand']
  #allocation7 [shape = 'bf16[128,64]{1,0:T(16,128)(2,1)}', space=vmem, size = 0x8000, scoped, tag = 'scratch operand']
  #allocation8 [shape = 's32[6]{0}', space=sflag, size = 0x18, scoped, tag = 'scratch operand']
  #allocation9 [shape = 's32[5]{0}', space=sflag, size = 0x14, scoped, tag = 'scratch operand']
  #allocation10 [shape = 's32[1]{0}', space=sflag, size = 0x4, scoped, tag = 'scoped memory for model_forward.3']
  #allocation11 [shape = 'u8[512]{0}', space=smem, size = 0x200, scoped, tag = 'prefetched SMEM operand 0']
  #allocation12 [shape = 's32[]', space=sflag, size = 0x4, offset = 0, fixed_abs, tag = 'sflag constant byte address 0x0 - dummy sync flag']
  #allocation13 [shape = 's32[]', space=sflag, size = 0x4, offset = 0, fixed_abs, tag = 'sflag constant byte address 0x0 - dummy sync flag']
  #allocation14 [shape = 's32[]', space=sflag, size = 0x4, offset = 0, fixed_abs, tag = 'sflag constant byte address 0x0 - dummy sync flag']
  #allocation15 [shape = 's32[]', space=sflag, size = 0x4, offset = 0, fixed_abs, tag = 'sflag constant byte address 0x0 - dummy sync flag']
  #allocation16 [shape = 's32[]', space=sflag, size = 0x4, offset = 0, fixed_abs, tag = 'sflag constant byte address 0x0 - dummy sync flag']
  #allocation17 [shape = 's32[]', space=sflag, size = 0x4, offset = 0, fixed_abs, tag = 'sflag constant byte address 0x0 - dummy sync flag']
  #allocation18 [shape = 's32[]', space=sflag, size = 0x4, offset = 0, fixed_abs, tag = 'sflag constant byte address 0x0 - dummy sync flag']
  #allocation19 [shape = 's32[]', space=sflag, size = 0x4, offset = 0, fixed_abs, tag = 'sflag constant byte address 0x0 - dummy sync flag']
  #allocation20 [shape = 's32[]', space=sflag, size = 0x4, offset = 0, fixed_abs, tag = 'sflag constant byte address 0x0 - dummy sync flag']
  #allocation21 [shape = 's32[]', space=sflag, size = 0x4, offset = 0, fixed_abs, tag = 'sflag constant byte address 0x0 - dummy sync flag']
  #allocation22 [shape = 's32[]', space=sflag, size = 0x4, offset = 0, fixed_abs, tag = 'sflag constant byte address 0x0 - dummy sync flag']
  %s0 = inlined_call_operand.vmem [shape: s32[6], index: 0, kind: input, shape index: {}]
  %s1 = inlined_call_operand.vmem [shape: f32[8,8,256], index: 1, kind: input, shape index: {}]
  %s2 = inlined_call_operand.vmem [shape: bf16[256,128], index: 2, kind: input, shape index: {}]
  %s3 = inlined_call_operand.vmem [shape: bf16[128,128], index: 3, kind: input, shape index: {}]
  %s4 = inlined_call_operand.vmem [shape: bf16[128,128], index: 4, kind: input, shape index: {}]
  %s5 = inlined_call_operand.vmem [shape: bf16[128,128], index: 5, kind: input, shape index: {}]
  %s6 = inlined_call_operand.vmem [shape: bf16[128,64], index: 6, kind: input, shape index: {}]
  %s7 = inlined_call_operand.vmem [shape: f32[2,128], index: 7, kind: input, shape index: {}]
  %s8 = inlined_call_operand.vmem [shape: f32[2,64], index: 8, kind: input, shape index: {}]
  %s9 = inlined_call_operand.vmem [shape: f32[6,8,64], index: 9, kind: output, shape index: {0}]
  %s10 = inlined_call_operand.vmem [shape: f32[6,8], index: 10, kind: output, shape index: {1}]
  %11 = xla_tuple %s9, %s10
  %s12 = sld [smem:[#allocation0]]
  $region400: #{model_forward.3} parent=0
    _
  %s14 = ssub.s32 1, %s12
  %s15 = scalar_select 0, %s14, %s12
  %s16 = sshll.u32 %s0, 4
  %s17 = int_to_ptr.vmem [resolvable:$true] %s16
  %19 = dma.vmem_to_smem %s17, 16, [#allocation11], [#allocation10]
  %20 = dma.done [#allocation10], 16
  %21 = sfence
  // Predicated region
  $region2: #{model_forward.3} parent=0 // pred_check
    _
  $region3: #{model_forward.3} parent=0 // pred_check_branch
    %23 = sbr.rel (0) target = $region5
  $region4: #{model_forward.3} parent=0 // pred_region
    _
  $region5: #{model_forward.3} parent=0 // pred_fallthru
    _
  // Predicated region
  $region6: #{model_forward.3} parent=0 // pred_check
    _
  $region7: #{model_forward.3} parent=0 // pred_check_branch
    %25 = sbr.rel (0) target = $region9
  $region8: #{model_forward.3} parent=0 // pred_region
    _
  $region9: #{model_forward.3} parent=0 // pred_fallthru
    _
  %s27 = sld [smem:[#allocation11]]
  %s28 = smul.u32 %s27, 2
  %s29 = smul.addr %s28, 8
  %s30 = scalar_lea.vmem %s1, %s29
  %p32 = scmp.lt.u32.totalorder 16, 8
  %p33 = pneg %p32
  // Predicated region
  $region10: #{model_forward.3} parent=0 // pred_check
    _
  $region11: #{model_forward.3} parent=0 // pred_check_branch
    %35 = sbr.rel (%p32) target = $region13
  $region12: #{model_forward.3} parent=0 // pred_region
    %s50 = sand.u32 16, 7
    %p51 = scmp.eq.s32.totalorder %s50, 0
    // Predicated region
    $region25: #{model_forward.3} parent=12 // pred_check
      %p52 = pneg %p51
    $region26: #{model_forward.3} parent=12 // pred_check_branch
      %54 = sbr.rel (%p52) target = $region28
    $region27: #{model_forward.3} parent=12 // pred_region
      loop: start=0, step=1, limit=1
      $region29: #{model_forward.3} parent=27 // loop_pre_header
        _
      $region30: #{model_forward.3} parent=27 // loop_header
        %s56 = sphi 0, %s60
        %p57 = scmp.ge.s32.totalorder %s56, 1
        %s61 = sphi %s30, %s30
        %s62 = sphi [#allocation2], [#allocation2]
      $region31: #{model_forward.3} parent=27 // loop_header_branch
        %59 = sbr.rel (%p57) target = $region35
      $region32: #{model_forward.3} parent=27 // loop_body
        %v63 = vld [vmem:[%s61] sm:$0xff]
        %64 = vst [vmem:[%s62] sm:$0xff] %v63
        %v65 = vld [vmem:[%s61 + $0x8] sm:$0xff]
        %66 = vst [vmem:[%s62 + $0x8] sm:$0xff] %v65
      $region33: #{model_forward.3} parent=27 // loop_footer
        %s60 = sadd.s32 1, %s56
      $region34: #{model_forward.3} parent=27 // loop_footer_branch
        %55 = sbr.rel target = $region30
      $region35: #{model_forward.3} parent=27 // loop_exit
        _
    $region28: #{model_forward.3} parent=12 // pred_fallthru
      _
    %p67 = pneg %p51
    // Predicated region
    $region36: #{model_forward.3} parent=12 // pred_check
      _
    $region37: #{model_forward.3} parent=12 // pred_check_branch
      %69 = sbr.rel (%p51) target = $region39
    $region38: #{model_forward.3} parent=12 // pred_region
      %s70 = sand.u32 16, 7
    $region39: #{model_forward.3} parent=12 // pred_fallthru
      _
  $region13: #{model_forward.3} parent=0 // pred_fallthru
    _
  // Predicated region
  $region14: #{model_forward.3} parent=0 // pred_check
    %p36 = pneg %p32
  $region15: #{model_forward.3} parent=0 // pred_check_branch
    %38 = sbr.rel (%p36) target = $region17
  $region16: #{model_forward.3} parent=0 // pred_region
    %s39 = sshllo.u32 0, 16
    loop: start=0, step=1, limit=1
    $region18: #{model_forward.3} parent=16 // loop_pre_header
      _
    $region19: #{model_forward.3} parent=16 // loop_header
      %s41 = sphi 0, %s45
      %p42 = scmp.ge.s32.totalorder %s41, 1
      %s46 = sphi %s30, %s30
      %s47 = sphi [#allocation2], [#allocation2]
    $region20: #{model_forward.3} parent=16 // loop_header_branch
      %44 = sbr.rel (%p42) target = $region24
    $region21: #{model_forward.3} parent=16 // loop_body
      %v48 = vld [vmem:[%s46] sm:%s39]
      %49 = vst [vmem:[%s47] sm:%s39] %v48
    $region22: #{model_forward.3} parent=16 // loop_footer
      %s45 = sadd.s32 1, %s41
    $region23: #{model_forward.3} parent=16 // loop_footer_branch
      %40 = sbr.rel target = $region19
    $region24: #{model_forward.3} parent=16 // loop_exit
      _
  $region17: #{model_forward.3} parent=0 // pred_fallthru
    _
  // Predicated region
  $region40: #{model_forward.3} parent=0 // pred_check
    _
  $region41: #{model_forward.3} parent=0 // pred_check_branch
    %73 = sbr.rel (0) target = $region43
  $region42: #{model_forward.3} parent=0 // pred_region
    %74 = vsyncadd [#allocation8], 256
  $region43: #{model_forward.3} parent=0 // pred_fallthru
    _
  %s75 = sld [smem:[#allocation11 + $0x1]]
  %s76 = smul.u32 %s75, 2
  %s77 = smul.addr %s76, 8
  %s78 = scalar_lea.vmem %s1, %s77
  %s79 = scalar_lea.vmem [#allocation2], 16
  %s80 = scalar_lea.sflag [#allocation8], 1
  %p82 = scmp.lt.u32.totalorder 16, 8
  %p83 = pneg %p82
  // Predicated region
  $region44: #{model_forward.3} parent=0 // pred_check
    _
  $region45: #{model_forward.3} parent=0 // pred_check_branch
    %85 = sbr.rel (%p82) target = $region47
  $region46: #{model_forward.3} parent=0 // pred_region
    %s100 = sand.u32 16, 7
    %p101 = scmp.eq.s32.totalorder %s100, 0
    // Predicated region
    $region59: #{model_forward.3} parent=46 // pred_check
      %p102 = pneg %p101
    $region60: #{model_forward.3} parent=46 // pred_check_branch
      %104 = sbr.rel (%p102) target = $region62
    $region61: #{model_forward.3} parent=46 // pred_region
      loop: start=0, step=1, limit=1
      $region63: #{model_forward.3} parent=61 // loop_pre_header
        _
      $region64: #{model_forward.3} parent=61 // loop_header
        %s106 = sphi 0, %s110
        %p107 = scmp.ge.s32.totalorder %s106, 1
        %s111 = sphi %s78, %s78
        %s112 = sphi %s79, %s79
      $region65: #{model_forward.3} parent=61 // loop_header_branch
        %109 = sbr.rel (%p107) target = $region69
      $region66: #{model_forward.3} parent=61 // loop_body
        %v113 = vld [vmem:[%s111] sm:$0xff]
        %114 = vst [vmem:[%s112] sm:$0xff] %v113
        %v115 = vld [vmem:[%s111 + $0x8] sm:$0xff]
        %116 = vst [vmem:[%s112 + $0x8] sm:$0xff] %v115
      $region67: #{model_forward.3} parent=61 // loop_footer
        %s110 = sadd.s32 1, %s106
      $region68: #{model_forward.3} parent=61 // loop_footer_branch
        %105 = sbr.rel target = $region64
      $region69: #{model_forward.3} parent=61 // loop_exit
        _
    $region62: #{model_forward.3} parent=46 // pred_fallthru
      _
    %p117 = pneg %p101
    // Predicated region
    $region70: #{model_forward.3} parent=46 // pred_check
      _
    $region71: #{model_forward.3} parent=46 // pred_check_branch
      %119 = sbr.rel (%p101) target = $region73
    $region72: #{model_forward.3} parent=46 // pred_region
      %s120 = sand.u32 16, 7
    $region73: #{model_forward.3} parent=46 // pred_fallthru
      _
  $region47: #{model_forward.3} parent=0 // pred_fallthru
    _
  // Predicated region
  $region48: #{model_forward.3} parent=0 // pred_check
    %p86 = pneg %p82
  $region49: #{model_forward.3} parent=0 // pred_check_branch
    %88 = sbr.rel (%p86) target = $region51
  $region50: #{model_forward.3} parent=0 // pred_region
    %s89 = sshllo.u32 0, 16
    loop: start=0, step=1, limit=1
    $region52: #{model_forward.3} parent=50 // loop_pre_header
      _
    $region53: #{model_forward.3} parent=50 // loop_header
      %s91 = sphi 0, %s95
      %p92 = scmp.ge.s32.totalorder %s91, 1
      %s96 = sphi %s78, %s78
      %s97 = sphi %s79, %s79
    $region54: #{model_forward.3} parent=50 // loop_header_branch
      %94 = sbr.rel (%p92) target = $region58
    $region55: #{model_forward.3} parent=50 // loop_body
      %v98 = vld [vmem:[%s96] sm:%s89]
      %99 = vst [vmem:[%s97] sm:%s89] %v98
    $region56: #{model_forward.3} parent=50 // loop_footer
      %s95 = sadd.s32 1, %s91
    $region57: #{model_forward.3} parent=50 // loop_footer_branch
      %90 = sbr.rel target = $region53
    $region58: #{model_forward.3} parent=50 // loop_exit
      _
  $region51: #{model_forward.3} parent=0 // pred_fallthru
    _
  // Predicated region
  $region74: #{model_forward.3} parent=0 // pred_check
    _
  $region75: #{model_forward.3} parent=0 // pred_check_branch
    %123 = sbr.rel (0) target = $region77
  $region76: #{model_forward.3} parent=0 // pred_region
    %124 = vsyncadd %s80, 256
  $region77: #{model_forward.3} parent=0 // pred_fallthru
    _
  %s125 = sld [smem:[#allocation11 + $0x2]]
  %s126 = smul.u32 %s125, 2
  %s127 = smul.addr %s126, 8
  %s128 = scalar_lea.vmem %s1, %s127
  %s129 = scalar_lea.vmem [#allocation2], 32
  %s130 = scalar_lea.sflag [#allocation8], 2
  %p132 = scmp.lt.u32.totalorder 16, 8
  %p133 = pneg %p132
  // Predicated region
  $region78: #{model_forward.3} parent=0 // pred_check
    _
  $region79: #{model_forward.3} parent=0 // pred_check_branch
    %135 = sbr.rel (%p132) target = $region81
  $region80: #{model_forward.3} parent=0 // pred_region
    %s150 = sand.u32 16, 7
    %p151 = scmp.eq.s32.totalorder %s150, 0
    // Predicated region
    $region93: #{model_forward.3} parent=80 // pred_check
      %p152 = pneg %p151
    $region94: #{model_forward.3} parent=80 // pred_check_branch
      %154 = sbr.rel (%p152) target = $region96
    $region95: #{model_forward.3} parent=80 // pred_region
      loop: start=0, step=1, limit=1
      $region97: #{model_forward.3} parent=95 // loop_pre_header
        _
      $region98: #{model_forward.3} parent=95 // loop_header
        %s156 = sphi 0, %s160
        %p157 = scmp.ge.s32.totalorder %s156, 1
        %s161 = sphi %s128, %s128
        %s162 = sphi %s129, %s129
      $region99: #{model_forward.3} parent=95 // loop_header_branch
        %159 = sbr.rel (%p157) target = $region103
      $region100: #{model_forward.3} parent=95 // loop_body
        %v163 = vld [vmem:[%s161] sm:$0xff]
        %164 = vst [vmem:[%s162] sm:$0xff] %v163
        %v165 = vld [vmem:[%s161 + $0x8] sm:$0xff]
        %166 = vst [vmem:[%s162 + $0x8] sm:$0xff] %v165
      $region101: #{model_forward.3} parent=95 // loop_footer
        %s160 = sadd.s32 1, %s156
      $region102: #{model_forward.3} parent=95 // loop_footer_branch
        %155 = sbr.rel target = $region98
      $region103: #{model_forward.3} parent=95 // loop_exit
        _
    $region96: #{model_forward.3} parent=80 // pred_fallthru
      _
    %p167 = pneg %p151
    // Predicated region
    $region104: #{model_forward.3} parent=80 // pred_check
      _
    $region105: #{model_forward.3} parent=80 // pred_check_branch
      %169 = sbr.rel (%p151) target = $region107
    $region106: #{model_forward.3} parent=80 // pred_region
      %s170 = sand.u32 16, 7
    $region107: #{model_forward.3} parent=80 // pred_fallthru
      _
  $region81: #{model_forward.3} parent=0 // pred_fallthru
    _
  // Predicated region
  $region82: #{model_forward.3} parent=0 // pred_check
    %p136 = pneg %p132
  $region83: #{model_forward.3} parent=0 // pred_check_branch
    %138 = sbr.rel (%p136) target = $region85
  $region84: #{model_forward.3} parent=0 // pred_region
    %s139 = sshllo.u32 0, 16
    loop: start=0, step=1, limit=1
    $region86: #{model_forward.3} parent=84 // loop_pre_header
      _
    $region87: #{model_forward.3} parent=84 // loop_header
      %s141 = sphi 0, %s145
      %p142 = scmp.ge.s32.totalorder %s141, 1
      %s146 = sphi %s128, %s128
      %s147 = sphi %s129, %s129
    $region88: #{model_forward.3} parent=84 // loop_header_branch
      %144 = sbr.rel (%p142) target = $region92
    $region89: #{model_forward.3} parent=84 // loop_body
      %v148 = vld [vmem:[%s146] sm:%s139]
      %149 = vst [vmem:[%s147] sm:%s139] %v148
    $region90: #{model_forward.3} parent=84 // loop_footer
      %s145 = sadd.s32 1, %s141
    $region91: #{model_forward.3} parent=84 // loop_footer_branch
      %140 = sbr.rel target = $region87
    $region92: #{model_forward.3} parent=84 // loop_exit
      _
  $region85: #{model_forward.3} parent=0 // pred_fallthru
    _
  // Predicated region
  $region108: #{model_forward.3} parent=0 // pred_check
    _
  $region109: #{model_forward.3} parent=0 // pred_check_branch
    %173 = sbr.rel (0) target = $region111
  $region110: #{model_forward.3} parent=0 // pred_region
    %174 = vsyncadd %s130, 256
  $region111: #{model_forward.3} parent=0 // pred_fallthru
    _
  %s175 = sld [smem:[#allocation11 + $0x3]]
  %s176 = smul.u32 %s175, 2
  %s177 = smul.addr %s176, 8
  %s178 = scalar_lea.vmem %s1, %s177
  %s179 = scalar_lea.vmem [#allocation2], 48
  %s180 = scalar_lea.sflag [#allocation8], 3
  %p182 = scmp.lt.u32.totalorder 16, 8
  %p183 = pneg %p182
  // Predicated region
  $region112: #{model_forward.3} parent=0 // pred_check
    _
  $region113: #{model_forward.3} parent=0 // pred_check_branch
    %185 = sbr.rel (%p182) target = $region115
  $region114: #{model_forward.3} parent=0 // pred_region
    %s200 = sand.u32 16, 7
    %p201 = scmp.eq.s32.totalorder %s200, 0
    // Predicated region
    $region127: #{model_forward.3} parent=114 // pred_check
      %p202 = pneg %p201
    $region128: #{model_forward.3} parent=114 // pred_check_branch
      %204 = sbr.rel (%p202) target = $region130
    $region129: #{model_forward.3} parent=114 // pred_region
      loop: start=0, step=1, limit=1
      $region131: #{model_forward.3} parent=129 // loop_pre_header
        _
      $region132: #{model_forward.3} parent=129 // loop_header
        %s206 = sphi 0, %s210
        %p207 = scmp.ge.s32.totalorder %s206, 1
        %s211 = sphi %s178, %s178
        %s212 = sphi %s179, %s179
      $region133: #{model_forward.3} parent=129 // loop_header_branch
        %209 = sbr.rel (%p207) target = $region137
      $region134: #{model_forward.3} parent=129 // loop_body
        %v213 = vld [vmem:[%s211] sm:$0xff]
        %214 = vst [vmem:[%s212] sm:$0xff] %v213
        %v215 = vld [vmem:[%s211 + $0x8] sm:$0xff]
        %216 = vst [vmem:[%s212 + $0x8] sm:$0xff] %v215
      $region135: #{model_forward.3} parent=129 // loop_footer
        %s210 = sadd.s32 1, %s206
      $region136: #{model_forward.3} parent=129 // loop_footer_branch
        %205 = sbr.rel target = $region132
      $region137: #{model_forward.3} parent=129 // loop_exit
        _
    $region130: #{model_forward.3} parent=114 // pred_fallthru
      _
    %p217 = pneg %p201
    // Predicated region
    $region138: #{model_forward.3} parent=114 // pred_check
      _
    $region139: #{model_forward.3} parent=114 // pred_check_branch
      %219 = sbr.rel (%p201) target = $region141
    $region140: #{model_forward.3} parent=114 // pred_region
      %s220 = sand.u32 16, 7
    $region141: #{model_forward.3} parent=114 // pred_fallthru
      _
  $region115: #{model_forward.3} parent=0 // pred_fallthru
    _
  // Predicated region
  $region116: #{model_forward.3} parent=0 // pred_check
    %p186 = pneg %p182
  $region117: #{model_forward.3} parent=0 // pred_check_branch
    %188 = sbr.rel (%p186) target = $region119
  $region118: #{model_forward.3} parent=0 // pred_region
    %s189 = sshllo.u32 0, 16
    loop: start=0, step=1, limit=1
    $region120: #{model_forward.3} parent=118 // loop_pre_header
      _
    $region121: #{model_forward.3} parent=118 // loop_header
      %s191 = sphi 0, %s195
      %p192 = scmp.ge.s32.totalorder %s191, 1
      %s196 = sphi %s178, %s178
      %s197 = sphi %s179, %s179
    $region122: #{model_forward.3} parent=118 // loop_header_branch
      %194 = sbr.rel (%p192) target = $region126
    $region123: #{model_forward.3} parent=118 // loop_body
      %v198 = vld [vmem:[%s196] sm:%s189]
      %199 = vst [vmem:[%s197] sm:%s189] %v198
    $region124: #{model_forward.3} parent=118 // loop_footer
      %s195 = sadd.s32 1, %s191
    $region125: #{model_forward.3} parent=118 // loop_footer_branch
      %190 = sbr.rel target = $region121
    $region126: #{model_forward.3} parent=118 // loop_exit
      _
  $region119: #{model_forward.3} parent=0 // pred_fallthru
    _
  // Predicated region
  $region142: #{model_forward.3} parent=0 // pred_check
    _
  $region143: #{model_forward.3} parent=0 // pred_check_branch
    %223 = sbr.rel (0) target = $region145
  $region144: #{model_forward.3} parent=0 // pred_region
    %224 = vsyncadd %s180, 256
  $region145: #{model_forward.3} parent=0 // pred_fallthru
    _
  %s225 = sld [smem:[#allocation11 + $0x4]]
  %s226 = smul.u32 %s225, 2
  %s227 = smul.addr %s226, 8
  %s228 = scalar_lea.vmem %s1, %s227
  %s229 = scalar_lea.vmem [#allocation2], 64
  %s230 = scalar_lea.sflag [#allocation8], 4
  %p232 = scmp.lt.u32.totalorder 16, 8
  %p233 = pneg %p232
  // Predicated region
  $region146: #{model_forward.3} parent=0 // pred_check
    _
  $region147: #{model_forward.3} parent=0 // pred_check_branch
    %235 = sbr.rel (%p232) target = $region149
  $region148: #{model_forward.3} parent=0 // pred_region
    %s250 = sand.u32 16, 7
    %p251 = scmp.eq.s32.totalorder %s250, 0
    // Predicated region
    $region161: #{model_forward.3} parent=148 // pred_check
      %p252 = pneg %p251
    $region162: #{model_forward.3} parent=148 // pred_check_branch
      %254 = sbr.rel (%p252) target = $region164
    $region163: #{model_forward.3} parent=148 // pred_region
      loop: start=0, step=1, limit=1
      $region165: #{model_forward.3} parent=163 // loop_pre_header
        _
      $region166: #{model_forward.3} parent=163 // loop_header
        %s256 = sphi 0, %s260
        %p257 = scmp.ge.s32.totalorder %s256, 1
        %s261 = sphi %s228, %s228
        %s262 = sphi %s229, %s229
      $region167: #{model_forward.3} parent=163 // loop_header_branch
        %259 = sbr.rel (%p257) target = $region171
      $region168: #{model_forward.3} parent=163 // loop_body
        %v263 = vld [vmem:[%s261] sm:$0xff]
        %264 = vst [vmem:[%s262] sm:$0xff] %v263
        %v265 = vld [vmem:[%s261 + $0x8] sm:$0xff]
        %266 = vst [vmem:[%s262 + $0x8] sm:$0xff] %v265
      $region169: #{model_forward.3} parent=163 // loop_footer
        %s260 = sadd.s32 1, %s256
      $region170: #{model_forward.3} parent=163 // loop_footer_branch
        %255 = sbr.rel target = $region166
      $region171: #{model_forward.3} parent=163 // loop_exit
        _
    $region164: #{model_forward.3} parent=148 // pred_fallthru
      _
    %p267 = pneg %p251
    // Predicated region
    $region172: #{model_forward.3} parent=148 // pred_check
      _
    $region173: #{model_forward.3} parent=148 // pred_check_branch
      %269 = sbr.rel (%p251) target = $region175
    $region174: #{model_forward.3} parent=148 // pred_region
      %s270 = sand.u32 16, 7
    $region175: #{model_forward.3} parent=148 // pred_fallthru
      _
  $region149: #{model_forward.3} parent=0 // pred_fallthru
    _
  // Predicated region
  $region150: #{model_forward.3} parent=0 // pred_check
    %p236 = pneg %p232
  $region151: #{model_forward.3} parent=0 // pred_check_branch
    %238 = sbr.rel (%p236) target = $region153
  $region152: #{model_forward.3} parent=0 // pred_region
    %s239 = sshllo.u32 0, 16
    loop: start=0, step=1, limit=1
    $region154: #{model_forward.3} parent=152 // loop_pre_header
      _
    $region155: #{model_forward.3} parent=152 // loop_header
      %s241 = sphi 0, %s245
      %p242 = scmp.ge.s32.totalorder %s241, 1
      %s246 = sphi %s228, %s228
      %s247 = sphi %s229, %s229
    $region156: #{model_forward.3} parent=152 // loop_header_branch
      %244 = sbr.rel (%p242) target = $region160
    $region157: #{model_forward.3} parent=152 // loop_body
      %v248 = vld [vmem:[%s246] sm:%s239]
      %249 = vst [vmem:[%s247] sm:%s239] %v248
    $region158: #{model_forward.3} parent=152 // loop_footer
      %s245 = sadd.s32 1, %s241
    $region159: #{model_forward.3} parent=152 // loop_footer_branch
      %240 = sbr.rel target = $region155
    $region160: #{model_forward.3} parent=152 // loop_exit
      _
  $region153: #{model_forward.3} parent=0 // pred_fallthru
    _
  // Predicated region
  $region176: #{model_forward.3} parent=0 // pred_check
    _
  $region177: #{model_forward.3} parent=0 // pred_check_branch
    %273 = sbr.rel (0) target = $region179
  $region178: #{model_forward.3} parent=0 // pred_region
    %274 = vsyncadd %s230, 256
  $region179: #{model_forward.3} parent=0 // pred_fallthru
    _
  %s275 = sld [smem:[#allocation11 + $0x5]]
  %s276 = smul.u32 %s275, 2
  %s277 = smul.addr %s276, 8
  %s278 = scalar_lea.vmem %s1, %s277
  %s279 = scalar_lea.vmem [#allocation2], 80
  %s280 = scalar_lea.sflag [#allocation8], 5
  %p282 = scmp.lt.u32.totalorder 16, 8
  %p283 = pneg %p282
  // Predicated region
  $region180: #{model_forward.3} parent=0 // pred_check
    _
  $region181: #{model_forward.3} parent=0 // pred_check_branch
    %285 = sbr.rel (%p282) target = $region183
  $region182: #{model_forward.3} parent=0 // pred_region
    %s300 = sand.u32 16, 7
    %p301 = scmp.eq.s32.totalorder %s300, 0
    // Predicated region
    $region195: #{model_forward.3} parent=182 // pred_check
      %p302 = pneg %p301
    $region196: #{model_forward.3} parent=182 // pred_check_branch
      %304 = sbr.rel (%p302) target = $region198
    $region197: #{model_forward.3} parent=182 // pred_region
      loop: start=0, step=1, limit=1
      $region199: #{model_forward.3} parent=197 // loop_pre_header
        _
      $region200: #{model_forward.3} parent=197 // loop_header
        %s306 = sphi 0, %s310
        %p307 = scmp.ge.s32.totalorder %s306, 1
        %s311 = sphi %s278, %s278
        %s312 = sphi %s279, %s279
      $region201: #{model_forward.3} parent=197 // loop_header_branch
        %309 = sbr.rel (%p307) target = $region205
      $region202: #{model_forward.3} parent=197 // loop_body
        %v313 = vld [vmem:[%s311] sm:$0xff]
        %314 = vst [vmem:[%s312] sm:$0xff] %v313
        %v315 = vld [vmem:[%s311 + $0x8] sm:$0xff]
        %316 = vst [vmem:[%s312 + $0x8] sm:$0xff] %v315
      $region203: #{model_forward.3} parent=197 // loop_footer
        %s310 = sadd.s32 1, %s306
      $region204: #{model_forward.3} parent=197 // loop_footer_branch
        %305 = sbr.rel target = $region200
      $region205: #{model_forward.3} parent=197 // loop_exit
        _
    $region198: #{model_forward.3} parent=182 // pred_fallthru
      _
    %p317 = pneg %p301
    // Predicated region
    $region206: #{model_forward.3} parent=182 // pred_check
      _
    $region207: #{model_forward.3} parent=182 // pred_check_branch
      %319 = sbr.rel (%p301) target = $region209
    $region208: #{model_forward.3} parent=182 // pred_region
      %s320 = sand.u32 16, 7
    $region209: #{model_forward.3} parent=182 // pred_fallthru
      _
  $region183: #{model_forward.3} parent=0 // pred_fallthru
    _
  // Predicated region
  $region184: #{model_forward.3} parent=0 // pred_check
    %p286 = pneg %p282
  $region185: #{model_forward.3} parent=0 // pred_check_branch
    %288 = sbr.rel (%p286) target = $region187
  $region186: #{model_forward.3} parent=0 // pred_region
    %s289 = sshllo.u32 0, 16
    loop: start=0, step=1, limit=1
    $region188: #{model_forward.3} parent=186 // loop_pre_header
      _
    $region189: #{model_forward.3} parent=186 // loop_header
      %s291 = sphi 0, %s295
      %p292 = scmp.ge.s32.totalorder %s291, 1
      %s296 = sphi %s278, %s278
      %s297 = sphi %s279, %s279
    $region190: #{model_forward.3} parent=186 // loop_header_branch
      %294 = sbr.rel (%p292) target = $region194
    $region191: #{model_forward.3} parent=186 // loop_body
      %v298 = vld [vmem:[%s296] sm:%s289]
      %299 = vst [vmem:[%s297] sm:%s289] %v298
    $region192: #{model_forward.3} parent=186 // loop_footer
      %s295 = sadd.s32 1, %s291
    $region193: #{model_forward.3} parent=186 // loop_footer_branch
      %290 = sbr.rel target = $region189
    $region194: #{model_forward.3} parent=186 // loop_exit
      _
  $region187: #{model_forward.3} parent=0 // pred_fallthru
    _
  // Predicated region
  $region210: #{model_forward.3} parent=0 // pred_check
    _
  $region211: #{model_forward.3} parent=0 // pred_check_branch
    %323 = sbr.rel (0) target = $region213
  $region212: #{model_forward.3} parent=0 // pred_region
    %324 = vsyncadd %s280, 256
  $region213: #{model_forward.3} parent=0 // pred_fallthru
    _
  %p326 = scmp.lt.u32.totalorder 128, 8
  %p327 = pneg %p326
  // Predicated region
  $region214: #{model_forward.3} parent=0 // pred_check
    _
  $region215: #{model_forward.3} parent=0 // pred_check_branch
    %329 = sbr.rel (%p326) target = $region217
  $region216: #{model_forward.3} parent=0 // pred_region
    %s344 = sand.u32 128, 7
    %p345 = scmp.eq.s32.totalorder %s344, 0
    // Predicated region
    $region229: #{model_forward.3} parent=216 // pred_check
      %p346 = pneg %p345
    $region230: #{model_forward.3} parent=216 // pred_check_branch
      %348 = sbr.rel (%p346) target = $region232
    $region231: #{model_forward.3} parent=216 // pred_region
      loop: start=0, step=1, limit=1
      $region233: #{model_forward.3} parent=231 // loop_pre_header
        _
      $region234: #{model_forward.3} parent=231 // loop_header
        %s350 = sphi 0, %s354
        %p351 = scmp.ge.s32.totalorder %s350, 1
        %s355 = sphi %s2, %s2
        %s356 = sphi [#allocation3], [#allocation3]
      $region235: #{model_forward.3} parent=231 // loop_header_branch
        %353 = sbr.rel (%p351) target = $region239
      $region236: #{model_forward.3} parent=231 // loop_body
        %v357 = vld [vmem:[%s355] sm:$0xff]
        %358 = vst [vmem:[%s356] sm:$0xff] %v357
        %v359 = vld [vmem:[%s355 + $0x8] sm:$0xff]
        %360 = vst [vmem:[%s356 + $0x8] sm:$0xff] %v359
        %v361 = vld [vmem:[%s355 + $0x10] sm:$0xff]
        %362 = vst [vmem:[%s356 + $0x10] sm:$0xff] %v361
        %v363 = vld [vmem:[%s355 + $0x18] sm:$0xff]
        %364 = vst [vmem:[%s356 + $0x18] sm:$0xff] %v363
        %v365 = vld [vmem:[%s355 + $0x20] sm:$0xff]
        %366 = vst [vmem:[%s356 + $0x20] sm:$0xff] %v365
        %v367 = vld [vmem:[%s355 + $0x28] sm:$0xff]
        %368 = vst [vmem:[%s356 + $0x28] sm:$0xff] %v367
        %v369 = vld [vmem:[%s355 + $0x30] sm:$0xff]
        %370 = vst [vmem:[%s356 + $0x30] sm:$0xff] %v369
        %v371 = vld [vmem:[%s355 + $0x38] sm:$0xff]
        %372 = vst [vmem:[%s356 + $0x38] sm:$0xff] %v371
        %v373 = vld [vmem:[%s355 + $0x40] sm:$0xff]
        %374 = vst [vmem:[%s356 + $0x40] sm:$0xff] %v373
        %v375 = vld [vmem:[%s355 + $0x48] sm:$0xff]
        %376 = vst [vmem:[%s356 + $0x48] sm:$0xff] %v375
        %v377 = vld [vmem:[%s355 + $0x50] sm:$0xff]
        %378 = vst [vmem:[%s356 + $0x50] sm:$0xff] %v377
        %v379 = vld [vmem:[%s355 + $0x58] sm:$0xff]
        %380 = vst [vmem:[%s356 + $0x58] sm:$0xff] %v379
        %v381 = vld [vmem:[%s355 + $0x60] sm:$0xff]
        %382 = vst [vmem:[%s356 + $0x60] sm:$0xff] %v381
        %v383 = vld [vmem:[%s355 + $0x68] sm:$0xff]
        %384 = vst [vmem:[%s356 + $0x68] sm:$0xff] %v383
        %v385 = vld [vmem:[%s355 + $0x70] sm:$0xff]
        %386 = vst [vmem:[%s356 + $0x70] sm:$0xff] %v385
        %v387 = vld [vmem:[%s355 + $0x78] sm:$0xff]
        %388 = vst [vmem:[%s356 + $0x78] sm:$0xff] %v387
      $region237: #{model_forward.3} parent=231 // loop_footer
        %s354 = sadd.s32 1, %s350
      $region238: #{model_forward.3} parent=231 // loop_footer_branch
        %349 = sbr.rel target = $region234
      $region239: #{model_forward.3} parent=231 // loop_exit
        _
    $region232: #{model_forward.3} parent=216 // pred_fallthru
      _
    %p389 = pneg %p345
    // Predicated region
    $region240: #{model_forward.3} parent=216 // pred_check
      _
    $region241: #{model_forward.3} parent=216 // pred_check_branch
      %391 = sbr.rel (%p345) target = $region243
    $region242: #{model_forward.3} parent=216 // pred_region
      %s392 = sand.u32 128, 7
    $region243: #{model_forward.3} parent=216 // pred_fallthru
      _
  $region217: #{model_forward.3} parent=0 // pred_fallthru
    _
  // Predicated region
  $region218: #{model_forward.3} parent=0 // pred_check
    %p330 = pneg %p326
  $region219: #{model_forward.3} parent=0 // pred_check_branch
    %332 = sbr.rel (%p330) target = $region221
  $region220: #{model_forward.3} parent=0 // pred_region
    %s333 = sshllo.u32 0, 128
    loop: start=0, step=1, limit=1
    $region222: #{model_forward.3} parent=220 // loop_pre_header
      _
    $region223: #{model_forward.3} parent=220 // loop_header
      %s335 = sphi 0, %s339
      %p336 = scmp.ge.s32.totalorder %s335, 1
      %s340 = sphi %s2, %s2
      %s341 = sphi [#allocation3], [#allocation3]
    $region224: #{model_forward.3} parent=220 // loop_header_branch
      %338 = sbr.rel (%p336) target = $region228
    $region225: #{model_forward.3} parent=220 // loop_body
      %v342 = vld [vmem:[%s340] sm:%s333]
      %343 = vst [vmem:[%s341] sm:%s333] %v342
    $region226: #{model_forward.3} parent=220 // loop_footer
      %s339 = sadd.s32 1, %s335
    $region227: #{model_forward.3} parent=220 // loop_footer_branch
      %334 = sbr.rel target = $region223
    $region228: #{model_forward.3} parent=220 // loop_exit
      _
  $region221: #{model_forward.3} parent=0 // pred_fallthru
    _
  // Predicated region
  $region244: #{model_forward.3} parent=0 // pred_check
    _
  $region245: #{model_forward.3} parent=0 // pred_check_branch
    %395 = sbr.rel (0) target = $region247
  $region246: #{model_forward.3} parent=0 // pred_region
    %396 = vsyncadd [#allocation9], 2048
  $region247: #{model_forward.3} parent=0 // pred_fallthru
    _
  %s397 = scalar_lea.sflag [#allocation9], 1
  %p399 = scmp.lt.u32.totalorder 64, 8
  %p400 = pneg %p399
  // Predicated region
  $region248: #{model_forward.3} parent=0 // pred_check
    _
  $region249: #{model_forward.3} parent=0 // pred_check_branch
    %402 = sbr.rel (%p399) target = $region251
  $region250: #{model_forward.3} parent=0 // pred_region
    %s417 = sand.u32 64, 7
    %p418 = scmp.eq.s32.totalorder %s417, 0
    // Predicated region
    $region263: #{model_forward.3} parent=250 // pred_check
      %p419 = pneg %p418
    $region264: #{model_forward.3} parent=250 // pred_check_branch
      %421 = sbr.rel (%p419) target = $region266
    $region265: #{model_forward.3} parent=250 // pred_region
      loop: start=0, step=1, limit=1
      $region267: #{model_forward.3} parent=265 // loop_pre_header
        _
      $region268: #{model_forward.3} parent=265 // loop_header
        %s423 = sphi 0, %s427
        %p424 = scmp.ge.s32.totalorder %s423, 1
        %s428 = sphi %s3, %s3
        %s429 = sphi [#allocation4], [#allocation4]
      $region269: #{model_forward.3} parent=265 // loop_header_branch
        %426 = sbr.rel (%p424) target = $region273
      $region270: #{model_forward.3} parent=265 // loop_body
        %v430 = vld [vmem:[%s428] sm:$0xff]
        %431 = vst [vmem:[%s429] sm:$0xff] %v430
        %v432 = vld [vmem:[%s428 + $0x8] sm:$0xff]
        %433 = vst [vmem:[%s429 + $0x8] sm:$0xff] %v432
        %v434 = vld [vmem:[%s428 + $0x10] sm:$0xff]
        %435 = vst [vmem:[%s429 + $0x10] sm:$0xff] %v434
        %v436 = vld [vmem:[%s428 + $0x18] sm:$0xff]
        %437 = vst [vmem:[%s429 + $0x18] sm:$0xff] %v436
        %v438 = vld [vmem:[%s428 + $0x20] sm:$0xff]
        %439 = vst [vmem:[%s429 + $0x20] sm:$0xff] %v438
        %v440 = vld [vmem:[%s428 + $0x28] sm:$0xff]
        %441 = vst [vmem:[%s429 + $0x28] sm:$0xff] %v440
        %v442 = vld [vmem:[%s428 + $0x30] sm:$0xff]
        %443 = vst [vmem:[%s429 + $0x30] sm:$0xff] %v442
        %v444 = vld [vmem:[%s428 + $0x38] sm:$0xff]
        %445 = vst [vmem:[%s429 + $0x38] sm:$0xff] %v444
      $region271: #{model_forward.3} parent=265 // loop_footer
        %s427 = sadd.s32 1, %s423
      $region272: #{model_forward.3} parent=265 // loop_footer_branch
        %422 = sbr.rel target = $region268
      $region273: #{model_forward.3} parent=265 // loop_exit
        _
    $region266: #{model_forward.3} parent=250 // pred_fallthru
      _
    %p446 = pneg %p418
    // Predicated region
    $region274: #{model_forward.3} parent=250 // pred_check
      _
    $region275: #{model_forward.3} parent=250 // pred_check_branch
      %448 = sbr.rel (%p418) target = $region277
    $region276: #{model_forward.3} parent=250 // pred_region
      %s449 = sand.u32 64, 7
    $region277: #{model_forward.3} parent=250 // pred_fallthru
      _
  $region251: #{model_forward.3} parent=0 // pred_fallthru
    _
  // Predicated region
  $region252: #{model_forward.3} parent=0 // pred_check
    %p403 = pneg %p399
  $region253: #{model_forward.3} parent=0 // pred_check_branch
    %405 = sbr.rel (%p403) target = $region255
  $region254: #{model_forward.3} parent=0 // pred_region
    %s406 = sshllo.u32 0, 64
    loop: start=0, step=1, limit=1
    $region256: #{model_forward.3} parent=254 // loop_pre_header
      _
    $region257: #{model_forward.3} parent=254 // loop_header
      %s408 = sphi 0, %s412
      %p409 = scmp.ge.s32.totalorder %s408, 1
      %s413 = sphi %s3, %s3
      %s414 = sphi [#allocation4], [#allocation4]
    $region258: #{model_forward.3} parent=254 // loop_header_branch
      %411 = sbr.rel (%p409) target = $region262
    $region259: #{model_forward.3} parent=254 // loop_body
      %v415 = vld [vmem:[%s413] sm:%s406]
      %416 = vst [vmem:[%s414] sm:%s406] %v415
    $region260: #{model_forward.3} parent=254 // loop_footer
      %s412 = sadd.s32 1, %s408
    $region261: #{model_forward.3} parent=254 // loop_footer_branch
      %407 = sbr.rel target = $region257
    $region262: #{model_forward.3} parent=254 // loop_exit
      _
  $region255: #{model_forward.3} parent=0 // pred_fallthru
    _
  // Predicated region
  $region278: #{model_forward.3} parent=0 // pred_check
    _
  $region279: #{model_forward.3} parent=0 // pred_check_branch
    %452 = sbr.rel (0) target = $region281
  $region280: #{model_forward.3} parent=0 // pred_region
    %453 = vsyncadd %s397, 1024
  $region281: #{model_forward.3} parent=0 // pred_fallthru
    _
  %s454 = scalar_lea.sflag [#allocation9], 2
  %p456 = scmp.lt.u32.totalorder 64, 8
  %p457 = pneg %p456
  // Predicated region
  $region282: #{model_forward.3} parent=0 // pred_check
    _
  $region283: #{model_forward.3} parent=0 // pred_check_branch
    %459 = sbr.rel (%p456) target = $region285
  $region284: #{model_forward.3} parent=0 // pred_region
    %s474 = sand.u32 64, 7
    %p475 = scmp.eq.s32.totalorder %s474, 0
    // Predicated region
    $region297: #{model_forward.3} parent=284 // pred_check
      %p476 = pneg %p475
    $region298: #{model_forward.3} parent=284 // pred_check_branch
      %478 = sbr.rel (%p476) target = $region300
    $region299: #{model_forward.3} parent=284 // pred_region
      loop: start=0, step=1, limit=1
      $region301: #{model_forward.3} parent=299 // loop_pre_header
        _
      $region302: #{model_forward.3} parent=299 // loop_header
        %s480 = sphi 0, %s484
        %p481 = scmp.ge.s32.totalorder %s480, 1
        %s485 = sphi %s4, %s4
        %s486 = sphi [#allocation5], [#allocation5]
      $region303: #{model_forward.3} parent=299 // loop_header_branch
        %483 = sbr.rel (%p481) target = $region307
      $region304: #{model_forward.3} parent=299 // loop_body
        %v487 = vld [vmem:[%s485] sm:$0xff]
        %488 = vst [vmem:[%s486] sm:$0xff] %v487
        %v489 = vld [vmem:[%s485 + $0x8] sm:$0xff]
        %490 = vst [vmem:[%s486 + $0x8] sm:$0xff] %v489
        %v491 = vld [vmem:[%s485 + $0x10] sm:$0xff]
        %492 = vst [vmem:[%s486 + $0x10] sm:$0xff] %v491
        %v493 = vld [vmem:[%s485 + $0x18] sm:$0xff]
        %494 = vst [vmem:[%s486 + $0x18] sm:$0xff] %v493
        %v495 = vld [vmem:[%s485 + $0x20] sm:$0xff]
        %496 = vst [vmem:[%s486 + $0x20] sm:$0xff] %v495
        %v497 = vld [vmem:[%s485 + $0x28] sm:$0xff]
        %498 = vst [vmem:[%s486 + $0x28] sm:$0xff] %v497
        %v499 = vld [vmem:[%s485 + $0x30] sm:$0xff]
        %500 = vst [vmem:[%s486 + $0x30] sm:$0xff] %v499
        %v501 = vld [vmem:[%s485 + $0x38] sm:$0xff]
        %502 = vst [vmem:[%s486 + $0x38] sm:$0xff] %v501
      $region305: #{model_forward.3} parent=299 // loop_footer
        %s484 = sadd.s32 1, %s480
      $region306: #{model_forward.3} parent=299 // loop_footer_branch
        %479 = sbr.rel target = $region302
      $region307: #{model_forward.3} parent=299 // loop_exit
        _
    $region300: #{model_forward.3} parent=284 // pred_fallthru
      _
    %p503 = pneg %p475
    // Predicated region
    $region308: #{model_forward.3} parent=284 // pred_check
      _
    $region309: #{model_forward.3} parent=284 // pred_check_branch
      %505 = sbr.rel (%p475) target = $region311
    $region310: #{model_forward.3} parent=284 // pred_region
      %s506 = sand.u32 64, 7
    $region311: #{model_forward.3} parent=284 // pred_fallthru
      _
  $region285: #{model_forward.3} parent=0 // pred_fallthru
    _
  // Predicated region
  $region286: #{model_forward.3} parent=0 // pred_check
    %p460 = pneg %p456
  $region287: #{model_forward.3} parent=0 // pred_check_branch
    %462 = sbr.rel (%p460) target = $region289
  $region288: #{model_forward.3} parent=0 // pred_region
    %s463 = sshllo.u32 0, 64
    loop: start=0, step=1, limit=1
    $region290: #{model_forward.3} parent=288 // loop_pre_header
      _
    $region291: #{model_forward.3} parent=288 // loop_header
      %s465 = sphi 0, %s469
      %p466 = scmp.ge.s32.totalorder %s465, 1
      %s470 = sphi %s4, %s4
      %s471 = sphi [#allocation5], [#allocation5]
    $region292: #{model_forward.3} parent=288 // loop_header_branch
      %468 = sbr.rel (%p466) target = $region296
    $region293: #{model_forward.3} parent=288 // loop_body
      %v472 = vld [vmem:[%s470] sm:%s463]
      %473 = vst [vmem:[%s471] sm:%s463] %v472
    $region294: #{model_forward.3} parent=288 // loop_footer
      %s469 = sadd.s32 1, %s465
    $region295: #{model_forward.3} parent=288 // loop_footer_branch
      %464 = sbr.rel target = $region291
    $region296: #{model_forward.3} parent=288 // loop_exit
      _
  $region289: #{model_forward.3} parent=0 // pred_fallthru
    _
  // Predicated region
  $region312: #{model_forward.3} parent=0 // pred_check
    _
  $region313: #{model_forward.3} parent=0 // pred_check_branch
    %509 = sbr.rel (0) target = $region315
  $region314: #{model_forward.3} parent=0 // pred_region
    %510 = vsyncadd %s454, 1024
  $region315: #{model_forward.3} parent=0 // pred_fallthru
    _
  %s511 = scalar_lea.sflag [#allocation9], 3
  %p513 = scmp.lt.u32.totalorder 64, 8
  %p514 = pneg %p513
  // Predicated region
  $region316: #{model_forward.3} parent=0 // pred_check
    _
  $region317: #{model_forward.3} parent=0 // pred_check_branch
    %516 = sbr.rel (%p513) target = $region319
  $region318: #{model_forward.3} parent=0 // pred_region
    %s531 = sand.u32 64, 7
    %p532 = scmp.eq.s32.totalorder %s531, 0
    // Predicated region
    $region331: #{model_forward.3} parent=318 // pred_check
      %p533 = pneg %p532
    $region332: #{model_forward.3} parent=318 // pred_check_branch
      %535 = sbr.rel (%p533) target = $region334
    $region333: #{model_forward.3} parent=318 // pred_region
      loop: start=0, step=1, limit=1
      $region335: #{model_forward.3} parent=333 // loop_pre_header
        _
      $region336: #{model_forward.3} parent=333 // loop_header
        %s537 = sphi 0, %s541
        %p538 = scmp.ge.s32.totalorder %s537, 1
        %s542 = sphi %s5, %s5
        %s543 = sphi [#allocation6], [#allocation6]
      $region337: #{model_forward.3} parent=333 // loop_header_branch
        %540 = sbr.rel (%p538) target = $region341
      $region338: #{model_forward.3} parent=333 // loop_body
        %v544 = vld [vmem:[%s542] sm:$0xff]
        %545 = vst [vmem:[%s543] sm:$0xff] %v544
        %v546 = vld [vmem:[%s542 + $0x8] sm:$0xff]
        %547 = vst [vmem:[%s543 + $0x8] sm:$0xff] %v546
        %v548 = vld [vmem:[%s542 + $0x10] sm:$0xff]
        %549 = vst [vmem:[%s543 + $0x10] sm:$0xff] %v548
        %v550 = vld [vmem:[%s542 + $0x18] sm:$0xff]
        %551 = vst [vmem:[%s543 + $0x18] sm:$0xff] %v550
        %v552 = vld [vmem:[%s542 + $0x20] sm:$0xff]
        %553 = vst [vmem:[%s543 + $0x20] sm:$0xff] %v552
        %v554 = vld [vmem:[%s542 + $0x28] sm:$0xff]
        %555 = vst [vmem:[%s543 + $0x28] sm:$0xff] %v554
        %v556 = vld [vmem:[%s542 + $0x30] sm:$0xff]
        %557 = vst [vmem:[%s543 + $0x30] sm:$0xff] %v556
        %v558 = vld [vmem:[%s542 + $0x38] sm:$0xff]
        %559 = vst [vmem:[%s543 + $0x38] sm:$0xff] %v558
      $region339: #{model_forward.3} parent=333 // loop_footer
        %s541 = sadd.s32 1, %s537
      $region340: #{model_forward.3} parent=333 // loop_footer_branch
        %536 = sbr.rel target = $region336
      $region341: #{model_forward.3} parent=333 // loop_exit
        _
    $region334: #{model_forward.3} parent=318 // pred_fallthru
      _
    %p560 = pneg %p532
    // Predicated region
    $region342: #{model_forward.3} parent=318 // pred_check
      _
    $region343: #{model_forward.3} parent=318 // pred_check_branch
      %562 = sbr.rel (%p532) target = $region345
    $region344: #{model_forward.3} parent=318 // pred_region
      %s563 = sand.u32 64, 7
    $region345: #{model_forward.3} parent=318 // pred_fallthru
      _
  $region319: #{model_forward.3} parent=0 // pred_fallthru
    _
  // Predicated region
  $region320: #{model_forward.3} parent=0 // pred_check
    %p517 = pneg %p513
  $region321: #{model_forward.3} parent=0 // pred_check_branch
    %519 = sbr.rel (%p517) target = $region323
  $region322: #{model_forward.3} parent=0 // pred_region
    %s520 = sshllo.u32 0, 64
    loop: start=0, step=1, limit=1
    $region324: #{model_forward.3} parent=322 // loop_pre_header
      _
    $region325: #{model_forward.3} parent=322 // loop_header
      %s522 = sphi 0, %s526
      %p523 = scmp.ge.s32.totalorder %s522, 1
      %s527 = sphi %s5, %s5
      %s528 = sphi [#allocation6], [#allocation6]
    $region326: #{model_forward.3} parent=322 // loop_header_branch
      %525 = sbr.rel (%p523) target = $region330
    $region327: #{model_forward.3} parent=322 // loop_body
      %v529 = vld [vmem:[%s527] sm:%s520]
      %530 = vst [vmem:[%s528] sm:%s520] %v529
    $region328: #{model_forward.3} parent=322 // loop_footer
      %s526 = sadd.s32 1, %s522
    $region329: #{model_forward.3} parent=322 // loop_footer_branch
      %521 = sbr.rel target = $region325
    $region330: #{model_forward.3} parent=322 // loop_exit
      _
  $region323: #{model_forward.3} parent=0 // pred_fallthru
    _
  // Predicated region
  $region346: #{model_forward.3} parent=0 // pred_check
    _
  $region347: #{model_forward.3} parent=0 // pred_check_branch
    %566 = sbr.rel (0) target = $region349
  $region348: #{model_forward.3} parent=0 // pred_region
    %567 = vsyncadd %s511, 1024
  $region349: #{model_forward.3} parent=0 // pred_fallthru
    _
  %s568 = scalar_lea.sflag [#allocation9], 4
  %p570 = scmp.lt.u32.totalorder 64, 8
  %p571 = pneg %p570
  // Predicated region
  $region350: #{model_forward.3} parent=0 // pred_check
    _
  $region351: #{model_forward.3} parent=0 // pred_check_branch
    %573 = sbr.rel (%p570) target = $region353
  $region352: #{model_forward.3} parent=0 // pred_region
    %s588 = sand.u32 64, 7
    %p589 = scmp.eq.s32.totalorder %s588, 0
    // Predicated region
    $region365: #{model_forward.3} parent=352 // pred_check
      %p590 = pneg %p589
    $region366: #{model_forward.3} parent=352 // pred_check_branch
      %592 = sbr.rel (%p590) target = $region368
    $region367: #{model_forward.3} parent=352 // pred_region
      loop: start=0, step=1, limit=1
      $region369: #{model_forward.3} parent=367 // loop_pre_header
        _
      $region370: #{model_forward.3} parent=367 // loop_header
        %s594 = sphi 0, %s598
        %p595 = scmp.ge.s32.totalorder %s594, 1
        %s599 = sphi %s6, %s6
        %s600 = sphi [#allocation7], [#allocation7]
      $region371: #{model_forward.3} parent=367 // loop_header_branch
        %597 = sbr.rel (%p595) target = $region375
      $region372: #{model_forward.3} parent=367 // loop_body
        %v601 = vld [vmem:[%s599] sm:$0xff]
        %602 = vst [vmem:[%s600] sm:$0xff] %v601
        %v603 = vld [vmem:[%s599 + $0x8] sm:$0xff]
        %604 = vst [vmem:[%s600 + $0x8] sm:$0xff] %v603
        %v605 = vld [vmem:[%s599 + $0x10] sm:$0xff]
        %606 = vst [vmem:[%s600 + $0x10] sm:$0xff] %v605
        %v607 = vld [vmem:[%s599 + $0x18] sm:$0xff]
        %608 = vst [vmem:[%s600 + $0x18] sm:$0xff] %v607
        %v609 = vld [vmem:[%s599 + $0x20] sm:$0xff]
        %610 = vst [vmem:[%s600 + $0x20] sm:$0xff] %v609
        %v611 = vld [vmem:[%s599 + $0x28] sm:$0xff]
        %612 = vst [vmem:[%s600 + $0x28] sm:$0xff] %v611
        %v613 = vld [vmem:[%s599 + $0x30] sm:$0xff]
        %614 = vst [vmem:[%s600 + $0x30] sm:$0xff] %v613
        %v615 = vld [vmem:[%s599 + $0x38] sm:$0xff]
        %616 = vst [vmem:[%s600 + $0x38] sm:$0xff] %v615
      $region373: #{model_forward.3} parent=367 // loop_footer
        %s598 = sadd.s32 1, %s594
      $region374: #{model_forward.3} parent=367 // loop_footer_branch
        %593 = sbr.rel target = $region370
      $region375: #{model_forward.3} parent=367 // loop_exit
        _
    $region368: #{model_forward.3} parent=352 // pred_fallthru
      _
    %p617 = pneg %p589
    // Predicated region
    $region376: #{model_forward.3} parent=352 // pred_check
      _
    $region377: #{model_forward.3} parent=352 // pred_check_branch
      %619 = sbr.rel (%p589) target = $region379
    $region378: #{model_forward.3} parent=352 // pred_region
      %s620 = sand.u32 64, 7
    $region379: #{model_forward.3} parent=352 // pred_fallthru
      _
  $region353: #{model_forward.3} parent=0 // pred_fallthru
    _
  // Predicated region
  $region354: #{model_forward.3} parent=0 // pred_check
    %p574 = pneg %p570
  $region355: #{model_forward.3} parent=0 // pred_check_branch
    %576 = sbr.rel (%p574) target = $region357
  $region356: #{model_forward.3} parent=0 // pred_region
    %s577 = sshllo.u32 0, 64
    loop: start=0, step=1, limit=1
    $region358: #{model_forward.3} parent=356 // loop_pre_header
      _
    $region359: #{model_forward.3} parent=356 // loop_header
      %s579 = sphi 0, %s583
      %p580 = scmp.ge.s32.totalorder %s579, 1
      %s584 = sphi %s6, %s6
      %s585 = sphi [#allocation7], [#allocation7]
    $region360: #{model_forward.3} parent=356 // loop_header_branch
      %582 = sbr.rel (%p580) target = $region364
    $region361: #{model_forward.3} parent=356 // loop_body
      %v586 = vld [vmem:[%s584] sm:%s577]
      %587 = vst [vmem:[%s585] sm:%s577] %v586
    $region362: #{model_forward.3} parent=356 // loop_footer
      %s583 = sadd.s32 1, %s579
    $region363: #{model_forward.3} parent=356 // loop_footer_branch
      %578 = sbr.rel target = $region359
    $region364: #{model_forward.3} parent=356 // loop_exit
      _
  $region357: #{model_forward.3} parent=0 // pred_fallthru
    _
  // Predicated region
  $region380: #{model_forward.3} parent=0 // pred_check
    _
  $region381: #{model_forward.3} parent=0 // pred_check_branch
    %623 = sbr.rel (0) target = $region383
  $region382: #{model_forward.3} parent=0 // pred_region
    %624 = vsyncadd %s568, 1024
  $region383: #{model_forward.3} parent=0 // pred_fallthru
    _
  %v625 = vld [vmem:[%s7] sm:$0x3]
  %v626 = vld [vmem:[%s8] sm:$0x3]
  %s627 = smul.u32 8, 1
  %s628 = smul.u32 %s627, 2
  %s629 = sshll.u32 %s628, 4
  %630 = dma.done [#allocation8], %s629
  %s631 = sshll.u32 %s628, 4
  %632 = dma.done %s80, %s631
  %s633 = sshll.u32 %s628, 4
  %634 = dma.done %s130, %s633
  %s635 = sshll.u32 %s628, 4
  %636 = dma.done %s180, %s635
  %s637 = sshll.u32 %s628, 4
  %638 = dma.done %s230, %s637
  %s639 = sshll.u32 %s628, 4
  %640 = dma.done %s280, %s639
  %v641 = vld [vmem:[#allocation2] sm:$0xff]
  %v642 = vld [vmem:[#allocation2 + $0x8] sm:$0xff]
  %v643 = vld [vmem:[#allocation2 + $0x10] sm:$0xff]
  %v644 = vld [vmem:[#allocation2 + $0x18] sm:$0xff]
  %v645 = vld [vmem:[#allocation2 + $0x20] sm:$0xff]
  %v646 = vld [vmem:[#allocation2 + $0x28] sm:$0xff]
  %v647 = vld [vmem:[#allocation2 + $0x30] sm:$0xff]
  %v648 = vld [vmem:[#allocation2 + $0x38] sm:$0xff]
  %v649 = vld [vmem:[#allocation2 + $0x40] sm:$0xff]
  %v650 = vld [vmem:[#allocation2 + $0x48] sm:$0xff]
  %v651 = vld [vmem:[#allocation2 + $0x50] sm:$0xff]
  %v652 = vld [vmem:[#allocation2 + $0x58] sm:$0xff]
  %s653 = smul.u32 4, 32
  %s654 = smul.u32 %s653, 1
  %s655 = sshll.u32 %s654, 4
  %656 = dma.done [#allocation9], %s655
  %v657 = vpack.c.bf16 %v643, %v641
  %v658 = vpack.c.bf16 %v644, %v642
  %v659 = vpack.c.bf16 %v647, %v645
  %v660 = vpack.c.bf16 %v648, %v646
  %v661 = vpack.c.bf16 %v651, %v649
  %v662 = vpack.c.bf16 %v652, %v650
  %v663 = vld [vmem:[#allocation3] sm:$0xff]
  %v664 = vld [vmem:[#allocation3 + $0x8] sm:$0xff]
  %v665 = vld [vmem:[#allocation3 + $0x10] sm:$0xff]
  %v666 = vld [vmem:[#allocation3 + $0x18] sm:$0xff]
  %v667 = vld [vmem:[#allocation3 + $0x20] sm:$0xff]
  %v668 = vld [vmem:[#allocation3 + $0x28] sm:$0xff]
  %v669 = vld [vmem:[#allocation3 + $0x30] sm:$0xff]
  %v670 = vld [vmem:[#allocation3 + $0x38] sm:$0xff]
  %v671 = vld [vmem:[#allocation3 + $0x40] sm:$0xff]
  %v672 = vld [vmem:[#allocation3 + $0x48] sm:$0xff]
  %v673 = vld [vmem:[#allocation3 + $0x50] sm:$0xff]
  %v674 = vld [vmem:[#allocation3 + $0x58] sm:$0xff]
  %v675 = vld [vmem:[#allocation3 + $0x60] sm:$0xff]
  %v676 = vld [vmem:[#allocation3 + $0x68] sm:$0xff]
  %v677 = vld [vmem:[#allocation3 + $0x70] sm:$0xff]
  %v678 = vld [vmem:[#allocation3 + $0x78] sm:$0xff]
  %679 = vmatprep.subr.bf16.mxu0 0
  %680 = vmatpush1.bf16.msra.mxu0 %v663
  %681 = vmatprep.subr.bf16.mxu0 0
  %682 = vmatpush1.bf16.msra.mxu0 %v664
  %683 = vmatprep.subr.bf16.mxu0 0
  %684 = vmatpush1.bf16.msra.mxu0 %v665
  %685 = vmatprep.subr.bf16.mxu0 0
  %686 = vmatpush1.bf16.msra.mxu0 %v666
  %687 = vmatprep.subr.bf16.mxu0 0
  %688 = vmatpush1.bf16.msra.mxu0 %v667
  %689 = vmatprep.subr.bf16.mxu0 0
  %690 = vmatpush1.bf16.msra.mxu0 %v668
  %691 = vmatprep.subr.bf16.mxu0 0
  %692 = vmatpush1.bf16.msra.mxu0 %v669
  %693 = vmatprep.subr.bf16.mxu0 0
  %694 = vmatpush1.bf16.msra.mxu0 %v670
  %695 = vmatprep.subr.bf16.mxu0 0
  %696 = vmatpush1.bf16.msra.mxu0 %v671
  %697 = vmatprep.subr.bf16.mxu0 0
  %698 = vmatpush1.bf16.msra.mxu0 %v672
  %699 = vmatprep.subr.bf16.mxu0 0
  %700 = vmatpush1.bf16.msra.mxu0 %v673
  %701 = vmatprep.subr.bf16.mxu0 0
  %702 = vmatpush1.bf16.msra.mxu0 %v674
  %703 = vmatprep.subr.bf16.mxu0 0
  %704 = vmatpush1.bf16.msra.mxu0 %v675
  %705 = vmatprep.subr.bf16.mxu0 0
  %706 = vmatpush1.bf16.msra.mxu0 %v676
  %707 = vmatprep.subr.bf16.mxu0 0
  %708 = vmatpush1.bf16.msra.mxu0 %v677
  %709 = vmatprep.subr.bf16.mxu0 0
  %710 = vmatpush1.bf16.msra.mxu0 %v678
  %711 = vmatprep.mubr.bf16.mxu0 %v658
  %712 = vmatmul.mubr.bf16.gmra.mrb[0].mxu0 %v657
  %v713 = vpop.f32.mrb[0].mxu0
  %v714 = vadd.f32 0.0, %v713
  %v715 = vpop.f32.mrb[0].mxu0
  %v716 = vpop.f32.mrb[0].mxu0
  %v717 = vadd.f32 0.0, %v716
  %v718 = vpop.f32.mrb[0].mxu0
  %719 = vmatprep.mubr.bf16.mxu0 %v660
  %720 = vmatmul.mubr.bf16.gmra.mrb[0].mxu0 %v659
  %v721 = vpop.f32.mrb[0].mxu0
  %v722 = vadd.f32 0.0, %v721
  %v723 = vpop.f32.mrb[0].mxu0
  %v724 = vpop.f32.mrb[0].mxu0
  %v725 = vadd.f32 0.0, %v724
  %v726 = vpop.f32.mrb[0].mxu0
  %727 = vmatprep.mubr.bf16.mxu0 %v662
  %728 = vmatmul.mubr.bf16.gmra.mrb[0].mxu0 %v661
  %v729 = vpop.f32.mrb[0].mxu0
  %v730 = vadd.f32 0.0, %v729
  %v731 = vpop.f32.mrb[0].mxu0
  %v732 = vpop.f32.mrb[0].mxu0
  %v733 = vadd.f32 0.0, %v732
  %v734 = vpop.f32.mrb[0].mxu0
  %735 = vdwg.mxu0
  %v736 = vadd.f32 %v714, %v717
  %v737 = vadd.f32 %v736, %v722
  %v738 = vadd.f32 %v737, %v725
  %v739 = vadd.f32 %v738, %v730
  %v740 = vadd.f32 %v739, %v733
  %v741 = vrot.slane %v740, 4
  %v742 = vadd.f32 %v740, %v741
  %v743 = vrot.slane %v742, 2
  %v744 = vadd.f32 %v742, %v743
  %v745 = vrot.slane %v744, 1
  %v746 = vadd.f32 %v744, %v745
  %v747 = vmul.f32 %v746, 0.020833334
  %v748 = vmul.f32 %v714, %v714
  %v749 = vmul.f32 %v717, %v717
  %v750 = vmul.f32 %v722, %v722
  %v751 = vmul.f32 %v725, %v725
  %v752 = vmul.f32 %v730, %v730
  %v753 = vmul.f32 %v733, %v733
  %v754 = vadd.f32 %v748, %v749
  %v755 = vadd.f32 %v754, %v750
  %v756 = vadd.f32 %v755, %v751
  %v757 = vadd.f32 %v756, %v752
  %v758 = vadd.f32 %v757, %v753
  %v759 = vrot.slane %v758, 4
  %v760 = vadd.f32 %v758, %v759
  %v761 = vrot.slane %v760, 2
  %v762 = vadd.f32 %v760, %v761
  %v763 = vrot.slane %v762, 1
  %v764 = vadd.f32 %v762, %v763
  %v765 = vmul.f32 %v764, 0.020833334
  %v766 = vmul.f32 %v747, %v747
  %v767 = vsub.f32 %v765, %v766
  %v768 = vadd.f32 %v767, 1e-05
  %v769 = vrsqrt.pop %v768
  %v770 = vmul.f32 %v625, %v769
  %v771 = vsub.f32 %v714, %v747
  %v772 = vsub.f32 %v717, %v747
  %v773 = vsub.f32 %v722, %v747
  %v774 = vsub.f32 %v725, %v747
  %v775 = vsub.f32 %v730, %v747
  %v776 = vsub.f32 %v733, %v747
  %v777 = vlaneseq
  %v778 = vshrl.u32 %v777, 7
  %v779 = vsub.s32 0, %v778
  %v780 = vrot.slane %v770, %v779
  %v781 = vmul.f32 %v771, %v780
  %v782 = vmul.f32 %v772, %v780
  %v783 = vmul.f32 %v773, %v780
  %v784 = vmul.f32 %v774, %v780
  %v785 = vmul.f32 %v775, %v780
  %v786 = vmul.f32 %v776, %v780
  %v787 = vlaneseq
  %v788 = vshrl.u32 %v787, 7
  %v789 = vsub.s32 1, %v788
  %v790 = vrot.slane %v625, %v789
  %v791 = vadd.f32 %v781, %v790
  %v792 = vadd.f32 %v782, %v790
  %v793 = vadd.f32 %v783, %v790
  %v794 = vadd.f32 %v784, %v790
  %v795 = vadd.f32 %v785, %v790
  %v796 = vadd.f32 %v786, %v790
  %v797 = vmul.f32 %v791, 0.02
  %v798 = vmul.f32 %v792, 0.02
  %v799 = vmul.f32 %v793, 0.02
  %v800 = vmul.f32 %v794, 0.02
  %v801 = vmul.f32 %v795, 0.02
  %v802 = vmul.f32 %v796, 0.02
  %v803 = vmax.f32 %v791, %v797
  %v804 = vmax.f32 %v792, %v798
  %v805 = vmax.f32 %v793, %v799
  %v806 = vmax.f32 %v794, %v800
  %v807 = vmax.f32 %v795, %v801
  %v808 = vmax.f32 %v796, %v802
  %s809 = smul.u32 4, 16
  %s810 = smul.u32 %s809, 1
  %s811 = sshll.u32 %s810, 4
  %812 = dma.done %s397, %s811
  %v813 = vpack.c.bf16 %v804, %v803
  %v814 = vpack.c.bf16 %v806, %v805
  %v815 = vpack.c.bf16 %v808, %v807
  %v816 = vld [vmem:[#allocation4] sm:$0xff]
  %v817 = vld [vmem:[#allocation4 + $0x8] sm:$0xff]
  %v818 = vld [vmem:[#allocation4 + $0x10] sm:$0xff]
  %v819 = vld [vmem:[#allocation4 + $0x18] sm:$0xff]
  %v820 = vld [vmem:[#allocation4 + $0x20] sm:$0xff]
  %v821 = vld [vmem:[#allocation4 + $0x28] sm:$0xff]
  %v822 = vld [vmem:[#allocation4 + $0x30] sm:$0xff]
  %v823 = vld [vmem:[#allocation4 + $0x38] sm:$0xff]
  %824 = vmatprep.subr.bf16.mxu0 0
  %825 = vmatpush1.bf16.msra.mxu0 %v816
  %826 = vmatprep.subr.bf16.mxu0 0
  %827 = vmatpush1.bf16.msra.mxu0 %v817
  %828 = vmatprep.subr.bf16.mxu0 0
  %829 = vmatpush1.bf16.msra.mxu0 %v818
  %830 = vmatprep.subr.bf16.mxu0 0
  %831 = vmatpush1.bf16.msra.mxu0 %v819
  %832 = vmatprep.subr.bf16.mxu0 0
  %833 = vmatpush1.bf16.msra.mxu0 %v820
  %834 = vmatprep.subr.bf16.mxu0 0
  %835 = vmatpush1.bf16.msra.mxu0 %v821
  %836 = vmatprep.subr.bf16.mxu0 0
  %837 = vmatpush1.bf16.msra.mxu0 %v822
  %838 = vmatprep.subr.bf16.mxu0 0
  %839 = vmatpush1.bf16.msra.mxu0 %v823
  %840 = vmatprep.subr.bf16.mxu0 0
  %841 = vmatpush1.bf16.msra.mxu0 0
  %842 = vmatprep.subr.bf16.mxu0 0
  %843 = vmatpush1.bf16.msra.mxu0 0
  %844 = vmatprep.subr.bf16.mxu0 0
  %845 = vmatpush1.bf16.msra.mxu0 0
  %846 = vmatprep.subr.bf16.mxu0 0
  %847 = vmatpush1.bf16.msra.mxu0 0
  %848 = vmatprep.subr.bf16.mxu0 0
  %849 = vmatpush1.bf16.msra.mxu0 0
  %850 = vmatprep.subr.bf16.mxu0 0
  %851 = vmatpush1.bf16.msra.mxu0 0
  %852 = vmatprep.subr.bf16.mxu0 0
  %853 = vmatpush1.bf16.msra.mxu0 0
  %854 = vmatprep.subr.bf16.mxu0 0
  %855 = vmatpush1.bf16.msra.mxu0 0
  %856 = vmatprep.mubr.bf16.mxu0 0
  %857 = vmatmul.mubr.bf16.gmra.mrb[0].mxu0 %v813
  %v858 = vpop.f32.mrb[0].mxu0
  %v859 = vadd.f32 0.0, %v858
  %v860 = vpop.f32.mrb[0].mxu0
  %v861 = vpop.f32.mrb[0].mxu0
  %v862 = vadd.f32 0.0, %v861
  %v863 = vpop.f32.mrb[0].mxu0
  %864 = vmatprep.mubr.bf16.mxu0 0
  %865 = vmatmul.mubr.bf16.gmra.mrb[0].mxu0 %v814
  %v866 = vpop.f32.mrb[0].mxu0
  %v867 = vadd.f32 0.0, %v866
  %v868 = vpop.f32.mrb[0].mxu0
  %v869 = vpop.f32.mrb[0].mxu0
  %v870 = vadd.f32 0.0, %v869
  %v871 = vpop.f32.mrb[0].mxu0
  %872 = vmatprep.mubr.bf16.mxu0 0
  %873 = vmatmul.mubr.bf16.gmra.mrb[0].mxu0 %v815
  %v874 = vpop.f32.mrb[0].mxu0
  %v875 = vadd.f32 0.0, %v874
  %v876 = vpop.f32.mrb[0].mxu0
  %v877 = vpop.f32.mrb[0].mxu0
  %v878 = vadd.f32 0.0, %v877
  %v879 = vpop.f32.mrb[0].mxu0
  %880 = vdwg.mxu0
  %v881 = vadd.f32 %v859, %v862
  %v882 = vadd.f32 %v881, %v867
  %v883 = vadd.f32 %v882, %v870
  %v884 = vadd.f32 %v883, %v875
  %v885 = vadd.f32 %v884, %v878
  %v886 = vrot.slane %v885, 4
  %v887 = vadd.f32 %v885, %v886
  %v888 = vrot.slane %v887, 2
  %v889 = vadd.f32 %v887, %v888
  %v890 = vrot.slane %v889, 1
  %v891 = vadd.f32 %v889, %v890
  %v892 = vmul.f32 %v891, 0.020833334
  %v893 = vmul.f32 %v859, %v859
  %v894 = vmul.f32 %v862, %v862
  %v895 = vmul.f32 %v867, %v867
  %v896 = vmul.f32 %v870, %v870
  %v897 = vmul.f32 %v875, %v875
  %v898 = vmul.f32 %v878, %v878
  %v899 = vadd.f32 %v893, %v894
  %v900 = vadd.f32 %v899, %v895
  %v901 = vadd.f32 %v900, %v896
  %v902 = vadd.f32 %v901, %v897
  %v903 = vadd.f32 %v902, %v898
  %v904 = vrot.slane %v903, 4
  %v905 = vadd.f32 %v903, %v904
  %v906 = vrot.slane %v905, 2
  %v907 = vadd.f32 %v905, %v906
  %v908 = vrot.slane %v907, 1
  %v909 = vadd.f32 %v907, %v908
  %v910 = vmul.f32 %v909, 0.020833334
  %v911 = vmul.f32 %v892, %v892
  %v912 = vsub.f32 %v910, %v911
  %v913 = vadd.f32 %v912, 1e-05
  %v914 = vrsqrt.pop %v913
  %v915 = vmul.f32 %v625, %v914
  %v916 = vsub.f32 %v859, %v892
  %v917 = vsub.f32 %v862, %v892
  %v918 = vsub.f32 %v867, %v892
  %v919 = vsub.f32 %v870, %v892
  %v920 = vsub.f32 %v875, %v892
  %v921 = vsub.f32 %v878, %v892
  %v922 = vlaneseq
  %v923 = vshrl.u32 %v922, 7
  %v924 = vsub.s32 0, %v923
  %v925 = vrot.slane %v915, %v924
  %v926 = vmul.f32 %v916, %v925
  %v927 = vmul.f32 %v917, %v925
  %v928 = vmul.f32 %v918, %v925
  %v929 = vmul.f32 %v919, %v925
  %v930 = vmul.f32 %v920, %v925
  %v931 = vmul.f32 %v921, %v925
  %v932 = vadd.f32 %v926, %v790
  %v933 = vadd.f32 %v927, %v790
  %v934 = vadd.f32 %v928, %v790
  %v935 = vadd.f32 %v929, %v790
  %v936 = vadd.f32 %v930, %v790
  %v937 = vadd.f32 %v931, %v790
  %v938 = vmul.f32 %v932, 0.02
  %v939 = vmul.f32 %v933, 0.02
  %v940 = vmul.f32 %v934, 0.02
  %v941 = vmul.f32 %v935, 0.02
  %v942 = vmul.f32 %v936, 0.02
  %v943 = vmul.f32 %v937, 0.02
  %v944 = vmax.f32 %v932, %v938
  %v945 = vmax.f32 %v933, %v939
  %v946 = vmax.f32 %v934, %v940
  %v947 = vmax.f32 %v935, %v941
  %v948 = vmax.f32 %v936, %v942
  %v949 = vmax.f32 %v937, %v943
  %s950 = sshll.u32 %s810, 4
  %951 = dma.done %s454, %s950
  %v952 = vpack.c.bf16 %v945, %v944
  %v953 = vpack.c.bf16 %v947, %v946
  %v954 = vpack.c.bf16 %v949, %v948
  %v955 = vld [vmem:[#allocation5] sm:$0xff]
  %v956 = vld [vmem:[#allocation5 + $0x8] sm:$0xff]
  %v957 = vld [vmem:[#allocation5 + $0x10] sm:$0xff]
  %v958 = vld [vmem:[#allocation5 + $0x18] sm:$0xff]
  %v959 = vld [vmem:[#allocation5 + $0x20] sm:$0xff]
  %v960 = vld [vmem:[#allocation5 + $0x28] sm:$0xff]
  %v961 = vld [vmem:[#allocation5 + $0x30] sm:$0xff]
  %v962 = vld [vmem:[#allocation5 + $0x38] sm:$0xff]
  %963 = vmatprep.subr.bf16.mxu0 0
  %964 = vmatpush1.bf16.msra.mxu0 %v955
  %965 = vmatprep.subr.bf16.mxu0 0
  %966 = vmatpush1.bf16.msra.mxu0 %v956
  %967 = vmatprep.subr.bf16.mxu0 0
  %968 = vmatpush1.bf16.msra.mxu0 %v957
  %969 = vmatprep.subr.bf16.mxu0 0
  %970 = vmatpush1.bf16.msra.mxu0 %v958
  %971 = vmatprep.subr.bf16.mxu0 0
  %972 = vmatpush1.bf16.msra.mxu0 %v959
  %973 = vmatprep.subr.bf16.mxu0 0
  %974 = vmatpush1.bf16.msra.mxu0 %v960
  %975 = vmatprep.subr.bf16.mxu0 0
  %976 = vmatpush1.bf16.msra.mxu0 %v961
  %977 = vmatprep.subr.bf16.mxu0 0
  %978 = vmatpush1.bf16.msra.mxu0 %v962
  %979 = vmatprep.subr.bf16.mxu0 0
  %980 = vmatpush1.bf16.msra.mxu0 0
  %981 = vmatprep.subr.bf16.mxu0 0
  %982 = vmatpush1.bf16.msra.mxu0 0
  %983 = vmatprep.subr.bf16.mxu0 0
  %984 = vmatpush1.bf16.msra.mxu0 0
  %985 = vmatprep.subr.bf16.mxu0 0
  %986 = vmatpush1.bf16.msra.mxu0 0
  %987 = vmatprep.subr.bf16.mxu0 0
  %988 = vmatpush1.bf16.msra.mxu0 0
  %989 = vmatprep.subr.bf16.mxu0 0
  %990 = vmatpush1.bf16.msra.mxu0 0
  %991 = vmatprep.subr.bf16.mxu0 0
  %992 = vmatpush1.bf16.msra.mxu0 0
  %993 = vmatprep.subr.bf16.mxu0 0
  %994 = vmatpush1.bf16.msra.mxu0 0
  %995 = vmatprep.mubr.bf16.mxu0 0
  %996 = vmatmul.mubr.bf16.gmra.mrb[0].mxu0 %v952
  %v997 = vpop.f32.mrb[0].mxu0
  %v998 = vadd.f32 0.0, %v997
  %v999 = vpop.f32.mrb[0].mxu0
  %v1000 = vpop.f32.mrb[0].mxu0
  %v1001 = vadd.f32 0.0, %v1000
  %v1002 = vpop.f32.mrb[0].mxu0
  %1003 = vmatprep.mubr.bf16.mxu0 0
  %1004 = vmatmul.mubr.bf16.gmra.mrb[0].mxu0 %v953
  %v1005 = vpop.f32.mrb[0].mxu0
  %v1006 = vadd.f32 0.0, %v1005
  %v1007 = vpop.f32.mrb[0].mxu0
  %v1008 = vpop.f32.mrb[0].mxu0
  %v1009 = vadd.f32 0.0, %v1008
  %v1010 = vpop.f32.mrb[0].mxu0
  %1011 = vmatprep.mubr.bf16.mxu0 0
  %1012 = vmatmul.mubr.bf16.gmra.mrb[0].mxu0 %v954
  %v1013 = vpop.f32.mrb[0].mxu0
  %v1014 = vadd.f32 0.0, %v1013
  %v1015 = vpop.f32.mrb[0].mxu0
  %v1016 = vpop.f32.mrb[0].mxu0
  %v1017 = vadd.f32 0.0, %v1016
  %v1018 = vpop.f32.mrb[0].mxu0
  %1019 = vdwg.mxu0
  %v1020 = vadd.f32 %v998, %v1001
  %v1021 = vadd.f32 %v1020, %v1006
  %v1022 = vadd.f32 %v1021, %v1009
  %v1023 = vadd.f32 %v1022, %v1014
  %v1024 = vadd.f32 %v1023, %v1017
  %v1025 = vrot.slane %v1024, 4
  %v1026 = vadd.f32 %v1024, %v1025
  %v1027 = vrot.slane %v1026, 2
  %v1028 = vadd.f32 %v1026, %v1027
  %v1029 = vrot.slane %v1028, 1
  %v1030 = vadd.f32 %v1028, %v1029
  %v1031 = vmul.f32 %v1030, 0.020833334
  %v1032 = vmul.f32 %v998, %v998
  %v1033 = vmul.f32 %v1001, %v1001
  %v1034 = vmul.f32 %v1006, %v1006
  %v1035 = vmul.f32 %v1009, %v1009
  %v1036 = vmul.f32 %v1014, %v1014
  %v1037 = vmul.f32 %v1017, %v1017
  %v1038 = vadd.f32 %v1032, %v1033
  %v1039 = vadd.f32 %v1038, %v1034
  %v1040 = vadd.f32 %v1039, %v1035
  %v1041 = vadd.f32 %v1040, %v1036
  %v1042 = vadd.f32 %v1041, %v1037
  %v1043 = vrot.slane %v1042, 4
  %v1044 = vadd.f32 %v1042, %v1043
  %v1045 = vrot.slane %v1044, 2
  %v1046 = vadd.f32 %v1044, %v1045
  %v1047 = vrot.slane %v1046, 1
  %v1048 = vadd.f32 %v1046, %v1047
  %v1049 = vmul.f32 %v1048, 0.020833334
  %v1050 = vmul.f32 %v1031, %v1031
  %v1051 = vsub.f32 %v1049, %v1050
  %v1052 = vadd.f32 %v1051, 1e-05
  %v1053 = vrsqrt.pop %v1052
  %v1054 = vmul.f32 %v625, %v1053
  %v1055 = vsub.f32 %v998, %v1031
  %v1056 = vsub.f32 %v1001, %v1031
  %v1057 = vsub.f32 %v1006, %v1031
  %v1058 = vsub.f32 %v1009, %v1031
  %v1059 = vsub.f32 %v1014, %v1031
  %v1060 = vsub.f32 %v1017, %v1031
  %v1061 = vlaneseq
  %v1062 = vshrl.u32 %v1061, 7
  %v1063 = vsub.s32 0, %v1062
  %v1064 = vrot.slane %v1054, %v1063
  %v1065 = vmul.f32 %v1055, %v1064
  %v1066 = vmul.f32 %v1056, %v1064
  %v1067 = vmul.f32 %v1057, %v1064
  %v1068 = vmul.f32 %v1058, %v1064
  %v1069 = vmul.f32 %v1059, %v1064
  %v1070 = vmul.f32 %v1060, %v1064
  %v1071 = vadd.f32 %v1065, %v790
  %v1072 = vadd.f32 %v1066, %v790
  %v1073 = vadd.f32 %v1067, %v790
  %v1074 = vadd.f32 %v1068, %v790
  %v1075 = vadd.f32 %v1069, %v790
  %v1076 = vadd.f32 %v1070, %v790
  %v1077 = vmul.f32 %v1071, 0.02
  %v1078 = vmul.f32 %v1072, 0.02
  %v1079 = vmul.f32 %v1073, 0.02
  %v1080 = vmul.f32 %v1074, 0.02
  %v1081 = vmul.f32 %v1075, 0.02
  %v1082 = vmul.f32 %v1076, 0.02
  %v1083 = vmax.f32 %v1071, %v1077
  %v1084 = vmax.f32 %v1072, %v1078
  %v1085 = vmax.f32 %v1073, %v1079
  %v1086 = vmax.f32 %v1074, %v1080
  %v1087 = vmax.f32 %v1075, %v1081
  %v1088 = vmax.f32 %v1076, %v1082
  %s1089 = sshll.u32 %s810, 4
  %1090 = dma.done %s511, %s1089
  %v1091 = vpack.c.bf16 %v1084, %v1083
  %v1092 = vpack.c.bf16 %v1086, %v1085
  %v1093 = vpack.c.bf16 %v1088, %v1087
  %v1094 = vld [vmem:[#allocation6] sm:$0xff]
  %v1095 = vld [vmem:[#allocation6 + $0x8] sm:$0xff]
  %v1096 = vld [vmem:[#allocation6 + $0x10] sm:$0xff]
  %v1097 = vld [vmem:[#allocation6 + $0x18] sm:$0xff]
  %v1098 = vld [vmem:[#allocation6 + $0x20] sm:$0xff]
  %v1099 = vld [vmem:[#allocation6 + $0x28] sm:$0xff]
  %v1100 = vld [vmem:[#allocation6 + $0x30] sm:$0xff]
  %v1101 = vld [vmem:[#allocation6 + $0x38] sm:$0xff]
  %1102 = vmatprep.subr.bf16.mxu0 0
  %1103 = vmatpush1.bf16.msra.mxu0 %v1094
  %1104 = vmatprep.subr.bf16.mxu0 0
  %1105 = vmatpush1.bf16.msra.mxu0 %v1095
  %1106 = vmatprep.subr.bf16.mxu0 0
  %1107 = vmatpush1.bf16.msra.mxu0 %v1096
  %1108 = vmatprep.subr.bf16.mxu0 0
  %1109 = vmatpush1.bf16.msra.mxu0 %v1097
  %1110 = vmatprep.subr.bf16.mxu0 0
  %1111 = vmatpush1.bf16.msra.mxu0 %v1098
  %1112 = vmatprep.subr.bf16.mxu0 0
  %1113 = vmatpush1.bf16.msra.mxu0 %v1099
  %1114 = vmatprep.subr.bf16.mxu0 0
  %1115 = vmatpush1.bf16.msra.mxu0 %v1100
  %1116 = vmatprep.subr.bf16.mxu0 0
  %1117 = vmatpush1.bf16.msra.mxu0 %v1101
  %1118 = vmatprep.subr.bf16.mxu0 0
  %1119 = vmatpush1.bf16.msra.mxu0 0
  %1120 = vmatprep.subr.bf16.mxu0 0
  %1121 = vmatpush1.bf16.msra.mxu0 0
  %1122 = vmatprep.subr.bf16.mxu0 0
  %1123 = vmatpush1.bf16.msra.mxu0 0
  %1124 = vmatprep.subr.bf16.mxu0 0
  %1125 = vmatpush1.bf16.msra.mxu0 0
  %1126 = vmatprep.subr.bf16.mxu0 0
  %1127 = vmatpush1.bf16.msra.mxu0 0
  %1128 = vmatprep.subr.bf16.mxu0 0
  %1129 = vmatpush1.bf16.msra.mxu0 0
  %1130 = vmatprep.subr.bf16.mxu0 0
  %1131 = vmatpush1.bf16.msra.mxu0 0
  %1132 = vmatprep.subr.bf16.mxu0 0
  %1133 = vmatpush1.bf16.msra.mxu0 0
  %1134 = vmatprep.mubr.bf16.mxu0 0
  %1135 = vmatmul.mubr.bf16.gmra.mrb[0].mxu0 %v1091
  %v1136 = vpop.f32.mrb[0].mxu0
  %v1137 = vadd.f32 0.0, %v1136
  %v1138 = vpop.f32.mrb[0].mxu0
  %v1139 = vpop.f32.mrb[0].mxu0
  %v1140 = vadd.f32 0.0, %v1139
  %v1141 = vpop.f32.mrb[0].mxu0
  %1142 = vmatprep.mubr.bf16.mxu0 0
  %1143 = vmatmul.mubr.bf16.gmra.mrb[0].mxu0 %v1092
  %v1144 = vpop.f32.mrb[0].mxu0
  %v1145 = vadd.f32 0.0, %v1144
  %v1146 = vpop.f32.mrb[0].mxu0
  %v1147 = vpop.f32.mrb[0].mxu0
  %v1148 = vadd.f32 0.0, %v1147
  %v1149 = vpop.f32.mrb[0].mxu0
  %1150 = vmatprep.mubr.bf16.mxu0 0
  %1151 = vmatmul.mubr.bf16.gmra.mrb[0].mxu0 %v1093
  %v1152 = vpop.f32.mrb[0].mxu0
  %v1153 = vadd.f32 0.0, %v1152
  %v1154 = vpop.f32.mrb[0].mxu0
  %v1155 = vpop.f32.mrb[0].mxu0
  %v1156 = vadd.f32 0.0, %v1155
  %v1157 = vpop.f32.mrb[0].mxu0
  %1158 = vdwg.mxu0
  %v1159 = vadd.f32 %v1137, %v1140
  %v1160 = vadd.f32 %v1159, %v1145
  %v1161 = vadd.f32 %v1160, %v1148
  %v1162 = vadd.f32 %v1161, %v1153
  %v1163 = vadd.f32 %v1162, %v1156
  %v1164 = vrot.slane %v1163, 4
  %v1165 = vadd.f32 %v1163, %v1164
  %v1166 = vrot.slane %v1165, 2
  %v1167 = vadd.f32 %v1165, %v1166
  %v1168 = vrot.slane %v1167, 1
  %v1169 = vadd.f32 %v1167, %v1168
  %v1170 = vmul.f32 %v1169, 0.020833334
  %v1171 = vmul.f32 %v1137, %v1137
  %v1172 = vmul.f32 %v1140, %v1140
  %v1173 = vmul.f32 %v1145, %v1145
  %v1174 = vmul.f32 %v1148, %v1148
  %v1175 = vmul.f32 %v1153, %v1153
  %v1176 = vmul.f32 %v1156, %v1156
  %v1177 = vadd.f32 %v1171, %v1172
  %v1178 = vadd.f32 %v1177, %v1173
  %v1179 = vadd.f32 %v1178, %v1174
  %v1180 = vadd.f32 %v1179, %v1175
  %v1181 = vadd.f32 %v1180, %v1176
  %v1182 = vrot.slane %v1181, 4
  %v1183 = vadd.f32 %v1181, %v1182
  %v1184 = vrot.slane %v1183, 2
  %v1185 = vadd.f32 %v1183, %v1184
  %v1186 = vrot.slane %v1185, 1
  %v1187 = vadd.f32 %v1185, %v1186
  %v1188 = vmul.f32 %v1187, 0.020833334
  %v1189 = vmul.f32 %v1170, %v1170
  %v1190 = vsub.f32 %v1188, %v1189
  %v1191 = vadd.f32 %v1190, 1e-05
  %v1192 = vrsqrt.pop %v1191
  %v1193 = vmul.f32 %v625, %v1192
  %v1194 = vsub.f32 %v1137, %v1170
  %v1195 = vsub.f32 %v1140, %v1170
  %v1196 = vsub.f32 %v1145, %v1170
  %v1197 = vsub.f32 %v1148, %v1170
  %v1198 = vsub.f32 %v1153, %v1170
  %v1199 = vsub.f32 %v1156, %v1170
  %v1200 = vlaneseq
  %v1201 = vshrl.u32 %v1200, 7
  %v1202 = vsub.s32 0, %v1201
  %v1203 = vrot.slane %v1193, %v1202
  %v1204 = vmul.f32 %v1194, %v1203
  %v1205 = vmul.f32 %v1195, %v1203
  %v1206 = vmul.f32 %v1196, %v1203
  %v1207 = vmul.f32 %v1197, %v1203
  %v1208 = vmul.f32 %v1198, %v1203
  %v1209 = vmul.f32 %v1199, %v1203
  %v1210 = vadd.f32 %v1204, %v790
  %v1211 = vadd.f32 %v1205, %v790
  %v1212 = vadd.f32 %v1206, %v790
  %v1213 = vadd.f32 %v1207, %v790
  %v1214 = vadd.f32 %v1208, %v790
  %v1215 = vadd.f32 %v1209, %v790
  %v1216 = vmul.f32 %v1210, 0.02
  %v1217 = vmul.f32 %v1211, 0.02
  %v1218 = vmul.f32 %v1212, 0.02
  %v1219 = vmul.f32 %v1213, 0.02
  %v1220 = vmul.f32 %v1214, 0.02
  %v1221 = vmul.f32 %v1215, 0.02
  %v1222 = vmax.f32 %v1210, %v1216
  %v1223 = vmax.f32 %v1211, %v1217
  %v1224 = vmax.f32 %v1212, %v1218
  %v1225 = vmax.f32 %v1213, %v1219
  %v1226 = vmax.f32 %v1214, %v1220
  %v1227 = vmax.f32 %v1215, %v1221
  %s1228 = sshll.u32 %s810, 4
  %1229 = dma.done %s568, %s1228
  %v1230 = vpack.c.bf16 %v1223, %v1222
  %v1231 = vpack.c.bf16 %v1225, %v1224
  %v1232 = vpack.c.bf16 %v1227, %v1226
  %v1233 = vld [vmem:[#allocation7] sm:$0xff]
  %v1234 = vld [vmem:[#allocation7 + $0x8] sm:$0xff]
  %v1235 = vld [vmem:[#allocation7 + $0x10] sm:$0xff]
  %v1236 = vld [vmem:[#allocation7 + $0x18] sm:$0xff]
  %v1237 = vld [vmem:[#allocation7 + $0x20] sm:$0xff]
  %v1238 = vld [vmem:[#allocation7 + $0x28] sm:$0xff]
  %v1239 = vld [vmem:[#allocation7 + $0x30] sm:$0xff]
  %v1240 = vld [vmem:[#allocation7 + $0x38] sm:$0xff]
  %1241 = vmatprep.subr.bf16.mxu0 0
  %1242 = vmatpush1.bf16.msra.mxu0 %v1233
  %1243 = vmatprep.subr.bf16.mxu0 0
  %1244 = vmatpush1.bf16.msra.mxu0 %v1234
  %1245 = vmatprep.subr.bf16.mxu0 0
  %1246 = vmatpush1.bf16.msra.mxu0 %v1235
  %1247 = vmatprep.subr.bf16.mxu0 0
  %1248 = vmatpush1.bf16.msra.mxu0 %v1236
  %1249 = vmatprep.subr.bf16.mxu0 0
  %1250 = vmatpush1.bf16.msra.mxu0 %v1237
  %1251 = vmatprep.subr.bf16.mxu0 0
  %1252 = vmatpush1.bf16.msra.mxu0 %v1238
  %1253 = vmatprep.subr.bf16.mxu0 0
  %1254 = vmatpush1.bf16.msra.mxu0 %v1239
  %1255 = vmatprep.subr.bf16.mxu0 0
  %1256 = vmatpush1.bf16.msra.mxu0 %v1240
  %1257 = vmatprep.subr.bf16.mxu0 0
  %1258 = vmatpush1.bf16.msra.mxu0 0
  %1259 = vmatprep.subr.bf16.mxu0 0
  %1260 = vmatpush1.bf16.msra.mxu0 0
  %1261 = vmatprep.subr.bf16.mxu0 0
  %1262 = vmatpush1.bf16.msra.mxu0 0
  %1263 = vmatprep.subr.bf16.mxu0 0
  %1264 = vmatpush1.bf16.msra.mxu0 0
  %1265 = vmatprep.subr.bf16.mxu0 0
  %1266 = vmatpush1.bf16.msra.mxu0 0
  %1267 = vmatprep.subr.bf16.mxu0 0
  %1268 = vmatpush1.bf16.msra.mxu0 0
  %1269 = vmatprep.subr.bf16.mxu0 0
  %1270 = vmatpush1.bf16.msra.mxu0 0
  %1271 = vmatprep.subr.bf16.mxu0 0
  %1272 = vmatpush1.bf16.msra.mxu0 0
  %1273 = vmatprep.mubr.bf16.mxu0 0
  %1274 = vmatmul.mubr.bf16.gmra.mrb[0].mxu0 %v1230
  %v1275 = vpop.f32.mrb[0].mxu0
  %v1276 = vadd.f32 0.0, %v1275
  %v1277 = vpop.f32.mrb[0].mxu0
  %v1278 = vpop.f32.mrb[0].mxu0
  %v1279 = vadd.f32 0.0, %v1278
  %v1280 = vpop.f32.mrb[0].mxu0
  %1281 = vmatprep.mubr.bf16.mxu0 0
  %1282 = vmatmul.mubr.bf16.gmra.mrb[0].mxu0 %v1231
  %v1283 = vpop.f32.mrb[0].mxu0
  %v1284 = vadd.f32 0.0, %v1283
  %v1285 = vpop.f32.mrb[0].mxu0
  %v1286 = vpop.f32.mrb[0].mxu0
  %v1287 = vadd.f32 0.0, %v1286
  %v1288 = vpop.f32.mrb[0].mxu0
  %1289 = vmatprep.mubr.bf16.mxu0 0
  %1290 = vmatmul.mubr.bf16.gmra.mrb[0].mxu0 %v1232
  %v1291 = vpop.f32.mrb[0].mxu0
  %v1292 = vadd.f32 0.0, %v1291
  %v1293 = vpop.f32.mrb[0].mxu0
  %v1294 = vpop.f32.mrb[0].mxu0
  %v1295 = vadd.f32 0.0, %v1294
  %v1296 = vpop.f32.mrb[0].mxu0
  %1297 = vdwg.mxu0
  %vm1298 = vcmask 523264
  %v1299 = vsel %vm1298, %v1276, 0.0
  %v1300 = vsel %vm1298, %v1279, 0.0
  %v1301 = vadd.f32 %v1299, %v1300
  %v1302 = vsel %vm1298, %v1284, 0.0
  %v1303 = vadd.f32 %v1301, %v1302
  %v1304 = vsel %vm1298, %v1287, 0.0
  %v1305 = vadd.f32 %v1303, %v1304
  %v1306 = vsel %vm1298, %v1292, 0.0
  %v1307 = vadd.f32 %v1305, %v1306
  %v1308 = vsel %vm1298, %v1295, 0.0
  %v1309 = vadd.f32 %v1307, %v1308
  %v1310 = vrot.slane %v1309, 4
  %v1311 = vadd.f32 %v1309, %v1310
  %v1312 = vrot.slane %v1311, 2
  %v1313 = vadd.f32 %v1311, %v1312
  %v1314 = vrot.slane %v1313, 1
  %v1315 = vadd.f32 %v1313, %v1314
  %v1316 = vmul.f32 %v1315, 0.020833334
  %v1317 = vmul.f32 %v1276, %v1276
  %v1318 = vmul.f32 %v1279, %v1279
  %v1319 = vmul.f32 %v1284, %v1284
  %v1320 = vmul.f32 %v1287, %v1287
  %v1321 = vmul.f32 %v1292, %v1292
  %v1322 = vmul.f32 %v1295, %v1295
  %v1323 = vsel %vm1298, %v1317, 0.0
  %v1324 = vsel %vm1298, %v1318, 0.0
  %v1325 = vadd.f32 %v1323, %v1324
  %v1326 = vsel %vm1298, %v1319, 0.0
  %v1327 = vadd.f32 %v1325, %v1326
  %v1328 = vsel %vm1298, %v1320, 0.0
  %v1329 = vadd.f32 %v1327, %v1328
  %v1330 = vsel %vm1298, %v1321, 0.0
  %v1331 = vadd.f32 %v1329, %v1330
  %v1332 = vsel %vm1298, %v1322, 0.0
  %v1333 = vadd.f32 %v1331, %v1332
  %v1334 = vrot.slane %v1333, 4
  %v1335 = vadd.f32 %v1333, %v1334
  %v1336 = vrot.slane %v1335, 2
  %v1337 = vadd.f32 %v1335, %v1336
  %v1338 = vrot.slane %v1337, 1
  %v1339 = vadd.f32 %v1337, %v1338
  %v1340 = vmul.f32 %v1339, 0.020833334
  %v1341 = vmul.f32 %v1316, %v1316
  %v1342 = vsub.f32 %v1340, %v1341
  %v1343 = vadd.f32 %v1342, 1e-05
  %v1344 = vrsqrt.pop %v1343
  %v1345 = vmul.f32 %v626, %v1344
  %v1346 = vsub.f32 %v1276, %v1316
  %v1347 = vsub.f32 %v1279, %v1316
  %v1348 = vsub.f32 %v1284, %v1316
  %v1349 = vsub.f32 %v1287, %v1316
  %v1350 = vsub.f32 %v1292, %v1316
  %v1351 = vsub.f32 %v1295, %v1316
  %v1352 = vlaneseq
  %v1353 = vshrl.u32 %v1352, 7
  %v1354 = vsub.s32 0, %v1353
  %v1355 = vrot.slane %v1345, %v1354
  %v1356 = vmul.f32 %v1346, %v1355
  %v1357 = vmul.f32 %v1347, %v1355
  %v1358 = vmul.f32 %v1348, %v1355
  %v1359 = vmul.f32 %v1349, %v1355
  %v1360 = vmul.f32 %v1350, %v1355
  %v1361 = vmul.f32 %v1351, %v1355
  %v1362 = vlaneseq
  %v1363 = vshrl.u32 %v1362, 7
  %v1364 = vsub.s32 1, %v1363
  %v1365 = vrot.slane %v626, %v1364
  %v1366 = vadd.f32 %v1356, %v1365
  %v1367 = vadd.f32 %v1357, %v1365
  %v1368 = vadd.f32 %v1358, %v1365
  %v1369 = vadd.f32 %v1359, %v1365
  %v1370 = vadd.f32 %v1360, %v1365
  %v1371 = vadd.f32 %v1361, %v1365
  %v1372 = vmul.f32 %v1366, 0.02
  %v1373 = vmul.f32 %v1367, 0.02
  %v1374 = vmul.f32 %v1368, 0.02
  %v1375 = vmul.f32 %v1369, 0.02
  %v1376 = vmul.f32 %v1370, 0.02
  %v1377 = vmul.f32 %v1371, 0.02
  %v1378 = vmax.f32 %v1366, %v1372
  %v1379 = vmax.f32 %v1367, %v1373
  %v1380 = vmax.f32 %v1368, %v1374
  %v1381 = vmax.f32 %v1369, %v1375
  %v1382 = vmax.f32 %v1370, %v1376
  %v1383 = vmax.f32 %v1371, %v1377
  %1384 = vst.msk [vmem:[%s9] sm:$0xff] %vm1298, %v1378
  %1385 = vst.msk [vmem:[%s9 + $0x8] sm:$0xff] %vm1298, %v1379
  %1386 = vst.msk [vmem:[%s9 + $0x10] sm:$0xff] %vm1298, %v1380
  %1387 = vst.msk [vmem:[%s9 + $0x18] sm:$0xff] %vm1298, %v1381
  %1388 = vst.msk [vmem:[%s9 + $0x20] sm:$0xff] %vm1298, %v1382
  %1389 = vst.msk [vmem:[%s9 + $0x28] sm:$0xff] %vm1298, %v1383
  %v1390 = vmul.f32 %v1378, %v1378
  %v1391 = vmul.f32 %v1379, %v1379
  %v1392 = vmul.f32 %v1380, %v1380
  %v1393 = vmul.f32 %v1381, %v1381
  %v1394 = vmul.f32 %v1382, %v1382
  %v1395 = vmul.f32 %v1383, %v1383
  %v1396 = vsel %vm1298, %v1390, 0.0
  %1397 = vadd.xlane.f32.xlu0 %v1396
  %v1398 = vpop.xlane.xlu0 %1397
  %v1399 = vsel %vm1298, %v1391, 0.0
  %1400 = vadd.xlane.f32.xlu0 %v1399
  %v1401 = vpop.xlane.xlu0 %1400
  %v1402 = vsel %vm1298, %v1392, 0.0
  %1403 = vadd.xlane.f32.xlu0 %v1402
  %v1404 = vpop.xlane.xlu0 %1403
  %v1405 = vsel %vm1298, %v1393, 0.0
  %1406 = vadd.xlane.f32.xlu0 %v1405
  %v1407 = vpop.xlane.xlu0 %1406
  %v1408 = vsel %vm1298, %v1394, 0.0
  %1409 = vadd.xlane.f32.xlu0 %v1408
  %v1410 = vpop.xlane.xlu0 %1409
  %v1411 = vsel %vm1298, %v1395, 0.0
  %1412 = vadd.xlane.f32.xlu0 %v1411
  %v1413 = vpop.xlane.xlu0 %1412
  %v1414 = vrsqrt.pop %v1398
  %v1415 = vmul.f32 %v1398, %v1414
  %vm1416 = vcmp.eq.f32.partialorder %v1398, inf
  %v1417 = vsel %vm1416, %v1398, %v1415
  %vm1418 = vcmp.eq.f32.partialorder %v1398, 0.0
  %v1419 = vand.u32 %v1398, 2147483648
  %v1420 = vsel %vm1418, %v1419, %v1417
  %v1421 = vrsqrt.pop %v1401
  %v1422 = vmul.f32 %v1401, %v1421
  %vm1423 = vcmp.eq.f32.partialorder %v1401, inf
  %v1424 = vsel %vm1423, %v1401, %v1422
  %vm1425 = vcmp.eq.f32.partialorder %v1401, 0.0
  %v1426 = vand.u32 %v1401, 2147483648
  %v1427 = vsel %vm1425, %v1426, %v1424
  %v1428 = vrsqrt.pop %v1404
  %v1429 = vmul.f32 %v1404, %v1428
  %vm1430 = vcmp.eq.f32.partialorder %v1404, inf
  %v1431 = vsel %vm1430, %v1404, %v1429
  %vm1432 = vcmp.eq.f32.partialorder %v1404, 0.0
  %v1433 = vand.u32 %v1404, 2147483648
  %v1434 = vsel %vm1432, %v1433, %v1431
  %v1435 = vrsqrt.pop %v1407
  %v1436 = vmul.f32 %v1407, %v1435
  %vm1437 = vcmp.eq.f32.partialorder %v1407, inf
  %v1438 = vsel %vm1437, %v1407, %v1436
  %vm1439 = vcmp.eq.f32.partialorder %v1407, 0.0
  %v1440 = vand.u32 %v1407, 2147483648
  %v1441 = vsel %vm1439, %v1440, %v1438
  %v1442 = vrsqrt.pop %v1410
  %v1443 = vmul.f32 %v1410, %v1442
  %vm1444 = vcmp.eq.f32.partialorder %v1410, inf
  %v1445 = vsel %vm1444, %v1410, %v1443
  %vm1446 = vcmp.eq.f32.partialorder %v1410, 0.0
  %v1447 = vand.u32 %v1410, 2147483648
  %v1448 = vsel %vm1446, %v1447, %v1445
  %v1449 = vrsqrt.pop %v1413
  %v1450 = vmul.f32 %v1413, %v1449
  %vm1451 = vcmp.eq.f32.partialorder %v1413, inf
  %v1452 = vsel %vm1451, %v1413, %v1450
  %vm1453 = vcmp.eq.f32.partialorder %v1413, 0.0
  %v1454 = vand.u32 %v1413, 2147483648
  %v1455 = vsel %vm1453, %v1454, %v1452
  %v1462 = vlaneseq
  %v1463 = vand.u32 %v1462, 127
  %v1464 = vlaneseq
  %v1465 = vshrl.u32 %v1464, 7
  %v1466 = vsub.s32 %v1463, %v1465
  %v1467 = vrot.slane %v1420, %v1466
  %v1468 = vlaneseq
  %v1469 = vshrl.u32 %v1468, 7
  %v1470 = vsub.s32 %v1463, %v1469
  %v1471 = vrot.slane %v1427, %v1470
  %v1472 = vlaneseq
  %v1473 = vshrl.u32 %v1472, 7
  %v1474 = vsub.s32 %v1463, %v1473
  %v1475 = vrot.slane %v1434, %v1474
  %v1476 = vlaneseq
  %v1477 = vshrl.u32 %v1476, 7
  %v1478 = vsub.s32 %v1463, %v1477
  %v1479 = vrot.slane %v1441, %v1478
  %v1480 = vlaneseq
  %v1481 = vshrl.u32 %v1480, 7
  %v1482 = vsub.s32 %v1463, %v1481
  %v1483 = vrot.slane %v1448, %v1482
  %v1484 = vlaneseq
  %v1485 = vshrl.u32 %v1484, 7
  %v1486 = vsub.s32 %v1463, %v1485
  %v1487 = vrot.slane %v1455, %v1486
  %vm1488 = vcmask 1041409
  %v1489 = vsel %vm1488, %v1471, %v1467
  %vm1490 = vcmask 1042434
  %v1491 = vsel %vm1490, %v1475, %v1489
  %vm1492 = vcmask 1043459
  %v1493 = vsel %vm1492, %v1479, %v1491
  %vm1494 = vcmask 1044484
  %v1495 = vsel %vm1494, %v1483, %v1493
  %vm1496 = vcmask 1045509
  %v1497 = vsel %vm1496, %v1487, %v1495
  %vm1499 = vcmask 62464
  %1500 = vst.msk [vmem:[%s10] sm:$0x3f] %vm1499, %v1497
  // Predicated region
  $region384: #{model_forward.3} parent=0 // pred_check
    _
  $region385: #{model_forward.3} parent=0 // pred_check_branch
    %1502 = sbr.rel (0) target = $region387
  $region386: #{model_forward.3} parent=0 // pred_region
    _
  $region387: #{model_forward.3} parent=0 // pred_fallthru
    _
  // Predicated region
  $region388: #{model_forward.3} parent=0 // pred_check
    _
  $region389: #{model_forward.3} parent=0 // pred_check_branch
    %1504 = sbr.rel (0) target = $region391
  $region390: #{model_forward.3} parent=0 // pred_region
    _
  $region391: #{model_forward.3} parent=0 // pred_fallthru
    _
  // Predicated region
  $region392: #{model_forward.3} parent=0 // pred_check
    _
  $region393: #{model_forward.3} parent=0 // pred_check_branch
    %1506 = sbr.rel (0) target = $region395
  $region394: #{model_forward.3} parent=0 // pred_region
    _
  $region395: #{model_forward.3} parent=0 // pred_fallthru
    _
  // Predicated region
  $region396: #{model_forward.3} parent=0 // pred_check
    _
  $region397: #{model_forward.3} parent=0 // pred_check_branch
    %1508 = sbr.rel (0) target = $region399
  $region398: #{model_forward.3} parent=0 // pred_region
    _
  $region399: #{model_forward.3} parent=0 // pred_fallthru
    _
  %1509 = vsyncmov [#allocation8]
  %s1510 = vpop.sfrf %1509
  %p1511 = scmp.eq.s32.totalorder %s1510, 0
  %p1512 = pneg %p1511
  %1514 = shalt.err (%p1512)
  %s1515 = scalar_lea.sflag [#allocation8], 1
  %1516 = vsyncmov %s1515
  %s1517 = vpop.sfrf %1516
  %p1518 = scmp.eq.s32.totalorder %s1517, 0
  %p1519 = pneg %p1518
  %1521 = shalt.err (%p1519)
  %s1522 = scalar_lea.sflag [#allocation8], 2
  %1523 = vsyncmov %s1522
  %s1524 = vpop.sfrf %1523
  %p1525 = scmp.eq.s32.totalorder %s1524, 0
  %p1526 = pneg %p1525
  %1528 = shalt.err (%p1526)
  %s1529 = scalar_lea.sflag [#allocation8], 3
  %1530 = vsyncmov %s1529
  %s1531 = vpop.sfrf %1530
  %p1532 = scmp.eq.s32.totalorder %s1531, 0
  %p1533 = pneg %p1532
  %1535 = shalt.err (%p1533)
  %s1536 = scalar_lea.sflag [#allocation8], 4
  %1537 = vsyncmov %s1536
  %s1538 = vpop.sfrf %1537
  %p1539 = scmp.eq.s32.totalorder %s1538, 0
  %p1540 = pneg %p1539
  %1542 = shalt.err (%p1540)
  %s1543 = scalar_lea.sflag [#allocation8], 5
  %1544 = vsyncmov %s1543
  %s1545 = vpop.sfrf %1544
  %p1546 = scmp.eq.s32.totalorder %s1545, 0
  %p1547 = pneg %p1546
  %1549 = shalt.err (%p1547)
  %1550 = vsyncmov [#allocation9]
  %s1551 = vpop.sfrf %1550
  %p1552 = scmp.eq.s32.totalorder %s1551, 0
  %p1553 = pneg %p1552
  %1555 = shalt.err (%p1553)
  %s1556 = scalar_lea.sflag [#allocation9], 1
  %1557 = vsyncmov %s1556
  %s1558 = vpop.sfrf %1557
  %p1559 = scmp.eq.s32.totalorder %s1558, 0
  %p1560 = pneg %p1559
  %1562 = shalt.err (%p1560)
  %s1563 = scalar_lea.sflag [#allocation9], 2
  %1564 = vsyncmov %s1563
  %s1565 = vpop.sfrf %1564
  %p1566 = scmp.eq.s32.totalorder %s1565, 0
  %p1567 = pneg %p1566
  %1569 = shalt.err (%p1567)
  %s1570 = scalar_lea.sflag [#allocation9], 3
  %1571 = vsyncmov %s1570
  %s1572 = vpop.sfrf %1571
  %p1573 = scmp.eq.s32.totalorder %s1572, 0
  %p1574 = pneg %p1573
  %1576 = shalt.err (%p1574)
  %s1577 = scalar_lea.sflag [#allocation9], 4
  %1578 = vsyncmov %s1577
  %s1579 = vpop.sfrf %1578
  %p1580 = scmp.eq.s32.totalorder %s1579, 0
  %p1581 = pneg %p1580
  %1583 = shalt.err (%p1581)

// kernel: model_forward.2
$region0: #{model_forward.2}
  #allocation0 [shape = 'u32[]', space=smem, size = 0x4, offset = 0x4, fixed_abs, tag = 'smem constant byte address 0x4 - core index']
  #allocation1 [shape = 'u32[144,128]{1,0:T(1,128)}', space=vmem, size = 0x12000, scoped, tag = 'internal scratch']
  #allocation2 [shape = 'f32[64,1024]{1,0:T(8,128)}', space=vmem, size = 0x40000, scoped, tag = 'scratch operand']
  #allocation3 [shape = 'bf16[1024,512]{1,0:T(16,128)(2,1)}', space=vmem, size = 0x100000, scoped, tag = 'scratch operand']
  #allocation4 [shape = 'bf16[512,512]{1,0:T(16,128)(2,1)}', space=vmem, size = 0x80000, scoped, tag = 'scratch operand']
  #allocation5 [shape = 'bf16[512,512]{1,0:T(16,128)(2,1)}', space=vmem, size = 0x80000, scoped, tag = 'scratch operand']
  #allocation6 [shape = 'bf16[512,512]{1,0:T(16,128)(2,1)}', space=vmem, size = 0x80000, scoped, tag = 'scratch operand']
  #allocation7 [shape = 'bf16[512,256]{1,0:T(16,128)(2,1)}', space=vmem, size = 0x40000, scoped, tag = 'scratch operand']
  #allocation8 [shape = 's32[6]{0}', space=sflag, size = 0x18, scoped, tag = 'scratch operand']
  #allocation9 [shape = 's32[]', space=sflag, size = 0x4, offset = 0, fixed_abs, tag = 'sflag constant byte address 0x0 - dummy sync flag']
  #allocation11 [shape = 's32[]', space=sflag, size = 0x4, offset = 0, fixed_abs, tag = 'sflag constant byte address 0x0 - dummy sync flag']
  #allocation12 [shape = 's32[]', space=sflag, size = 0x4, offset = 0, fixed_abs, tag = 'sflag constant byte address 0x0 - dummy sync flag']
  #allocation13 [shape = 'u32[]', space=smem, size = 0x4, offset = 0x44, fixed_abs, tag = 'smem constant byte address 0x44 - assertion arg 0']
  #allocation14 [shape = 'u32[]', space=smem, size = 0x4, offset = 0x48, fixed_abs, tag = 'smem constant byte address 0x48 - assertion arg 1']
  #allocation15 [shape = 's32[]', space=sflag, size = 0x4, offset = 0, fixed_abs, tag = 'sflag constant byte address 0x0 - dummy sync flag']
  #allocation17 [shape = 's32[]', space=sflag, size = 0x4, offset = 0, fixed_abs, tag = 'sflag constant byte address 0x0 - dummy sync flag']
  #allocation19 [shape = 's32[]', space=sflag, size = 0x4, offset = 0, fixed_abs, tag = 'sflag constant byte address 0x0 - dummy sync flag']
  #allocation21 [shape = 's32[]', space=sflag, size = 0x4, offset = 0, fixed_abs, tag = 'sflag constant byte address 0x0 - dummy sync flag']
  %s0 = inlined_call_operand.hbm [shape: f32[64,1024], index: 0, kind: input, shape index: {}]
  %s1 = inlined_call_operand.hbm [shape: bf16[1024,512], index: 1, kind: input, shape index: {}]
  %s2 = inlined_call_operand.hbm [shape: bf16[512,512], index: 2, kind: input, shape index: {}]
  %s3 = inlined_call_operand.hbm [shape: bf16[512,512], index: 3, kind: input, shape index: {}]
  %s4 = inlined_call_operand.hbm [shape: bf16[512,512], index: 4, kind: input, shape index: {}]
  %s5 = inlined_call_operand.hbm [shape: bf16[512,256], index: 5, kind: input, shape index: {}]
  %s6 = inlined_call_operand.vmem [shape: f32[2,512], index: 6, kind: input, shape index: {}]
  %s7 = inlined_call_operand.vmem [shape: f32[2,256], index: 7, kind: input, shape index: {}]
  %s8 = inlined_call_operand.vmem [shape: f32[8,8,256], index: 8, kind: output, shape index: {0}]
  %s9 = inlined_call_operand.vmem [shape: f32[8,1], index: 9, kind: output, shape index: {1}]
  %10 = xla_tuple %s8, %s9
  %s11 = sld [smem:[#allocation0]]
  $region30: #{model_forward.2} parent=0
    _
  %s13 = ssub.s32 1, %s11
  %s14 = scalar_select 0, %s13, %s11
  $region1: #{model_forward.2} parent=0
    #allocation10 [shape = 'u32[9]{0}', space=smem, size = 0x24, scoped, tag = 'DMA stride descriptor']
    #allocation16 [shape = 'u32[9]{0}', space=smem, size = 0x24, scoped, tag = 'DMA stride descriptor']
    #allocation18 [shape = 'u32[9]{0}', space=smem, size = 0x24, scoped, tag = 'DMA stride descriptor']
    #allocation20 [shape = 'u32[9]{0}', space=smem, size = 0x24, scoped, tag = 'DMA stride descriptor']
    #allocation22 [shape = 'u32[9]{0}', space=smem, size = 0x24, scoped, tag = 'DMA stride descriptor']
    // Predicated region
    $region2: #{model_forward.2} parent=1 // pred_check
      _
    $region3: #{model_forward.2} parent=1 // pred_check_branch
      %16 = sbr.rel (0) target = $region5
    $region4: #{model_forward.2} parent=1 // pred_region
      _
    $region5: #{model_forward.2} parent=1 // pred_fallthru
      _
    // Predicated region
    $region6: #{model_forward.2} parent=1 // pred_check
      _
    $region7: #{model_forward.2} parent=1 // pred_check_branch
      %18 = sbr.rel (0) target = $region9
    $region8: #{model_forward.2} parent=1 // pred_region
      _
    $region9: #{model_forward.2} parent=1 // pred_fallthru
      _
    %s20 = sshll.u32 1, 14
    %s21 = sxor.u32 4294967295, %s20
    %s23 = sld [smem:[#allocation0]]
    %s24 = sadd.s32 2, %s23
    %s26 = sshll.u32 7, 26
    %s27 = sxor.u32 4294967295, %s26
    %s28 = sand.u32 0, %s27
    %s29 = sshll.u32 %s24, 26
    %s30 = sor.u32 %s28, %s29
    %s31 = sshll.u32 [#allocation3], 4
    %s32 = int_to_ptr.vmem [resolvable:$true] %s31
    %35 = sst [smem:[#allocation10]] 512
    %s36 = scalar_lea.smem [#allocation10], 1
    %37 = sst [smem:[%s36]] 512
    %s38 = scalar_lea.smem [#allocation10], 2
    %39 = sst [smem:[%s38]] 4
    %s40 = scalar_lea.smem [#allocation10], 3
    %41 = sst [smem:[%s40]] 64
    %s42 = scalar_lea.smem [#allocation10], 4
    %43 = sst [smem:[%s42]] 128
    %s44 = scalar_lea.smem [#allocation10], 5
    %45 = sst [smem:[%s44]] 2
    %s46 = scalar_lea.smem [#allocation10], 6
    %47 = sst [smem:[%s46]] 256
    %s48 = scalar_lea.smem [#allocation10], 7
    %49 = sst [smem:[%s48]] 64
    %s50 = scalar_lea.smem [#allocation10], 8
    %51 = sst [smem:[%s50]] 4
    %53 = dma.general %s1, 32768, %s32, [#allocation8], [#allocation9], [#allocation10], %s30, 0
    %s54 = scalar_lea.sflag [#allocation8], 5
    // Predicated region
    $region10: #{model_forward.2} parent=1 // pred_check
      _
    $region11: #{model_forward.2} parent=1 // pred_check_branch
      %56 = sbr.rel target = $region13
    $region12: #{model_forward.2} parent=1 // pred_region
      %57 = sst [smem:[#allocation13]] [#allocation12]
      %58 = sst [smem:[#allocation14]] [#allocation11]
    $region13: #{model_forward.2} parent=1 // pred_fallthru
      _
    %60 = shalt.err (0)
    %s62 = sshll.u32 [#allocation2], 4
    %s63 = int_to_ptr.vmem [resolvable:$true] %s62
    %65 = dma.hbm_to_vmem [thread:$0]  %s0, 8192, %s63, %s54
    %s66 = scalar_lea.sflag [#allocation8], 1
    %s68 = sshll.u32 1, 14
    %s69 = sxor.u32 4294967295, %s68
    %s71 = sadd.s32 2, %s23
    %s73 = sshll.u32 7, 26
    %s74 = sxor.u32 4294967295, %s73
    %s75 = sand.u32 0, %s74
    %s76 = sshll.u32 %s71, 26
    %s77 = sor.u32 %s75, %s76
    %s78 = sshll.u32 [#allocation4], 4
    %s79 = int_to_ptr.vmem [resolvable:$true] %s78
    %82 = sst [smem:[#allocation16]] 512
    %s83 = scalar_lea.smem [#allocation16], 1
    %84 = sst [smem:[%s83]] 512
    %s85 = scalar_lea.smem [#allocation16], 2
    %86 = sst [smem:[%s85]] 4
    %s87 = scalar_lea.smem [#allocation16], 3
    %88 = sst [smem:[%s87]] 64
    %s89 = scalar_lea.smem [#allocation16], 4
    %90 = sst [smem:[%s89]] 128
    %s91 = scalar_lea.smem [#allocation16], 5
    %92 = sst [smem:[%s91]] 2
    %s93 = scalar_lea.smem [#allocation16], 6
    %94 = sst [smem:[%s93]] 256
    %s95 = scalar_lea.smem [#allocation16], 7
    %96 = sst [smem:[%s95]] 64
    %s97 = scalar_lea.smem [#allocation16], 8
    %98 = sst [smem:[%s97]] 4
    %100 = dma.general %s2, 16384, %s79, %s66, [#allocation15], [#allocation16], %s77, 0
    %s101 = scalar_lea.sflag [#allocation8], 2
    %s103 = sshll.u32 1, 14
    %s104 = sxor.u32 4294967295, %s103
    %s106 = sadd.s32 2, %s23
    %s108 = sshll.u32 7, 26
    %s109 = sxor.u32 4294967295, %s108
    %s110 = sand.u32 0, %s109
    %s111 = sshll.u32 %s106, 26
    %s112 = sor.u32 %s110, %s111
    %s113 = sshll.u32 [#allocation5], 4
    %s114 = int_to_ptr.vmem [resolvable:$true] %s113
    %117 = sst [smem:[#allocation18]] 512
    %s118 = scalar_lea.smem [#allocation18], 1
    %119 = sst [smem:[%s118]] 512
    %s120 = scalar_lea.smem [#allocation18], 2
    %121 = sst [smem:[%s120]] 4
    %s122 = scalar_lea.smem [#allocation18], 3
    %123 = sst [smem:[%s122]] 64
    %s124 = scalar_lea.smem [#allocation18], 4
    %125 = sst [smem:[%s124]] 128
    %s126 = scalar_lea.smem [#allocation18], 5
    %127 = sst [smem:[%s126]] 2
    %s128 = scalar_lea.smem [#allocation18], 6
    %129 = sst [smem:[%s128]] 256
    %s130 = scalar_lea.smem [#allocation18], 7
    %131 = sst [smem:[%s130]] 64
    %s132 = scalar_lea.smem [#allocation18], 8
    %133 = sst [smem:[%s132]] 4
    %135 = dma.general %s3, 16384, %s114, %s101, [#allocation17], [#allocation18], %s112, 0
    %s136 = scalar_lea.sflag [#allocation8], 3
    %s138 = sshll.u32 1, 14
    %s139 = sxor.u32 4294967295, %s138
    %s141 = sadd.s32 2, %s23
    %s143 = sshll.u32 7, 26
    %s144 = sxor.u32 4294967295, %s143
    %s145 = sand.u32 0, %s144
    %s146 = sshll.u32 %s141, 26
    %s147 = sor.u32 %s145, %s146
    %s148 = sshll.u32 [#allocation6], 4
    %s149 = int_to_ptr.vmem [resolvable:$true] %s148
    %152 = sst [smem:[#allocation20]] 512
    %s153 = scalar_lea.smem [#allocation20], 1
    %154 = sst [smem:[%s153]] 512
    %s155 = scalar_lea.smem [#allocation20], 2
    %156 = sst [smem:[%s155]] 4
    %s157 = scalar_lea.smem [#allocation20], 3
    %158 = sst [smem:[%s157]] 64
    %s159 = scalar_lea.smem [#allocation20], 4
    %160 = sst [smem:[%s159]] 128
    %s161 = scalar_lea.smem [#allocation20], 5
    %162 = sst [smem:[%s161]] 2
    %s163 = scalar_lea.smem [#allocation20], 6
    %164 = sst [smem:[%s163]] 256
    %s165 = scalar_lea.smem [#allocation20], 7
    %166 = sst [smem:[%s165]] 64
    %s167 = scalar_lea.smem [#allocation20], 8
    %168 = sst [smem:[%s167]] 4
    %170 = dma.general %s4, 16384, %s149, %s136, [#allocation19], [#allocation20], %s147, 0
    %s171 = scalar_lea.sflag [#allocation8], 4
    %s173 = sshll.u32 1, 14
    %s174 = sxor.u32 4294967295, %s173
    %s176 = sadd.s32 2, %s23
    %s178 = sshll.u32 7, 26
    %s179 = sxor.u32 4294967295, %s178
    %s180 = sand.u32 0, %s179
    %s181 = sshll.u32 %s176, 26
    %s182 = sor.u32 %s180, %s181
    %s183 = sshll.u32 [#allocation7], 4
    %s184 = int_to_ptr.vmem [resolvable:$true] %s183
    %187 = sst [smem:[#allocation22]] 256
    %s188 = scalar_lea.smem [#allocation22], 1
    %189 = sst [smem:[%s188]] 256
    %s190 = scalar_lea.smem [#allocation22], 2
    %191 = sst [smem:[%s190]] 2
    %s192 = scalar_lea.smem [#allocation22], 3
    %193 = sst [smem:[%s192]] 64
    %s194 = scalar_lea.smem [#allocation22], 4
    %195 = sst [smem:[%s194]] 128
    %s196 = scalar_lea.smem [#allocation22], 5
    %197 = sst [smem:[%s196]] 2
    %s198 = scalar_lea.smem [#allocation22], 6
    %199 = sst [smem:[%s198]] 128
    %s200 = scalar_lea.smem [#allocation22], 7
    %201 = sst [smem:[%s200]] 64
    %s202 = scalar_lea.smem [#allocation22], 8
    %203 = sst [smem:[%s202]] 4
    %205 = dma.general %s5, 8192, %s184, %s171, [#allocation21], [#allocation22], %s182, 0
    %v206 = vld [vmem:[%s6] sm:$0xff]
    %v207 = vld [vmem:[%s7] sm:$0xf]
    %s208 = smul.u32 8, 8
    %s209 = smul.u32 %s208, 8
    %s210 = sshll.u32 %s209, 4
    %211 = dma.done %s54, %s210
    %v212 = vld [vmem:[#allocation2] sm:$0xff]
    %v213 = vld [vmem:[#allocation2 + $0x8] sm:$0xff]
    %v214 = vld [vmem:[#allocation2 + $0x10] sm:$0xff]
    %v215 = vld [vmem:[#allocation2 + $0x18] sm:$0xff]
    %v216 = vld [vmem:[#allocation2 + $0x20] sm:$0xff]
    %v217 = vld [vmem:[#allocation2 + $0x28] sm:$0xff]
    %v218 = vld [vmem:[#allocation2 + $0x30] sm:$0xff]
    %v219 = vld [vmem:[#allocation2 + $0x38] sm:$0xff]
    %v220 = vld [vmem:[#allocation2 + $0x40] sm:$0xff]
    %v221 = vld [vmem:[#allocation2 + $0x48] sm:$0xff]
    %v222 = vld [vmem:[#allocation2 + $0x50] sm:$0xff]
    %v223 = vld [vmem:[#allocation2 + $0x58] sm:$0xff]
    %v224 = vld [vmem:[#allocation2 + $0x60] sm:$0xff]
    %v225 = vld [vmem:[#allocation2 + $0x68] sm:$0xff]
    %v226 = vld [vmem:[#allocation2 + $0x70] sm:$0xff]
    %v227 = vld [vmem:[#allocation2 + $0x78] sm:$0xff]
    %v228 = vld [vmem:[#allocation2 + $0x80] sm:$0xff]
    %v229 = vld [vmem:[#allocation2 + $0x88] sm:$0xff]
    %v230 = vld [vmem:[#allocation2 + $0x90] sm:$0xff]
    %v231 = vld [vmem:[#allocation2 + $0x98] sm:$0xff]
    %v232 = vld [vmem:[#allocation2 + $0xa0] sm:$0xff]
    %v233 = vld [vmem:[#allocation2 + $0xa8] sm:$0xff]
    %v234 = vld [vmem:[#allocation2 + $0xb0] sm:$0xff]
    %v235 = vld [vmem:[#allocation2 + $0xb8] sm:$0xff]
    %v236 = vld [vmem:[#allocation2 + $0xc0] sm:$0xff]
    %v237 = vld [vmem:[#allocation2 + $0xc8] sm:$0xff]
    %v238 = vld [vmem:[#allocation2 + $0xd0] sm:$0xff]
    %v239 = vld [vmem:[#allocation2 + $0xd8] sm:$0xff]
    %v240 = vld [vmem:[#allocation2 + $0xe0] sm:$0xff]
    %v241 = vld [vmem:[#allocation2 + $0xe8] sm:$0xff]
    %v242 = vld [vmem:[#allocation2 + $0xf0] sm:$0xff]
    %v243 = vld [vmem:[#allocation2 + $0xf8] sm:$0xff]
    %v244 = vld [vmem:[#allocation2 + $0x100] sm:$0xff]
    %v245 = vld [vmem:[#allocation2 + $0x108] sm:$0xff]
    %v246 = vld [vmem:[#allocation2 + $0x110] sm:$0xff]
    %v247 = vld [vmem:[#allocation2 + $0x118] sm:$0xff]
    %v248 = vld [vmem:[#allocation2 + $0x120] sm:$0xff]
    %v249 = vld [vmem:[#allocation2 + $0x128] sm:$0xff]
    %v250 = vld [vmem:[#allocation2 + $0x130] sm:$0xff]
    %v251 = vld [vmem:[#allocation2 + $0x138] sm:$0xff]
    %v252 = vld [vmem:[#allocation2 + $0x140] sm:$0xff]
    %v253 = vld [vmem:[#allocation2 + $0x148] sm:$0xff]
    %v254 = vld [vmem:[#allocation2 + $0x150] sm:$0xff]
    %v255 = vld [vmem:[#allocation2 + $0x158] sm:$0xff]
    %v256 = vld [vmem:[#allocation2 + $0x160] sm:$0xff]
    %v257 = vld [vmem:[#allocation2 + $0x168] sm:$0xff]
    %v258 = vld [vmem:[#allocation2 + $0x170] sm:$0xff]
    %v259 = vld [vmem:[#allocation2 + $0x178] sm:$0xff]
    %v260 = vld [vmem:[#allocation2 + $0x180] sm:$0xff]
    %v261 = vld [vmem:[#allocation2 + $0x188] sm:$0xff]
    %v262 = vld [vmem:[#allocation2 + $0x190] sm:$0xff]
    %v263 = vld [vmem:[#allocation2 + $0x198] sm:$0xff]
    %v264 = vld [vmem:[#allocation2 + $0x1a0] sm:$0xff]
    %v265 = vld [vmem:[#allocation2 + $0x1a8] sm:$0xff]
    %v266 = vld [vmem:[#allocation2 + $0x1b0] sm:$0xff]
    %v267 = vld [vmem:[#allocation2 + $0x1b8] sm:$0xff]
    %v268 = vld [vmem:[#allocation2 + $0x1c0] sm:$0xff]
    %v269 = vld [vmem:[#allocation2 + $0x1c8] sm:$0xff]
    %v270 = vld [vmem:[#allocation2 + $0x1d0] sm:$0xff]
    %v271 = vld [vmem:[#allocation2 + $0x1d8] sm:$0xff]
    %v272 = vld [vmem:[#allocation2 + $0x1e0] sm:$0xff]
    %v273 = vld [vmem:[#allocation2 + $0x1e8] sm:$0xff]
    %v274 = vld [vmem:[#allocation2 + $0x1f0] sm:$0xff]
    %v275 = vld [vmem:[#allocation2 + $0x1f8] sm:$0xff]
    %s276 = smul.u32 4, 128
    %s277 = smul.u32 %s276, 4
    %s278 = sshll.u32 %s277, 4
    %279 = dma.done [#allocation8], %s278
    %v280 = vpack.c.bf16 %v220, %v212
    %v281 = vpack.c.bf16 %v221, %v213
    %v282 = vpack.c.bf16 %v222, %v214
    %v283 = vpack.c.bf16 %v223, %v215
    %v284 = vpack.c.bf16 %v224, %v216
    %v285 = vpack.c.bf16 %v225, %v217
    %v286 = vpack.c.bf16 %v226, %v218
    %v287 = vpack.c.bf16 %v227, %v219
    %v288 = vpack.c.bf16 %v236, %v228
    %v289 = vpack.c.bf16 %v237, %v229
    %v290 = vpack.c.bf16 %v238, %v230
    %v291 = vpack.c.bf16 %v239, %v231
    %v292 = vpack.c.bf16 %v240, %v232
    %v293 = vpack.c.bf16 %v241, %v233
    %v294 = vpack.c.bf16 %v242, %v234
    %v295 = vpack.c.bf16 %v243, %v235
    %v296 = vpack.c.bf16 %v252, %v244
    %v297 = vpack.c.bf16 %v253, %v245
    %v298 = vpack.c.bf16 %v254, %v246
    %v299 = vpack.c.bf16 %v255, %v247
    %v300 = vpack.c.bf16 %v256, %v248
    %v301 = vpack.c.bf16 %v257, %v249
    %v302 = vpack.c.bf16 %v258, %v250
    %v303 = vpack.c.bf16 %v259, %v251
    %v304 = vpack.c.bf16 %v268, %v260
    %v305 = vpack.c.bf16 %v269, %v261
    %v306 = vpack.c.bf16 %v270, %v262
    %v307 = vpack.c.bf16 %v271, %v263
    %v308 = vpack.c.bf16 %v272, %v264
    %v309 = vpack.c.bf16 %v273, %v265
    %v310 = vpack.c.bf16 %v274, %v266
    %v311 = vpack.c.bf16 %v275, %v267
    %v312 = vld [vmem:[#allocation3] sm:$0xff]
    %v313 = vld [vmem:[#allocation3 + $0x8] sm:$0xff]
    %v314 = vld [vmem:[#allocation3 + $0x10] sm:$0xff]
    %v315 = vld [vmem:[#allocation3 + $0x18] sm:$0xff]
    %v316 = vld [vmem:[#allocation3 + $0x20] sm:$0xff]
    %v317 = vld [vmem:[#allocation3 + $0x28] sm:$0xff]
    %v318 = vld [vmem:[#allocation3 + $0x30] sm:$0xff]
    %v319 = vld [vmem:[#allocation3 + $0x38] sm:$0xff]
    %v320 = vld [vmem:[#allocation3 + $0x40] sm:$0xff]
    %v321 = vld [vmem:[#allocation3 + $0x48] sm:$0xff]
    %v322 = vld [vmem:[#allocation3 + $0x50] sm:$0xff]
    %v323 = vld [vmem:[#allocation3 + $0x58] sm:$0xff]
    %v324 = vld [vmem:[#allocation3 + $0x60] sm:$0xff]
    %v325 = vld [vmem:[#allocation3 + $0x68] sm:$0xff]
    %v326 = vld [vmem:[#allocation3 + $0x70] sm:$0xff]
    %v327 = vld [vmem:[#allocation3 + $0x78] sm:$0xff]
    %v328 = vld [vmem:[#allocation3 + $0x80] sm:$0xff]
    %v329 = vld [vmem:[#allocation3 + $0x88] sm:$0xff]
    %v330 = vld [vmem:[#allocation3 + $0x90] sm:$0xff]
    %v331 = vld [vmem:[#allocation3 + $0x98] sm:$0xff]
    %v332 = vld [vmem:[#allocation3 + $0xa0] sm:$0xff]
    %v333 = vld [vmem:[#allocation3 + $0xa8] sm:$0xff]
    %v334 = vld [vmem:[#allocation3 + $0xb0] sm:$0xff]
    %v335 = vld [vmem:[#allocation3 + $0xb8] sm:$0xff]
    %v336 = vld [vmem:[#allocation3 + $0xc0] sm:$0xff]
    %v337 = vld [vmem:[#allocation3 + $0xc8] sm:$0xff]
    %v338 = vld [vmem:[#allocation3 + $0xd0] sm:$0xff]
    %v339 = vld [vmem:[#allocation3 + $0xd8] sm:$0xff]
    %v340 = vld [vmem:[#allocation3 + $0xe0] sm:$0xff]
    %v341 = vld [vmem:[#allocation3 + $0xe8] sm:$0xff]
    %v342 = vld [vmem:[#allocation3 + $0xf0] sm:$0xff]
    %v343 = vld [vmem:[#allocation3 + $0xf8] sm:$0xff]
    %v344 = vld [vmem:[#allocation3 + $0x100] sm:$0xff]
    %v345 = vld [vmem:[#allocation3 + $0x108] sm:$0xff]
    %v346 = vld [vmem:[#allocation3 + $0x110] sm:$0xff]
    %v347 = vld [vmem:[#allocation3 + $0x118] sm:$0xff]
    %v348 = vld [vmem:[#allocation3 + $0x120] sm:$0xff]
    %v349 = vld [vmem:[#allocation3 + $0x128] sm:$0xff]
    %v350 = vld [vmem:[#allocation3 + $0x130] sm:$0xff]
    %v351 = vld [vmem:[#allocation3 + $0x138] sm:$0xff]
    %v352 = vld [vmem:[#allocation3 + $0x140] sm:$0xff]
    %v353 = vld [vmem:[#allocation3 + $0x148] sm:$0xff]
    %v354 = vld [vmem:[#allocation3 + $0x150] sm:$0xff]
    %v355 = vld [vmem:[#allocation3 + $0x158] sm:$0xff]
    %v356 = vld [vmem:[#allocation3 + $0x160] sm:$0xff]
    %v357 = vld [vmem:[#allocation3 + $0x168] sm:$0xff]
    %v358 = vld [vmem:[#allocation3 + $0x170] sm:$0xff]
    %v359 = vld [vmem:[#allocation3 + $0x178] sm:$0xff]
    %v360 = vld [vmem:[#allocation3 + $0x180] sm:$0xff]
    %v361 = vld [vmem:[#allocation3 + $0x188] sm:$0xff]
    %v362 = vld [vmem:[#allocation3 + $0x190] sm:$0xff]
    %v363 = vld [vmem:[#allocation3 + $0x198] sm:$0xff]
    %v364 = vld [vmem:[#allocation3 + $0x1a0] sm:$0xff]
    %v365 = vld [vmem:[#allocation3 + $0x1a8] sm:$0xff]
    %v366 = vld [vmem:[#allocation3 + $0x1b0] sm:$0xff]
    %v367 = vld [vmem:[#allocation3 + $0x1b8] sm:$0xff]
    %v368 = vld [vmem:[#allocation3 + $0x1c0] sm:$0xff]
    %v369 = vld [vmem:[#allocation3 + $0x1c8] sm:$0xff]
    %v370 = vld [vmem:[#allocation3 + $0x1d0] sm:$0xff]
    %v371 = vld [vmem:[#allocation3 + $0x1d8] sm:$0xff]
    %v372 = vld [vmem:[#allocation3 + $0x1e0] sm:$0xff]
    %v373 = vld [vmem:[#allocation3 + $0x1e8] sm:$0xff]
    %v374 = vld [vmem:[#allocation3 + $0x1f0] sm:$0xff]
    %v375 = vld [vmem:[#allocation3 + $0x1f8] sm:$0xff]
    %v376 = vld [vmem:[#allocation3 + $0x200] sm:$0xff]
    %v377 = vld [vmem:[#allocation3 + $0x208] sm:$0xff]
    %v378 = vld [vmem:[#allocation3 + $0x210] sm:$0xff]
    %v379 = vld [vmem:[#allocation3 + $0x218] sm:$0xff]
    %v380 = vld [vmem:[#allocation3 + $0x220] sm:$0xff]
    %v381 = vld [vmem:[#allocation3 + $0x228] sm:$0xff]
    %v382 = vld [vmem:[#allocation3 + $0x230] sm:$0xff]
    %v383 = vld [vmem:[#allocation3 + $0x238] sm:$0xff]
    %v384 = vld [vmem:[#allocation3 + $0x240] sm:$0xff]
    %v385 = vld [vmem:[#allocation3 + $0x248] sm:$0xff]
    %v386 = vld [vmem:[#allocation3 + $0x250] sm:$0xff]
    %v387 = vld [vmem:[#allocation3 + $0x258] sm:$0xff]
    %v388 = vld [vmem:[#allocation3 + $0x260] sm:$0xff]
    %v389 = vld [vmem:[#allocation3 + $0x268] sm:$0xff]
    %v390 = vld [vmem:[#allocation3 + $0x270] sm:$0xff]
    %v391 = vld [vmem:[#allocation3 + $0x278] sm:$0xff]
    %v392 = vld [vmem:[#allocation3 + $0x280] sm:$0xff]
    %v393 = vld [vmem:[#allocation3 + $0x288] sm:$0xff]
    %v394 = vld [vmem:[#allocation3 + $0x290] sm:$0xff]
    %v395 = vld [vmem:[#allocation3 + $0x298] sm:$0xff]
    %v396 = vld [vmem:[#allocation3 + $0x2a0] sm:$0xff]
    %v397 = vld [vmem:[#allocation3 + $0x2a8] sm:$0xff]
    %v398 = vld [vmem:[#allocation3 + $0x2b0] sm:$0xff]
    %v399 = vld [vmem:[#allocation3 + $0x2b8] sm:$0xff]
    %v400 = vld [vmem:[#allocation3 + $0x2c0] sm:$0xff]
    %v401 = vld [vmem:[#allocation3 + $0x2c8] sm:$0xff]
    %v402 = vld [vmem:[#allocation3 + $0x2d0] sm:$0xff]
    %v403 = vld [vmem:[#allocation3 + $0x2d8] sm:$0xff]
    %v404 = vld [vmem:[#allocation3 + $0x2e0] sm:$0xff]
    %v405 = vld [vmem:[#allocation3 + $0x2e8] sm:$0xff]
    %v406 = vld [vmem:[#allocation3 + $0x2f0] sm:$0xff]
    %v407 = vld [vmem:[#allocation3 + $0x2f8] sm:$0xff]
    %v408 = vld [vmem:[#allocation3 + $0x300] sm:$0xff]
    %v409 = vld [vmem:[#allocation3 + $0x308] sm:$0xff]
    %v410 = vld [vmem:[#allocation3 + $0x310] sm:$0xff]
    %v411 = vld [vmem:[#allocation3 + $0x318] sm:$0xff]
    %v412 = vld [vmem:[#allocation3 + $0x320] sm:$0xff]
    %v413 = vld [vmem:[#allocation3 + $0x328] sm:$0xff]
    %v414 = vld [vmem:[#allocation3 + $0x330] sm:$0xff]
    %v415 = vld [vmem:[#allocation3 + $0x338] sm:$0xff]
    %v416 = vld [vmem:[#allocation3 + $0x340] sm:$0xff]
    %v417 = vld [vmem:[#allocation3 + $0x348] sm:$0xff]
    %v418 = vld [vmem:[#allocation3 + $0x350] sm:$0xff]
    %v419 = vld [vmem:[#allocation3 + $0x358] sm:$0xff]
    %v420 = vld [vmem:[#allocation3 + $0x360] sm:$0xff]
    %v421 = vld [vmem:[#allocation3 + $0x368] sm:$0xff]
    %v422 = vld [vmem:[#allocation3 + $0x370] sm:$0xff]
    %v423 = vld [vmem:[#allocation3 + $0x378] sm:$0xff]
    %v424 = vld [vmem:[#allocation3 + $0x380] sm:$0xff]
    %v425 = vld [vmem:[#allocation3 + $0x388] sm:$0xff]
    %v426 = vld [vmem:[#allocation3 + $0x390] sm:$0xff]
    %v427 = vld [vmem:[#allocation3 + $0x398] sm:$0xff]
    %v428 = vld [vmem:[#allocation3 + $0x3a0] sm:$0xff]
    %v429 = vld [vmem:[#allocation3 + $0x3a8] sm:$0xff]
    %v430 = vld [vmem:[#allocation3 + $0x3b0] sm:$0xff]
    %v431 = vld [vmem:[#allocation3 + $0x3b8] sm:$0xff]
    %v432 = vld [vmem:[#allocation3 + $0x3c0] sm:$0xff]
    %v433 = vld [vmem:[#allocation3 + $0x3c8] sm:$0xff]
    %v434 = vld [vmem:[#allocation3 + $0x3d0] sm:$0xff]
    %v435 = vld [vmem:[#allocation3 + $0x3d8] sm:$0xff]
    %v436 = vld [vmem:[#allocation3 + $0x3e0] sm:$0xff]
    %v437 = vld [vmem:[#allocation3 + $0x3e8] sm:$0xff]
    %v438 = vld [vmem:[#allocation3 + $0x3f0] sm:$0xff]
    %v439 = vld [vmem:[#allocation3 + $0x3f8] sm:$0xff]
    %v440 = vld [vmem:[#allocation3 + $0x400] sm:$0xff]
    %v441 = vld [vmem:[#allocation3 + $0x408] sm:$0xff]
    %v442 = vld [vmem:[#allocation3 + $0x410] sm:$0xff]
    %v443 = vld [vmem:[#allocation3 + $0x418] sm:$0xff]
    %v444 = vld [vmem:[#allocation3 + $0x420] sm:$0xff]
    %v445 = vld [vmem:[#allocation3 + $0x428] sm:$0xff]
    %v446 = vld [vmem:[#allocation3 + $0x430] sm:$0xff]
    %v447 = vld [vmem:[#allocation3 + $0x438] sm:$0xff]
    %v448 = vld [vmem:[#allocation3 + $0x440] sm:$0xff]
    %v449 = vld [vmem:[#allocation3 + $0x448] sm:$0xff]
    %v450 = vld [vmem:[#allocation3 + $0x450] sm:$0xff]
    %v451 = vld [vmem:[#allocation3 + $0x458] sm:$0xff]
    %v452 = vld [vmem:[#allocation3 + $0x460] sm:$0xff]
    %v453 = vld [vmem:[#allocation3 + $0x468] sm:$0xff]
    %v454 = vld [vmem:[#allocation3 + $0x470] sm:$0xff]
    %v455 = vld [vmem:[#allocation3 + $0x478] sm:$0xff]
    %v456 = vld [vmem:[#allocation3 + $0x480] sm:$0xff]
    %v457 = vld [vmem:[#allocation3 + $0x488] sm:$0xff]
    %v458 = vld [vmem:[#allocation3 + $0x490] sm:$0xff]
    %v459 = vld [vmem:[#allocation3 + $0x498] sm:$0xff]
    %v460 = vld [vmem:[#allocation3 + $0x4a0] sm:$0xff]
    %v461 = vld [vmem:[#allocation3 + $0x4a8] sm:$0xff]
    %v462 = vld [vmem:[#allocation3 + $0x4b0] sm:$0xff]
    %v463 = vld [vmem:[#allocation3 + $0x4b8] sm:$0xff]
    %v464 = vld [vmem:[#allocation3 + $0x4c0] sm:$0xff]
    %v465 = vld [vmem:[#allocation3 + $0x4c8] sm:$0xff]
    %v466 = vld [vmem:[#allocation3 + $0x4d0] sm:$0xff]
    %v467 = vld [vmem:[#allocation3 + $0x4d8] sm:$0xff]
    %v468 = vld [vmem:[#allocation3 + $0x4e0] sm:$0xff]
    %v469 = vld [vmem:[#allocation3 + $0x4e8] sm:$0xff]
    %v470 = vld [vmem:[#allocation3 + $0x4f0] sm:$0xff]
    %v471 = vld [vmem:[#allocation3 + $0x4f8] sm:$0xff]
    %v472 = vld [vmem:[#allocation3 + $0x500] sm:$0xff]
    %v473 = vld [vmem:[#allocation3 + $0x508] sm:$0xff]
    %v474 = vld [vmem:[#allocation3 + $0x510] sm:$0xff]
    %v475 = vld [vmem:[#allocation3 + $0x518] sm:$0xff]
    %v476 = vld [vmem:[#allocation3 + $0x520] sm:$0xff]
    %v477 = vld [vmem:[#allocation3 + $0x528] sm:$0xff]
    %v478 = vld [vmem:[#allocation3 + $0x530] sm:$0xff]
    %v479 = vld [vmem:[#allocation3 + $0x538] sm:$0xff]
    %v480 = vld [vmem:[#allocation3 + $0x540] sm:$0xff]
    %v481 = vld [vmem:[#allocation3 + $0x548] sm:$0xff]
    %v482 = vld [vmem:[#allocation3 + $0x550] sm:$0xff]
    %v483 = vld [vmem:[#allocation3 + $0x558] sm:$0xff]
    %v484 = vld [vmem:[#allocation3 + $0x560] sm:$0xff]
    %v485 = vld [vmem:[#allocation3 + $0x568] sm:$0xff]
    %v486 = vld [vmem:[#allocation3 + $0x570] sm:$0xff]
    %v487 = vld [vmem:[#allocation3 + $0x578] sm:$0xff]
    %v488 = vld [vmem:[#allocation3 + $0x580] sm:$0xff]
    %v489 = vld [vmem:[#allocation3 + $0x588] sm:$0xff]
    %v490 = vld [vmem:[#allocation3 + $0x590] sm:$0xff]
    %v491 = vld [vmem:[#allocation3 + $0x598] sm:$0xff]
    %v492 = vld [vmem:[#allocation3 + $0x5a0] sm:$0xff]
    %v493 = vld [vmem:[#allocation3 + $0x5a8] sm:$0xff]
    %v494 = vld [vmem:[#allocation3 + $0x5b0] sm:$0xff]
    %v495 = vld [vmem:[#allocation3 + $0x5b8] sm:$0xff]
    %v496 = vld [vmem:[#allocation3 + $0x5c0] sm:$0xff]
    %v497 = vld [vmem:[#allocation3 + $0x5c8] sm:$0xff]
    %v498 = vld [vmem:[#allocation3 + $0x5d0] sm:$0xff]
    %v499 = vld [vmem:[#allocation3 + $0x5d8] sm:$0xff]
    %v500 = vld [vmem:[#allocation3 + $0x5e0] sm:$0xff]
    %v501 = vld [vmem:[#allocation3 + $0x5e8] sm:$0xff]
    %v502 = vld [vmem:[#allocation3 + $0x5f0] sm:$0xff]
    %v503 = vld [vmem:[#allocation3 + $0x5f8] sm:$0xff]
    %v504 = vld [vmem:[#allocation3 + $0x600] sm:$0xff]
    %v505 = vld [vmem:[#allocation3 + $0x608] sm:$0xff]
    %v506 = vld [vmem:[#allocation3 + $0x610] sm:$0xff]
    %v507 = vld [vmem:[#allocation3 + $0x618] sm:$0xff]
    %v508 = vld [vmem:[#allocation3 + $0x620] sm:$0xff]
    %v509 = vld [vmem:[#allocation3 + $0x628] sm:$0xff]
    %v510 = vld [vmem:[#allocation3 + $0x630] sm:$0xff]
    %v511 = vld [vmem:[#allocation3 + $0x638] sm:$0xff]
    %v512 = vld [vmem:[#allocation3 + $0x640] sm:$0xff]
    %v513 = vld [vmem:[#allocation3 + $0x648] sm:$0xff]
    %v514 = vld [vmem:[#allocation3 + $0x650] sm:$0xff]
    %v515 = vld [vmem:[#allocation3 + $0x658] sm:$0xff]
    %v516 = vld [vmem:[#allocation3 + $0x660] sm:$0xff]
    %v517 = vld [vmem:[#allocation3 + $0x668] sm:$0xff]
    %v518 = vld [vmem:[#allocation3 + $0x670] sm:$0xff]
    %v519 = vld [vmem:[#allocation3 + $0x678] sm:$0xff]
    %v520 = vld [vmem:[#allocation3 + $0x680] sm:$0xff]
    %v521 = vld [vmem:[#allocation3 + $0x688] sm:$0xff]
    %v522 = vld [vmem:[#allocation3 + $0x690] sm:$0xff]
    %v523 = vld [vmem:[#allocation3 + $0x698] sm:$0xff]
    %v524 = vld [vmem:[#allocation3 + $0x6a0] sm:$0xff]
    %v525 = vld [vmem:[#allocation3 + $0x6a8] sm:$0xff]
    %v526 = vld [vmem:[#allocation3 + $0x6b0] sm:$0xff]
    %v527 = vld [vmem:[#allocation3 + $0x6b8] sm:$0xff]
    %v528 = vld [vmem:[#allocation3 + $0x6c0] sm:$0xff]
    %v529 = vld [vmem:[#allocation3 + $0x6c8] sm:$0xff]
    %v530 = vld [vmem:[#allocation3 + $0x6d0] sm:$0xff]
    %v531 = vld [vmem:[#allocation3 + $0x6d8] sm:$0xff]
    %v532 = vld [vmem:[#allocation3 + $0x6e0] sm:$0xff]
    %v533 = vld [vmem:[#allocation3 + $0x6e8] sm:$0xff]
    %v534 = vld [vmem:[#allocation3 + $0x6f0] sm:$0xff]
    %v535 = vld [vmem:[#allocation3 + $0x6f8] sm:$0xff]
    %v536 = vld [vmem:[#allocation3 + $0x700] sm:$0xff]
    %v537 = vld [vmem:[#allocation3 + $0x708] sm:$0xff]
    %v538 = vld [vmem:[#allocation3 + $0x710] sm:$0xff]
    %v539 = vld [vmem:[#allocation3 + $0x718] sm:$0xff]
    %v540 = vld [vmem:[#allocation3 + $0x720] sm:$0xff]
    %v541 = vld [vmem:[#allocation3 + $0x728] sm:$0xff]
    %v542 = vld [vmem:[#allocation3 + $0x730] sm:$0xff]
    %v543 = vld [vmem:[#allocation3 + $0x738] sm:$0xff]
    %v544 = vld [vmem:[#allocation3 + $0x740] sm:$0xff]
    %v545 = vld [vmem:[#allocation3 + $0x748] sm:$0xff]
    %v546 = vld [vmem:[#allocation3 + $0x750] sm:$0xff]
    %v547 = vld [vmem:[#allocation3 + $0x758] sm:$0xff]
    %v548 = vld [vmem:[#allocation3 + $0x760] sm:$0xff]
    %v549 = vld [vmem:[#allocation3 + $0x768] sm:$0xff]
    %v550 = vld [vmem:[#allocation3 + $0x770] sm:$0xff]
    %v551 = vld [vmem:[#allocation3 + $0x778] sm:$0xff]
    %v552 = vld [vmem:[#allocation3 + $0x780] sm:$0xff]
    %v553 = vld [vmem:[#allocation3 + $0x788] sm:$0xff]
    %v554 = vld [vmem:[#allocation3 + $0x790] sm:$0xff]
    %v555 = vld [vmem:[#allocation3 + $0x798] sm:$0xff]
    %v556 = vld [vmem:[#allocation3 + $0x7a0] sm:$0xff]
    %v557 = vld [vmem:[#allocation3 + $0x7a8] sm:$0xff]
    %v558 = vld [vmem:[#allocation3 + $0x7b0] sm:$0xff]
    %v559 = vld [vmem:[#allocation3 + $0x7b8] sm:$0xff]
    %v560 = vld [vmem:[#allocation3 + $0x7c0] sm:$0xff]
    %v561 = vld [vmem:[#allocation3 + $0x7c8] sm:$0xff]
    %v562 = vld [vmem:[#allocation3 + $0x7d0] sm:$0xff]
    %v563 = vld [vmem:[#allocation3 + $0x7d8] sm:$0xff]
    %v564 = vld [vmem:[#allocation3 + $0x7e0] sm:$0xff]
    %v565 = vld [vmem:[#allocation3 + $0x7e8] sm:$0xff]
    %v566 = vld [vmem:[#allocation3 + $0x7f0] sm:$0xff]
    %v567 = vld [vmem:[#allocation3 + $0x7f8] sm:$0xff]
    %568 = vmatprep.subr.bf16.mxu0 %v313
    %569 = vmatpush1.bf16.msra.mxu0 %v312
    %570 = vmatprep.subr.bf16.mxu0 %v317
    %571 = vmatpush1.bf16.msra.mxu0 %v316
    %572 = vmatprep.subr.bf16.mxu0 %v321
    %573 = vmatpush1.bf16.msra.mxu0 %v320
    %574 = vmatprep.subr.bf16.mxu0 %v325
    %575 = vmatpush1.bf16.msra.mxu0 %v324
    %576 = vmatprep.subr.bf16.mxu0 %v329
    %577 = vmatpush1.bf16.msra.mxu0 %v328
    %578 = vmatprep.subr.bf16.mxu0 %v333
    %579 = vmatpush1.bf16.msra.mxu0 %v332
    %580 = vmatprep.subr.bf16.mxu0 %v337
    %581 = vmatpush1.bf16.msra.mxu0 %v336
    %582 = vmatprep.subr.bf16.mxu0 %v341
    %583 = vmatpush1.bf16.msra.mxu0 %v340
    %584 = vmatprep.subr.bf16.mxu0 %v345
    %585 = vmatpush1.bf16.msra.mxu0 %v344
    %586 = vmatprep.subr.bf16.mxu0 %v349
    %587 = vmatpush1.bf16.msra.mxu0 %v348
    %588 = vmatprep.subr.bf16.mxu0 %v353
    %589 = vmatpush1.bf16.msra.mxu0 %v352
    %590 = vmatprep.subr.bf16.mxu0 %v357
    %591 = vmatpush1.bf16.msra.mxu0 %v356
    %592 = vmatprep.subr.bf16.mxu0 %v361
    %593 = vmatpush1.bf16.msra.mxu0 %v360
    %594 = vmatprep.subr.bf16.mxu0 %v365
    %595 = vmatpush1.bf16.msra.mxu0 %v364
    %596 = vmatprep.subr.bf16.mxu0 %v369
    %597 = vmatpush1.bf16.msra.mxu0 %v368
    %598 = vmatprep.subr.bf16.mxu0 %v373
    %599 = vmatpush1.bf16.msra.mxu0 %v372
    %600 = vmatprep.mubr.bf16.mxu0 %v281
    %601 = vmatmul.mubr.bf16.gmra.mrb[0].mxu0 %v280
    %v602 = vpop.f32.mrb[0].mxu0
    %v603 = vadd.f32 0.0, %v602
    %v604 = vpop.f32.mrb[0].mxu0
    %v605 = vadd.f32 0.0, %v604
    %v606 = vpop.f32.mrb[0].mxu0
    %v607 = vadd.f32 0.0, %v606
    %v608 = vpop.f32.mrb[0].mxu0
    %v609 = vadd.f32 0.0, %v608
    %610 = vmatprep.mubr.bf16.mxu0 %v289
    %611 = vmatmul.mubr.bf16.gmra.mrb[0].mxu0 %v288
    %v612 = vpop.f32.mrb[0].mxu0
    %v613 = vadd.f32 0.0, %v612
    %v614 = vpop.f32.mrb[0].mxu0
    %v615 = vadd.f32 0.0, %v614
    %v616 = vpop.f32.mrb[0].mxu0
    %v617 = vadd.f32 0.0, %v616
    %v618 = vpop.f32.mrb[0].mxu0
    %v619 = vadd.f32 0.0, %v618
    %620 = vmatprep.mubr.bf16.mxu0 %v297
    %621 = vmatmul.mubr.bf16.gmra.mrb[0].mxu0 %v296
    %v622 = vpop.f32.mrb[0].mxu0
    %v623 = vadd.f32 0.0, %v622
    %v624 = vpop.f32.mrb[0].mxu0
    %v625 = vadd.f32 0.0, %v624
    %v626 = vpop.f32.mrb[0].mxu0
    %v627 = vadd.f32 0.0, %v626
    %v628 = vpop.f32.mrb[0].mxu0
    %v629 = vadd.f32 0.0, %v628
    %630 = vmatprep.mubr.bf16.mxu0 %v305
    %631 = vmatmul.mubr.bf16.gmra.mrb[0].mxu0 %v304
    %v632 = vpop.f32.mrb[0].mxu0
    %v633 = vadd.f32 0.0, %v632
    %v634 = vpop.f32.mrb[0].mxu0
    %v635 = vadd.f32 0.0, %v634
    %v636 = vpop.f32.mrb[0].mxu0
    %v637 = vadd.f32 0.0, %v636
    %v638 = vpop.f32.mrb[0].mxu0
    %v639 = vadd.f32 0.0, %v638
    %640 = vdwg.mxu0
    %641 = vmatprep.subr.bf16.mxu0 %v377
    %642 = vmatpush1.bf16.msra.mxu0 %v376
    %643 = vmatprep.subr.bf16.mxu0 %v381
    %644 = vmatpush1.bf16.msra.mxu0 %v380
    %645 = vmatprep.subr.bf16.mxu0 %v385
    %646 = vmatpush1.bf16.msra.mxu0 %v384
    %647 = vmatprep.subr.bf16.mxu0 %v389
    %648 = vmatpush1.bf16.msra.mxu0 %v388
    %649 = vmatprep.subr.bf16.mxu0 %v393
    %650 = vmatpush1.bf16.msra.mxu0 %v392
    %651 = vmatprep.subr.bf16.mxu0 %v397
    %652 = vmatpush1.bf16.msra.mxu0 %v396
    %653 = vmatprep.subr.bf16.mxu0 %v401
    %654 = vmatpush1.bf16.msra.mxu0 %v400
    %655 = vmatprep.subr.bf16.mxu0 %v405
    %656 = vmatpush1.bf16.msra.mxu0 %v404
    %657 = vmatprep.subr.bf16.mxu0 %v409
    %658 = vmatpush1.bf16.msra.mxu0 %v408
    %659 = vmatprep.subr.bf16.mxu0 %v413
    %660 = vmatpush1.bf16.msra.mxu0 %v412
    %661 = vmatprep.subr.bf16.mxu0 %v417
    %662 = vmatpush1.bf16.msra.mxu0 %v416
    %663 = vmatprep.subr.bf16.mxu0 %v421
    %664 = vmatpush1.bf16.msra.mxu0 %v420
    %665 = vmatprep.subr.bf16.mxu0 %v425
    %666 = vmatpush1.bf16.msra.mxu0 %v424
    %667 = vmatprep.subr.bf16.mxu0 %v429
    %668 = vmatpush1.bf16.msra.mxu0 %v428
    %669 = vmatprep.subr.bf16.mxu0 %v433
    %670 = vmatpush1.bf16.msra.mxu0 %v432
    %671 = vmatprep.subr.bf16.mxu0 %v437
    %672 = vmatpush1.bf16.msra.mxu0 %v436
    %673 = vmatprep.mubr.bf16.mxu0 %v283
    %674 = vmatmul.mubr.bf16.gmra.mrb[0].mxu0 %v282
    %v675 = vpop.f32.mrb[0].mxu0
    %v676 = vadd.f32 %v603, %v675
    %v677 = vpop.f32.mrb[0].mxu0
    %v678 = vadd.f32 %v605, %v677
    %v679 = vpop.f32.mrb[0].mxu0
    %v680 = vadd.f32 %v607, %v679
    %v681 = vpop.f32.mrb[0].mxu0
    %v682 = vadd.f32 %v609, %v681
    %683 = vmatprep.mubr.bf16.mxu0 %v291
    %684 = vmatmul.mubr.bf16.gmra.mrb[0].mxu0 %v290
    %v685 = vpop.f32.mrb[0].mxu0
    %v686 = vadd.f32 %v613, %v685
    %v687 = vpop.f32.mrb[0].mxu0
    %v688 = vadd.f32 %v615, %v687
    %v689 = vpop.f32.mrb[0].mxu0
    %v690 = vadd.f32 %v617, %v689
    %v691 = vpop.f32.mrb[0].mxu0
    %v692 = vadd.f32 %v619, %v691
    %693 = vmatprep.mubr.bf16.mxu0 %v299
    %694 = vmatmul.mubr.bf16.gmra.mrb[0].mxu0 %v298
    %v695 = vpop.f32.mrb[0].mxu0
    %v696 = vadd.f32 %v623, %v695
    %v697 = vpop.f32.mrb[0].mxu0
    %v698 = vadd.f32 %v625, %v697
    %v699 = vpop.f32.mrb[0].mxu0
    %v700 = vadd.f32 %v627, %v699
    %v701 = vpop.f32.mrb[0].mxu0
    %v702 = vadd.f32 %v629, %v701
    %703 = vmatprep.mubr.bf16.mxu0 %v307
    %704 = vmatmul.mubr.bf16.gmra.mrb[0].mxu0 %v306
    %v705 = vpop.f32.mrb[0].mxu0
    %v706 = vadd.f32 %v633, %v705
    %v707 = vpop.f32.mrb[0].mxu0
    %v708 = vadd.f32 %v635, %v707
    %v709 = vpop.f32.mrb[0].mxu0
    %v710 = vadd.f32 %v637, %v709
    %v711 = vpop.f32.mrb[0].mxu0
    %v712 = vadd.f32 %v639, %v711
    %713 = vdwg.mxu0
    %714 = vmatprep.subr.bf16.mxu0 %v441
    %715 = vmatpush1.bf16.msra.mxu0 %v440
    %716 = vmatprep.subr.bf16.mxu0 %v445
    %717 = vmatpush1.bf16.msra.mxu0 %v444
    %718 = vmatprep.subr.bf16.mxu0 %v449
    %719 = vmatpush1.bf16.msra.mxu0 %v448
    %720 = vmatprep.subr.bf16.mxu0 %v453
    %721 = vmatpush1.bf16.msra.mxu0 %v452
    %722 = vmatprep.subr.bf16.mxu0 %v457
    %723 = vmatpush1.bf16.msra.mxu0 %v456
    %724 = vmatprep.subr.bf16.mxu0 %v461
    %725 = vmatpush1.bf16.msra.mxu0 %v460
    %726 = vmatprep.subr.bf16.mxu0 %v465
    %727 = vmatpush1.bf16.msra.mxu0 %v464
    %728 = vmatprep.subr.bf16.mxu0 %v469
    %729 = vmatpush1.bf16.msra.mxu0 %v468
    %730 = vmatprep.subr.bf16.mxu0 %v473
    %731 = vmatpush1.bf16.msra.mxu0 %v472
    %732 = vmatprep.subr.bf16.mxu0 %v477
    %733 = vmatpush1.bf16.msra.mxu0 %v476
    %734 = vmatprep.subr.bf16.mxu0 %v481
    %735 = vmatpush1.bf16.msra.mxu0 %v480
    %736 = vmatprep.subr.bf16.mxu0 %v485
    %737 = vmatpush1.bf16.msra.mxu0 %v484
    %738 = vmatprep.subr.bf16.mxu0 %v489
    %739 = vmatpush1.bf16.msra.mxu0 %v488
    %740 = vmatprep.subr.bf16.mxu0 %v493
    %741 = vmatpush1.bf16.msra.mxu0 %v492
    %742 = vmatprep.subr.bf16.mxu0 %v497
    %743 = vmatpush1.bf16.msra.mxu0 %v496
    %744 = vmatprep.subr.bf16.mxu0 %v501
    %745 = vmatpush1.bf16.msra.mxu0 %v500
    %746 = vmatprep.mubr.bf16.mxu0 %v285
    %747 = vmatmul.mubr.bf16.gmra.mrb[0].mxu0 %v284
    %v748 = vpop.f32.mrb[0].mxu0
    %v749 = vadd.f32 %v676, %v748
    %v750 = vpop.f32.mrb[0].mxu0
    %v751 = vadd.f32 %v678, %v750
    %v752 = vpop.f32.mrb[0].mxu0
    %v753 = vadd.f32 %v680, %v752
    %v754 = vpop.f32.mrb[0].mxu0
    %v755 = vadd.f32 %v682, %v754
    %756 = vmatprep.mubr.bf16.mxu0 %v293
    %757 = vmatmul.mubr.bf16.gmra.mrb[0].mxu0 %v292
    %v758 = vpop.f32.mrb[0].mxu0
    %v759 = vadd.f32 %v686, %v758
    %v760 = vpop.f32.mrb[0].mxu0
    %v761 = vadd.f32 %v688, %v760
    %v762 = vpop.f32.mrb[0].mxu0
    %v763 = vadd.f32 %v690, %v762
    %v764 = vpop.f32.mrb[0].mxu0
    %v765 = vadd.f32 %v692, %v764
    %766 = vmatprep.mubr.bf16.mxu0 %v301
    %767 = vmatmul.mubr.bf16.gmra.mrb[0].mxu0 %v300
    %v768 = vpop.f32.mrb[0].mxu0
    %v769 = vadd.f32 %v696, %v768
    %v770 = vpop.f32.mrb[0].mxu0
    %v771 = vadd.f32 %v698, %v770
    %v772 = vpop.f32.mrb[0].mxu0
    %v773 = vadd.f32 %v700, %v772
    %v774 = vpop.f32.mrb[0].mxu0
    %v775 = vadd.f32 %v702, %v774
    %776 = vmatprep.mubr.bf16.mxu0 %v309
    %777 = vmatmul.mubr.bf16.gmra.mrb[0].mxu0 %v308
    %v778 = vpop.f32.mrb[0].mxu0
    %v779 = vadd.f32 %v706, %v778
    %v780 = vpop.f32.mrb[0].mxu0
    %v781 = vadd.f32 %v708, %v780
    %v782 = vpop.f32.mrb[0].mxu0
    %v783 = vadd.f32 %v710, %v782
    %v784 = vpop.f32.mrb[0].mxu0
    %v785 = vadd.f32 %v712, %v784
    %786 = vdwg.mxu0
    %787 = vmatprep.subr.bf16.mxu0 %v505
    %788 = vmatpush1.bf16.msra.mxu0 %v504
    %789 = vmatprep.subr.bf16.mxu0 %v509
    %790 = vmatpush1.bf16.msra.mxu0 %v508
    %791 = vmatprep.subr.bf16.mxu0 %v513
    %792 = vmatpush1.bf16.msra.mxu0 %v512
    %793 = vmatprep.subr.bf16.mxu0 %v517
    %794 = vmatpush1.bf16.msra.mxu0 %v516
    %795 = vmatprep.subr.bf16.mxu0 %v521
    %796 = vmatpush1.bf16.msra.mxu0 %v520
    %797 = vmatprep.subr.bf16.mxu0 %v525
    %798 = vmatpush1.bf16.msra.mxu0 %v524
    %799 = vmatprep.subr.bf16.mxu0 %v529
    %800 = vmatpush1.bf16.msra.mxu0 %v528
    %801 = vmatprep.subr.bf16.mxu0 %v533
    %802 = vmatpush1.bf16.msra.mxu0 %v532
    %803 = vmatprep.subr.bf16.mxu0 %v537
    %804 = vmatpush1.bf16.msra.mxu0 %v536
    %805 = vmatprep.subr.bf16.mxu0 %v541
    %806 = vmatpush1.bf16.msra.mxu0 %v540
    %807 = vmatprep.subr.bf16.mxu0 %v545
    %808 = vmatpush1.bf16.msra.mxu0 %v544
    %809 = vmatprep.subr.bf16.mxu0 %v549
    %810 = vmatpush1.bf16.msra.mxu0 %v548
    %811 = vmatprep.subr.bf16.mxu0 %v553
    %812 = vmatpush1.bf16.msra.mxu0 %v552
    %813 = vmatprep.subr.bf16.mxu0 %v557
    %814 = vmatpush1.bf16.msra.mxu0 %v556
    %815 = vmatprep.subr.bf16.mxu0 %v561
    %816 = vmatpush1.bf16.msra.mxu0 %v560
    %817 = vmatprep.subr.bf16.mxu0 %v565
    %818 = vmatpush1.bf16.msra.mxu0 %v564
    %819 = vmatprep.mubr.bf16.mxu0 %v287
    %820 = vmatmul.mubr.bf16.gmra.mrb[0].mxu0 %v286
    %v821 = vpop.f32.mrb[0].mxu0
    %v822 = vadd.f32 %v749, %v821
    %v823 = vpop.f32.mrb[0].mxu0
    %v824 = vadd.f32 %v751, %v823
    %v825 = vpop.f32.mrb[0].mxu0
    %v826 = vadd.f32 %v753, %v825
    %v827 = vpop.f32.mrb[0].mxu0
    %v828 = vadd.f32 %v755, %v827
    %829 = vmatprep.mubr.bf16.mxu0 %v295
    %830 = vmatmul.mubr.bf16.gmra.mrb[0].mxu0 %v294
    %v831 = vpop.f32.mrb[0].mxu0
    %v832 = vadd.f32 %v759, %v831
    %v833 = vpop.f32.mrb[0].mxu0
    %v834 = vadd.f32 %v761, %v833
    %v835 = vpop.f32.mrb[0].mxu0
    %v836 = vadd.f32 %v763, %v835
    %v837 = vpop.f32.mrb[0].mxu0
    %v838 = vadd.f32 %v765, %v837
    %839 = vmatprep.mubr.bf16.mxu0 %v303
    %840 = vmatmul.mubr.bf16.gmra.mrb[0].mxu0 %v302
    %v841 = vpop.f32.mrb[0].mxu0
    %v842 = vadd.f32 %v769, %v841
    %v843 = vpop.f32.mrb[0].mxu0
    %v844 = vadd.f32 %v771, %v843
    %v845 = vpop.f32.mrb[0].mxu0
    %v846 = vadd.f32 %v773, %v845
    %v847 = vpop.f32.mrb[0].mxu0
    %v848 = vadd.f32 %v775, %v847
    %849 = vmatprep.mubr.bf16.mxu0 %v311
    %850 = vmatmul.mubr.bf16.gmra.mrb[0].mxu0 %v310
    %v851 = vpop.f32.mrb[0].mxu0
    %v852 = vadd.f32 %v779, %v851
    %v853 = vpop.f32.mrb[0].mxu0
    %v854 = vadd.f32 %v781, %v853
    %v855 = vpop.f32.mrb[0].mxu0
    %v856 = vadd.f32 %v783, %v855
    %v857 = vpop.f32.mrb[0].mxu0
    %v858 = vadd.f32 %v785, %v857
    %859 = vdwg.mxu0
    %860 = vmatprep.subr.bf16.mxu0 %v315
    %861 = vmatpush1.bf16.msra.mxu0 %v314
    %862 = vmatprep.subr.bf16.mxu0 %v319
    %863 = vmatpush1.bf16.msra.mxu0 %v318
    %864 = vmatprep.subr.bf16.mxu0 %v323
    %865 = vmatpush1.bf16.msra.mxu0 %v322
    %866 = vmatprep.subr.bf16.mxu0 %v327
    %867 = vmatpush1.bf16.msra.mxu0 %v326
    %868 = vmatprep.subr.bf16.mxu0 %v331
    %869 = vmatpush1.bf16.msra.mxu0 %v330
    %870 = vmatprep.subr.bf16.mxu0 %v335
    %871 = vmatpush1.bf16.msra.mxu0 %v334
    %872 = vmatprep.subr.bf16.mxu0 %v339
    %873 = vmatpush1.bf16.msra.mxu0 %v338
    %874 = vmatprep.subr.bf16.mxu0 %v343
    %875 = vmatpush1.bf16.msra.mxu0 %v342
    %876 = vmatprep.subr.bf16.mxu0 %v347
    %877 = vmatpush1.bf16.msra.mxu0 %v346
    %878 = vmatprep.subr.bf16.mxu0 %v351
    %879 = vmatpush1.bf16.msra.mxu0 %v350
    %880 = vmatprep.subr.bf16.mxu0 %v355
    %881 = vmatpush1.bf16.msra.mxu0 %v354
    %882 = vmatprep.subr.bf16.mxu0 %v359
    %883 = vmatpush1.bf16.msra.mxu0 %v358
    %884 = vmatprep.subr.bf16.mxu0 %v363
    %885 = vmatpush1.bf16.msra.mxu0 %v362
    %886 = vmatprep.subr.bf16.mxu0 %v367
    %887 = vmatpush1.bf16.msra.mxu0 %v366
    %888 = vmatprep.subr.bf16.mxu0 %v371
    %889 = vmatpush1.bf16.msra.mxu0 %v370
    %890 = vmatprep.subr.bf16.mxu0 %v375
    %891 = vmatpush1.bf16.msra.mxu0 %v374
    %892 = vmatprep.mubr.bf16.mxu0 %v281
    %893 = vmatmul.mubr.bf16.gmra.mrb[0].mxu0 %v280
    %v894 = vpop.f32.mrb[0].mxu0
    %v895 = vadd.f32 0.0, %v894
    %v896 = vpop.f32.mrb[0].mxu0
    %v897 = vadd.f32 0.0, %v896
    %v898 = vpop.f32.mrb[0].mxu0
    %v899 = vadd.f32 0.0, %v898
    %v900 = vpop.f32.mrb[0].mxu0
    %v901 = vadd.f32 0.0, %v900
    %902 = vmatprep.mubr.bf16.mxu0 %v289
    %903 = vmatmul.mubr.bf16.gmra.mrb[0].mxu0 %v288
    %v904 = vpop.f32.mrb[0].mxu0
    %v905 = vadd.f32 0.0, %v904
    %v906 = vpop.f32.mrb[0].mxu0
    %v907 = vadd.f32 0.0, %v906
    %v908 = vpop.f32.mrb[0].mxu0
    %v909 = vadd.f32 0.0, %v908
    %v910 = vpop.f32.mrb[0].mxu0
    %v911 = vadd.f32 0.0, %v910
    %912 = vmatprep.mubr.bf16.mxu0 %v297
    %913 = vmatmul.mubr.bf16.gmra.mrb[0].mxu0 %v296
    %v914 = vpop.f32.mrb[0].mxu0
    %v915 = vadd.f32 0.0, %v914
    %v916 = vpop.f32.mrb[0].mxu0
    %v917 = vadd.f32 0.0, %v916
    %v918 = vpop.f32.mrb[0].mxu0
    %v919 = vadd.f32 0.0, %v918
    %v920 = vpop.f32.mrb[0].mxu0
    %v921 = vadd.f32 0.0, %v920
    %922 = vmatprep.mubr.bf16.mxu0 %v305
    %923 = vmatmul.mubr.bf16.gmra.mrb[0].mxu0 %v304
    %v924 = vpop.f32.mrb[0].mxu0
    %v925 = vadd.f32 0.0, %v924
    %v926 = vpop.f32.mrb[0].mxu0
    %v927 = vadd.f32 0.0, %v926
    %v928 = vpop.f32.mrb[0].mxu0
    %v929 = vadd.f32 0.0, %v928
    %v930 = vpop.f32.mrb[0].mxu0
    %v931 = vadd.f32 0.0, %v930
    %932 = vdwg.mxu0
    %933 = vmatprep.subr.bf16.mxu0 %v379
    %934 = vmatpush1.bf16.msra.mxu0 %v378
    %935 = vmatprep.subr.bf16.mxu0 %v383
    %936 = vmatpush1.bf16.msra.mxu0 %v382
    %937 = vmatprep.subr.bf16.mxu0 %v387
    %938 = vmatpush1.bf16.msra.mxu0 %v386
    %939 = vmatprep.subr.bf16.mxu0 %v391
    %940 = vmatpush1.bf16.msra.mxu0 %v390
    %941 = vmatprep.subr.bf16.mxu0 %v395
    %942 = vmatpush1.bf16.msra.mxu0 %v394
    %943 = vmatprep.subr.bf16.mxu0 %v399
    %944 = vmatpush1.bf16.msra.mxu0 %v398
    %945 = vmatprep.subr.bf16.mxu0 %v403
    %946 = vmatpush1.bf16.msra.mxu0 %v402
    %947 = vmatprep.subr.bf16.mxu0 %v407
    %948 = vmatpush1.bf16.msra.mxu0 %v406
    %949 = vmatprep.subr.bf16.mxu0 %v411
    %950 = vmatpush1.bf16.msra.mxu0 %v410
    %951 = vmatprep.subr.bf16.mxu0 %v415
    %952 = vmatpush1.bf16.msra.mxu0 %v414
    %953 = vmatprep.subr.bf16.mxu0 %v419
    %954 = vmatpush1.bf16.msra.mxu0 %v418
    %955 = vmatprep.subr.bf16.mxu0 %v423
    %956 = vmatpush1.bf16.msra.mxu0 %v422
    %957 = vmatprep.subr.bf16.mxu0 %v427
    %958 = vmatpush1.bf16.msra.mxu0 %v426
    %959 = vmatprep.subr.bf16.mxu0 %v431
    %960 = vmatpush1.bf16.msra.mxu0 %v430
    %961 = vmatprep.subr.bf16.mxu0 %v435
    %962 = vmatpush1.bf16.msra.mxu0 %v434
    %963 = vmatprep.subr.bf16.mxu0 %v439
    %964 = vmatpush1.bf16.msra.mxu0 %v438
    %965 = vmatprep.mubr.bf16.mxu0 %v283
    %966 = vmatmul.mubr.bf16.gmra.mrb[0].mxu0 %v282
    %v967 = vpop.f32.mrb[0].mxu0
    %v968 = vadd.f32 %v895, %v967
    %v969 = vpop.f32.mrb[0].mxu0
    %v970 = vadd.f32 %v897, %v969
    %v971 = vpop.f32.mrb[0].mxu0
    %v972 = vadd.f32 %v899, %v971
    %v973 = vpop.f32.mrb[0].mxu0
    %v974 = vadd.f32 %v901, %v973
    %975 = vmatprep.mubr.bf16.mxu0 %v291
    %976 = vmatmul.mubr.bf16.gmra.mrb[0].mxu0 %v290
    %v977 = vpop.f32.mrb[0].mxu0
    %v978 = vadd.f32 %v905, %v977
    %v979 = vpop.f32.mrb[0].mxu0
    %v980 = vadd.f32 %v907, %v979
    %v981 = vpop.f32.mrb[0].mxu0
    %v982 = vadd.f32 %v909, %v981
    %v983 = vpop.f32.mrb[0].mxu0
    %v984 = vadd.f32 %v911, %v983
    %985 = vmatprep.mubr.bf16.mxu0 %v299
    %986 = vmatmul.mubr.bf16.gmra.mrb[0].mxu0 %v298
    %v987 = vpop.f32.mrb[0].mxu0
    %v988 = vadd.f32 %v915, %v987
    %v989 = vpop.f32.mrb[0].mxu0
    %v990 = vadd.f32 %v917, %v989
    %v991 = vpop.f32.mrb[0].mxu0
    %v992 = vadd.f32 %v919, %v991
    %v993 = vpop.f32.mrb[0].mxu0
    %v994 = vadd.f32 %v921, %v993
    %995 = vmatprep.mubr.bf16.mxu0 %v307
    %996 = vmatmul.mubr.bf16.gmra.mrb[0].mxu0 %v306
    %v997 = vpop.f32.mrb[0].mxu0
    %v998 = vadd.f32 %v925, %v997
    %v999 = vpop.f32.mrb[0].mxu0
    %v1000 = vadd.f32 %v927, %v999
    %v1001 = vpop.f32.mrb[0].mxu0
    %v1002 = vadd.f32 %v929, %v1001
    %v1003 = vpop.f32.mrb[0].mxu0
    %v1004 = vadd.f32 %v931, %v1003
    %1005 = vdwg.mxu0
    %1006 = vmatprep.subr.bf16.mxu0 %v443
    %1007 = vmatpush1.bf16.msra.mxu0 %v442
    %1008 = vmatprep.subr.bf16.mxu0 %v447
    %1009 = vmatpush1.bf16.msra.mxu0 %v446
    %1010 = vmatprep.subr.bf16.mxu0 %v451
    %1011 = vmatpush1.bf16.msra.mxu0 %v450
    %1012 = vmatprep.subr.bf16.mxu0 %v455
    %1013 = vmatpush1.bf16.msra.mxu0 %v454
    %1014 = vmatprep.subr.bf16.mxu0 %v459
    %1015 = vmatpush1.bf16.msra.mxu0 %v458
    %1016 = vmatprep.subr.bf16.mxu0 %v463
    %1017 = vmatpush1.bf16.msra.mxu0 %v462
    %1018 = vmatprep.subr.bf16.mxu0 %v467
    %1019 = vmatpush1.bf16.msra.mxu0 %v466
    %1020 = vmatprep.subr.bf16.mxu0 %v471
    %1021 = vmatpush1.bf16.msra.mxu0 %v470
    %1022 = vmatprep.subr.bf16.mxu0 %v475
    %1023 = vmatpush1.bf16.msra.mxu0 %v474
    %1024 = vmatprep.subr.bf16.mxu0 %v479
    %1025 = vmatpush1.bf16.msra.mxu0 %v478
    %1026 = vmatprep.subr.bf16.mxu0 %v483
    %1027 = vmatpush1.bf16.msra.mxu0 %v482
    %1028 = vmatprep.subr.bf16.mxu0 %v487
    %1029 = vmatpush1.bf16.msra.mxu0 %v486
    %1030 = vmatprep.subr.bf16.mxu0 %v491
    %1031 = vmatpush1.bf16.msra.mxu0 %v490
    %1032 = vmatprep.subr.bf16.mxu0 %v495
    %1033 = vmatpush1.bf16.msra.mxu0 %v494
    %1034 = vmatprep.subr.bf16.mxu0 %v499
    %1035 = vmatpush1.bf16.msra.mxu0 %v498
    %1036 = vmatprep.subr.bf16.mxu0 %v503
    %1037 = vmatpush1.bf16.msra.mxu0 %v502
    %1038 = vmatprep.mubr.bf16.mxu0 %v285
    %1039 = vmatmul.mubr.bf16.gmra.mrb[0].mxu0 %v284
    %v1040 = vpop.f32.mrb[0].mxu0
    %v1041 = vadd.f32 %v968, %v1040
    %v1042 = vpop.f32.mrb[0].mxu0
    %v1043 = vadd.f32 %v970, %v1042
    %v1044 = vpop.f32.mrb[0].mxu0
    %v1045 = vadd.f32 %v972, %v1044
    %v1046 = vpop.f32.mrb[0].mxu0
    %v1047 = vadd.f32 %v974, %v1046
    %1048 = vmatprep.mubr.bf16.mxu0 %v293
    %1049 = vmatmul.mubr.bf16.gmra.mrb[0].mxu0 %v292
    %v1050 = vpop.f32.mrb[0].mxu0
    %v1051 = vadd.f32 %v978, %v1050
    %v1052 = vpop.f32.mrb[0].mxu0
    %v1053 = vadd.f32 %v980, %v1052
    %v1054 = vpop.f32.mrb[0].mxu0
    %v1055 = vadd.f32 %v982, %v1054
    %v1056 = vpop.f32.mrb[0].mxu0
    %v1057 = vadd.f32 %v984, %v1056
    %1058 = vmatprep.mubr.bf16.mxu0 %v301
    %1059 = vmatmul.mubr.bf16.gmra.mrb[0].mxu0 %v300
    %v1060 = vpop.f32.mrb[0].mxu0
    %v1061 = vadd.f32 %v988, %v1060
    %v1062 = vpop.f32.mrb[0].mxu0
    %v1063 = vadd.f32 %v990, %v1062
    %v1064 = vpop.f32.mrb[0].mxu0
    %v1065 = vadd.f32 %v992, %v1064
    %v1066 = vpop.f32.mrb[0].mxu0
    %v1067 = vadd.f32 %v994, %v1066
    %1068 = vmatprep.mubr.bf16.mxu0 %v309
    %1069 = vmatmul.mubr.bf16.gmra.mrb[0].mxu0 %v308
    %v1070 = vpop.f32.mrb[0].mxu0
    %v1071 = vadd.f32 %v998, %v1070
    %v1072 = vpop.f32.mrb[0].mxu0
    %v1073 = vadd.f32 %v1000, %v1072
    %v1074 = vpop.f32.mrb[0].mxu0
    %v1075 = vadd.f32 %v1002, %v1074
    %v1076 = vpop.f32.mrb[0].mxu0
    %v1077 = vadd.f32 %v1004, %v1076
    %1078 = vdwg.mxu0
    %1079 = vmatprep.subr.bf16.mxu0 %v507
    %1080 = vmatpush1.bf16.msra.mxu0 %v506
    %1081 = vmatprep.subr.bf16.mxu0 %v511
    %1082 = vmatpush1.bf16.msra.mxu0 %v510
    %1083 = vmatprep.subr.bf16.mxu0 %v515
    %1084 = vmatpush1.bf16.msra.mxu0 %v514
    %1085 = vmatprep.subr.bf16.mxu0 %v519
    %1086 = vmatpush1.bf16.msra.mxu0 %v518
    %1087 = vmatprep.subr.bf16.mxu0 %v523
    %1088 = vmatpush1.bf16.msra.mxu0 %v522
    %1089 = vmatprep.subr.bf16.mxu0 %v527
    %1090 = vmatpush1.bf16.msra.mxu0 %v526
    %1091 = vmatprep.subr.bf16.mxu0 %v531
    %1092 = vmatpush1.bf16.msra.mxu0 %v530
    %1093 = vmatprep.subr.bf16.mxu0 %v535
    %1094 = vmatpush1.bf16.msra.mxu0 %v534
    %1095 = vmatprep.subr.bf16.mxu0 %v539
    %1096 = vmatpush1.bf16.msra.mxu0 %v538
    %1097 = vmatprep.subr.bf16.mxu0 %v543
    %1098 = vmatpush1.bf16.msra.mxu0 %v542
    %1099 = vmatprep.subr.bf16.mxu0 %v547
    %1100 = vmatpush1.bf16.msra.mxu0 %v546
    %1101 = vmatprep.subr.bf16.mxu0 %v551
    %1102 = vmatpush1.bf16.msra.mxu0 %v550
    %1103 = vmatprep.subr.bf16.mxu0 %v555
    %1104 = vmatpush1.bf16.msra.mxu0 %v554
    %1105 = vmatprep.subr.bf16.mxu0 %v559
    %1106 = vmatpush1.bf16.msra.mxu0 %v558
    %1107 = vmatprep.subr.bf16.mxu0 %v563
    %1108 = vmatpush1.bf16.msra.mxu0 %v562
    %1109 = vmatprep.subr.bf16.mxu0 %v567
    %1110 = vmatpush1.bf16.msra.mxu0 %v566
    %1111 = vmatprep.mubr.bf16.mxu0 %v287
    %1112 = vmatmul.mubr.bf16.gmra.mrb[0].mxu0 %v286
    %v1113 = vpop.f32.mrb[0].mxu0
    %v1114 = vadd.f32 %v1041, %v1113
    %v1115 = vpop.f32.mrb[0].mxu0
    %v1116 = vadd.f32 %v1043, %v1115
    %v1117 = vpop.f32.mrb[0].mxu0
    %v1118 = vadd.f32 %v1045, %v1117
    %v1119 = vpop.f32.mrb[0].mxu0
    %v1120 = vadd.f32 %v1047, %v1119
    %1121 = vmatprep.mubr.bf16.mxu0 %v295
    %1122 = vmatmul.mubr.bf16.gmra.mrb[0].mxu0 %v294
    %v1123 = vpop.f32.mrb[0].mxu0
    %v1124 = vadd.f32 %v1051, %v1123
    %v1125 = vpop.f32.mrb[0].mxu0
    %v1126 = vadd.f32 %v1053, %v1125
    %v1127 = vpop.f32.mrb[0].mxu0
    %v1128 = vadd.f32 %v1055, %v1127
    %v1129 = vpop.f32.mrb[0].mxu0
    %v1130 = vadd.f32 %v1057, %v1129
    %1131 = vmatprep.mubr.bf16.mxu0 %v303
    %1132 = vmatmul.mubr.bf16.gmra.mrb[0].mxu0 %v302
    %v1133 = vpop.f32.mrb[0].mxu0
    %v1134 = vadd.f32 %v1061, %v1133
    %v1135 = vpop.f32.mrb[0].mxu0
    %v1136 = vadd.f32 %v1063, %v1135
    %v1137 = vpop.f32.mrb[0].mxu0
    %v1138 = vadd.f32 %v1065, %v1137
    %v1139 = vpop.f32.mrb[0].mxu0
    %v1140 = vadd.f32 %v1067, %v1139
    %1141 = vmatprep.mubr.bf16.mxu0 %v311
    %1142 = vmatmul.mubr.bf16.gmra.mrb[0].mxu0 %v310
    %v1143 = vpop.f32.mrb[0].mxu0
    %v1144 = vadd.f32 %v1071, %v1143
    %v1145 = vpop.f32.mrb[0].mxu0
    %v1146 = vadd.f32 %v1073, %v1145
    %v1147 = vpop.f32.mrb[0].mxu0
    %v1148 = vadd.f32 %v1075, %v1147
    %v1149 = vpop.f32.mrb[0].mxu0
    %v1150 = vadd.f32 %v1077, %v1149
    %1151 = vdwg.mxu0
    %v1152 = vadd.f32 %v822, %v826
    %v1153 = vadd.f32 %v1152, %v832
    %v1154 = vadd.f32 %v1153, %v836
    %v1155 = vadd.f32 %v1154, %v842
    %v1156 = vadd.f32 %v1155, %v846
    %v1157 = vadd.f32 %v1156, %v852
    %v1158 = vadd.f32 %v1157, %v856
    %v1159 = vrot.slane %v1158, 4
    %v1160 = vadd.f32 %v1158, %v1159
    %v1161 = vrot.slane %v1160, 2
    %v1162 = vadd.f32 %v1160, %v1161
    %v1163 = vrot.slane %v1162, 1
    %v1164 = vadd.f32 %v1162, %v1163
    %v1165 = vadd.f32 %v824, %v828
    %v1166 = vadd.f32 %v1165, %v834
    %v1167 = vadd.f32 %v1166, %v838
    %v1168 = vadd.f32 %v1167, %v844
    %v1169 = vadd.f32 %v1168, %v848
    %v1170 = vadd.f32 %v1169, %v854
    %v1171 = vadd.f32 %v1170, %v858
    %v1172 = vrot.slane %v1171, 4
    %v1173 = vadd.f32 %v1171, %v1172
    %v1174 = vrot.slane %v1173, 2
    %v1175 = vadd.f32 %v1173, %v1174
    %v1176 = vrot.slane %v1175, 1
    %v1177 = vadd.f32 %v1175, %v1176
    %v1178 = vadd.f32 %v1114, %v1118
    %v1179 = vadd.f32 %v1178, %v1124
    %v1180 = vadd.f32 %v1179, %v1128
    %v1181 = vadd.f32 %v1180, %v1134
    %v1182 = vadd.f32 %v1181, %v1138
    %v1183 = vadd.f32 %v1182, %v1144
    %v1184 = vadd.f32 %v1183, %v1148
    %v1185 = vrot.slane %v1184, 4
    %v1186 = vadd.f32 %v1184, %v1185
    %v1187 = vrot.slane %v1186, 2
    %v1188 = vadd.f32 %v1186, %v1187
    %v1189 = vrot.slane %v1188, 1
    %v1190 = vadd.f32 %v1188, %v1189
    %v1191 = vadd.f32 %v1116, %v1120
    %v1192 = vadd.f32 %v1191, %v1126
    %v1193 = vadd.f32 %v1192, %v1130
    %v1194 = vadd.f32 %v1193, %v1136
    %v1195 = vadd.f32 %v1194, %v1140
    %v1196 = vadd.f32 %v1195, %v1146
    %v1197 = vadd.f32 %v1196, %v1150
    %v1198 = vrot.slane %v1197, 4
    %v1199 = vadd.f32 %v1197, %v1198
    %v1200 = vrot.slane %v1199, 2
    %v1201 = vadd.f32 %v1199, %v1200
    %v1202 = vrot.slane %v1201, 1
    %v1203 = vadd.f32 %v1201, %v1202
    %v1204 = vmul.f32 %v1164, 0.015625
    %v1205 = vmul.f32 %v1177, 0.015625
    %v1206 = vmul.f32 %v1190, 0.015625
    %v1207 = vmul.f32 %v1203, 0.015625
    %v1208 = vmul.f32 %v822, %v822
    %v1209 = vmul.f32 %v824, %v824
    %v1210 = vmul.f32 %v1114, %v1114
    %v1211 = vmul.f32 %v1116, %v1116
    %v1212 = vmul.f32 %v826, %v826
    %v1213 = vmul.f32 %v828, %v828
    %v1214 = vmul.f32 %v1118, %v1118
    %v1215 = vmul.f32 %v1120, %v1120
    %v1216 = vmul.f32 %v832, %v832
    %v1217 = vmul.f32 %v834, %v834
    %v1218 = vmul.f32 %v1124, %v1124
    %v1219 = vmul.f32 %v1126, %v1126
    %v1220 = vmul.f32 %v836, %v836
    %v1221 = vmul.f32 %v838, %v838
    %v1222 = vmul.f32 %v1128, %v1128
    %v1223 = vmul.f32 %v1130, %v1130
    %v1224 = vmul.f32 %v842, %v842
    %v1225 = vmul.f32 %v844, %v844
    %v1226 = vmul.f32 %v1134, %v1134
    %v1227 = vmul.f32 %v1136, %v1136
    %v1228 = vmul.f32 %v846, %v846
    %v1229 = vmul.f32 %v848, %v848
    %v1230 = vmul.f32 %v1138, %v1138
    %v1231 = vmul.f32 %v1140, %v1140
    %v1232 = vmul.f32 %v852, %v852
    %v1233 = vmul.f32 %v854, %v854
    %v1234 = vmul.f32 %v1144, %v1144
    %v1235 = vmul.f32 %v1146, %v1146
    %v1236 = vmul.f32 %v856, %v856
    %v1237 = vmul.f32 %v858, %v858
    %v1238 = vmul.f32 %v1148, %v1148
    %v1239 = vmul.f32 %v1150, %v1150
    %v1240 = vadd.f32 %v1208, %v1212
    %v1241 = vadd.f32 %v1240, %v1216
    %v1242 = vadd.f32 %v1241, %v1220
    %v1243 = vadd.f32 %v1242, %v1224
    %v1244 = vadd.f32 %v1243, %v1228
    %v1245 = vadd.f32 %v1244, %v1232
    %v1246 = vadd.f32 %v1245, %v1236
    %v1247 = vrot.slane %v1246, 4
    %v1248 = vadd.f32 %v1246, %v1247
    %v1249 = vrot.slane %v1248, 2
    %v1250 = vadd.f32 %v1248, %v1249
    %v1251 = vrot.slane %v1250, 1
    %v1252 = vadd.f32 %v1250, %v1251
    %v1253 = vadd.f32 %v1209, %v1213
    %v1254 = vadd.f32 %v1253, %v1217
    %v1255 = vadd.f32 %v1254, %v1221
    %v1256 = vadd.f32 %v1255, %v1225
    %v1257 = vadd.f32 %v1256, %v1229
    %v1258 = vadd.f32 %v1257, %v1233
    %v1259 = vadd.f32 %v1258, %v1237
    %v1260 = vrot.slane %v1259, 4
    %v1261 = vadd.f32 %v1259, %v1260
    %v1262 = vrot.slane %v1261, 2
    %v1263 = vadd.f32 %v1261, %v1262
    %v1264 = vrot.slane %v1263, 1
    %v1265 = vadd.f32 %v1263, %v1264
    %v1266 = vadd.f32 %v1210, %v1214
    %v1267 = vadd.f32 %v1266, %v1218
    %v1268 = vadd.f32 %v1267, %v1222
    %v1269 = vadd.f32 %v1268, %v1226
    %v1270 = vadd.f32 %v1269, %v1230
    %v1271 = vadd.f32 %v1270, %v1234
    %v1272 = vadd.f32 %v1271, %v1238
    %v1273 = vrot.slane %v1272, 4
    %v1274 = vadd.f32 %v1272, %v1273
    %v1275 = vrot.slane %v1274, 2
    %v1276 = vadd.f32 %v1274, %v1275
    %v1277 = vrot.slane %v1276, 1
    %v1278 = vadd.f32 %v1276, %v1277
    %v1279 = vadd.f32 %v1211, %v1215
    %v1280 = vadd.f32 %v1279, %v1219
    %v1281 = vadd.f32 %v1280, %v1223
    %v1282 = vadd.f32 %v1281, %v1227
    %v1283 = vadd.f32 %v1282, %v1231
    %v1284 = vadd.f32 %v1283, %v1235
    %v1285 = vadd.f32 %v1284, %v1239
    %v1286 = vrot.slane %v1285, 4
    %v1287 = vadd.f32 %v1285, %v1286
    %v1288 = vrot.slane %v1287, 2
    %v1289 = vadd.f32 %v1287, %v1288
    %v1290 = vrot.slane %v1289, 1
    %v1291 = vadd.f32 %v1289, %v1290
    %v1292 = vmul.f32 %v1252, 0.015625
    %v1293 = vmul.f32 %v1265, 0.015625
    %v1294 = vmul.f32 %v1278, 0.015625
    %v1295 = vmul.f32 %v1291, 0.015625
    %v1296 = vmul.f32 %v1204, %v1204
    %v1297 = vmul.f32 %v1205, %v1205
    %v1298 = vmul.f32 %v1206, %v1206
    %v1299 = vmul.f32 %v1207, %v1207
    %v1300 = vsub.f32 %v1292, %v1296
    %v1301 = vsub.f32 %v1293, %v1297
    %v1302 = vsub.f32 %v1294, %v1298
    %v1303 = vsub.f32 %v1295, %v1299
    %v1304 = vadd.f32 %v1300, 1e-05
    %v1305 = vadd.f32 %v1301, 1e-05
    %v1306 = vadd.f32 %v1302, 1e-05
    %v1307 = vadd.f32 %v1303, 1e-05
    %v1308 = vrsqrt.pop %v1304
    %v1309 = vrsqrt.pop %v1305
    %v1310 = vrsqrt.pop %v1306
    %v1311 = vrsqrt.pop %v1307
    %v1316 = vcombine.low %v1308, %v1309
    %v1317 = vcombine.low %v1310, %v1311
    %v1319 = vunpack.c.l.s4 1983009808
    %v1320 = vunpack.c.0.s8 %v1319
    %v1321 = vlaneseq
    %v1322 = vshrl.u32 %v1321, 7
    %v1323 = vsub.s32 %v1320, %v1322
    %v1324 = vrot.slane %v1316, %v1323
    %v1326 = vunpack.c.l.s4 1983009808
    %v1327 = vunpack.c.0.s8 %v1326
    %v1328 = vlaneseq
    %v1329 = vshrl.u32 %v1328, 7
    %v1330 = vsub.s32 %v1327, %v1329
    %v1331 = vrot.slane %v1317, %v1330
    %v1332 = vcombine.low %v1324, %v1331
    %v1334 = vmul.f32 %v206, %v1332
    %v1335 = vsub.f32 %v822, %v1204
    %v1336 = vsub.f32 %v824, %v1205
    %v1337 = vsub.f32 %v1114, %v1206
    %v1338 = vsub.f32 %v1116, %v1207
    %v1339 = vsub.f32 %v826, %v1204
    %v1340 = vsub.f32 %v828, %v1205
    %v1341 = vsub.f32 %v1118, %v1206
    %v1342 = vsub.f32 %v1120, %v1207
    %v1343 = vsub.f32 %v832, %v1204
    %v1344 = vsub.f32 %v834, %v1205
    %v1345 = vsub.f32 %v1124, %v1206
    %v1346 = vsub.f32 %v1126, %v1207
    %v1347 = vsub.f32 %v836, %v1204
    %v1348 = vsub.f32 %v838, %v1205
    %v1349 = vsub.f32 %v1128, %v1206
    %v1350 = vsub.f32 %v1130, %v1207
    %v1351 = vsub.f32 %v842, %v1204
    %v1352 = vsub.f32 %v844, %v1205
    %v1353 = vsub.f32 %v1134, %v1206
    %v1354 = vsub.f32 %v1136, %v1207
    %v1355 = vsub.f32 %v846, %v1204
    %v1356 = vsub.f32 %v848, %v1205
    %v1357 = vsub.f32 %v1138, %v1206
    %v1358 = vsub.f32 %v1140, %v1207
    %v1359 = vsub.f32 %v852, %v1204
    %v1360 = vsub.f32 %v854, %v1205
    %v1361 = vsub.f32 %v1144, %v1206
    %v1362 = vsub.f32 %v1146, %v1207
    %v1363 = vsub.f32 %v856, %v1204
    %v1364 = vsub.f32 %v858, %v1205
    %v1365 = vsub.f32 %v1148, %v1206
    %v1366 = vsub.f32 %v1150, %v1207
    %v1368 = vlaneseq
    %v1369 = vshrl.u32 %v1368, 7
    %v1370 = vsub.s32 0, %v1369
    %v1371 = vrot.slane %v1334, %v1370
    %v1372 = vlaneseq
    %v1373 = vshrl.u32 %v1372, 7
    %v1374 = vsub.s32 2, %v1373
    %v1375 = vrot.slane %v1334, %v1374
    %v1376 = vlaneseq
    %v1377 = vshrl.u32 %v1376, 7
    %v1378 = vsub.s32 4, %v1377
    %v1379 = vrot.slane %v1334, %v1378
    %v1380 = vlaneseq
    %v1381 = vshrl.u32 %v1380, 7
    %v1382 = vsub.s32 6, %v1381
    %v1383 = vrot.slane %v1334, %v1382
    %v1388 = vlaneseq
    %v1389 = vshrl.u32 %v1388, 7
    %v1390 = vsub.s32 0, %v1389
    %v1391 = vrot.slane %v1371, %v1390
    %v1392 = vlaneseq
    %v1393 = vshrl.u32 %v1392, 7
    %v1394 = vsub.s32 0, %v1393
    %v1395 = vrot.slane %v1375, %v1394
    %v1396 = vlaneseq
    %v1397 = vshrl.u32 %v1396, 7
    %v1398 = vsub.s32 0, %v1397
    %v1399 = vrot.slane %v1379, %v1398
    %v1400 = vlaneseq
    %v1401 = vshrl.u32 %v1400, 7
    %v1402 = vsub.s32 0, %v1401
    %v1403 = vrot.slane %v1383, %v1402
    %v1404 = vmul.f32 %v1335, %v1391
    %v1405 = vmul.f32 %v1336, %v1395
    %v1406 = vmul.f32 %v1337, %v1399
    %v1407 = vmul.f32 %v1338, %v1403
    %v1408 = vmul.f32 %v1339, %v1391
    %v1409 = vmul.f32 %v1340, %v1395
    %v1410 = vmul.f32 %v1341, %v1399
    %v1411 = vmul.f32 %v1342, %v1403
    %v1412 = vmul.f32 %v1343, %v1391
    %v1413 = vmul.f32 %v1344, %v1395
    %v1414 = vmul.f32 %v1345, %v1399
    %v1415 = vmul.f32 %v1346, %v1403
    %v1416 = vmul.f32 %v1347, %v1391
    %v1417 = vmul.f32 %v1348, %v1395
    %v1418 = vmul.f32 %v1349, %v1399
    %v1419 = vmul.f32 %v1350, %v1403
    %v1420 = vmul.f32 %v1351, %v1391
    %v1421 = vmul.f32 %v1352, %v1395
    %v1422 = vmul.f32 %v1353, %v1399
    %v1423 = vmul.f32 %v1354, %v1403
    %v1424 = vmul.f32 %v1355, %v1391
    %v1425 = vmul.f32 %v1356, %v1395
    %v1426 = vmul.f32 %v1357, %v1399
    %v1427 = vmul.f32 %v1358, %v1403
    %v1428 = vmul.f32 %v1359, %v1391
    %v1429 = vmul.f32 %v1360, %v1395
    %v1430 = vmul.f32 %v1361, %v1399
    %v1431 = vmul.f32 %v1362, %v1403
    %v1432 = vmul.f32 %v1363, %v1391
    %v1433 = vmul.f32 %v1364, %v1395
    %v1434 = vmul.f32 %v1365, %v1399
    %v1435 = vmul.f32 %v1366, %v1403
    %v1437 = vlaneseq
    %v1438 = vshrl.u32 %v1437, 7
    %v1439 = vsub.s32 1, %v1438
    %v1440 = vrot.slane %v206, %v1439
    %v1441 = vlaneseq
    %v1442 = vshrl.u32 %v1441, 7
    %v1443 = vsub.s32 3, %v1442
    %v1444 = vrot.slane %v206, %v1443
    %v1445 = vlaneseq
    %v1446 = vshrl.u32 %v1445, 7
    %v1447 = vsub.s32 5, %v1446
    %v1448 = vrot.slane %v206, %v1447
    %v1449 = vlaneseq
    %v1450 = vshrl.u32 %v1449, 7
    %v1451 = vsub.s32 7, %v1450
    %v1452 = vrot.slane %v206, %v1451
    %v1457 = vlaneseq
    %v1458 = vshrl.u32 %v1457, 7
    %v1459 = vsub.s32 1, %v1458
    %v1460 = vrot.slane %v1440, %v1459
    %v1461 = vlaneseq
    %v1462 = vshrl.u32 %v1461, 7
    %v1463 = vsub.s32 1, %v1462
    %v1464 = vrot.slane %v1444, %v1463
    %v1465 = vlaneseq
    %v1466 = vshrl.u32 %v1465, 7
    %v1467 = vsub.s32 1, %v1466
    %v1468 = vrot.slane %v1448, %v1467
    %v1469 = vlaneseq
    %v1470 = vshrl.u32 %v1469, 7
    %v1471 = vsub.s32 1, %v1470
    %v1472 = vrot.slane %v1452, %v1471
    %v1473 = vadd.f32 %v1404, %v1460
    %v1474 = vadd.f32 %v1405, %v1464
    %v1475 = vadd.f32 %v1406, %v1468
    %v1476 = vadd.f32 %v1407, %v1472
    %v1477 = vadd.f32 %v1408, %v1460
    %v1478 = vadd.f32 %v1409, %v1464
    %v1479 = vadd.f32 %v1410, %v1468
    %v1480 = vadd.f32 %v1411, %v1472
    %v1481 = vadd.f32 %v1412, %v1460
    %v1482 = vadd.f32 %v1413, %v1464
    %v1483 = vadd.f32 %v1414, %v1468
    %v1484 = vadd.f32 %v1415, %v1472
    %v1485 = vadd.f32 %v1416, %v1460
    %v1486 = vadd.f32 %v1417, %v1464
    %v1487 = vadd.f32 %v1418, %v1468
    %v1488 = vadd.f32 %v1419, %v1472
    %v1489 = vadd.f32 %v1420, %v1460
    %v1490 = vadd.f32 %v1421, %v1464
    %v1491 = vadd.f32 %v1422, %v1468
    %v1492 = vadd.f32 %v1423, %v1472
    %v1493 = vadd.f32 %v1424, %v1460
    %v1494 = vadd.f32 %v1425, %v1464
    %v1495 = vadd.f32 %v1426, %v1468
    %v1496 = vadd.f32 %v1427, %v1472
    %v1497 = vadd.f32 %v1428, %v1460
    %v1498 = vadd.f32 %v1429, %v1464
    %v1499 = vadd.f32 %v1430, %v1468
    %v1500 = vadd.f32 %v1431, %v1472
    %v1501 = vadd.f32 %v1432, %v1460
    %v1502 = vadd.f32 %v1433, %v1464
    %v1503 = vadd.f32 %v1434, %v1468
    %v1504 = vadd.f32 %v1435, %v1472
    %v1505 = vmul.f32 %v1473, 0.02
    %v1506 = vmul.f32 %v1474, 0.02
    %v1507 = vmul.f32 %v1475, 0.02
    %v1508 = vmul.f32 %v1476, 0.02
    %v1509 = vmul.f32 %v1477, 0.02
    %v1510 = vmul.f32 %v1478, 0.02
    %v1511 = vmul.f32 %v1479, 0.02
    %v1512 = vmul.f32 %v1480, 0.02
    %v1513 = vmul.f32 %v1481, 0.02
    %v1514 = vmul.f32 %v1482, 0.02
    %v1515 = vmul.f32 %v1483, 0.02
    %v1516 = vmul.f32 %v1484, 0.02
    %v1517 = vmul.f32 %v1485, 0.02
    %v1518 = vmul.f32 %v1486, 0.02
    %v1519 = vmul.f32 %v1487, 0.02
    %v1520 = vmul.f32 %v1488, 0.02
    %v1521 = vmul.f32 %v1489, 0.02
    %v1522 = vmul.f32 %v1490, 0.02
    %v1523 = vmul.f32 %v1491, 0.02
    %v1524 = vmul.f32 %v1492, 0.02
    %v1525 = vmul.f32 %v1493, 0.02
    %v1526 = vmul.f32 %v1494, 0.02
    %v1527 = vmul.f32 %v1495, 0.02
    %v1528 = vmul.f32 %v1496, 0.02
    %v1529 = vmul.f32 %v1497, 0.02
    %v1530 = vmul.f32 %v1498, 0.02
    %v1531 = vmul.f32 %v1499, 0.02
    %v1532 = vmul.f32 %v1500, 0.02
    %v1533 = vmul.f32 %v1501, 0.02
    %v1534 = vmul.f32 %v1502, 0.02
    %v1535 = vmul.f32 %v1503, 0.02
    %v1536 = vmul.f32 %v1504, 0.02
    %v1537 = vmax.f32 %v1473, %v1505
    %v1538 = vmax.f32 %v1474, %v1506
    %v1539 = vmax.f32 %v1475, %v1507
    %v1540 = vmax.f32 %v1476, %v1508
    %v1541 = vmax.f32 %v1477, %v1509
    %v1542 = vmax.f32 %v1478, %v1510
    %v1543 = vmax.f32 %v1479, %v1511
    %v1544 = vmax.f32 %v1480, %v1512
    %v1545 = vmax.f32 %v1481, %v1513
    %v1546 = vmax.f32 %v1482, %v1514
    %v1547 = vmax.f32 %v1483, %v1515
    %v1548 = vmax.f32 %v1484, %v1516
    %v1549 = vmax.f32 %v1485, %v1517
    %v1550 = vmax.f32 %v1486, %v1518
    %v1551 = vmax.f32 %v1487, %v1519
    %v1552 = vmax.f32 %v1488, %v1520
    %v1553 = vmax.f32 %v1489, %v1521
    %v1554 = vmax.f32 %v1490, %v1522
    %v1555 = vmax.f32 %v1491, %v1523
    %v1556 = vmax.f32 %v1492, %v1524
    %v1557 = vmax.f32 %v1493, %v1525
    %v1558 = vmax.f32 %v1494, %v1526
    %v1559 = vmax.f32 %v1495, %v1527
    %v1560 = vmax.f32 %v1496, %v1528
    %v1561 = vmax.f32 %v1497, %v1529
    %v1562 = vmax.f32 %v1498, %v1530
    %v1563 = vmax.f32 %v1499, %v1531
    %v1564 = vmax.f32 %v1500, %v1532
    %v1565 = vmax.f32 %v1501, %v1533
    %v1566 = vmax.f32 %v1502, %v1534
    %v1567 = vmax.f32 %v1503, %v1535
    %v1568 = vmax.f32 %v1504, %v1536
    %s1569 = smul.u32 4, 64
    %s1570 = smul.u32 %s1569, 4
    %s1571 = sshll.u32 %s1570, 4
    %1572 = dma.done %s66, %s1571
    %v1573 = vpack.c.bf16 %v1541, %v1537
    %v1574 = vpack.c.bf16 %v1542, %v1538
    %v1575 = vpack.c.bf16 %v1543, %v1539
    %v1576 = vpack.c.bf16 %v1544, %v1540
    %v1577 = vpack.c.bf16 %v1549, %v1545
    %v1578 = vpack.c.bf16 %v1550, %v1546
    %v1579 = vpack.c.bf16 %v1551, %v1547
    %v1580 = vpack.c.bf16 %v1552, %v1548
    %v1581 = vpack.c.bf16 %v1557, %v1553
    %v1582 = vpack.c.bf16 %v1558, %v1554
    %v1583 = vpack.c.bf16 %v1559, %v1555
    %v1584 = vpack.c.bf16 %v1560, %v1556
    %v1585 = vpack.c.bf16 %v1565, %v1561
    %v1586 = vpack.c.bf16 %v1566, %v1562
    %v1587 = vpack.c.bf16 %v1567, %v1563
    %v1588 = vpack.c.bf16 %v1568, %v1564
    %v1589 = vld [vmem:[#allocation4] sm:$0xff]
    %v1590 = vld [vmem:[#allocation4 + $0x8] sm:$0xff]
    %v1591 = vld [vmem:[#allocation4 + $0x10] sm:$0xff]
    %v1592 = vld [vmem:[#allocation4 + $0x18] sm:$0xff]
    %v1593 = vld [vmem:[#allocation4 + $0x20] sm:$0xff]
    %v1594 = vld [vmem:[#allocation4 + $0x28] sm:$0xff]
    %v1595 = vld [vmem:[#allocation4 + $0x30] sm:$0xff]
    %v1596 = vld [vmem:[#allocation4 + $0x38] sm:$0xff]
    %v1597 = vld [vmem:[#allocation4 + $0x40] sm:$0xff]
    %v1598 = vld [vmem:[#allocation4 + $0x48] sm:$0xff]
    %v1599 = vld [vmem:[#allocation4 + $0x50] sm:$0xff]
    %v1600 = vld [vmem:[#allocation4 + $0x58] sm:$0xff]
    %v1601 = vld [vmem:[#allocation4 + $0x60] sm:$0xff]
    %v1602 = vld [vmem:[#allocation4 + $0x68] sm:$0xff]
    %v1603 = vld [vmem:[#allocation4 + $0x70] sm:$0xff]
    %v1604 = vld [vmem:[#allocation4 + $0x78] sm:$0xff]
    %v1605 = vld [vmem:[#allocation4 + $0x80] sm:$0xff]
    %v1606 = vld [vmem:[#allocation4 + $0x88] sm:$0xff]
    %v1607 = vld [vmem:[#allocation4 + $0x90] sm:$0xff]
    %v1608 = vld [vmem:[#allocation4 + $0x98] sm:$0xff]
    %v1609 = vld [vmem:[#allocation4 + $0xa0] sm:$0xff]
    %v1610 = vld [vmem:[#allocation4 + $0xa8] sm:$0xff]
    %v1611 = vld [vmem:[#allocation4 + $0xb0] sm:$0xff]
    %v1612 = vld [vmem:[#allocation4 + $0xb8] sm:$0xff]
    %v1613 = vld [vmem:[#allocation4 + $0xc0] sm:$0xff]
    %v1614 = vld [vmem:[#allocation4 + $0xc8] sm:$0xff]
    %v1615 = vld [vmem:[#allocation4 + $0xd0] sm:$0xff]
    %v1616 = vld [vmem:[#allocation4 + $0xd8] sm:$0xff]
    %v1617 = vld [vmem:[#allocation4 + $0xe0] sm:$0xff]
    %v1618 = vld [vmem:[#allocation4 + $0xe8] sm:$0xff]
    %v1619 = vld [vmem:[#allocation4 + $0xf0] sm:$0xff]
    %v1620 = vld [vmem:[#allocation4 + $0xf8] sm:$0xff]
    %v1621 = vld [vmem:[#allocation4 + $0x100] sm:$0xff]
    %v1622 = vld [vmem:[#allocation4 + $0x108] sm:$0xff]
    %v1623 = vld [vmem:[#allocation4 + $0x110] sm:$0xff]
    %v1624 = vld [vmem:[#allocation4 + $0x118] sm:$0xff]
    %v1625 = vld [vmem:[#allocation4 + $0x120] sm:$0xff]
    %v1626 = vld [vmem:[#allocation4 + $0x128] sm:$0xff]
    %v1627 = vld [vmem:[#allocation4 + $0x130] sm:$0xff]
    %v1628 = vld [vmem:[#allocation4 + $0x138] sm:$0xff]
    %v1629 = vld [vmem:[#allocation4 + $0x140] sm:$0xff]
    %v1630 = vld [vmem:[#allocation4 + $0x148] sm:$0xff]
    %v1631 = vld [vmem:[#allocation4 + $0x150] sm:$0xff]
    %v1632 = vld [vmem:[#allocation4 + $0x158] sm:$0xff]
    %v1633 = vld [vmem:[#allocation4 + $0x160] sm:$0xff]
    %v1634 = vld [vmem:[#allocation4 + $0x168] sm:$0xff]
    %v1635 = vld [vmem:[#allocation4 + $0x170] sm:$0xff]
    %v1636 = vld [vmem:[#allocation4 + $0x178] sm:$0xff]
    %v1637 = vld [vmem:[#allocation4 + $0x180] sm:$0xff]
    %v1638 = vld [vmem:[#allocation4 + $0x188] sm:$0xff]
    %v1639 = vld [vmem:[#allocation4 + $0x190] sm:$0xff]
    %v1640 = vld [vmem:[#allocation4 + $0x198] sm:$0xff]
    %v1641 = vld [vmem:[#allocation4 + $0x1a0] sm:$0xff]
    %v1642 = vld [vmem:[#allocation4 + $0x1a8] sm:$0xff]
    %v1643 = vld [vmem:[#allocation4 + $0x1b0] sm:$0xff]
    %v1644 = vld [vmem:[#allocation4 + $0x1b8] sm:$0xff]
    %v1645 = vld [vmem:[#allocation4 + $0x1c0] sm:$0xff]
    %v1646 = vld [vmem:[#allocation4 + $0x1c8] sm:$0xff]
    %v1647 = vld [vmem:[#allocation4 + $0x1d0] sm:$0xff]
    %v1648 = vld [vmem:[#allocation4 + $0x1d8] sm:$0xff]
    %v1649 = vld [vmem:[#allocation4 + $0x1e0] sm:$0xff]
    %v1650 = vld [vmem:[#allocation4 + $0x1e8] sm:$0xff]
    %v1651 = vld [vmem:[#allocation4 + $0x1f0] sm:$0xff]
    %v1652 = vld [vmem:[#allocation4 + $0x1f8] sm:$0xff]
    %v1653 = vld [vmem:[#allocation4 + $0x200] sm:$0xff]
    %v1654 = vld [vmem:[#allocation4 + $0x208] sm:$0xff]
    %v1655 = vld [vmem:[#allocation4 + $0x210] sm:$0xff]
    %v1656 = vld [vmem:[#allocation4 + $0x218] sm:$0xff]
    %v1657 = vld [vmem:[#allocation4 + $0x220] sm:$0xff]
    %v1658 = vld [vmem:[#allocation4 + $0x228] sm:$0xff]
    %v1659 = vld [vmem:[#allocation4 + $0x230] sm:$0xff]
    %v1660 = vld [vmem:[#allocation4 + $0x238] sm:$0xff]
    %v1661 = vld [vmem:[#allocation4 + $0x240] sm:$0xff]
    %v1662 = vld [vmem:[#allocation4 + $0x248] sm:$0xff]
    %v1663 = vld [vmem:[#allocation4 + $0x250] sm:$0xff]
    %v1664 = vld [vmem:[#allocation4 + $0x258] sm:$0xff]
    %v1665 = vld [vmem:[#allocation4 + $0x260] sm:$0xff]
    %v1666 = vld [vmem:[#allocation4 + $0x268] sm:$0xff]
    %v1667 = vld [vmem:[#allocation4 + $0x270] sm:$0xff]
    %v1668 = vld [vmem:[#allocation4 + $0x278] sm:$0xff]
    %v1669 = vld [vmem:[#allocation4 + $0x280] sm:$0xff]
    %v1670 = vld [vmem:[#allocation4 + $0x288] sm:$0xff]
    %v1671 = vld [vmem:[#allocation4 + $0x290] sm:$0xff]
    %v1672 = vld [vmem:[#allocation4 + $0x298] sm:$0xff]
    %v1673 = vld [vmem:[#allocation4 + $0x2a0] sm:$0xff]
    %v1674 = vld [vmem:[#allocation4 + $0x2a8] sm:$0xff]
    %v1675 = vld [vmem:[#allocation4 + $0x2b0] sm:$0xff]
    %v1676 = vld [vmem:[#allocation4 + $0x2b8] sm:$0xff]
    %v1677 = vld [vmem:[#allocation4 + $0x2c0] sm:$0xff]
    %v1678 = vld [vmem:[#allocation4 + $0x2c8] sm:$0xff]
    %v1679 = vld [vmem:[#allocation4 + $0x2d0] sm:$0xff]
    %v1680 = vld [vmem:[#allocation4 + $0x2d8] sm:$0xff]
    %v1681 = vld [vmem:[#allocation4 + $0x2e0] sm:$0xff]
    %v1682 = vld [vmem:[#allocation4 + $0x2e8] sm:$0xff]
    %v1683 = vld [vmem:[#allocation4 + $0x2f0] sm:$0xff]
    %v1684 = vld [vmem:[#allocation4 + $0x2f8] sm:$0xff]
    %v1685 = vld [vmem:[#allocation4 + $0x300] sm:$0xff]
    %v1686 = vld [vmem:[#allocation4 + $0x308] sm:$0xff]
    %v1687 = vld [vmem:[#allocation4 + $0x310] sm:$0xff]
    %v1688 = vld [vmem:[#allocation4 + $0x318] sm:$0xff]
    %v1689 = vld [vmem:[#allocation4 + $0x320] sm:$0xff]
    %v1690 = vld [vmem:[#allocation4 + $0x328] sm:$0xff]
    %v1691 = vld [vmem:[#allocation4 + $0x330] sm:$0xff]
    %v1692 = vld [vmem:[#allocation4 + $0x338] sm:$0xff]
    %v1693 = vld [vmem:[#allocation4 + $0x340] sm:$0xff]
    %v1694 = vld [vmem:[#allocation4 + $0x348] sm:$0xff]
    %v1695 = vld [vmem:[#allocation4 + $0x350] sm:$0xff]
    %v1696 = vld [vmem:[#allocation4 + $0x358] sm:$0xff]
    %v1697 = vld [vmem:[#allocation4 + $0x360] sm:$0xff]
    %v1698 = vld [vmem:[#allocation4 + $0x368] sm:$0xff]
    %v1699 = vld [vmem:[#allocation4 + $0x370] sm:$0xff]
    %v1700 = vld [vmem:[#allocation4 + $0x378] sm:$0xff]
    %v1701 = vld [vmem:[#allocation4 + $0x380] sm:$0xff]
    %v1702 = vld [vmem:[#allocation4 + $0x388] sm:$0xff]
    %v1703 = vld [vmem:[#allocation4 + $0x390] sm:$0xff]
    %v1704 = vld [vmem:[#allocation4 + $0x398] sm:$0xff]
    %v1705 = vld [vmem:[#allocation4 + $0x3a0] sm:$0xff]
    %v1706 = vld [vmem:[#allocation4 + $0x3a8] sm:$0xff]
    %v1707 = vld [vmem:[#allocation4 + $0x3b0] sm:$0xff]
    %v1708 = vld [vmem:[#allocation4 + $0x3b8] sm:$0xff]
    %v1709 = vld [vmem:[#allocation4 + $0x3c0] sm:$0xff]
    %v1710 = vld [vmem:[#allocation4 + $0x3c8] sm:$0xff]
    %v1711 = vld [vmem:[#allocation4 + $0x3d0] sm:$0xff]
    %v1712 = vld [vmem:[#allocation4 + $0x3d8] sm:$0xff]
    %v1713 = vld [vmem:[#allocation4 + $0x3e0] sm:$0xff]
    %v1714 = vld [vmem:[#allocation4 + $0x3e8] sm:$0xff]
    %v1715 = vld [vmem:[#allocation4 + $0x3f0] sm:$0xff]
    %v1716 = vld [vmem:[#allocation4 + $0x3f8] sm:$0xff]
    %1717 = vmatprep.subr.bf16.mxu0 %v1590
    %1718 = vmatpush1.bf16.msra.mxu0 %v1589
    %1719 = vmatprep.subr.bf16.mxu0 %v1594
    %1720 = vmatpush1.bf16.msra.mxu0 %v1593
    %1721 = vmatprep.subr.bf16.mxu0 %v1598
    %1722 = vmatpush1.bf16.msra.mxu0 %v1597
    %1723 = vmatprep.subr.bf16.mxu0 %v1602
    %1724 = vmatpush1.bf16.msra.mxu0 %v1601
    %1725 = vmatprep.subr.bf16.mxu0 %v1606
    %1726 = vmatpush1.bf16.msra.mxu0 %v1605
    %1727 = vmatprep.subr.bf16.mxu0 %v1610
    %1728 = vmatpush1.bf16.msra.mxu0 %v1609
    %1729 = vmatprep.subr.bf16.mxu0 %v1614
    %1730 = vmatpush1.bf16.msra.mxu0 %v1613
    %1731 = vmatprep.subr.bf16.mxu0 %v1618
    %1732 = vmatpush1.bf16.msra.mxu0 %v1617
    %1733 = vmatprep.subr.bf16.mxu0 %v1622
    %1734 = vmatpush1.bf16.msra.mxu0 %v1621
    %1735 = vmatprep.subr.bf16.mxu0 %v1626
    %1736 = vmatpush1.bf16.msra.mxu0 %v1625
    %1737 = vmatprep.subr.bf16.mxu0 %v1630
    %1738 = vmatpush1.bf16.msra.mxu0 %v1629
    %1739 = vmatprep.subr.bf16.mxu0 %v1634
    %1740 = vmatpush1.bf16.msra.mxu0 %v1633
    %1741 = vmatprep.subr.bf16.mxu0 %v1638
    %1742 = vmatpush1.bf16.msra.mxu0 %v1637
    %1743 = vmatprep.subr.bf16.mxu0 %v1642
    %1744 = vmatpush1.bf16.msra.mxu0 %v1641
    %1745 = vmatprep.subr.bf16.mxu0 %v1646
    %1746 = vmatpush1.bf16.msra.mxu0 %v1645
    %1747 = vmatprep.subr.bf16.mxu0 %v1650
    %1748 = vmatpush1.bf16.msra.mxu0 %v1649
    %1749 = vmatprep.mubr.bf16.mxu0 %v1574
    %1750 = vmatmul.mubr.bf16.gmra.mrb[0].mxu0 %v1573
    %v1751 = vpop.f32.mrb[0].mxu0
    %v1752 = vadd.f32 0.0, %v1751
    %v1753 = vpop.f32.mrb[0].mxu0
    %v1754 = vadd.f32 0.0, %v1753
    %v1755 = vpop.f32.mrb[0].mxu0
    %v1756 = vadd.f32 0.0, %v1755
    %v1757 = vpop.f32.mrb[0].mxu0
    %v1758 = vadd.f32 0.0, %v1757
    %1759 = vmatprep.mubr.bf16.mxu0 %v1578
    %1760 = vmatmul.mubr.bf16.gmra.mrb[0].mxu0 %v1577
    %v1761 = vpop.f32.mrb[0].mxu0
    %v1762 = vadd.f32 0.0, %v1761
    %v1763 = vpop.f32.mrb[0].mxu0
    %v1764 = vadd.f32 0.0, %v1763
    %v1765 = vpop.f32.mrb[0].mxu0
    %v1766 = vadd.f32 0.0, %v1765
    %v1767 = vpop.f32.mrb[0].mxu0
    %v1768 = vadd.f32 0.0, %v1767
    %1769 = vmatprep.mubr.bf16.mxu0 %v1582
    %1770 = vmatmul.mubr.bf16.gmra.mrb[0].mxu0 %v1581
    %v1771 = vpop.f32.mrb[0].mxu0
    %v1772 = vadd.f32 0.0, %v1771
    %v1773 = vpop.f32.mrb[0].mxu0
    %v1774 = vadd.f32 0.0, %v1773
    %v1775 = vpop.f32.mrb[0].mxu0
    %v1776 = vadd.f32 0.0, %v1775
    %v1777 = vpop.f32.mrb[0].mxu0
    %v1778 = vadd.f32 0.0, %v1777
    %1779 = vmatprep.mubr.bf16.mxu0 %v1586
    %1780 = vmatmul.mubr.bf16.gmra.mrb[0].mxu0 %v1585
    %v1781 = vpop.f32.mrb[0].mxu0
    %v1782 = vadd.f32 0.0, %v1781
    %v1783 = vpop.f32.mrb[0].mxu0
    %v1784 = vadd.f32 0.0, %v1783
    %v1785 = vpop.f32.mrb[0].mxu0
    %v1786 = vadd.f32 0.0, %v1785
    %v1787 = vpop.f32.mrb[0].mxu0
    %v1788 = vadd.f32 0.0, %v1787
    %1789 = vdwg.mxu0
    %1790 = vmatprep.subr.bf16.mxu0 %v1654
    %1791 = vmatpush1.bf16.msra.mxu0 %v1653
    %1792 = vmatprep.subr.bf16.mxu0 %v1658
    %1793 = vmatpush1.bf16.msra.mxu0 %v1657
    %1794 = vmatprep.subr.bf16.mxu0 %v1662
    %1795 = vmatpush1.bf16.msra.mxu0 %v1661
    %1796 = vmatprep.subr.bf16.mxu0 %v1666
    %1797 = vmatpush1.bf16.msra.mxu0 %v1665
    %1798 = vmatprep.subr.bf16.mxu0 %v1670
    %1799 = vmatpush1.bf16.msra.mxu0 %v1669
    %1800 = vmatprep.subr.bf16.mxu0 %v1674
    %1801 = vmatpush1.bf16.msra.mxu0 %v1673
    %1802 = vmatprep.subr.bf16.mxu0 %v1678
    %1803 = vmatpush1.bf16.msra.mxu0 %v1677
    %1804 = vmatprep.subr.bf16.mxu0 %v1682
    %1805 = vmatpush1.bf16.msra.mxu0 %v1681
    %1806 = vmatprep.subr.bf16.mxu0 %v1686
    %1807 = vmatpush1.bf16.msra.mxu0 %v1685
    %1808 = vmatprep.subr.bf16.mxu0 %v1690
    %1809 = vmatpush1.bf16.msra.mxu0 %v1689
    %1810 = vmatprep.subr.bf16.mxu0 %v1694
    %1811 = vmatpush1.bf16.msra.mxu0 %v1693
    %1812 = vmatprep.subr.bf16.mxu0 %v1698
    %1813 = vmatpush1.bf16.msra.mxu0 %v1697
    %1814 = vmatprep.subr.bf16.mxu0 %v1702
    %1815 = vmatpush1.bf16.msra.mxu0 %v1701
    %1816 = vmatprep.subr.bf16.mxu0 %v1706
    %1817 = vmatpush1.bf16.msra.mxu0 %v1705
    %1818 = vmatprep.subr.bf16.mxu0 %v1710
    %1819 = vmatpush1.bf16.msra.mxu0 %v1709
    %1820 = vmatprep.subr.bf16.mxu0 %v1714
    %1821 = vmatpush1.bf16.msra.mxu0 %v1713
    %1822 = vmatprep.mubr.bf16.mxu0 %v1576
    %1823 = vmatmul.mubr.bf16.gmra.mrb[0].mxu0 %v1575
    %v1824 = vpop.f32.mrb[0].mxu0
    %v1825 = vadd.f32 %v1752, %v1824
    %v1826 = vpop.f32.mrb[0].mxu0
    %v1827 = vadd.f32 %v1754, %v1826
    %v1828 = vpop.f32.mrb[0].mxu0
    %v1829 = vadd.f32 %v1756, %v1828
    %v1830 = vpop.f32.mrb[0].mxu0
    %v1831 = vadd.f32 %v1758, %v1830
    %1832 = vmatprep.mubr.bf16.mxu0 %v1580
    %1833 = vmatmul.mubr.bf16.gmra.mrb[0].mxu0 %v1579
    %v1834 = vpop.f32.mrb[0].mxu0
    %v1835 = vadd.f32 %v1762, %v1834
    %v1836 = vpop.f32.mrb[0].mxu0
    %v1837 = vadd.f32 %v1764, %v1836
    %v1838 = vpop.f32.mrb[0].mxu0
    %v1839 = vadd.f32 %v1766, %v1838
    %v1840 = vpop.f32.mrb[0].mxu0
    %v1841 = vadd.f32 %v1768, %v1840
    %1842 = vmatprep.mubr.bf16.mxu0 %v1584
    %1843 = vmatmul.mubr.bf16.gmra.mrb[0].mxu0 %v1583
    %v1844 = vpop.f32.mrb[0].mxu0
    %v1845 = vadd.f32 %v1772, %v1844
    %v1846 = vpop.f32.mrb[0].mxu0
    %v1847 = vadd.f32 %v1774, %v1846
    %v1848 = vpop.f32.mrb[0].mxu0
    %v1849 = vadd.f32 %v1776, %v1848
    %v1850 = vpop.f32.mrb[0].mxu0
    %v1851 = vadd.f32 %v1778, %v1850
    %1852 = vmatprep.mubr.bf16.mxu0 %v1588
    %1853 = vmatmul.mubr.bf16.gmra.mrb[0].mxu0 %v1587
    %v1854 = vpop.f32.mrb[0].mxu0
    %v1855 = vadd.f32 %v1782, %v1854
    %v1856 = vpop.f32.mrb[0].mxu0
    %v1857 = vadd.f32 %v1784, %v1856
    %v1858 = vpop.f32.mrb[0].mxu0
    %v1859 = vadd.f32 %v1786, %v1858
    %v1860 = vpop.f32.mrb[0].mxu0
    %v1861 = vadd.f32 %v1788, %v1860
    %1862 = vdwg.mxu0
    %1863 = vmatprep.subr.bf16.mxu0 %v1592
    %1864 = vmatpush1.bf16.msra.mxu0 %v1591
    %1865 = vmatprep.subr.bf16.mxu0 %v1596
    %1866 = vmatpush1.bf16.msra.mxu0 %v1595
    %1867 = vmatprep.subr.bf16.mxu0 %v1600
    %1868 = vmatpush1.bf16.msra.mxu0 %v1599
    %1869 = vmatprep.subr.bf16.mxu0 %v1604
    %1870 = vmatpush1.bf16.msra.mxu0 %v1603
    %1871 = vmatprep.subr.bf16.mxu0 %v1608
    %1872 = vmatpush1.bf16.msra.mxu0 %v1607
    %1873 = vmatprep.subr.bf16.mxu0 %v1612
    %1874 = vmatpush1.bf16.msra.mxu0 %v1611
    %1875 = vmatprep.subr.bf16.mxu0 %v1616
    %1876 = vmatpush1.bf16.msra.mxu0 %v1615
    %1877 = vmatprep.subr.bf16.mxu0 %v1620
    %1878 = vmatpush1.bf16.msra.mxu0 %v1619
    %1879 = vmatprep.subr.bf16.mxu0 %v1624
    %1880 = vmatpush1.bf16.msra.mxu0 %v1623
    %1881 = vmatprep.subr.bf16.mxu0 %v1628
    %1882 = vmatpush1.bf16.msra.mxu0 %v1627
    %1883 = vmatprep.subr.bf16.mxu0 %v1632
    %1884 = vmatpush1.bf16.msra.mxu0 %v1631
    %1885 = vmatprep.subr.bf16.mxu0 %v1636
    %1886 = vmatpush1.bf16.msra.mxu0 %v1635
    %1887 = vmatprep.subr.bf16.mxu0 %v1640
    %1888 = vmatpush1.bf16.msra.mxu0 %v1639
    %1889 = vmatprep.subr.bf16.mxu0 %v1644
    %1890 = vmatpush1.bf16.msra.mxu0 %v1643
    %1891 = vmatprep.subr.bf16.mxu0 %v1648
    %1892 = vmatpush1.bf16.msra.mxu0 %v1647
    %1893 = vmatprep.subr.bf16.mxu0 %v1652
    %1894 = vmatpush1.bf16.msra.mxu0 %v1651
    %1895 = vmatprep.mubr.bf16.mxu0 %v1574
    %1896 = vmatmul.mubr.bf16.gmra.mrb[0].mxu0 %v1573
    %v1897 = vpop.f32.mrb[0].mxu0
    %v1898 = vadd.f32 0.0, %v1897
    %v1899 = vpop.f32.mrb[0].mxu0
    %v1900 = vadd.f32 0.0, %v1899
    %v1901 = vpop.f32.mrb[0].mxu0
    %v1902 = vadd.f32 0.0, %v1901
    %v1903 = vpop.f32.mrb[0].mxu0
    %v1904 = vadd.f32 0.0, %v1903
    %1905 = vmatprep.mubr.bf16.mxu0 %v1578
    %1906 = vmatmul.mubr.bf16.gmra.mrb[0].mxu0 %v1577
    %v1907 = vpop.f32.mrb[0].mxu0
    %v1908 = vadd.f32 0.0, %v1907
    %v1909 = vpop.f32.mrb[0].mxu0
    %v1910 = vadd.f32 0.0, %v1909
    %v1911 = vpop.f32.mrb[0].mxu0
    %v1912 = vadd.f32 0.0, %v1911
    %v1913 = vpop.f32.mrb[0].mxu0
    %v1914 = vadd.f32 0.0, %v1913
    %1915 = vmatprep.mubr.bf16.mxu0 %v1582
    %1916 = vmatmul.mubr.bf16.gmra.mrb[0].mxu0 %v1581
    %v1917 = vpop.f32.mrb[0].mxu0
    %v1918 = vadd.f32 0.0, %v1917
    %v1919 = vpop.f32.mrb[0].mxu0
    %v1920 = vadd.f32 0.0, %v1919
    %v1921 = vpop.f32.mrb[0].mxu0
    %v1922 = vadd.f32 0.0, %v1921
    %v1923 = vpop.f32.mrb[0].mxu0
    %v1924 = vadd.f32 0.0, %v1923
    %1925 = vmatprep.mubr.bf16.mxu0 %v1586
    %1926 = vmatmul.mubr.bf16.gmra.mrb[0].mxu0 %v1585
    %v1927 = vpop.f32.mrb[0].mxu0
    %v1928 = vadd.f32 0.0, %v1927
    %v1929 = vpop.f32.mrb[0].mxu0
    %v1930 = vadd.f32 0.0, %v1929
    %v1931 = vpop.f32.mrb[0].mxu0
    %v1932 = vadd.f32 0.0, %v1931
    %v1933 = vpop.f32.mrb[0].mxu0
    %v1934 = vadd.f32 0.0, %v1933
    %1935 = vdwg.mxu0
    %1936 = vmatprep.subr.bf16.mxu0 %v1656
    %1937 = vmatpush1.bf16.msra.mxu0 %v1655
    %1938 = vmatprep.subr.bf16.mxu0 %v1660
    %1939 = vmatpush1.bf16.msra.mxu0 %v1659
    %1940 = vmatprep.subr.bf16.mxu0 %v1664
    %1941 = vmatpush1.bf16.msra.mxu0 %v1663
    %1942 = vmatprep.subr.bf16.mxu0 %v1668
    %1943 = vmatpush1.bf16.msra.mxu0 %v1667
    %1944 = vmatprep.subr.bf16.mxu0 %v1672
    %1945 = vmatpush1.bf16.msra.mxu0 %v1671
    %1946 = vmatprep.subr.bf16.mxu0 %v1676
    %1947 = vmatpush1.bf16.msra.mxu0 %v1675
    %1948 = vmatprep.subr.bf16.mxu0 %v1680
    %1949 = vmatpush1.bf16.msra.mxu0 %v1679
    %1950 = vmatprep.subr.bf16.mxu0 %v1684
    %1951 = vmatpush1.bf16.msra.mxu0 %v1683
    %1952 = vmatprep.subr.bf16.mxu0 %v1688
    %1953 = vmatpush1.bf16.msra.mxu0 %v1687
    %1954 = vmatprep.subr.bf16.mxu0 %v1692
    %1955 = vmatpush1.bf16.msra.mxu0 %v1691
    %1956 = vmatprep.subr.bf16.mxu0 %v1696
    %1957 = vmatpush1.bf16.msra.mxu0 %v1695
    %1958 = vmatprep.subr.bf16.mxu0 %v1700
    %1959 = vmatpush1.bf16.msra.mxu0 %v1699
    %1960 = vmatprep.subr.bf16.mxu0 %v1704
    %1961 = vmatpush1.bf16.msra.mxu0 %v1703
    %1962 = vmatprep.subr.bf16.mxu0 %v1708
    %1963 = vmatpush1.bf16.msra.mxu0 %v1707
    %1964 = vmatprep.subr.bf16.mxu0 %v1712
    %1965 = vmatpush1.bf16.msra.mxu0 %v1711
    %1966 = vmatprep.subr.bf16.mxu0 %v1716
    %1967 = vmatpush1.bf16.msra.mxu0 %v1715
    %1968 = vmatprep.mubr.bf16.mxu0 %v1576
    %1969 = vmatmul.mubr.bf16.gmra.mrb[0].mxu0 %v1575
    %v1970 = vpop.f32.mrb[0].mxu0
    %v1971 = vadd.f32 %v1898, %v1970
    %v1972 = vpop.f32.mrb[0].mxu0
    %v1973 = vadd.f32 %v1900, %v1972
    %v1974 = vpop.f32.mrb[0].mxu0
    %v1975 = vadd.f32 %v1902, %v1974
    %v1976 = vpop.f32.mrb[0].mxu0
    %v1977 = vadd.f32 %v1904, %v1976
    %1978 = vmatprep.mubr.bf16.mxu0 %v1580
    %1979 = vmatmul.mubr.bf16.gmra.mrb[0].mxu0 %v1579
    %v1980 = vpop.f32.mrb[0].mxu0
    %v1981 = vadd.f32 %v1908, %v1980
    %v1982 = vpop.f32.mrb[0].mxu0
    %v1983 = vadd.f32 %v1910, %v1982
    %v1984 = vpop.f32.mrb[0].mxu0
    %v1985 = vadd.f32 %v1912, %v1984
    %v1986 = vpop.f32.mrb[0].mxu0
    %v1987 = vadd.f32 %v1914, %v1986
    %1988 = vmatprep.mubr.bf16.mxu0 %v1584
    %1989 = vmatmul.mubr.bf16.gmra.mrb[0].mxu0 %v1583
    %v1990 = vpop.f32.mrb[0].mxu0
    %v1991 = vadd.f32 %v1918, %v1990
    %v1992 = vpop.f32.mrb[0].mxu0
    %v1993 = vadd.f32 %v1920, %v1992
    %v1994 = vpop.f32.mrb[0].mxu0
    %v1995 = vadd.f32 %v1922, %v1994
    %v1996 = vpop.f32.mrb[0].mxu0
    %v1997 = vadd.f32 %v1924, %v1996
    %1998 = vmatprep.mubr.bf16.mxu0 %v1588
    %1999 = vmatmul.mubr.bf16.gmra.mrb[0].mxu0 %v1587
    %v2000 = vpop.f32.mrb[0].mxu0
    %v2001 = vadd.f32 %v1928, %v2000
    %v2002 = vpop.f32.mrb[0].mxu0
    %v2003 = vadd.f32 %v1930, %v2002
    %v2004 = vpop.f32.mrb[0].mxu0
    %v2005 = vadd.f32 %v1932, %v2004
    %v2006 = vpop.f32.mrb[0].mxu0
    %v2007 = vadd.f32 %v1934, %v2006
    %2008 = vdwg.mxu0
    %v2009 = vadd.f32 %v1825, %v1829
    %v2010 = vadd.f32 %v2009, %v1835
    %v2011 = vadd.f32 %v2010, %v1839
    %v2012 = vadd.f32 %v2011, %v1845
    %v2013 = vadd.f32 %v2012, %v1849
    %v2014 = vadd.f32 %v2013, %v1855
    %v2015 = vadd.f32 %v2014, %v1859
    %v2016 = vrot.slane %v2015, 4
    %v2017 = vadd.f32 %v2015, %v2016
    %v2018 = vrot.slane %v2017, 2
    %v2019 = vadd.f32 %v2017, %v2018
    %v2020 = vrot.slane %v2019, 1
    %v2021 = vadd.f32 %v2019, %v2020
    %v2022 = vadd.f32 %v1827, %v1831
    %v2023 = vadd.f32 %v2022, %v1837
    %v2024 = vadd.f32 %v2023, %v1841
    %v2025 = vadd.f32 %v2024, %v1847
    %v2026 = vadd.f32 %v2025, %v1851
    %v2027 = vadd.f32 %v2026, %v1857
    %v2028 = vadd.f32 %v2027, %v1861
    %v2029 = vrot.slane %v2028, 4
    %v2030 = vadd.f32 %v2028, %v2029
    %v2031 = vrot.slane %v2030, 2
    %v2032 = vadd.f32 %v2030, %v2031
    %v2033 = vrot.slane %v2032, 1
    %v2034 = vadd.f32 %v2032, %v2033
    %v2035 = vadd.f32 %v1971, %v1975
    %v2036 = vadd.f32 %v2035, %v1981
    %v2037 = vadd.f32 %v2036, %v1985
    %v2038 = vadd.f32 %v2037, %v1991
    %v2039 = vadd.f32 %v2038, %v1995
    %v2040 = vadd.f32 %v2039, %v2001
    %v2041 = vadd.f32 %v2040, %v2005
    %v2042 = vrot.slane %v2041, 4
    %v2043 = vadd.f32 %v2041, %v2042
    %v2044 = vrot.slane %v2043, 2
    %v2045 = vadd.f32 %v2043, %v2044
    %v2046 = vrot.slane %v2045, 1
    %v2047 = vadd.f32 %v2045, %v2046
    %v2048 = vadd.f32 %v1973, %v1977
    %v2049 = vadd.f32 %v2048, %v1983
    %v2050 = vadd.f32 %v2049, %v1987
    %v2051 = vadd.f32 %v2050, %v1993
    %v2052 = vadd.f32 %v2051, %v1997
    %v2053 = vadd.f32 %v2052, %v2003
    %v2054 = vadd.f32 %v2053, %v2007
    %v2055 = vrot.slane %v2054, 4
    %v2056 = vadd.f32 %v2054, %v2055
    %v2057 = vrot.slane %v2056, 2
    %v2058 = vadd.f32 %v2056, %v2057
    %v2059 = vrot.slane %v2058, 1
    %v2060 = vadd.f32 %v2058, %v2059
    %v2061 = vmul.f32 %v2021, 0.015625
    %v2062 = vmul.f32 %v2034, 0.015625
    %v2063 = vmul.f32 %v2047, 0.015625
    %v2064 = vmul.f32 %v2060, 0.015625
    %v2065 = vmul.f32 %v1825, %v1825
    %v2066 = vmul.f32 %v1827, %v1827
    %v2067 = vmul.f32 %v1971, %v1971
    %v2068 = vmul.f32 %v1973, %v1973
    %v2069 = vmul.f32 %v1829, %v1829
    %v2070 = vmul.f32 %v1831, %v1831
    %v2071 = vmul.f32 %v1975, %v1975
    %v2072 = vmul.f32 %v1977, %v1977
    %v2073 = vmul.f32 %v1835, %v1835
    %v2074 = vmul.f32 %v1837, %v1837
    %v2075 = vmul.f32 %v1981, %v1981
    %v2076 = vmul.f32 %v1983, %v1983
    %v2077 = vmul.f32 %v1839, %v1839
    %v2078 = vmul.f32 %v1841, %v1841
    %v2079 = vmul.f32 %v1985, %v1985
    %v2080 = vmul.f32 %v1987, %v1987
    %v2081 = vmul.f32 %v1845, %v1845
    %v2082 = vmul.f32 %v1847, %v1847
    %v2083 = vmul.f32 %v1991, %v1991
    %v2084 = vmul.f32 %v1993, %v1993
    %v2085 = vmul.f32 %v1849, %v1849
    %v2086 = vmul.f32 %v1851, %v1851
    %v2087 = vmul.f32 %v1995, %v1995
    %v2088 = vmul.f32 %v1997, %v1997
    %v2089 = vmul.f32 %v1855, %v1855
    %v2090 = vmul.f32 %v1857, %v1857
    %v2091 = vmul.f32 %v2001, %v2001
    %v2092 = vmul.f32 %v2003, %v2003
    %v2093 = vmul.f32 %v1859, %v1859
    %v2094 = vmul.f32 %v1861, %v1861
    %v2095 = vmul.f32 %v2005, %v2005
    %v2096 = vmul.f32 %v2007, %v2007
    %v2097 = vadd.f32 %v2065, %v2069
    %v2098 = vadd.f32 %v2097, %v2073
    %v2099 = vadd.f32 %v2098, %v2077
    %v2100 = vadd.f32 %v2099, %v2081
    %v2101 = vadd.f32 %v2100, %v2085
    %v2102 = vadd.f32 %v2101, %v2089
    %v2103 = vadd.f32 %v2102, %v2093
    %v2104 = vrot.slane %v2103, 4
    %v2105 = vadd.f32 %v2103, %v2104
    %v2106 = vrot.slane %v2105, 2
    %v2107 = vadd.f32 %v2105, %v2106
    %v2108 = vrot.slane %v2107, 1
    %v2109 = vadd.f32 %v2107, %v2108
    %v2110 = vadd.f32 %v2066, %v2070
    %v2111 = vadd.f32 %v2110, %v2074
    %v2112 = vadd.f32 %v2111, %v2078
    %v2113 = vadd.f32 %v2112, %v2082
    %v2114 = vadd.f32 %v2113, %v2086
    %v2115 = vadd.f32 %v2114, %v2090
    %v2116 = vadd.f32 %v2115, %v2094
    %v2117 = vrot.slane %v2116, 4
    %v2118 = vadd.f32 %v2116, %v2117
    %v2119 = vrot.slane %v2118, 2
    %v2120 = vadd.f32 %v2118, %v2119
    %v2121 = vrot.slane %v2120, 1
    %v2122 = vadd.f32 %v2120, %v2121
    %v2123 = vadd.f32 %v2067, %v2071
    %v2124 = vadd.f32 %v2123, %v2075
    %v2125 = vadd.f32 %v2124, %v2079
    %v2126 = vadd.f32 %v2125, %v2083
    %v2127 = vadd.f32 %v2126, %v2087
    %v2128 = vadd.f32 %v2127, %v2091
    %v2129 = vadd.f32 %v2128, %v2095
    %v2130 = vrot.slane %v2129, 4
    %v2131 = vadd.f32 %v2129, %v2130
    %v2132 = vrot.slane %v2131, 2
    %v2133 = vadd.f32 %v2131, %v2132
    %v2134 = vrot.slane %v2133, 1
    %v2135 = vadd.f32 %v2133, %v2134
    %v2136 = vadd.f32 %v2068, %v2072
    %v2137 = vadd.f32 %v2136, %v2076
    %v2138 = vadd.f32 %v2137, %v2080
    %v2139 = vadd.f32 %v2138, %v2084
    %v2140 = vadd.f32 %v2139, %v2088
    %v2141 = vadd.f32 %v2140, %v2092
    %v2142 = vadd.f32 %v2141, %v2096
    %v2143 = vrot.slane %v2142, 4
    %v2144 = vadd.f32 %v2142, %v2143
    %v2145 = vrot.slane %v2144, 2
    %v2146 = vadd.f32 %v2144, %v2145
    %v2147 = vrot.slane %v2146, 1
    %v2148 = vadd.f32 %v2146, %v2147
    %v2149 = vmul.f32 %v2109, 0.015625
    %v2150 = vmul.f32 %v2122, 0.015625
    %v2151 = vmul.f32 %v2135, 0.015625
    %v2152 = vmul.f32 %v2148, 0.015625
    %v2153 = vmul.f32 %v2061, %v2061
    %v2154 = vmul.f32 %v2062, %v2062
    %v2155 = vmul.f32 %v2063, %v2063
    %v2156 = vmul.f32 %v2064, %v2064
    %v2157 = vsub.f32 %v2149, %v2153
    %v2158 = vsub.f32 %v2150, %v2154
    %v2159 = vsub.f32 %v2151, %v2155
    %v2160 = vsub.f32 %v2152, %v2156
    %v2161 = vadd.f32 %v2157, 1e-05
    %v2162 = vadd.f32 %v2158, 1e-05
    %v2163 = vadd.f32 %v2159, 1e-05
    %v2164 = vadd.f32 %v2160, 1e-05
    %v2165 = vrsqrt.pop %v2161
    %v2166 = vrsqrt.pop %v2162
    %v2167 = vrsqrt.pop %v2163
    %v2168 = vrsqrt.pop %v2164
    %v2173 = vcombine.low %v2165, %v2166
    %v2174 = vcombine.low %v2167, %v2168
    %v2176 = vunpack.c.l.s4 1983009808
    %v2177 = vunpack.c.0.s8 %v2176
    %v2178 = vlaneseq
    %v2179 = vshrl.u32 %v2178, 7
    %v2180 = vsub.s32 %v2177, %v2179
    %v2181 = vrot.slane %v2173, %v2180
    %v2183 = vunpack.c.l.s4 1983009808
    %v2184 = vunpack.c.0.s8 %v2183
    %v2185 = vlaneseq
    %v2186 = vshrl.u32 %v2185, 7
    %v2187 = vsub.s32 %v2184, %v2186
    %v2188 = vrot.slane %v2174, %v2187
    %v2189 = vcombine.low %v2181, %v2188
    %v2191 = vmul.f32 %v206, %v2189
    %v2192 = vsub.f32 %v1825, %v2061
    %v2193 = vsub.f32 %v1827, %v2062
    %v2194 = vsub.f32 %v1971, %v2063
    %v2195 = vsub.f32 %v1973, %v2064
    %v2196 = vsub.f32 %v1829, %v2061
    %v2197 = vsub.f32 %v1831, %v2062
    %v2198 = vsub.f32 %v1975, %v2063
    %v2199 = vsub.f32 %v1977, %v2064
    %v2200 = vsub.f32 %v1835, %v2061
    %v2201 = vsub.f32 %v1837, %v2062
    %v2202 = vsub.f32 %v1981, %v2063
    %v2203 = vsub.f32 %v1983, %v2064
    %v2204 = vsub.f32 %v1839, %v2061
    %v2205 = vsub.f32 %v1841, %v2062
    %v2206 = vsub.f32 %v1985, %v2063
    %v2207 = vsub.f32 %v1987, %v2064
    %v2208 = vsub.f32 %v1845, %v2061
    %v2209 = vsub.f32 %v1847, %v2062
    %v2210 = vsub.f32 %v1991, %v2063
    %v2211 = vsub.f32 %v1993, %v2064
    %v2212 = vsub.f32 %v1849, %v2061
    %v2213 = vsub.f32 %v1851, %v2062
    %v2214 = vsub.f32 %v1995, %v2063
    %v2215 = vsub.f32 %v1997, %v2064
    %v2216 = vsub.f32 %v1855, %v2061
    %v2217 = vsub.f32 %v1857, %v2062
    %v2218 = vsub.f32 %v2001, %v2063
    %v2219 = vsub.f32 %v2003, %v2064
    %v2220 = vsub.f32 %v1859, %v2061
    %v2221 = vsub.f32 %v1861, %v2062
    %v2222 = vsub.f32 %v2005, %v2063
    %v2223 = vsub.f32 %v2007, %v2064
    %v2225 = vlaneseq
    %v2226 = vshrl.u32 %v2225, 7
    %v2227 = vsub.s32 0, %v2226
    %v2228 = vrot.slane %v2191, %v2227
    %v2229 = vlaneseq
    %v2230 = vshrl.u32 %v2229, 7
    %v2231 = vsub.s32 2, %v2230
    %v2232 = vrot.slane %v2191, %v2231
    %v2233 = vlaneseq
    %v2234 = vshrl.u32 %v2233, 7
    %v2235 = vsub.s32 4, %v2234
    %v2236 = vrot.slane %v2191, %v2235
    %v2237 = vlaneseq
    %v2238 = vshrl.u32 %v2237, 7
    %v2239 = vsub.s32 6, %v2238
    %v2240 = vrot.slane %v2191, %v2239
    %v2245 = vlaneseq
    %v2246 = vshrl.u32 %v2245, 7
    %v2247 = vsub.s32 0, %v2246
    %v2248 = vrot.slane %v2228, %v2247
    %v2249 = vlaneseq
    %v2250 = vshrl.u32 %v2249, 7
    %v2251 = vsub.s32 0, %v2250
    %v2252 = vrot.slane %v2232, %v2251
    %v2253 = vlaneseq
    %v2254 = vshrl.u32 %v2253, 7
    %v2255 = vsub.s32 0, %v2254
    %v2256 = vrot.slane %v2236, %v2255
    %v2257 = vlaneseq
    %v2258 = vshrl.u32 %v2257, 7
    %v2259 = vsub.s32 0, %v2258
    %v2260 = vrot.slane %v2240, %v2259
    %v2261 = vmul.f32 %v2192, %v2248
    %v2262 = vmul.f32 %v2193, %v2252
    %v2263 = vmul.f32 %v2194, %v2256
    %v2264 = vmul.f32 %v2195, %v2260
    %v2265 = vmul.f32 %v2196, %v2248
    %v2266 = vmul.f32 %v2197, %v2252
    %v2267 = vmul.f32 %v2198, %v2256
    %v2268 = vmul.f32 %v2199, %v2260
    %v2269 = vmul.f32 %v2200, %v2248
    %v2270 = vmul.f32 %v2201, %v2252
    %v2271 = vmul.f32 %v2202, %v2256
    %v2272 = vmul.f32 %v2203, %v2260
    %v2273 = vmul.f32 %v2204, %v2248
    %v2274 = vmul.f32 %v2205, %v2252
    %v2275 = vmul.f32 %v2206, %v2256
    %v2276 = vmul.f32 %v2207, %v2260
    %v2277 = vmul.f32 %v2208, %v2248
    %v2278 = vmul.f32 %v2209, %v2252
    %v2279 = vmul.f32 %v2210, %v2256
    %v2280 = vmul.f32 %v2211, %v2260
    %v2281 = vmul.f32 %v2212, %v2248
    %v2282 = vmul.f32 %v2213, %v2252
    %v2283 = vmul.f32 %v2214, %v2256
    %v2284 = vmul.f32 %v2215, %v2260
    %v2285 = vmul.f32 %v2216, %v2248
    %v2286 = vmul.f32 %v2217, %v2252
    %v2287 = vmul.f32 %v2218, %v2256
    %v2288 = vmul.f32 %v2219, %v2260
    %v2289 = vmul.f32 %v2220, %v2248
    %v2290 = vmul.f32 %v2221, %v2252
    %v2291 = vmul.f32 %v2222, %v2256
    %v2292 = vmul.f32 %v2223, %v2260
    %v2293 = vadd.f32 %v2261, %v1460
    %v2294 = vadd.f32 %v2262, %v1464
    %v2295 = vadd.f32 %v2263, %v1468
    %v2296 = vadd.f32 %v2264, %v1472
    %v2297 = vadd.f32 %v2265, %v1460
    %v2298 = vadd.f32 %v2266, %v1464
    %v2299 = vadd.f32 %v2267, %v1468
    %v2300 = vadd.f32 %v2268, %v1472
    %v2301 = vadd.f32 %v2269, %v1460
    %v2302 = vadd.f32 %v2270, %v1464
    %v2303 = vadd.f32 %v2271, %v1468
    %v2304 = vadd.f32 %v2272, %v1472
    %v2305 = vadd.f32 %v2273, %v1460
    %v2306 = vadd.f32 %v2274, %v1464
    %v2307 = vadd.f32 %v2275, %v1468
    %v2308 = vadd.f32 %v2276, %v1472
    %v2309 = vadd.f32 %v2277, %v1460
    %v2310 = vadd.f32 %v2278, %v1464
    %v2311 = vadd.f32 %v2279, %v1468
    %v2312 = vadd.f32 %v2280, %v1472
    %v2313 = vadd.f32 %v2281, %v1460
    %v2314 = vadd.f32 %v2282, %v1464
    %v2315 = vadd.f32 %v2283, %v1468
    %v2316 = vadd.f32 %v2284, %v1472
    %v2317 = vadd.f32 %v2285, %v1460
    %v2318 = vadd.f32 %v2286, %v1464
    %v2319 = vadd.f32 %v2287, %v1468
    %v2320 = vadd.f32 %v2288, %v1472
    %v2321 = vadd.f32 %v2289, %v1460
    %v2322 = vadd.f32 %v2290, %v1464
    %v2323 = vadd.f32 %v2291, %v1468
    %v2324 = vadd.f32 %v2292, %v1472
    %v2325 = vmul.f32 %v2293, 0.02
    %v2326 = vmul.f32 %v2294, 0.02
    %v2327 = vmul.f32 %v2295, 0.02
    %v2328 = vmul.f32 %v2296, 0.02
    %v2329 = vmul.f32 %v2297, 0.02
    %v2330 = vmul.f32 %v2298, 0.02
    %v2331 = vmul.f32 %v2299, 0.02
    %v2332 = vmul.f32 %v2300, 0.02
    %v2333 = vmul.f32 %v2301, 0.02
    %v2334 = vmul.f32 %v2302, 0.02
    %v2335 = vmul.f32 %v2303, 0.02
    %v2336 = vmul.f32 %v2304, 0.02
    %v2337 = vmul.f32 %v2305, 0.02
    %v2338 = vmul.f32 %v2306, 0.02
    %v2339 = vmul.f32 %v2307, 0.02
    %v2340 = vmul.f32 %v2308, 0.02
    %v2341 = vmul.f32 %v2309, 0.02
    %v2342 = vmul.f32 %v2310, 0.02
    %v2343 = vmul.f32 %v2311, 0.02
    %v2344 = vmul.f32 %v2312, 0.02
    %v2345 = vmul.f32 %v2313, 0.02
    %v2346 = vmul.f32 %v2314, 0.02
    %v2347 = vmul.f32 %v2315, 0.02
    %v2348 = vmul.f32 %v2316, 0.02
    %v2349 = vmul.f32 %v2317, 0.02
    %v2350 = vmul.f32 %v2318, 0.02
    %v2351 = vmul.f32 %v2319, 0.02
    %v2352 = vmul.f32 %v2320, 0.02
    %v2353 = vmul.f32 %v2321, 0.02
    %v2354 = vmul.f32 %v2322, 0.02
    %v2355 = vmul.f32 %v2323, 0.02
    %v2356 = vmul.f32 %v2324, 0.02
    %v2357 = vmax.f32 %v2293, %v2325
    %v2358 = vmax.f32 %v2294, %v2326
    %v2359 = vmax.f32 %v2295, %v2327
    %v2360 = vmax.f32 %v2296, %v2328
    %v2361 = vmax.f32 %v2297, %v2329
    %v2362 = vmax.f32 %v2298, %v2330
    %v2363 = vmax.f32 %v2299, %v2331
    %v2364 = vmax.f32 %v2300, %v2332
    %v2365 = vmax.f32 %v2301, %v2333
    %v2366 = vmax.f32 %v2302, %v2334
    %v2367 = vmax.f32 %v2303, %v2335
    %v2368 = vmax.f32 %v2304, %v2336
    %v2369 = vmax.f32 %v2305, %v2337
    %v2370 = vmax.f32 %v2306, %v2338
    %v2371 = vmax.f32 %v2307, %v2339
    %v2372 = vmax.f32 %v2308, %v2340
    %v2373 = vmax.f32 %v2309, %v2341
    %v2374 = vmax.f32 %v2310, %v2342
    %v2375 = vmax.f32 %v2311, %v2343
    %v2376 = vmax.f32 %v2312, %v2344
    %v2377 = vmax.f32 %v2313, %v2345
    %v2378 = vmax.f32 %v2314, %v2346
    %v2379 = vmax.f32 %v2315, %v2347
    %v2380 = vmax.f32 %v2316, %v2348
    %v2381 = vmax.f32 %v2317, %v2349
    %v2382 = vmax.f32 %v2318, %v2350
    %v2383 = vmax.f32 %v2319, %v2351
    %v2384 = vmax.f32 %v2320, %v2352
    %v2385 = vmax.f32 %v2321, %v2353
    %v2386 = vmax.f32 %v2322, %v2354
    %v2387 = vmax.f32 %v2323, %v2355
    %v2388 = vmax.f32 %v2324, %v2356
    %s2389 = sshll.u32 %s1570, 4
    %2390 = dma.done %s101, %s2389
    %v2391 = vpack.c.bf16 %v2361, %v2357
    %v2392 = vpack.c.bf16 %v2362, %v2358
    %v2393 = vpack.c.bf16 %v2363, %v2359
    %v2394 = vpack.c.bf16 %v2364, %v2360
    %v2395 = vpack.c.bf16 %v2369, %v2365
    %v2396 = vpack.c.bf16 %v2370, %v2366
    %v2397 = vpack.c.bf16 %v2371, %v2367
    %v2398 = vpack.c.bf16 %v2372, %v2368
    %v2399 = vpack.c.bf16 %v2377, %v2373
    %v2400 = vpack.c.bf16 %v2378, %v2374
    %v2401 = vpack.c.bf16 %v2379, %v2375
    %v2402 = vpack.c.bf16 %v2380, %v2376
    %v2403 = vpack.c.bf16 %v2385, %v2381
    %v2404 = vpack.c.bf16 %v2386, %v2382
    %v2405 = vpack.c.bf16 %v2387, %v2383
    %v2406 = vpack.c.bf16 %v2388, %v2384
    %v2407 = vld [vmem:[#allocation5] sm:$0xff]
    %v2408 = vld [vmem:[#allocation5 + $0x8] sm:$0xff]
    %v2409 = vld [vmem:[#allocation5 + $0x10] sm:$0xff]
    %v2410 = vld [vmem:[#allocation5 + $0x18] sm:$0xff]
    %v2411 = vld [vmem:[#allocation5 + $0x20] sm:$0xff]
    %v2412 = vld [vmem:[#allocation5 + $0x28] sm:$0xff]
    %v2413 = vld [vmem:[#allocation5 + $0x30] sm:$0xff]
    %v2414 = vld [vmem:[#allocation5 + $0x38] sm:$0xff]
    %v2415 = vld [vmem:[#allocation5 + $0x40] sm:$0xff]
    %v2416 = vld [vmem:[#allocation5 + $0x48] sm:$0xff]
    %v2417 = vld [vmem:[#allocation5 + $0x50] sm:$0xff]
    %v2418 = vld [vmem:[#allocation5 + $0x58] sm:$0xff]
    %v2419 = vld [vmem:[#allocation5 + $0x60] sm:$0xff]
    %v2420 = vld [vmem:[#allocation5 + $0x68] sm:$0xff]
    %v2421 = vld [vmem:[#allocation5 + $0x70] sm:$0xff]
    %v2422 = vld [vmem:[#allocation5 + $0x78] sm:$0xff]
    %v2423 = vld [vmem:[#allocation5 + $0x80] sm:$0xff]
    %v2424 = vld [vmem:[#allocation5 + $0x88] sm:$0xff]
    %v2425 = vld [vmem:[#allocation5 + $0x90] sm:$0xff]
    %v2426 = vld [vmem:[#allocation5 + $0x98] sm:$0xff]
    %v2427 = vld [vmem:[#allocation5 + $0xa0] sm:$0xff]
    %v2428 = vld [vmem:[#allocation5 + $0xa8] sm:$0xff]
    %v2429 = vld [vmem:[#allocation5 + $0xb0] sm:$0xff]
    %v2430 = vld [vmem:[#allocation5 + $0xb8] sm:$0xff]
    %v2431 = vld [vmem:[#allocation5 + $0xc0] sm:$0xff]
    %v2432 = vld [vmem:[#allocation5 + $0xc8] sm:$0xff]
    %v2433 = vld [vmem:[#allocation5 + $0xd0] sm:$0xff]
    %v2434 = vld [vmem:[#allocation5 + $0xd8] sm:$0xff]
    %v2435 = vld [vmem:[#allocation5 + $0xe0] sm:$0xff]
    %v2436 = vld [vmem:[#allocation5 + $0xe8] sm:$0xff]
    %v2437 = vld [vmem:[#allocation5 + $0xf0] sm:$0xff]
    %v2438 = vld [vmem:[#allocation5 + $0xf8] sm:$0xff]
    %v2439 = vld [vmem:[#allocation5 + $0x100] sm:$0xff]
    %v2440 = vld [vmem:[#allocation5 + $0x108] sm:$0xff]
    %v2441 = vld [vmem:[#allocation5 + $0x110] sm:$0xff]
    %v2442 = vld [vmem:[#allocation5 + $0x118] sm:$0xff]
    %v2443 = vld [vmem:[#allocation5 + $0x120] sm:$0xff]
    %v2444 = vld [vmem:[#allocation5 + $0x128] sm:$0xff]
    %v2445 = vld [vmem:[#allocation5 + $0x130] sm:$0xff]
    %v2446 = vld [vmem:[#allocation5 + $0x138] sm:$0xff]
    %v2447 = vld [vmem:[#allocation5 + $0x140] sm:$0xff]
    %v2448 = vld [vmem:[#allocation5 + $0x148] sm:$0xff]
    %v2449 = vld [vmem:[#allocation5 + $0x150] sm:$0xff]
    %v2450 = vld [vmem:[#allocation5 + $0x158] sm:$0xff]
    %v2451 = vld [vmem:[#allocation5 + $0x160] sm:$0xff]
    %v2452 = vld [vmem:[#allocation5 + $0x168] sm:$0xff]
    %v2453 = vld [vmem:[#allocation5 + $0x170] sm:$0xff]
    %v2454 = vld [vmem:[#allocation5 + $0x178] sm:$0xff]
    %v2455 = vld [vmem:[#allocation5 + $0x180] sm:$0xff]
    %v2456 = vld [vmem:[#allocation5 + $0x188] sm:$0xff]
    %v2457 = vld [vmem:[#allocation5 + $0x190] sm:$0xff]
    %v2458 = vld [vmem:[#allocation5 + $0x198] sm:$0xff]
    %v2459 = vld [vmem:[#allocation5 + $0x1a0] sm:$0xff]
    %v2460 = vld [vmem:[#allocation5 + $0x1a8] sm:$0xff]
    %v2461 = vld [vmem:[#allocation5 + $0x1b0] sm:$0xff]
    %v2462 = vld [vmem:[#allocation5 + $0x1b8] sm:$0xff]
    %v2463 = vld [vmem:[#allocation5 + $0x1c0] sm:$0xff]
    %v2464 = vld [vmem:[#allocation5 + $0x1c8] sm:$0xff]
    %v2465 = vld [vmem:[#allocation5 + $0x1d0] sm:$0xff]
    %v2466 = vld [vmem:[#allocation5 + $0x1d8] sm:$0xff]
    %v2467 = vld [vmem:[#allocation5 + $0x1e0] sm:$0xff]
    %v2468 = vld [vmem:[#allocation5 + $0x1e8] sm:$0xff]
    %v2469 = vld [vmem:[#allocation5 + $0x1f0] sm:$0xff]
    %v2470 = vld [vmem:[#allocation5 + $0x1f8] sm:$0xff]
    %v2471 = vld [vmem:[#allocation5 + $0x200] sm:$0xff]
    %v2472 = vld [vmem:[#allocation5 + $0x208] sm:$0xff]
    %v2473 = vld [vmem:[#allocation5 + $0x210] sm:$0xff]
    %v2474 = vld [vmem:[#allocation5 + $0x218] sm:$0xff]
    %v2475 = vld [vmem:[#allocation5 + $0x220] sm:$0xff]
    %v2476 = vld [vmem:[#allocation5 + $0x228] sm:$0xff]
    %v2477 = vld [vmem:[#allocation5 + $0x230] sm:$0xff]
    %v2478 = vld [vmem:[#allocation5 + $0x238] sm:$0xff]
    %v2479 = vld [vmem:[#allocation5 + $0x240] sm:$0xff]
    %v2480 = vld [vmem:[#allocation5 + $0x248] sm:$0xff]
    %v2481 = vld [vmem:[#allocation5 + $0x250] sm:$0xff]
    %v2482 = vld [vmem:[#allocation5 + $0x258] sm:$0xff]
    %v2483 = vld [vmem:[#allocation5 + $0x260] sm:$0xff]
    %v2484 = vld [vmem:[#allocation5 + $0x268] sm:$0xff]
    %v2485 = vld [vmem:[#allocation5 + $0x270] sm:$0xff]
    %v2486 = vld [vmem:[#allocation5 + $0x278] sm:$0xff]
    %v2487 = vld [vmem:[#allocation5 + $0x280] sm:$0xff]
    %v2488 = vld [vmem:[#allocation5 + $0x288] sm:$0xff]
    %v2489 = vld [vmem:[#allocation5 + $0x290] sm:$0xff]
    %v2490 = vld [vmem:[#allocation5 + $0x298] sm:$0xff]
    %v2491 = vld [vmem:[#allocation5 + $0x2a0] sm:$0xff]
    %v2492 = vld [vmem:[#allocation5 + $0x2a8] sm:$0xff]
    %v2493 = vld [vmem:[#allocation5 + $0x2b0] sm:$0xff]
    %v2494 = vld [vmem:[#allocation5 + $0x2b8] sm:$0xff]
    %v2495 = vld [vmem:[#allocation5 + $0x2c0] sm:$0xff]
    %v2496 = vld [vmem:[#allocation5 + $0x2c8] sm:$0xff]
    %v2497 = vld [vmem:[#allocation5 + $0x2d0] sm:$0xff]
    %v2498 = vld [vmem:[#allocation5 + $0x2d8] sm:$0xff]
    %v2499 = vld [vmem:[#allocation5 + $0x2e0] sm:$0xff]
    %v2500 = vld [vmem:[#allocation5 + $0x2e8] sm:$0xff]
    %v2501 = vld [vmem:[#allocation5 + $0x2f0] sm:$0xff]
    %v2502 = vld [vmem:[#allocation5 + $0x2f8] sm:$0xff]
    %v2503 = vld [vmem:[#allocation5 + $0x300] sm:$0xff]
    %v2504 = vld [vmem:[#allocation5 + $0x308] sm:$0xff]
    %v2505 = vld [vmem:[#allocation5 + $0x310] sm:$0xff]
    %v2506 = vld [vmem:[#allocation5 + $0x318] sm:$0xff]
    %v2507 = vld [vmem:[#allocation5 + $0x320] sm:$0xff]
    %v2508 = vld [vmem:[#allocation5 + $0x328] sm:$0xff]
    %v2509 = vld [vmem:[#allocation5 + $0x330] sm:$0xff]
    %v2510 = vld [vmem:[#allocation5 + $0x338] sm:$0xff]
    %v2511 = vld [vmem:[#allocation5 + $0x340] sm:$0xff]
    %v2512 = vld [vmem:[#allocation5 + $0x348] sm:$0xff]
    %v2513 = vld [vmem:[#allocation5 + $0x350] sm:$0xff]
    %v2514 = vld [vmem:[#allocation5 + $0x358] sm:$0xff]
    %v2515 = vld [vmem:[#allocation5 + $0x360] sm:$0xff]
    %v2516 = vld [vmem:[#allocation5 + $0x368] sm:$0xff]
    %v2517 = vld [vmem:[#allocation5 + $0x370] sm:$0xff]
    %v2518 = vld [vmem:[#allocation5 + $0x378] sm:$0xff]
    %v2519 = vld [vmem:[#allocation5 + $0x380] sm:$0xff]
    %v2520 = vld [vmem:[#allocation5 + $0x388] sm:$0xff]
    %v2521 = vld [vmem:[#allocation5 + $0x390] sm:$0xff]
    %v2522 = vld [vmem:[#allocation5 + $0x398] sm:$0xff]
    %v2523 = vld [vmem:[#allocation5 + $0x3a0] sm:$0xff]
    %v2524 = vld [vmem:[#allocation5 + $0x3a8] sm:$0xff]
    %v2525 = vld [vmem:[#allocation5 + $0x3b0] sm:$0xff]
    %v2526 = vld [vmem:[#allocation5 + $0x3b8] sm:$0xff]
    %v2527 = vld [vmem:[#allocation5 + $0x3c0] sm:$0xff]
    %v2528 = vld [vmem:[#allocation5 + $0x3c8] sm:$0xff]
    %v2529 = vld [vmem:[#allocation5 + $0x3d0] sm:$0xff]
    %v2530 = vld [vmem:[#allocation5 + $0x3d8] sm:$0xff]
    %v2531 = vld [vmem:[#allocation5 + $0x3e0] sm:$0xff]
    %v2532 = vld [vmem:[#allocation5 + $0x3e8] sm:$0xff]
    %v2533 = vld [vmem:[#allocation5 + $0x3f0] sm:$0xff]
    %v2534 = vld [vmem:[#allocation5 + $0x3f8] sm:$0xff]
    %2535 = vmatprep.subr.bf16.mxu0 %v2408
    %2536 = vmatpush1.bf16.msra.mxu0 %v2407
    %2537 = vmatprep.subr.bf16.mxu0 %v2412
    %2538 = vmatpush1.bf16.msra.mxu0 %v2411
    %2539 = vmatprep.subr.bf16.mxu0 %v2416
    %2540 = vmatpush1.bf16.msra.mxu0 %v2415
    %2541 = vmatprep.subr.bf16.mxu0 %v2420
    %2542 = vmatpush1.bf16.msra.mxu0 %v2419
    %2543 = vmatprep.subr.bf16.mxu0 %v2424
    %2544 = vmatpush1.bf16.msra.mxu0 %v2423
    %2545 = vmatprep.subr.bf16.mxu0 %v2428
    %2546 = vmatpush1.bf16.msra.mxu0 %v2427
    %2547 = vmatprep.subr.bf16.mxu0 %v2432
    %2548 = vmatpush1.bf16.msra.mxu0 %v2431
    %2549 = vmatprep.subr.bf16.mxu0 %v2436
    %2550 = vmatpush1.bf16.msra.mxu0 %v2435
    %2551 = vmatprep.subr.bf16.mxu0 %v2440
    %2552 = vmatpush1.bf16.msra.mxu0 %v2439
    %2553 = vmatprep.subr.bf16.mxu0 %v2444
    %2554 = vmatpush1.bf16.msra.mxu0 %v2443
    %2555 = vmatprep.subr.bf16.mxu0 %v2448
    %2556 = vmatpush1.bf16.msra.mxu0 %v2447
    %2557 = vmatprep.subr.bf16.mxu0 %v2452
    %2558 = vmatpush1.bf16.msra.mxu0 %v2451
    %2559 = vmatprep.subr.bf16.mxu0 %v2456
    %2560 = vmatpush1.bf16.msra.mxu0 %v2455
    %2561 = vmatprep.subr.bf16.mxu0 %v2460
    %2562 = vmatpush1.bf16.msra.mxu0 %v2459
    %2563 = vmatprep.subr.bf16.mxu0 %v2464
    %2564 = vmatpush1.bf16.msra.mxu0 %v2463
    %2565 = vmatprep.subr.bf16.mxu0 %v2468
    %2566 = vmatpush1.bf16.msra.mxu0 %v2467
    %2567 = vmatprep.mubr.bf16.mxu0 %v2392
    %2568 = vmatmul.mubr.bf16.gmra.mrb[0].mxu0 %v2391
    %v2569 = vpop.f32.mrb[0].mxu0
    %v2570 = vadd.f32 0.0, %v2569
    %v2571 = vpop.f32.mrb[0].mxu0
    %v2572 = vadd.f32 0.0, %v2571
    %v2573 = vpop.f32.mrb[0].mxu0
    %v2574 = vadd.f32 0.0, %v2573
    %v2575 = vpop.f32.mrb[0].mxu0
    %v2576 = vadd.f32 0.0, %v2575
    %2577 = vmatprep.mubr.bf16.mxu0 %v2396
    %2578 = vmatmul.mubr.bf16.gmra.mrb[0].mxu0 %v2395
    %v2579 = vpop.f32.mrb[0].mxu0
    %v2580 = vadd.f32 0.0, %v2579
    %v2581 = vpop.f32.mrb[0].mxu0
    %v2582 = vadd.f32 0.0, %v2581
    %v2583 = vpop.f32.mrb[0].mxu0
    %v2584 = vadd.f32 0.0, %v2583
    %v2585 = vpop.f32.mrb[0].mxu0
    %v2586 = vadd.f32 0.0, %v2585
    %2587 = vmatprep.mubr.bf16.mxu0 %v2400
    %2588 = vmatmul.mubr.bf16.gmra.mrb[0].mxu0 %v2399
    %v2589 = vpop.f32.mrb[0].mxu0
    %v2590 = vadd.f32 0.0, %v2589
    %v2591 = vpop.f32.mrb[0].mxu0
    %v2592 = vadd.f32 0.0, %v2591
    %v2593 = vpop.f32.mrb[0].mxu0
    %v2594 = vadd.f32 0.0, %v2593
    %v2595 = vpop.f32.mrb[0].mxu0
    %v2596 = vadd.f32 0.0, %v2595
    %2597 = vmatprep.mubr.bf16.mxu0 %v2404
    %2598 = vmatmul.mubr.bf16.gmra.mrb[0].mxu0 %v2403
    %v2599 = vpop.f32.mrb[0].mxu0
    %v2600 = vadd.f32 0.0, %v2599
    %v2601 = vpop.f32.mrb[0].mxu0
    %v2602 = vadd.f32 0.0, %v2601
    %v2603 = vpop.f32.mrb[0].mxu0
    %v2604 = vadd.f32 0.0, %v2603
    %v2605 = vpop.f32.mrb[0].mxu0
    %v2606 = vadd.f32 0.0, %v2605
    %2607 = vdwg.mxu0
    %2608 = vmatprep.subr.bf16.mxu0 %v2472
    %2609 = vmatpush1.bf16.msra.mxu0 %v2471
    %2610 = vmatprep.subr.bf16.mxu0 %v2476
    %2611 = vmatpush1.bf16.msra.mxu0 %v2475
    %2612 = vmatprep.subr.bf16.mxu0 %v2480
    %2613 = vmatpush1.bf16.msra.mxu0 %v2479
    %2614 = vmatprep.subr.bf16.mxu0 %v2484
    %2615 = vmatpush1.bf16.msra.mxu0 %v2483
    %2616 = vmatprep.subr.bf16.mxu0 %v2488
    %2617 = vmatpush1.bf16.msra.mxu0 %v2487
    %2618 = vmatprep.subr.bf16.mxu0 %v2492
    %2619 = vmatpush1.bf16.msra.mxu0 %v2491
    %2620 = vmatprep.subr.bf16.mxu0 %v2496
    %2621 = vmatpush1.bf16.msra.mxu0 %v2495
    %2622 = vmatprep.subr.bf16.mxu0 %v2500
    %2623 = vmatpush1.bf16.msra.mxu0 %v2499
    %2624 = vmatprep.subr.bf16.mxu0 %v2504
    %2625 = vmatpush1.bf16.msra.mxu0 %v2503
    %2626 = vmatprep.subr.bf16.mxu0 %v2508
    %2627 = vmatpush1.bf16.msra.mxu0 %v2507
    %2628 = vmatprep.subr.bf16.mxu0 %v2512
    %2629 = vmatpush1.bf16.msra.mxu0 %v2511
    %2630 = vmatprep.subr.bf16.mxu0 %v2516
    %2631 = vmatpush1.bf16.msra.mxu0 %v2515
    %2632 = vmatprep.subr.bf16.mxu0 %v2520
    %2633 = vmatpush1.bf16.msra.mxu0 %v2519
    %2634 = vmatprep.subr.bf16.mxu0 %v2524
    %2635 = vmatpush1.bf16.msra.mxu0 %v2523
    %2636 = vmatprep.subr.bf16.mxu0 %v2528
    %2637 = vmatpush1.bf16.msra.mxu0 %v2527
    %2638 = vmatprep.subr.bf16.mxu0 %v2532
    %2639 = vmatpush1.bf16.msra.mxu0 %v2531
    %2640 = vmatprep.mubr.bf16.mxu0 %v2394
    %2641 = vmatmul.mubr.bf16.gmra.mrb[0].mxu0 %v2393
    %v2642 = vpop.f32.mrb[0].mxu0
    %v2643 = vadd.f32 %v2570, %v2642
    %v2644 = vpop.f32.mrb[0].mxu0
    %v2645 = vadd.f32 %v2572, %v2644
    %v2646 = vpop.f32.mrb[0].mxu0
    %v2647 = vadd.f32 %v2574, %v2646
    %v2648 = vpop.f32.mrb[0].mxu0
    %v2649 = vadd.f32 %v2576, %v2648
    %2650 = vmatprep.mubr.bf16.mxu0 %v2398
    %2651 = vmatmul.mubr.bf16.gmra.mrb[0].mxu0 %v2397
    %v2652 = vpop.f32.mrb[0].mxu0
    %v2653 = vadd.f32 %v2580, %v2652
    %v2654 = vpop.f32.mrb[0].mxu0
    %v2655 = vadd.f32 %v2582, %v2654
    %v2656 = vpop.f32.mrb[0].mxu0
    %v2657 = vadd.f32 %v2584, %v2656
    %v2658 = vpop.f32.mrb[0].mxu0
    %v2659 = vadd.f32 %v2586, %v2658
    %2660 = vmatprep.mubr.bf16.mxu0 %v2402
    %2661 = vmatmul.mubr.bf16.gmra.mrb[0].mxu0 %v2401
    %v2662 = vpop.f32.mrb[0].mxu0
    %v2663 = vadd.f32 %v2590, %v2662
    %v2664 = vpop.f32.mrb[0].mxu0
    %v2665 = vadd.f32 %v2592, %v2664
    %v2666 = vpop.f32.mrb[0].mxu0
    %v2667 = vadd.f32 %v2594, %v2666
    %v2668 = vpop.f32.mrb[0].mxu0
    %v2669 = vadd.f32 %v2596, %v2668
    %2670 = vmatprep.mubr.bf16.mxu0 %v2406
    %2671 = vmatmul.mubr.bf16.gmra.mrb[0].mxu0 %v2405
    %v2672 = vpop.f32.mrb[0].mxu0
    %v2673 = vadd.f32 %v2600, %v2672
    %v2674 = vpop.f32.mrb[0].mxu0
    %v2675 = vadd.f32 %v2602, %v2674
    %v2676 = vpop.f32.mrb[0].mxu0
    %v2677 = vadd.f32 %v2604, %v2676
    %v2678 = vpop.f32.mrb[0].mxu0
    %v2679 = vadd.f32 %v2606, %v2678
    %2680 = vdwg.mxu0
    %2681 = vmatprep.subr.bf16.mxu0 %v2410
    %2682 = vmatpush1.bf16.msra.mxu0 %v2409
    %2683 = vmatprep.subr.bf16.mxu0 %v2414
    %2684 = vmatpush1.bf16.msra.mxu0 %v2413
    %2685 = vmatprep.subr.bf16.mxu0 %v2418
    %2686 = vmatpush1.bf16.msra.mxu0 %v2417
    %2687 = vmatprep.subr.bf16.mxu0 %v2422
    %2688 = vmatpush1.bf16.msra.mxu0 %v2421
    %2689 = vmatprep.subr.bf16.mxu0 %v2426
    %2690 = vmatpush1.bf16.msra.mxu0 %v2425
    %2691 = vmatprep.subr.bf16.mxu0 %v2430
    %2692 = vmatpush1.bf16.msra.mxu0 %v2429
    %2693 = vmatprep.subr.bf16.mxu0 %v2434
    %2694 = vmatpush1.bf16.msra.mxu0 %v2433
    %2695 = vmatprep.subr.bf16.mxu0 %v2438
    %2696 = vmatpush1.bf16.msra.mxu0 %v2437
    %2697 = vmatprep.subr.bf16.mxu0 %v2442
    %2698 = vmatpush1.bf16.msra.mxu0 %v2441
    %2699 = vmatprep.subr.bf16.mxu0 %v2446
    %2700 = vmatpush1.bf16.msra.mxu0 %v2445
    %2701 = vmatprep.subr.bf16.mxu0 %v2450
    %2702 = vmatpush1.bf16.msra.mxu0 %v2449
    %2703 = vmatprep.subr.bf16.mxu0 %v2454
    %2704 = vmatpush1.bf16.msra.mxu0 %v2453
    %2705 = vmatprep.subr.bf16.mxu0 %v2458
    %2706 = vmatpush1.bf16.msra.mxu0 %v2457
    %2707 = vmatprep.subr.bf16.mxu0 %v2462
    %2708 = vmatpush1.bf16.msra.mxu0 %v2461
    %2709 = vmatprep.subr.bf16.mxu0 %v2466
    %2710 = vmatpush1.bf16.msra.mxu0 %v2465
    %2711 = vmatprep.subr.bf16.mxu0 %v2470
    %2712 = vmatpush1.bf16.msra.mxu0 %v2469
    %2713 = vmatprep.mubr.bf16.mxu0 %v2392
    %2714 = vmatmul.mubr.bf16.gmra.mrb[0].mxu0 %v2391
    %v2715 = vpop.f32.mrb[0].mxu0
    %v2716 = vadd.f32 0.0, %v2715
    %v2717 = vpop.f32.mrb[0].mxu0
    %v2718 = vadd.f32 0.0, %v2717
    %v2719 = vpop.f32.mrb[0].mxu0
    %v2720 = vadd.f32 0.0, %v2719
    %v2721 = vpop.f32.mrb[0].mxu0
    %v2722 = vadd.f32 0.0, %v2721
    %2723 = vmatprep.mubr.bf16.mxu0 %v2396
    %2724 = vmatmul.mubr.bf16.gmra.mrb[0].mxu0 %v2395
    %v2725 = vpop.f32.mrb[0].mxu0
    %v2726 = vadd.f32 0.0, %v2725
    %v2727 = vpop.f32.mrb[0].mxu0
    %v2728 = vadd.f32 0.0, %v2727
    %v2729 = vpop.f32.mrb[0].mxu0
    %v2730 = vadd.f32 0.0, %v2729
    %v2731 = vpop.f32.mrb[0].mxu0
    %v2732 = vadd.f32 0.0, %v2731
    %2733 = vmatprep.mubr.bf16.mxu0 %v2400
    %2734 = vmatmul.mubr.bf16.gmra.mrb[0].mxu0 %v2399
    %v2735 = vpop.f32.mrb[0].mxu0
    %v2736 = vadd.f32 0.0, %v2735
    %v2737 = vpop.f32.mrb[0].mxu0
    %v2738 = vadd.f32 0.0, %v2737
    %v2739 = vpop.f32.mrb[0].mxu0
    %v2740 = vadd.f32 0.0, %v2739
    %v2741 = vpop.f32.mrb[0].mxu0
    %v2742 = vadd.f32 0.0, %v2741
    %2743 = vmatprep.mubr.bf16.mxu0 %v2404
    %2744 = vmatmul.mubr.bf16.gmra.mrb[0].mxu0 %v2403
    %v2745 = vpop.f32.mrb[0].mxu0
    %v2746 = vadd.f32 0.0, %v2745
    %v2747 = vpop.f32.mrb[0].mxu0
    %v2748 = vadd.f32 0.0, %v2747
    %v2749 = vpop.f32.mrb[0].mxu0
    %v2750 = vadd.f32 0.0, %v2749
    %v2751 = vpop.f32.mrb[0].mxu0
    %v2752 = vadd.f32 0.0, %v2751
    %2753 = vdwg.mxu0
    %2754 = vmatprep.subr.bf16.mxu0 %v2474
    %2755 = vmatpush1.bf16.msra.mxu0 %v2473
    %2756 = vmatprep.subr.bf16.mxu0 %v2478
    %2757 = vmatpush1.bf16.msra.mxu0 %v2477
    %2758 = vmatprep.subr.bf16.mxu0 %v2482
    %2759 = vmatpush1.bf16.msra.mxu0 %v2481
    %2760 = vmatprep.subr.bf16.mxu0 %v2486
    %2761 = vmatpush1.bf16.msra.mxu0 %v2485
    %2762 = vmatprep.subr.bf16.mxu0 %v2490
    %2763 = vmatpush1.bf16.msra.mxu0 %v2489
    %2764 = vmatprep.subr.bf16.mxu0 %v2494
    %2765 = vmatpush1.bf16.msra.mxu0 %v2493
    %2766 = vmatprep.subr.bf16.mxu0 %v2498
    %2767 = vmatpush1.bf16.msra.mxu0 %v2497
    %2768 = vmatprep.subr.bf16.mxu0 %v2502
    %2769 = vmatpush1.bf16.msra.mxu0 %v2501
    %2770 = vmatprep.subr.bf16.mxu0 %v2506
    %2771 = vmatpush1.bf16.msra.mxu0 %v2505
    %2772 = vmatprep.subr.bf16.mxu0 %v2510
    %2773 = vmatpush1.bf16.msra.mxu0 %v2509
    %2774 = vmatprep.subr.bf16.mxu0 %v2514
    %2775 = vmatpush1.bf16.msra.mxu0 %v2513
    %2776 = vmatprep.subr.bf16.mxu0 %v2518
    %2777 = vmatpush1.bf16.msra.mxu0 %v2517
    %2778 = vmatprep.subr.bf16.mxu0 %v2522
    %2779 = vmatpush1.bf16.msra.mxu0 %v2521
    %2780 = vmatprep.subr.bf16.mxu0 %v2526
    %2781 = vmatpush1.bf16.msra.mxu0 %v2525
    %2782 = vmatprep.subr.bf16.mxu0 %v2530
    %2783 = vmatpush1.bf16.msra.mxu0 %v2529
    %2784 = vmatprep.subr.bf16.mxu0 %v2534
    %2785 = vmatpush1.bf16.msra.mxu0 %v2533
    %2786 = vmatprep.mubr.bf16.mxu0 %v2394
    %2787 = vmatmul.mubr.bf16.gmra.mrb[0].mxu0 %v2393
    %v2788 = vpop.f32.mrb[0].mxu0
    %v2789 = vadd.f32 %v2716, %v2788
    %v2790 = vpop.f32.mrb[0].mxu0
    %v2791 = vadd.f32 %v2718, %v2790
    %v2792 = vpop.f32.mrb[0].mxu0
    %v2793 = vadd.f32 %v2720, %v2792
    %v2794 = vpop.f32.mrb[0].mxu0
    %v2795 = vadd.f32 %v2722, %v2794
    %2796 = vmatprep.mubr.bf16.mxu0 %v2398
    %2797 = vmatmul.mubr.bf16.gmra.mrb[0].mxu0 %v2397
    %v2798 = vpop.f32.mrb[0].mxu0
    %v2799 = vadd.f32 %v2726, %v2798
    %v2800 = vpop.f32.mrb[0].mxu0
    %v2801 = vadd.f32 %v2728, %v2800
    %v2802 = vpop.f32.mrb[0].mxu0
    %v2803 = vadd.f32 %v2730, %v2802
    %v2804 = vpop.f32.mrb[0].mxu0
    %v2805 = vadd.f32 %v2732, %v2804
    %2806 = vmatprep.mubr.bf16.mxu0 %v2402
    %2807 = vmatmul.mubr.bf16.gmra.mrb[0].mxu0 %v2401
    %v2808 = vpop.f32.mrb[0].mxu0
    %v2809 = vadd.f32 %v2736, %v2808
    %v2810 = vpop.f32.mrb[0].mxu0
    %v2811 = vadd.f32 %v2738, %v2810
    %v2812 = vpop.f32.mrb[0].mxu0
    %v2813 = vadd.f32 %v2740, %v2812
    %v2814 = vpop.f32.mrb[0].mxu0
    %v2815 = vadd.f32 %v2742, %v2814
    %2816 = vmatprep.mubr.bf16.mxu0 %v2406
    %2817 = vmatmul.mubr.bf16.gmra.mrb[0].mxu0 %v2405
    %v2818 = vpop.f32.mrb[0].mxu0
    %v2819 = vadd.f32 %v2746, %v2818
    %v2820 = vpop.f32.mrb[0].mxu0
    %v2821 = vadd.f32 %v2748, %v2820
    %v2822 = vpop.f32.mrb[0].mxu0
    %v2823 = vadd.f32 %v2750, %v2822
    %v2824 = vpop.f32.mrb[0].mxu0
    %v2825 = vadd.f32 %v2752, %v2824
    %2826 = vdwg.mxu0
    %v2827 = vadd.f32 %v2643, %v2647
    %v2828 = vadd.f32 %v2827, %v2653
    %v2829 = vadd.f32 %v2828, %v2657
    %v2830 = vadd.f32 %v2829, %v2663
    %v2831 = vadd.f32 %v2830, %v2667
    %v2832 = vadd.f32 %v2831, %v2673
    %v2833 = vadd.f32 %v2832, %v2677
    %v2834 = vrot.slane %v2833, 4
    %v2835 = vadd.f32 %v2833, %v2834
    %v2836 = vrot.slane %v2835, 2
    %v2837 = vadd.f32 %v2835, %v2836
    %v2838 = vrot.slane %v2837, 1
    %v2839 = vadd.f32 %v2837, %v2838
    %v2840 = vadd.f32 %v2645, %v2649
    %v2841 = vadd.f32 %v2840, %v2655
    %v2842 = vadd.f32 %v2841, %v2659
    %v2843 = vadd.f32 %v2842, %v2665
    %v2844 = vadd.f32 %v2843, %v2669
    %v2845 = vadd.f32 %v2844, %v2675
    %v2846 = vadd.f32 %v2845, %v2679
    %v2847 = vrot.slane %v2846, 4
    %v2848 = vadd.f32 %v2846, %v2847
    %v2849 = vrot.slane %v2848, 2
    %v2850 = vadd.f32 %v2848, %v2849
    %v2851 = vrot.slane %v2850, 1
    %v2852 = vadd.f32 %v2850, %v2851
    %v2853 = vadd.f32 %v2789, %v2793
    %v2854 = vadd.f32 %v2853, %v2799
    %v2855 = vadd.f32 %v2854, %v2803
    %v2856 = vadd.f32 %v2855, %v2809
    %v2857 = vadd.f32 %v2856, %v2813
    %v2858 = vadd.f32 %v2857, %v2819
    %v2859 = vadd.f32 %v2858, %v2823
    %v2860 = vrot.slane %v2859, 4
    %v2861 = vadd.f32 %v2859, %v2860
    %v2862 = vrot.slane %v2861, 2
    %v2863 = vadd.f32 %v2861, %v2862
    %v2864 = vrot.slane %v2863, 1
    %v2865 = vadd.f32 %v2863, %v2864
    %v2866 = vadd.f32 %v2791, %v2795
    %v2867 = vadd.f32 %v2866, %v2801
    %v2868 = vadd.f32 %v2867, %v2805
    %v2869 = vadd.f32 %v2868, %v2811
    %v2870 = vadd.f32 %v2869, %v2815
    %v2871 = vadd.f32 %v2870, %v2821
    %v2872 = vadd.f32 %v2871, %v2825
    %v2873 = vrot.slane %v2872, 4
    %v2874 = vadd.f32 %v2872, %v2873
    %v2875 = vrot.slane %v2874, 2
    %v2876 = vadd.f32 %v2874, %v2875
    %v2877 = vrot.slane %v2876, 1
    %v2878 = vadd.f32 %v2876, %v2877
    %v2879 = vmul.f32 %v2839, 0.015625
    %v2880 = vmul.f32 %v2852, 0.015625
    %v2881 = vmul.f32 %v2865, 0.015625
    %v2882 = vmul.f32 %v2878, 0.015625
    %v2883 = vmul.f32 %v2643, %v2643
    %v2884 = vmul.f32 %v2645, %v2645
    %v2885 = vmul.f32 %v2789, %v2789
    %v2886 = vmul.f32 %v2791, %v2791
    %v2887 = vmul.f32 %v2647, %v2647
    %v2888 = vmul.f32 %v2649, %v2649
    %v2889 = vmul.f32 %v2793, %v2793
    %v2890 = vmul.f32 %v2795, %v2795
    %v2891 = vmul.f32 %v2653, %v2653
    %v2892 = vmul.f32 %v2655, %v2655
    %v2893 = vmul.f32 %v2799, %v2799
    %v2894 = vmul.f32 %v2801, %v2801
    %v2895 = vmul.f32 %v2657, %v2657
    %v2896 = vmul.f32 %v2659, %v2659
    %v2897 = vmul.f32 %v2803, %v2803
    %v2898 = vmul.f32 %v2805, %v2805
    %v2899 = vmul.f32 %v2663, %v2663
    %v2900 = vmul.f32 %v2665, %v2665
    %v2901 = vmul.f32 %v2809, %v2809
    %v2902 = vmul.f32 %v2811, %v2811
    %v2903 = vmul.f32 %v2667, %v2667
    %v2904 = vmul.f32 %v2669, %v2669
    %v2905 = vmul.f32 %v2813, %v2813
    %v2906 = vmul.f32 %v2815, %v2815
    %v2907 = vmul.f32 %v2673, %v2673
    %v2908 = vmul.f32 %v2675, %v2675
    %v2909 = vmul.f32 %v2819, %v2819
    %v2910 = vmul.f32 %v2821, %v2821
    %v2911 = vmul.f32 %v2677, %v2677
    %v2912 = vmul.f32 %v2679, %v2679
    %v2913 = vmul.f32 %v2823, %v2823
    %v2914 = vmul.f32 %v2825, %v2825
    %v2915 = vadd.f32 %v2883, %v2887
    %v2916 = vadd.f32 %v2915, %v2891
    %v2917 = vadd.f32 %v2916, %v2895
    %v2918 = vadd.f32 %v2917, %v2899
    %v2919 = vadd.f32 %v2918, %v2903
    %v2920 = vadd.f32 %v2919, %v2907
    %v2921 = vadd.f32 %v2920, %v2911
    %v2922 = vrot.slane %v2921, 4
    %v2923 = vadd.f32 %v2921, %v2922
    %v2924 = vrot.slane %v2923, 2
    %v2925 = vadd.f32 %v2923, %v2924
    %v2926 = vrot.slane %v2925, 1
    %v2927 = vadd.f32 %v2925, %v2926
    %v2928 = vadd.f32 %v2884, %v2888
    %v2929 = vadd.f32 %v2928, %v2892
    %v2930 = vadd.f32 %v2929, %v2896
    %v2931 = vadd.f32 %v2930, %v2900
    %v2932 = vadd.f32 %v2931, %v2904
    %v2933 = vadd.f32 %v2932, %v2908
    %v2934 = vadd.f32 %v2933, %v2912
    %v2935 = vrot.slane %v2934, 4
    %v2936 = vadd.f32 %v2934, %v2935
    %v2937 = vrot.slane %v2936, 2
    %v2938 = vadd.f32 %v2936, %v2937
    %v2939 = vrot.slane %v2938, 1
    %v2940 = vadd.f32 %v2938, %v2939
    %v2941 = vadd.f32 %v2885, %v2889
    %v2942 = vadd.f32 %v2941, %v2893
    %v2943 = vadd.f32 %v2942, %v2897
    %v2944 = vadd.f32 %v2943, %v2901
    %v2945 = vadd.f32 %v2944, %v2905
    %v2946 = vadd.f32 %v2945, %v2909
    %v2947 = vadd.f32 %v2946, %v2913
    %v2948 = vrot.slane %v2947, 4
    %v2949 = vadd.f32 %v2947, %v2948
    %v2950 = vrot.slane %v2949, 2
    %v2951 = vadd.f32 %v2949, %v2950
    %v2952 = vrot.slane %v2951, 1
    %v2953 = vadd.f32 %v2951, %v2952
    %v2954 = vadd.f32 %v2886, %v2890
    %v2955 = vadd.f32 %v2954, %v2894
    %v2956 = vadd.f32 %v2955, %v2898
    %v2957 = vadd.f32 %v2956, %v2902
    %v2958 = vadd.f32 %v2957, %v2906
    %v2959 = vadd.f32 %v2958, %v2910
    %v2960 = vadd.f32 %v2959, %v2914
    %v2961 = vrot.slane %v2960, 4
    %v2962 = vadd.f32 %v2960, %v2961
    %v2963 = vrot.slane %v2962, 2
    %v2964 = vadd.f32 %v2962, %v2963
    %v2965 = vrot.slane %v2964, 1
    %v2966 = vadd.f32 %v2964, %v2965
    %v2967 = vmul.f32 %v2927, 0.015625
    %v2968 = vmul.f32 %v2940, 0.015625
    %v2969 = vmul.f32 %v2953, 0.015625
    %v2970 = vmul.f32 %v2966, 0.015625
    %v2971 = vmul.f32 %v2879, %v2879
    %v2972 = vmul.f32 %v2880, %v2880
    %v2973 = vmul.f32 %v2881, %v2881
    %v2974 = vmul.f32 %v2882, %v2882
    %v2975 = vsub.f32 %v2967, %v2971
    %v2976 = vsub.f32 %v2968, %v2972
    %v2977 = vsub.f32 %v2969, %v2973
    %v2978 = vsub.f32 %v2970, %v2974
    %v2979 = vadd.f32 %v2975, 1e-05
    %v2980 = vadd.f32 %v2976, 1e-05
    %v2981 = vadd.f32 %v2977, 1e-05
    %v2982 = vadd.f32 %v2978, 1e-05
    %v2983 = vrsqrt.pop %v2979
    %v2984 = vrsqrt.pop %v2980
    %v2985 = vrsqrt.pop %v2981
    %v2986 = vrsqrt.pop %v2982
    %v2991 = vcombine.low %v2983, %v2984
    %v2992 = vcombine.low %v2985, %v2986
    %v2994 = vunpack.c.l.s4 1983009808
    %v2995 = vunpack.c.0.s8 %v2994
    %v2996 = vlaneseq
    %v2997 = vshrl.u32 %v2996, 7
    %v2998 = vsub.s32 %v2995, %v2997
    %v2999 = vrot.slane %v2991, %v2998
    %v3001 = vunpack.c.l.s4 1983009808
    %v3002 = vunpack.c.0.s8 %v3001
    %v3003 = vlaneseq
    %v3004 = vshrl.u32 %v3003, 7
    %v3005 = vsub.s32 %v3002, %v3004
    %v3006 = vrot.slane %v2992, %v3005
    %v3007 = vcombine.low %v2999, %v3006
    %v3009 = vmul.f32 %v206, %v3007
    %v3010 = vsub.f32 %v2643, %v2879
    %v3011 = vsub.f32 %v2645, %v2880
    %v3012 = vsub.f32 %v2789, %v2881
    %v3013 = vsub.f32 %v2791, %v2882
    %v3014 = vsub.f32 %v2647, %v2879
    %v3015 = vsub.f32 %v2649, %v2880
    %v3016 = vsub.f32 %v2793, %v2881
    %v3017 = vsub.f32 %v2795, %v2882
    %v3018 = vsub.f32 %v2653, %v2879
    %v3019 = vsub.f32 %v2655, %v2880
    %v3020 = vsub.f32 %v2799, %v2881
    %v3021 = vsub.f32 %v2801, %v2882
    %v3022 = vsub.f32 %v2657, %v2879
    %v3023 = vsub.f32 %v2659, %v2880
    %v3024 = vsub.f32 %v2803, %v2881
    %v3025 = vsub.f32 %v2805, %v2882
    %v3026 = vsub.f32 %v2663, %v2879
    %v3027 = vsub.f32 %v2665, %v2880
    %v3028 = vsub.f32 %v2809, %v2881
    %v3029 = vsub.f32 %v2811, %v2882
    %v3030 = vsub.f32 %v2667, %v2879
    %v3031 = vsub.f32 %v2669, %v2880
    %v3032 = vsub.f32 %v2813, %v2881
    %v3033 = vsub.f32 %v2815, %v2882
    %v3034 = vsub.f32 %v2673, %v2879
    %v3035 = vsub.f32 %v2675, %v2880
    %v3036 = vsub.f32 %v2819, %v2881
    %v3037 = vsub.f32 %v2821, %v2882
    %v3038 = vsub.f32 %v2677, %v2879
    %v3039 = vsub.f32 %v2679, %v2880
    %v3040 = vsub.f32 %v2823, %v2881
    %v3041 = vsub.f32 %v2825, %v2882
    %v3043 = vlaneseq
    %v3044 = vshrl.u32 %v3043, 7
    %v3045 = vsub.s32 0, %v3044
    %v3046 = vrot.slane %v3009, %v3045
    %v3047 = vlaneseq
    %v3048 = vshrl.u32 %v3047, 7
    %v3049 = vsub.s32 2, %v3048
    %v3050 = vrot.slane %v3009, %v3049
    %v3051 = vlaneseq
    %v3052 = vshrl.u32 %v3051, 7
    %v3053 = vsub.s32 4, %v3052
    %v3054 = vrot.slane %v3009, %v3053
    %v3055 = vlaneseq
    %v3056 = vshrl.u32 %v3055, 7
    %v3057 = vsub.s32 6, %v3056
    %v3058 = vrot.slane %v3009, %v3057
    %v3063 = vlaneseq
    %v3064 = vshrl.u32 %v3063, 7
    %v3065 = vsub.s32 0, %v3064
    %v3066 = vrot.slane %v3046, %v3065
    %v3067 = vlaneseq
    %v3068 = vshrl.u32 %v3067, 7
    %v3069 = vsub.s32 0, %v3068
    %v3070 = vrot.slane %v3050, %v3069
    %v3071 = vlaneseq
    %v3072 = vshrl.u32 %v3071, 7
    %v3073 = vsub.s32 0, %v3072
    %v3074 = vrot.slane %v3054, %v3073
    %v3075 = vlaneseq
    %v3076 = vshrl.u32 %v3075, 7
    %v3077 = vsub.s32 0, %v3076
    %v3078 = vrot.slane %v3058, %v3077
    %v3079 = vmul.f32 %v3010, %v3066
    %v3080 = vmul.f32 %v3011, %v3070
    %v3081 = vmul.f32 %v3012, %v3074
    %v3082 = vmul.f32 %v3013, %v3078
    %v3083 = vmul.f32 %v3014, %v3066
    %v3084 = vmul.f32 %v3015, %v3070
    %v3085 = vmul.f32 %v3016, %v3074
    %v3086 = vmul.f32 %v3017, %v3078
    %v3087 = vmul.f32 %v3018, %v3066
    %v3088 = vmul.f32 %v3019, %v3070
    %v3089 = vmul.f32 %v3020, %v3074
    %v3090 = vmul.f32 %v3021, %v3078
    %v3091 = vmul.f32 %v3022, %v3066
    %v3092 = vmul.f32 %v3023, %v3070
    %v3093 = vmul.f32 %v3024, %v3074
    %v3094 = vmul.f32 %v3025, %v3078
    %v3095 = vmul.f32 %v3026, %v3066
    %v3096 = vmul.f32 %v3027, %v3070
    %v3097 = vmul.f32 %v3028, %v3074
    %v3098 = vmul.f32 %v3029, %v3078
    %v3099 = vmul.f32 %v3030, %v3066
    %v3100 = vmul.f32 %v3031, %v3070
    %v3101 = vmul.f32 %v3032, %v3074
    %v3102 = vmul.f32 %v3033, %v3078
    %v3103 = vmul.f32 %v3034, %v3066
    %v3104 = vmul.f32 %v3035, %v3070
    %v3105 = vmul.f32 %v3036, %v3074
    %v3106 = vmul.f32 %v3037, %v3078
    %v3107 = vmul.f32 %v3038, %v3066
    %v3108 = vmul.f32 %v3039, %v3070
    %v3109 = vmul.f32 %v3040, %v3074
    %v3110 = vmul.f32 %v3041, %v3078
    %v3111 = vadd.f32 %v3079, %v1460
    %v3112 = vadd.f32 %v3080, %v1464
    %v3113 = vadd.f32 %v3081, %v1468
    %v3114 = vadd.f32 %v3082, %v1472
    %v3115 = vadd.f32 %v3083, %v1460
    %v3116 = vadd.f32 %v3084, %v1464
    %v3117 = vadd.f32 %v3085, %v1468
    %v3118 = vadd.f32 %v3086, %v1472
    %v3119 = vadd.f32 %v3087, %v1460
    %v3120 = vadd.f32 %v3088, %v1464
    %v3121 = vadd.f32 %v3089, %v1468
    %v3122 = vadd.f32 %v3090, %v1472
    %v3123 = vadd.f32 %v3091, %v1460
    %v3124 = vadd.f32 %v3092, %v1464
    %v3125 = vadd.f32 %v3093, %v1468
    %v3126 = vadd.f32 %v3094, %v1472
    %v3127 = vadd.f32 %v3095, %v1460
    %v3128 = vadd.f32 %v3096, %v1464
    %v3129 = vadd.f32 %v3097, %v1468
    %v3130 = vadd.f32 %v3098, %v1472
    %v3131 = vadd.f32 %v3099, %v1460
    %v3132 = vadd.f32 %v3100, %v1464
    %v3133 = vadd.f32 %v3101, %v1468
    %v3134 = vadd.f32 %v3102, %v1472
    %v3135 = vadd.f32 %v3103, %v1460
    %v3136 = vadd.f32 %v3104, %v1464
    %v3137 = vadd.f32 %v3105, %v1468
    %v3138 = vadd.f32 %v3106, %v1472
    %v3139 = vadd.f32 %v3107, %v1460
    %v3140 = vadd.f32 %v3108, %v1464
    %v3141 = vadd.f32 %v3109, %v1468
    %v3142 = vadd.f32 %v3110, %v1472
    %v3143 = vmul.f32 %v3111, 0.02
    %v3144 = vmul.f32 %v3112, 0.02
    %v3145 = vmul.f32 %v3113, 0.02
    %v3146 = vmul.f32 %v3114, 0.02
    %v3147 = vmul.f32 %v3115, 0.02
    %v3148 = vmul.f32 %v3116, 0.02
    %v3149 = vmul.f32 %v3117, 0.02
    %v3150 = vmul.f32 %v3118, 0.02
    %v3151 = vmul.f32 %v3119, 0.02
    %v3152 = vmul.f32 %v3120, 0.02
    %v3153 = vmul.f32 %v3121, 0.02
    %v3154 = vmul.f32 %v3122, 0.02
    %v3155 = vmul.f32 %v3123, 0.02
    %v3156 = vmul.f32 %v3124, 0.02
    %v3157 = vmul.f32 %v3125, 0.02
    %v3158 = vmul.f32 %v3126, 0.02
    %v3159 = vmul.f32 %v3127, 0.02
    %v3160 = vmul.f32 %v3128, 0.02
    %v3161 = vmul.f32 %v3129, 0.02
    %v3162 = vmul.f32 %v3130, 0.02
    %v3163 = vmul.f32 %v3131, 0.02
    %v3164 = vmul.f32 %v3132, 0.02
    %v3165 = vmul.f32 %v3133, 0.02
    %v3166 = vmul.f32 %v3134, 0.02
    %v3167 = vmul.f32 %v3135, 0.02
    %v3168 = vmul.f32 %v3136, 0.02
    %v3169 = vmul.f32 %v3137, 0.02
    %v3170 = vmul.f32 %v3138, 0.02
    %v3171 = vmul.f32 %v3139, 0.02
    %v3172 = vmul.f32 %v3140, 0.02
    %v3173 = vmul.f32 %v3141, 0.02
    %v3174 = vmul.f32 %v3142, 0.02
    %v3175 = vmax.f32 %v3111, %v3143
    %v3176 = vmax.f32 %v3112, %v3144
    %v3177 = vmax.f32 %v3113, %v3145
    %v3178 = vmax.f32 %v3114, %v3146
    %v3179 = vmax.f32 %v3115, %v3147
    %v3180 = vmax.f32 %v3116, %v3148
    %v3181 = vmax.f32 %v3117, %v3149
    %v3182 = vmax.f32 %v3118, %v3150
    %v3183 = vmax.f32 %v3119, %v3151
    %v3184 = vmax.f32 %v3120, %v3152
    %v3185 = vmax.f32 %v3121, %v3153
    %v3186 = vmax.f32 %v3122, %v3154
    %v3187 = vmax.f32 %v3123, %v3155
    %v3188 = vmax.f32 %v3124, %v3156
    %v3189 = vmax.f32 %v3125, %v3157
    %v3190 = vmax.f32 %v3126, %v3158
    %v3191 = vmax.f32 %v3127, %v3159
    %v3192 = vmax.f32 %v3128, %v3160
    %v3193 = vmax.f32 %v3129, %v3161
    %v3194 = vmax.f32 %v3130, %v3162
    %v3195 = vmax.f32 %v3131, %v3163
    %v3196 = vmax.f32 %v3132, %v3164
    %v3197 = vmax.f32 %v3133, %v3165
    %v3198 = vmax.f32 %v3134, %v3166
    %v3199 = vmax.f32 %v3135, %v3167
    %v3200 = vmax.f32 %v3136, %v3168
    %v3201 = vmax.f32 %v3137, %v3169
    %v3202 = vmax.f32 %v3138, %v3170
    %v3203 = vmax.f32 %v3139, %v3171
    %v3204 = vmax.f32 %v3140, %v3172
    %v3205 = vmax.f32 %v3141, %v3173
    %v3206 = vmax.f32 %v3142, %v3174
    %s3207 = sshll.u32 %s1570, 4
    %3208 = dma.done %s136, %s3207
    %v3209 = vpack.c.bf16 %v3179, %v3175
    %v3210 = vpack.c.bf16 %v3180, %v3176
    %v3211 = vpack.c.bf16 %v3181, %v3177
    %v3212 = vpack.c.bf16 %v3182, %v3178
    %v3213 = vpack.c.bf16 %v3187, %v3183
    %v3214 = vpack.c.bf16 %v3188, %v3184
    %v3215 = vpack.c.bf16 %v3189, %v3185
    %v3216 = vpack.c.bf16 %v3190, %v3186
    %v3217 = vpack.c.bf16 %v3195, %v3191
    %v3218 = vpack.c.bf16 %v3196, %v3192
    %v3219 = vpack.c.bf16 %v3197, %v3193
    %v3220 = vpack.c.bf16 %v3198, %v3194
    %v3221 = vpack.c.bf16 %v3203, %v3199
    %v3222 = vpack.c.bf16 %v3204, %v3200
    %v3223 = vpack.c.bf16 %v3205, %v3201
    %v3224 = vpack.c.bf16 %v3206, %v3202
    %v3225 = vld [vmem:[#allocation6] sm:$0xff]
    %v3226 = vld [vmem:[#allocation6 + $0x8] sm:$0xff]
    %v3227 = vld [vmem:[#allocation6 + $0x10] sm:$0xff]
    %v3228 = vld [vmem:[#allocation6 + $0x18] sm:$0xff]
    %v3229 = vld [vmem:[#allocation6 + $0x20] sm:$0xff]
    %v3230 = vld [vmem:[#allocation6 + $0x28] sm:$0xff]
    %v3231 = vld [vmem:[#allocation6 + $0x30] sm:$0xff]
    %v3232 = vld [vmem:[#allocation6 + $0x38] sm:$0xff]
    %v3233 = vld [vmem:[#allocation6 + $0x40] sm:$0xff]
    %v3234 = vld [vmem:[#allocation6 + $0x48] sm:$0xff]
    %v3235 = vld [vmem:[#allocation6 + $0x50] sm:$0xff]
    %v3236 = vld [vmem:[#allocation6 + $0x58] sm:$0xff]
    %v3237 = vld [vmem:[#allocation6 + $0x60] sm:$0xff]
    %v3238 = vld [vmem:[#allocation6 + $0x68] sm:$0xff]
    %v3239 = vld [vmem:[#allocation6 + $0x70] sm:$0xff]
    %v3240 = vld [vmem:[#allocation6 + $0x78] sm:$0xff]
    %v3241 = vld [vmem:[#allocation6 + $0x80] sm:$0xff]
    %v3242 = vld [vmem:[#allocation6 + $0x88] sm:$0xff]
    %v3243 = vld [vmem:[#allocation6 + $0x90] sm:$0xff]
    %v3244 = vld [vmem:[#allocation6 + $0x98] sm:$0xff]
    %v3245 = vld [vmem:[#allocation6 + $0xa0] sm:$0xff]
    %v3246 = vld [vmem:[#allocation6 + $0xa8] sm:$0xff]
    %v3247 = vld [vmem:[#allocation6 + $0xb0] sm:$0xff]
    %v3248 = vld [vmem:[#allocation6 + $0xb8] sm:$0xff]
    %v3249 = vld [vmem:[#allocation6 + $0xc0] sm:$0xff]
    %v3250 = vld [vmem:[#allocation6 + $0xc8] sm:$0xff]
    %v3251 = vld [vmem:[#allocation6 + $0xd0] sm:$0xff]
    %v3252 = vld [vmem:[#allocation6 + $0xd8] sm:$0xff]
    %v3253 = vld [vmem:[#allocation6 + $0xe0] sm:$0xff]
    %v3254 = vld [vmem:[#allocation6 + $0xe8] sm:$0xff]
    %v3255 = vld [vmem:[#allocation6 + $0xf0] sm:$0xff]
    %v3256 = vld [vmem:[#allocation6 + $0xf8] sm:$0xff]
    %v3257 = vld [vmem:[#allocation6 + $0x100] sm:$0xff]
    %v3258 = vld [vmem:[#allocation6 + $0x108] sm:$0xff]
    %v3259 = vld [vmem:[#allocation6 + $0x110] sm:$0xff]
    %v3260 = vld [vmem:[#allocation6 + $0x118] sm:$0xff]
    %v3261 = vld [vmem:[#allocation6 + $0x120] sm:$0xff]
    %v3262 = vld [vmem:[#allocation6 + $0x128] sm:$0xff]
    %v3263 = vld [vmem:[#allocation6 + $0x130] sm:$0xff]
    %v3264 = vld [vmem:[#allocation6 + $0x138] sm:$0xff]
    %v3265 = vld [vmem:[#allocation6 + $0x140] sm:$0xff]
    %v3266 = vld [vmem:[#allocation6 + $0x148] sm:$0xff]
    %v3267 = vld [vmem:[#allocation6 + $0x150] sm:$0xff]
    %v3268 = vld [vmem:[#allocation6 + $0x158] sm:$0xff]
    %v3269 = vld [vmem:[#allocation6 + $0x160] sm:$0xff]
    %v3270 = vld [vmem:[#allocation6 + $0x168] sm:$0xff]
    %v3271 = vld [vmem:[#allocation6 + $0x170] sm:$0xff]
    %v3272 = vld [vmem:[#allocation6 + $0x178] sm:$0xff]
    %v3273 = vld [vmem:[#allocation6 + $0x180] sm:$0xff]
    %v3274 = vld [vmem:[#allocation6 + $0x188] sm:$0xff]
    %v3275 = vld [vmem:[#allocation6 + $0x190] sm:$0xff]
    %v3276 = vld [vmem:[#allocation6 + $0x198] sm:$0xff]
    %v3277 = vld [vmem:[#allocation6 + $0x1a0] sm:$0xff]
    %v3278 = vld [vmem:[#allocation6 + $0x1a8] sm:$0xff]
    %v3279 = vld [vmem:[#allocation6 + $0x1b0] sm:$0xff]
    %v3280 = vld [vmem:[#allocation6 + $0x1b8] sm:$0xff]
    %v3281 = vld [vmem:[#allocation6 + $0x1c0] sm:$0xff]
    %v3282 = vld [vmem:[#allocation6 + $0x1c8] sm:$0xff]
    %v3283 = vld [vmem:[#allocation6 + $0x1d0] sm:$0xff]
    %v3284 = vld [vmem:[#allocation6 + $0x1d8] sm:$0xff]
    %v3285 = vld [vmem:[#allocation6 + $0x1e0] sm:$0xff]
    %v3286 = vld [vmem:[#allocation6 + $0x1e8] sm:$0xff]
    %v3287 = vld [vmem:[#allocation6 + $0x1f0] sm:$0xff]
    %v3288 = vld [vmem:[#allocation6 + $0x1f8] sm:$0xff]
    %v3289 = vld [vmem:[#allocation6 + $0x200] sm:$0xff]
    %v3290 = vld [vmem:[#allocation6 + $0x208] sm:$0xff]
    %v3291 = vld [vmem:[#allocation6 + $0x210] sm:$0xff]
    %v3292 = vld [vmem:[#allocation6 + $0x218] sm:$0xff]
    %v3293 = vld [vmem:[#allocation6 + $0x220] sm:$0xff]
    %v3294 = vld [vmem:[#allocation6 + $0x228] sm:$0xff]
    %v3295 = vld [vmem:[#allocation6 + $0x230] sm:$0xff]
    %v3296 = vld [vmem:[#allocation6 + $0x238] sm:$0xff]
    %v3297 = vld [vmem:[#allocation6 + $0x240] sm:$0xff]
    %v3298 = vld [vmem:[#allocation6 + $0x248] sm:$0xff]
    %v3299 = vld [vmem:[#allocation6 + $0x250] sm:$0xff]
    %v3300 = vld [vmem:[#allocation6 + $0x258] sm:$0xff]
    %v3301 = vld [vmem:[#allocation6 + $0x260] sm:$0xff]
    %v3302 = vld [vmem:[#allocation6 + $0x268] sm:$0xff]
    %v3303 = vld [vmem:[#allocation6 + $0x270] sm:$0xff]
    %v3304 = vld [vmem:[#allocation6 + $0x278] sm:$0xff]
    %v3305 = vld [vmem:[#allocation6 + $0x280] sm:$0xff]
    %v3306 = vld [vmem:[#allocation6 + $0x288] sm:$0xff]
    %v3307 = vld [vmem:[#allocation6 + $0x290] sm:$0xff]
    %v3308 = vld [vmem:[#allocation6 + $0x298] sm:$0xff]
    %v3309 = vld [vmem:[#allocation6 + $0x2a0] sm:$0xff]
    %v3310 = vld [vmem:[#allocation6 + $0x2a8] sm:$0xff]
    %v3311 = vld [vmem:[#allocation6 + $0x2b0] sm:$0xff]
    %v3312 = vld [vmem:[#allocation6 + $0x2b8] sm:$0xff]
    %v3313 = vld [vmem:[#allocation6 + $0x2c0] sm:$0xff]
    %v3314 = vld [vmem:[#allocation6 + $0x2c8] sm:$0xff]
    %v3315 = vld [vmem:[#allocation6 + $0x2d0] sm:$0xff]
    %v3316 = vld [vmem:[#allocation6 + $0x2d8] sm:$0xff]
    %v3317 = vld [vmem:[#allocation6 + $0x2e0] sm:$0xff]
    %v3318 = vld [vmem:[#allocation6 + $0x2e8] sm:$0xff]
    %v3319 = vld [vmem:[#allocation6 + $0x2f0] sm:$0xff]
    %v3320 = vld [vmem:[#allocation6 + $0x2f8] sm:$0xff]
    %v3321 = vld [vmem:[#allocation6 + $0x300] sm:$0xff]
    %v3322 = vld [vmem:[#allocation6 + $0x308] sm:$0xff]
    %v3323 = vld [vmem:[#allocation6 + $0x310] sm:$0xff]
    %v3324 = vld [vmem:[#allocation6 + $0x318] sm:$0xff]
    %v3325 = vld [vmem:[#allocation6 + $0x320] sm:$0xff]
    %v3326 = vld [vmem:[#allocation6 + $0x328] sm:$0xff]
    %v3327 = vld [vmem:[#allocation6 + $0x330] sm:$0xff]
    %v3328 = vld [vmem:[#allocation6 + $0x338] sm:$0xff]
    %v3329 = vld [vmem:[#allocation6 + $0x340] sm:$0xff]
    %v3330 = vld [vmem:[#allocation6 + $0x348] sm:$0xff]
    %v3331 = vld [vmem:[#allocation6 + $0x350] sm:$0xff]
    %v3332 = vld [vmem:[#allocation6 + $0x358] sm:$0xff]
    %v3333 = vld [vmem:[#allocation6 + $0x360] sm:$0xff]
    %v3334 = vld [vmem:[#allocation6 + $0x368] sm:$0xff]
    %v3335 = vld [vmem:[#allocation6 + $0x370] sm:$0xff]
    %v3336 = vld [vmem:[#allocation6 + $0x378] sm:$0xff]
    %v3337 = vld [vmem:[#allocation6 + $0x380] sm:$0xff]
    %v3338 = vld [vmem:[#allocation6 + $0x388] sm:$0xff]
    %v3339 = vld [vmem:[#allocation6 + $0x390] sm:$0xff]
    %v3340 = vld [vmem:[#allocation6 + $0x398] sm:$0xff]
    %v3341 = vld [vmem:[#allocation6 + $0x3a0] sm:$0xff]
    %v3342 = vld [vmem:[#allocation6 + $0x3a8] sm:$0xff]
    %v3343 = vld [vmem:[#allocation6 + $0x3b0] sm:$0xff]
    %v3344 = vld [vmem:[#allocation6 + $0x3b8] sm:$0xff]
    %v3345 = vld [vmem:[#allocation6 + $0x3c0] sm:$0xff]
    %v3346 = vld [vmem:[#allocation6 + $0x3c8] sm:$0xff]
    %v3347 = vld [vmem:[#allocation6 + $0x3d0] sm:$0xff]
    %v3348 = vld [vmem:[#allocation6 + $0x3d8] sm:$0xff]
    %v3349 = vld [vmem:[#allocation6 + $0x3e0] sm:$0xff]
    %v3350 = vld [vmem:[#allocation6 + $0x3e8] sm:$0xff]
    %v3351 = vld [vmem:[#allocation6 + $0x3f0] sm:$0xff]
    %v3352 = vld [vmem:[#allocation6 + $0x3f8] sm:$0xff]
    %3353 = vmatprep.subr.bf16.mxu0 %v3226
    %3354 = vmatpush1.bf16.msra.mxu0 %v3225
    %3355 = vmatprep.subr.bf16.mxu0 %v3230
    %3356 = vmatpush1.bf16.msra.mxu0 %v3229
    %3357 = vmatprep.subr.bf16.mxu0 %v3234
    %3358 = vmatpush1.bf16.msra.mxu0 %v3233
    %3359 = vmatprep.subr.bf16.mxu0 %v3238
    %3360 = vmatpush1.bf16.msra.mxu0 %v3237
    %3361 = vmatprep.subr.bf16.mxu0 %v3242
    %3362 = vmatpush1.bf16.msra.mxu0 %v3241
    %3363 = vmatprep.subr.bf16.mxu0 %v3246
    %3364 = vmatpush1.bf16.msra.mxu0 %v3245
    %3365 = vmatprep.subr.bf16.mxu0 %v3250
    %3366 = vmatpush1.bf16.msra.mxu0 %v3249
    %3367 = vmatprep.subr.bf16.mxu0 %v3254
    %3368 = vmatpush1.bf16.msra.mxu0 %v3253
    %3369 = vmatprep.subr.bf16.mxu0 %v3258
    %3370 = vmatpush1.bf16.msra.mxu0 %v3257
    %3371 = vmatprep.subr.bf16.mxu0 %v3262
    %3372 = vmatpush1.bf16.msra.mxu0 %v3261
    %3373 = vmatprep.subr.bf16.mxu0 %v3266
    %3374 = vmatpush1.bf16.msra.mxu0 %v3265
    %3375 = vmatprep.subr.bf16.mxu0 %v3270
    %3376 = vmatpush1.bf16.msra.mxu0 %v3269
    %3377 = vmatprep.subr.bf16.mxu0 %v3274
    %3378 = vmatpush1.bf16.msra.mxu0 %v3273
    %3379 = vmatprep.subr.bf16.mxu0 %v3278
    %3380 = vmatpush1.bf16.msra.mxu0 %v3277
    %3381 = vmatprep.subr.bf16.mxu0 %v3282
    %3382 = vmatpush1.bf16.msra.mxu0 %v3281
    %3383 = vmatprep.subr.bf16.mxu0 %v3286
    %3384 = vmatpush1.bf16.msra.mxu0 %v3285
    %3385 = vmatprep.mubr.bf16.mxu0 %v3210
    %3386 = vmatmul.mubr.bf16.gmra.mrb[0].mxu0 %v3209
    %v3387 = vpop.f32.mrb[0].mxu0
    %v3388 = vadd.f32 0.0, %v3387
    %v3389 = vpop.f32.mrb[0].mxu0
    %v3390 = vadd.f32 0.0, %v3389
    %v3391 = vpop.f32.mrb[0].mxu0
    %v3392 = vadd.f32 0.0, %v3391
    %v3393 = vpop.f32.mrb[0].mxu0
    %v3394 = vadd.f32 0.0, %v3393
    %3395 = vmatprep.mubr.bf16.mxu0 %v3214
    %3396 = vmatmul.mubr.bf16.gmra.mrb[0].mxu0 %v3213
    %v3397 = vpop.f32.mrb[0].mxu0
    %v3398 = vadd.f32 0.0, %v3397
    %v3399 = vpop.f32.mrb[0].mxu0
    %v3400 = vadd.f32 0.0, %v3399
    %v3401 = vpop.f32.mrb[0].mxu0
    %v3402 = vadd.f32 0.0, %v3401
    %v3403 = vpop.f32.mrb[0].mxu0
    %v3404 = vadd.f32 0.0, %v3403
    %3405 = vmatprep.mubr.bf16.mxu0 %v3218
    %3406 = vmatmul.mubr.bf16.gmra.mrb[0].mxu0 %v3217
    %v3407 = vpop.f32.mrb[0].mxu0
    %v3408 = vadd.f32 0.0, %v3407
    %v3409 = vpop.f32.mrb[0].mxu0
    %v3410 = vadd.f32 0.0, %v3409
    %v3411 = vpop.f32.mrb[0].mxu0
    %v3412 = vadd.f32 0.0, %v3411
    %v3413 = vpop.f32.mrb[0].mxu0
    %v3414 = vadd.f32 0.0, %v3413
    %3415 = vmatprep.mubr.bf16.mxu0 %v3222
    %3416 = vmatmul.mubr.bf16.gmra.mrb[0].mxu0 %v3221
    %v3417 = vpop.f32.mrb[0].mxu0
    %v3418 = vadd.f32 0.0, %v3417
    %v3419 = vpop.f32.mrb[0].mxu0
    %v3420 = vadd.f32 0.0, %v3419
    %v3421 = vpop.f32.mrb[0].mxu0
    %v3422 = vadd.f32 0.0, %v3421
    %v3423 = vpop.f32.mrb[0].mxu0
    %v3424 = vadd.f32 0.0, %v3423
    %3425 = vdwg.mxu0
    %3426 = vmatprep.subr.bf16.mxu0 %v3290
    %3427 = vmatpush1.bf16.msra.mxu0 %v3289
    %3428 = vmatprep.subr.bf16.mxu0 %v3294
    %3429 = vmatpush1.bf16.msra.mxu0 %v3293
    %3430 = vmatprep.subr.bf16.mxu0 %v3298
    %3431 = vmatpush1.bf16.msra.mxu0 %v3297
    %3432 = vmatprep.subr.bf16.mxu0 %v3302
    %3433 = vmatpush1.bf16.msra.mxu0 %v3301
    %3434 = vmatprep.subr.bf16.mxu0 %v3306
    %3435 = vmatpush1.bf16.msra.mxu0 %v3305
    %3436 = vmatprep.subr.bf16.mxu0 %v3310
    %3437 = vmatpush1.bf16.msra.mxu0 %v3309
    %3438 = vmatprep.subr.bf16.mxu0 %v3314
    %3439 = vmatpush1.bf16.msra.mxu0 %v3313
    %3440 = vmatprep.subr.bf16.mxu0 %v3318
    %3441 = vmatpush1.bf16.msra.mxu0 %v3317
    %3442 = vmatprep.subr.bf16.mxu0 %v3322
    %3443 = vmatpush1.bf16.msra.mxu0 %v3321
    %3444 = vmatprep.subr.bf16.mxu0 %v3326
    %3445 = vmatpush1.bf16.msra.mxu0 %v3325
    %3446 = vmatprep.subr.bf16.mxu0 %v3330
    %3447 = vmatpush1.bf16.msra.mxu0 %v3329
    %3448 = vmatprep.subr.bf16.mxu0 %v3334
    %3449 = vmatpush1.bf16.msra.mxu0 %v3333
    %3450 = vmatprep.subr.bf16.mxu0 %v3338
    %3451 = vmatpush1.bf16.msra.mxu0 %v3337
    %3452 = vmatprep.subr.bf16.mxu0 %v3342
    %3453 = vmatpush1.bf16.msra.mxu0 %v3341
    %3454 = vmatprep.subr.bf16.mxu0 %v3346
    %3455 = vmatpush1.bf16.msra.mxu0 %v3345
    %3456 = vmatprep.subr.bf16.mxu0 %v3350
    %3457 = vmatpush1.bf16.msra.mxu0 %v3349
    %3458 = vmatprep.mubr.bf16.mxu0 %v3212
    %3459 = vmatmul.mubr.bf16.gmra.mrb[0].mxu0 %v3211
    %v3460 = vpop.f32.mrb[0].mxu0
    %v3461 = vadd.f32 %v3388, %v3460
    %v3462 = vpop.f32.mrb[0].mxu0
    %v3463 = vadd.f32 %v3390, %v3462
    %v3464 = vpop.f32.mrb[0].mxu0
    %v3465 = vadd.f32 %v3392, %v3464
    %v3466 = vpop.f32.mrb[0].mxu0
    %v3467 = vadd.f32 %v3394, %v3466
    %3468 = vmatprep.mubr.bf16.mxu0 %v3216
    %3469 = vmatmul.mubr.bf16.gmra.mrb[0].mxu0 %v3215
    %v3470 = vpop.f32.mrb[0].mxu0
    %v3471 = vadd.f32 %v3398, %v3470
    %v3472 = vpop.f32.mrb[0].mxu0
    %v3473 = vadd.f32 %v3400, %v3472
    %v3474 = vpop.f32.mrb[0].mxu0
    %v3475 = vadd.f32 %v3402, %v3474
    %v3476 = vpop.f32.mrb[0].mxu0
    %v3477 = vadd.f32 %v3404, %v3476
    %3478 = vmatprep.mubr.bf16.mxu0 %v3220
    %3479 = vmatmul.mubr.bf16.gmra.mrb[0].mxu0 %v3219
    %v3480 = vpop.f32.mrb[0].mxu0
    %v3481 = vadd.f32 %v3408, %v3480
    %v3482 = vpop.f32.mrb[0].mxu0
    %v3483 = vadd.f32 %v3410, %v3482
    %v3484 = vpop.f32.mrb[0].mxu0
    %v3485 = vadd.f32 %v3412, %v3484
    %v3486 = vpop.f32.mrb[0].mxu0
    %v3487 = vadd.f32 %v3414, %v3486
    %3488 = vmatprep.mubr.bf16.mxu0 %v3224
    %3489 = vmatmul.mubr.bf16.gmra.mrb[0].mxu0 %v3223
    %v3490 = vpop.f32.mrb[0].mxu0
    %v3491 = vadd.f32 %v3418, %v3490
    %v3492 = vpop.f32.mrb[0].mxu0
    %v3493 = vadd.f32 %v3420, %v3492
    %v3494 = vpop.f32.mrb[0].mxu0
    %v3495 = vadd.f32 %v3422, %v3494
    %v3496 = vpop.f32.mrb[0].mxu0
    %v3497 = vadd.f32 %v3424, %v3496
    %3498 = vdwg.mxu0
    %3499 = vmatprep.subr.bf16.mxu0 %v3228
    %3500 = vmatpush1.bf16.msra.mxu0 %v3227
    %3501 = vmatprep.subr.bf16.mxu0 %v3232
    %3502 = vmatpush1.bf16.msra.mxu0 %v3231
    %3503 = vmatprep.subr.bf16.mxu0 %v3236
    %3504 = vmatpush1.bf16.msra.mxu0 %v3235
    %3505 = vmatprep.subr.bf16.mxu0 %v3240
    %3506 = vmatpush1.bf16.msra.mxu0 %v3239
    %3507 = vmatprep.subr.bf16.mxu0 %v3244
    %3508 = vmatpush1.bf16.msra.mxu0 %v3243
    %3509 = vmatprep.subr.bf16.mxu0 %v3248
    %3510 = vmatpush1.bf16.msra.mxu0 %v3247
    %3511 = vmatprep.subr.bf16.mxu0 %v3252
    %3512 = vmatpush1.bf16.msra.mxu0 %v3251
    %3513 = vmatprep.subr.bf16.mxu0 %v3256
    %3514 = vmatpush1.bf16.msra.mxu0 %v3255
    %3515 = vmatprep.subr.bf16.mxu0 %v3260
    %3516 = vmatpush1.bf16.msra.mxu0 %v3259
    %3517 = vmatprep.subr.bf16.mxu0 %v3264
    %3518 = vmatpush1.bf16.msra.mxu0 %v3263
    %3519 = vmatprep.subr.bf16.mxu0 %v3268
    %3520 = vmatpush1.bf16.msra.mxu0 %v3267
    %3521 = vmatprep.subr.bf16.mxu0 %v3272
    %3522 = vmatpush1.bf16.msra.mxu0 %v3271
    %3523 = vmatprep.subr.bf16.mxu0 %v3276
    %3524 = vmatpush1.bf16.msra.mxu0 %v3275
    %3525 = vmatprep.subr.bf16.mxu0 %v3280
    %3526 = vmatpush1.bf16.msra.mxu0 %v3279
    %3527 = vmatprep.subr.bf16.mxu0 %v3284
    %3528 = vmatpush1.bf16.msra.mxu0 %v3283
    %3529 = vmatprep.subr.bf16.mxu0 %v3288
    %3530 = vmatpush1.bf16.msra.mxu0 %v3287
    %3531 = vmatprep.mubr.bf16.mxu0 %v3210
    %3532 = vmatmul.mubr.bf16.gmra.mrb[0].mxu0 %v3209
    %v3533 = vpop.f32.mrb[0].mxu0
    %v3534 = vadd.f32 0.0, %v3533
    %v3535 = vpop.f32.mrb[0].mxu0
    %v3536 = vadd.f32 0.0, %v3535
    %v3537 = vpop.f32.mrb[0].mxu0
    %v3538 = vadd.f32 0.0, %v3537
    %v3539 = vpop.f32.mrb[0].mxu0
    %v3540 = vadd.f32 0.0, %v3539
    %3541 = vmatprep.mubr.bf16.mxu0 %v3214
    %3542 = vmatmul.mubr.bf16.gmra.mrb[0].mxu0 %v3213
    %v3543 = vpop.f32.mrb[0].mxu0
    %v3544 = vadd.f32 0.0, %v3543
    %v3545 = vpop.f32.mrb[0].mxu0
    %v3546 = vadd.f32 0.0, %v3545
    %v3547 = vpop.f32.mrb[0].mxu0
    %v3548 = vadd.f32 0.0, %v3547
    %v3549 = vpop.f32.mrb[0].mxu0
    %v3550 = vadd.f32 0.0, %v3549
    %3551 = vmatprep.mubr.bf16.mxu0 %v3218
    %3552 = vmatmul.mubr.bf16.gmra.mrb[0].mxu0 %v3217
    %v3553 = vpop.f32.mrb[0].mxu0
    %v3554 = vadd.f32 0.0, %v3553
    %v3555 = vpop.f32.mrb[0].mxu0
    %v3556 = vadd.f32 0.0, %v3555
    %v3557 = vpop.f32.mrb[0].mxu0
    %v3558 = vadd.f32 0.0, %v3557
    %v3559 = vpop.f32.mrb[0].mxu0
    %v3560 = vadd.f32 0.0, %v3559
    %3561 = vmatprep.mubr.bf16.mxu0 %v3222
    %3562 = vmatmul.mubr.bf16.gmra.mrb[0].mxu0 %v3221
    %v3563 = vpop.f32.mrb[0].mxu0
    %v3564 = vadd.f32 0.0, %v3563
    %v3565 = vpop.f32.mrb[0].mxu0
    %v3566 = vadd.f32 0.0, %v3565
    %v3567 = vpop.f32.mrb[0].mxu0
    %v3568 = vadd.f32 0.0, %v3567
    %v3569 = vpop.f32.mrb[0].mxu0
    %v3570 = vadd.f32 0.0, %v3569
    %3571 = vdwg.mxu0
    %3572 = vmatprep.subr.bf16.mxu0 %v3292
    %3573 = vmatpush1.bf16.msra.mxu0 %v3291
    %3574 = vmatprep.subr.bf16.mxu0 %v3296
    %3575 = vmatpush1.bf16.msra.mxu0 %v3295
    %3576 = vmatprep.subr.bf16.mxu0 %v3300
    %3577 = vmatpush1.bf16.msra.mxu0 %v3299
    %3578 = vmatprep.subr.bf16.mxu0 %v3304
    %3579 = vmatpush1.bf16.msra.mxu0 %v3303
    %3580 = vmatprep.subr.bf16.mxu0 %v3308
    %3581 = vmatpush1.bf16.msra.mxu0 %v3307
    %3582 = vmatprep.subr.bf16.mxu0 %v3312
    %3583 = vmatpush1.bf16.msra.mxu0 %v3311
    %3584 = vmatprep.subr.bf16.mxu0 %v3316
    %3585 = vmatpush1.bf16.msra.mxu0 %v3315
    %3586 = vmatprep.subr.bf16.mxu0 %v3320
    %3587 = vmatpush1.bf16.msra.mxu0 %v3319
    %3588 = vmatprep.subr.bf16.mxu0 %v3324
    %3589 = vmatpush1.bf16.msra.mxu0 %v3323
    %3590 = vmatprep.subr.bf16.mxu0 %v3328
    %3591 = vmatpush1.bf16.msra.mxu0 %v3327
    %3592 = vmatprep.subr.bf16.mxu0 %v3332
    %3593 = vmatpush1.bf16.msra.mxu0 %v3331
    %3594 = vmatprep.subr.bf16.mxu0 %v3336
    %3595 = vmatpush1.bf16.msra.mxu0 %v3335
    %3596 = vmatprep.subr.bf16.mxu0 %v3340
    %3597 = vmatpush1.bf16.msra.mxu0 %v3339
    %3598 = vmatprep.subr.bf16.mxu0 %v3344
    %3599 = vmatpush1.bf16.msra.mxu0 %v3343
    %3600 = vmatprep.subr.bf16.mxu0 %v3348
    %3601 = vmatpush1.bf16.msra.mxu0 %v3347
    %3602 = vmatprep.subr.bf16.mxu0 %v3352
    %3603 = vmatpush1.bf16.msra.mxu0 %v3351
    %3604 = vmatprep.mubr.bf16.mxu0 %v3212
    %3605 = vmatmul.mubr.bf16.gmra.mrb[0].mxu0 %v3211
    %v3606 = vpop.f32.mrb[0].mxu0
    %v3607 = vadd.f32 %v3534, %v3606
    %v3608 = vpop.f32.mrb[0].mxu0
    %v3609 = vadd.f32 %v3536, %v3608
    %v3610 = vpop.f32.mrb[0].mxu0
    %v3611 = vadd.f32 %v3538, %v3610
    %v3612 = vpop.f32.mrb[0].mxu0
    %v3613 = vadd.f32 %v3540, %v3612
    %3614 = vmatprep.mubr.bf16.mxu0 %v3216
    %3615 = vmatmul.mubr.bf16.gmra.mrb[0].mxu0 %v3215
    %v3616 = vpop.f32.mrb[0].mxu0
    %v3617 = vadd.f32 %v3544, %v3616
    %v3618 = vpop.f32.mrb[0].mxu0
    %v3619 = vadd.f32 %v3546, %v3618
    %v3620 = vpop.f32.mrb[0].mxu0
    %v3621 = vadd.f32 %v3548, %v3620
    %v3622 = vpop.f32.mrb[0].mxu0
    %v3623 = vadd.f32 %v3550, %v3622
    %3624 = vmatprep.mubr.bf16.mxu0 %v3220
    %3625 = vmatmul.mubr.bf16.gmra.mrb[0].mxu0 %v3219
    %v3626 = vpop.f32.mrb[0].mxu0
    %v3627 = vadd.f32 %v3554, %v3626
    %v3628 = vpop.f32.mrb[0].mxu0
    %v3629 = vadd.f32 %v3556, %v3628
    %v3630 = vpop.f32.mrb[0].mxu0
    %v3631 = vadd.f32 %v3558, %v3630
    %v3632 = vpop.f32.mrb[0].mxu0
    %v3633 = vadd.f32 %v3560, %v3632
    %3634 = vmatprep.mubr.bf16.mxu0 %v3224
    %3635 = vmatmul.mubr.bf16.gmra.mrb[0].mxu0 %v3223
    %v3636 = vpop.f32.mrb[0].mxu0
    %v3637 = vadd.f32 %v3564, %v3636
    %v3638 = vpop.f32.mrb[0].mxu0
    %v3639 = vadd.f32 %v3566, %v3638
    %v3640 = vpop.f32.mrb[0].mxu0
    %v3641 = vadd.f32 %v3568, %v3640
    %v3642 = vpop.f32.mrb[0].mxu0
    %v3643 = vadd.f32 %v3570, %v3642
    %3644 = vdwg.mxu0
    %v3645 = vadd.f32 %v3461, %v3465
    %v3646 = vadd.f32 %v3645, %v3471
    %v3647 = vadd.f32 %v3646, %v3475
    %v3648 = vadd.f32 %v3647, %v3481
    %v3649 = vadd.f32 %v3648, %v3485
    %v3650 = vadd.f32 %v3649, %v3491
    %v3651 = vadd.f32 %v3650, %v3495
    %v3652 = vrot.slane %v3651, 4
    %v3653 = vadd.f32 %v3651, %v3652
    %v3654 = vrot.slane %v3653, 2
    %v3655 = vadd.f32 %v3653, %v3654
    %v3656 = vrot.slane %v3655, 1
    %v3657 = vadd.f32 %v3655, %v3656
    %v3658 = vadd.f32 %v3463, %v3467
    %v3659 = vadd.f32 %v3658, %v3473
    %v3660 = vadd.f32 %v3659, %v3477
    %v3661 = vadd.f32 %v3660, %v3483
    %v3662 = vadd.f32 %v3661, %v3487
    %v3663 = vadd.f32 %v3662, %v3493
    %v3664 = vadd.f32 %v3663, %v3497
    %v3665 = vrot.slane %v3664, 4
    %v3666 = vadd.f32 %v3664, %v3665
    %v3667 = vrot.slane %v3666, 2
    %v3668 = vadd.f32 %v3666, %v3667
    %v3669 = vrot.slane %v3668, 1
    %v3670 = vadd.f32 %v3668, %v3669
    %v3671 = vadd.f32 %v3607, %v3611
    %v3672 = vadd.f32 %v3671, %v3617
    %v3673 = vadd.f32 %v3672, %v3621
    %v3674 = vadd.f32 %v3673, %v3627
    %v3675 = vadd.f32 %v3674, %v3631
    %v3676 = vadd.f32 %v3675, %v3637
    %v3677 = vadd.f32 %v3676, %v3641
    %v3678 = vrot.slane %v3677, 4
    %v3679 = vadd.f32 %v3677, %v3678
    %v3680 = vrot.slane %v3679, 2
    %v3681 = vadd.f32 %v3679, %v3680
    %v3682 = vrot.slane %v3681, 1
    %v3683 = vadd.f32 %v3681, %v3682
    %v3684 = vadd.f32 %v3609, %v3613
    %v3685 = vadd.f32 %v3684, %v3619
    %v3686 = vadd.f32 %v3685, %v3623
    %v3687 = vadd.f32 %v3686, %v3629
    %v3688 = vadd.f32 %v3687, %v3633
    %v3689 = vadd.f32 %v3688, %v3639
    %v3690 = vadd.f32 %v3689, %v3643
    %v3691 = vrot.slane %v3690, 4
    %v3692 = vadd.f32 %v3690, %v3691
    %v3693 = vrot.slane %v3692, 2
    %v3694 = vadd.f32 %v3692, %v3693
    %v3695 = vrot.slane %v3694, 1
    %v3696 = vadd.f32 %v3694, %v3695
    %v3697 = vmul.f32 %v3657, 0.015625
    %v3698 = vmul.f32 %v3670, 0.015625
    %v3699 = vmul.f32 %v3683, 0.015625
    %v3700 = vmul.f32 %v3696, 0.015625
    %v3701 = vmul.f32 %v3461, %v3461
    %v3702 = vmul.f32 %v3463, %v3463
    %v3703 = vmul.f32 %v3607, %v3607
    %v3704 = vmul.f32 %v3609, %v3609
    %v3705 = vmul.f32 %v3465, %v3465
    %v3706 = vmul.f32 %v3467, %v3467
    %v3707 = vmul.f32 %v3611, %v3611
    %v3708 = vmul.f32 %v3613, %v3613
    %v3709 = vmul.f32 %v3471, %v3471
    %v3710 = vmul.f32 %v3473, %v3473
    %v3711 = vmul.f32 %v3617, %v3617
    %v3712 = vmul.f32 %v3619, %v3619
    %v3713 = vmul.f32 %v3475, %v3475
    %v3714 = vmul.f32 %v3477, %v3477
    %v3715 = vmul.f32 %v3621, %v3621
    %v3716 = vmul.f32 %v3623, %v3623
    %v3717 = vmul.f32 %v3481, %v3481
    %v3718 = vmul.f32 %v3483, %v3483
    %v3719 = vmul.f32 %v3627, %v3627
    %v3720 = vmul.f32 %v3629, %v3629
    %v3721 = vmul.f32 %v3485, %v3485
    %v3722 = vmul.f32 %v3487, %v3487
    %v3723 = vmul.f32 %v3631, %v3631
    %v3724 = vmul.f32 %v3633, %v3633
    %v3725 = vmul.f32 %v3491, %v3491
    %v3726 = vmul.f32 %v3493, %v3493
    %v3727 = vmul.f32 %v3637, %v3637
    %v3728 = vmul.f32 %v3639, %v3639
    %v3729 = vmul.f32 %v3495, %v3495
    %v3730 = vmul.f32 %v3497, %v3497
    %v3731 = vmul.f32 %v3641, %v3641
    %v3732 = vmul.f32 %v3643, %v3643
    %v3733 = vadd.f32 %v3701, %v3705
    %v3734 = vadd.f32 %v3733, %v3709
    %v3735 = vadd.f32 %v3734, %v3713
    %v3736 = vadd.f32 %v3735, %v3717
    %v3737 = vadd.f32 %v3736, %v3721
    %v3738 = vadd.f32 %v3737, %v3725
    %v3739 = vadd.f32 %v3738, %v3729
    %v3740 = vrot.slane %v3739, 4
    %v3741 = vadd.f32 %v3739, %v3740
    %v3742 = vrot.slane %v3741, 2
    %v3743 = vadd.f32 %v3741, %v3742
    %v3744 = vrot.slane %v3743, 1
    %v3745 = vadd.f32 %v3743, %v3744
    %v3746 = vadd.f32 %v3702, %v3706
    %v3747 = vadd.f32 %v3746, %v3710
    %v3748 = vadd.f32 %v3747, %v3714
    %v3749 = vadd.f32 %v3748, %v3718
    %v3750 = vadd.f32 %v3749, %v3722
    %v3751 = vadd.f32 %v3750, %v3726
    %v3752 = vadd.f32 %v3751, %v3730
    %v3753 = vrot.slane %v3752, 4
    %v3754 = vadd.f32 %v3752, %v3753
    %v3755 = vrot.slane %v3754, 2
    %v3756 = vadd.f32 %v3754, %v3755
    %v3757 = vrot.slane %v3756, 1
    %v3758 = vadd.f32 %v3756, %v3757
    %v3759 = vadd.f32 %v3703, %v3707
    %v3760 = vadd.f32 %v3759, %v3711
    %v3761 = vadd.f32 %v3760, %v3715
    %v3762 = vadd.f32 %v3761, %v3719
    %v3763 = vadd.f32 %v3762, %v3723
    %v3764 = vadd.f32 %v3763, %v3727
    %v3765 = vadd.f32 %v3764, %v3731
    %v3766 = vrot.slane %v3765, 4
    %v3767 = vadd.f32 %v3765, %v3766
    %v3768 = vrot.slane %v3767, 2
    %v3769 = vadd.f32 %v3767, %v3768
    %v3770 = vrot.slane %v3769, 1
    %v3771 = vadd.f32 %v3769, %v3770
    %v3772 = vadd.f32 %v3704, %v3708
    %v3773 = vadd.f32 %v3772, %v3712
    %v3774 = vadd.f32 %v3773, %v3716
    %v3775 = vadd.f32 %v3774, %v3720
    %v3776 = vadd.f32 %v3775, %v3724
    %v3777 = vadd.f32 %v3776, %v3728
    %v3778 = vadd.f32 %v3777, %v3732
    %v3779 = vrot.slane %v3778, 4
    %v3780 = vadd.f32 %v3778, %v3779
    %v3781 = vrot.slane %v3780, 2
    %v3782 = vadd.f32 %v3780, %v3781
    %v3783 = vrot.slane %v3782, 1
    %v3784 = vadd.f32 %v3782, %v3783
    %v3785 = vmul.f32 %v3745, 0.015625
    %v3786 = vmul.f32 %v3758, 0.015625
    %v3787 = vmul.f32 %v3771, 0.015625
    %v3788 = vmul.f32 %v3784, 0.015625
    %v3789 = vmul.f32 %v3697, %v3697
    %v3790 = vmul.f32 %v3698, %v3698
    %v3791 = vmul.f32 %v3699, %v3699
    %v3792 = vmul.f32 %v3700, %v3700
    %v3793 = vsub.f32 %v3785, %v3789
    %v3794 = vsub.f32 %v3786, %v3790
    %v3795 = vsub.f32 %v3787, %v3791
    %v3796 = vsub.f32 %v3788, %v3792
    %v3797 = vadd.f32 %v3793, 1e-05
    %v3798 = vadd.f32 %v3794, 1e-05
    %v3799 = vadd.f32 %v3795, 1e-05
    %v3800 = vadd.f32 %v3796, 1e-05
    %v3801 = vrsqrt.pop %v3797
    %v3802 = vrsqrt.pop %v3798
    %v3803 = vrsqrt.pop %v3799
    %v3804 = vrsqrt.pop %v3800
    %v3809 = vcombine.low %v3801, %v3802
    %v3810 = vcombine.low %v3803, %v3804
    %v3812 = vunpack.c.l.s4 1983009808
    %v3813 = vunpack.c.0.s8 %v3812
    %v3814 = vlaneseq
    %v3815 = vshrl.u32 %v3814, 7
    %v3816 = vsub.s32 %v3813, %v3815
    %v3817 = vrot.slane %v3809, %v3816
    %v3819 = vunpack.c.l.s4 1983009808
    %v3820 = vunpack.c.0.s8 %v3819
    %v3821 = vlaneseq
    %v3822 = vshrl.u32 %v3821, 7
    %v3823 = vsub.s32 %v3820, %v3822
    %v3824 = vrot.slane %v3810, %v3823
    %v3825 = vcombine.low %v3817, %v3824
    %v3827 = vmul.f32 %v206, %v3825
    %v3828 = vsub.f32 %v3461, %v3697
    %v3829 = vsub.f32 %v3463, %v3698
    %v3830 = vsub.f32 %v3607, %v3699
    %v3831 = vsub.f32 %v3609, %v3700
    %v3832 = vsub.f32 %v3465, %v3697
    %v3833 = vsub.f32 %v3467, %v3698
    %v3834 = vsub.f32 %v3611, %v3699
    %v3835 = vsub.f32 %v3613, %v3700
    %v3836 = vsub.f32 %v3471, %v3697
    %v3837 = vsub.f32 %v3473, %v3698
    %v3838 = vsub.f32 %v3617, %v3699
    %v3839 = vsub.f32 %v3619, %v3700
    %v3840 = vsub.f32 %v3475, %v3697
    %v3841 = vsub.f32 %v3477, %v3698
    %v3842 = vsub.f32 %v3621, %v3699
    %v3843 = vsub.f32 %v3623, %v3700
    %v3844 = vsub.f32 %v3481, %v3697
    %v3845 = vsub.f32 %v3483, %v3698
    %v3846 = vsub.f32 %v3627, %v3699
    %v3847 = vsub.f32 %v3629, %v3700
    %v3848 = vsub.f32 %v3485, %v3697
    %v3849 = vsub.f32 %v3487, %v3698
    %v3850 = vsub.f32 %v3631, %v3699
    %v3851 = vsub.f32 %v3633, %v3700
    %v3852 = vsub.f32 %v3491, %v3697
    %v3853 = vsub.f32 %v3493, %v3698
    %v3854 = vsub.f32 %v3637, %v3699
    %v3855 = vsub.f32 %v3639, %v3700
    %v3856 = vsub.f32 %v3495, %v3697
    %v3857 = vsub.f32 %v3497, %v3698
    %v3858 = vsub.f32 %v3641, %v3699
    %v3859 = vsub.f32 %v3643, %v3700
    %v3861 = vlaneseq
    %v3862 = vshrl.u32 %v3861, 7
    %v3863 = vsub.s32 0, %v3862
    %v3864 = vrot.slane %v3827, %v3863
    %v3865 = vlaneseq
    %v3866 = vshrl.u32 %v3865, 7
    %v3867 = vsub.s32 2, %v3866
    %v3868 = vrot.slane %v3827, %v3867
    %v3869 = vlaneseq
    %v3870 = vshrl.u32 %v3869, 7
    %v3871 = vsub.s32 4, %v3870
    %v3872 = vrot.slane %v3827, %v3871
    %v3873 = vlaneseq
    %v3874 = vshrl.u32 %v3873, 7
    %v3875 = vsub.s32 6, %v3874
    %v3876 = vrot.slane %v3827, %v3875
    %v3881 = vlaneseq
    %v3882 = vshrl.u32 %v3881, 7
    %v3883 = vsub.s32 0, %v3882
    %v3884 = vrot.slane %v3864, %v3883
    %v3885 = vlaneseq
    %v3886 = vshrl.u32 %v3885, 7
    %v3887 = vsub.s32 0, %v3886
    %v3888 = vrot.slane %v3868, %v3887
    %v3889 = vlaneseq
    %v3890 = vshrl.u32 %v3889, 7
    %v3891 = vsub.s32 0, %v3890
    %v3892 = vrot.slane %v3872, %v3891
    %v3893 = vlaneseq
    %v3894 = vshrl.u32 %v3893, 7
    %v3895 = vsub.s32 0, %v3894
    %v3896 = vrot.slane %v3876, %v3895
    %v3897 = vmul.f32 %v3828, %v3884
    %v3898 = vmul.f32 %v3829, %v3888
    %v3899 = vmul.f32 %v3830, %v3892
    %v3900 = vmul.f32 %v3831, %v3896
    %v3901 = vmul.f32 %v3832, %v3884
    %v3902 = vmul.f32 %v3833, %v3888
    %v3903 = vmul.f32 %v3834, %v3892
    %v3904 = vmul.f32 %v3835, %v3896
    %v3905 = vmul.f32 %v3836, %v3884
    %v3906 = vmul.f32 %v3837, %v3888
    %v3907 = vmul.f32 %v3838, %v3892
    %v3908 = vmul.f32 %v3839, %v3896
    %v3909 = vmul.f32 %v3840, %v3884
    %v3910 = vmul.f32 %v3841, %v3888
    %v3911 = vmul.f32 %v3842, %v3892
    %v3912 = vmul.f32 %v3843, %v3896
    %v3913 = vmul.f32 %v3844, %v3884
    %v3914 = vmul.f32 %v3845, %v3888
    %v3915 = vmul.f32 %v3846, %v3892
    %v3916 = vmul.f32 %v3847, %v3896
    %v3917 = vmul.f32 %v3848, %v3884
    %v3918 = vmul.f32 %v3849, %v3888
    %v3919 = vmul.f32 %v3850, %v3892
    %v3920 = vmul.f32 %v3851, %v3896
    %v3921 = vmul.f32 %v3852, %v3884
    %v3922 = vmul.f32 %v3853, %v3888
    %v3923 = vmul.f32 %v3854, %v3892
    %v3924 = vmul.f32 %v3855, %v3896
    %v3925 = vmul.f32 %v3856, %v3884
    %v3926 = vmul.f32 %v3857, %v3888
    %v3927 = vmul.f32 %v3858, %v3892
    %v3928 = vmul.f32 %v3859, %v3896
    %v3929 = vadd.f32 %v3897, %v1460
    %v3930 = vadd.f32 %v3898, %v1464
    %v3931 = vadd.f32 %v3899, %v1468
    %v3932 = vadd.f32 %v3900, %v1472
    %v3933 = vadd.f32 %v3901, %v1460
    %v3934 = vadd.f32 %v3902, %v1464
    %v3935 = vadd.f32 %v3903, %v1468
    %v3936 = vadd.f32 %v3904, %v1472
    %v3937 = vadd.f32 %v3905, %v1460
    %v3938 = vadd.f32 %v3906, %v1464
    %v3939 = vadd.f32 %v3907, %v1468
    %v3940 = vadd.f32 %v3908, %v1472
    %v3941 = vadd.f32 %v3909, %v1460
    %v3942 = vadd.f32 %v3910, %v1464
    %v3943 = vadd.f32 %v3911, %v1468
    %v3944 = vadd.f32 %v3912, %v1472
    %v3945 = vadd.f32 %v3913, %v1460
    %v3946 = vadd.f32 %v3914, %v1464
    %v3947 = vadd.f32 %v3915, %v1468
    %v3948 = vadd.f32 %v3916, %v1472
    %v3949 = vadd.f32 %v3917, %v1460
    %v3950 = vadd.f32 %v3918, %v1464
    %v3951 = vadd.f32 %v3919, %v1468
    %v3952 = vadd.f32 %v3920, %v1472
    %v3953 = vadd.f32 %v3921, %v1460
    %v3954 = vadd.f32 %v3922, %v1464
    %v3955 = vadd.f32 %v3923, %v1468
    %v3956 = vadd.f32 %v3924, %v1472
    %v3957 = vadd.f32 %v3925, %v1460
    %v3958 = vadd.f32 %v3926, %v1464
    %v3959 = vadd.f32 %v3927, %v1468
    %v3960 = vadd.f32 %v3928, %v1472
    %v3961 = vmul.f32 %v3929, 0.02
    %v3962 = vmul.f32 %v3930, 0.02
    %v3963 = vmul.f32 %v3931, 0.02
    %v3964 = vmul.f32 %v3932, 0.02
    %v3965 = vmul.f32 %v3933, 0.02
    %v3966 = vmul.f32 %v3934, 0.02
    %v3967 = vmul.f32 %v3935, 0.02
    %v3968 = vmul.f32 %v3936, 0.02
    %v3969 = vmul.f32 %v3937, 0.02
    %v3970 = vmul.f32 %v3938, 0.02
    %v3971 = vmul.f32 %v3939, 0.02
    %v3972 = vmul.f32 %v3940, 0.02
    %v3973 = vmul.f32 %v3941, 0.02
    %v3974 = vmul.f32 %v3942, 0.02
    %v3975 = vmul.f32 %v3943, 0.02
    %v3976 = vmul.f32 %v3944, 0.02
    %v3977 = vmul.f32 %v3945, 0.02
    %v3978 = vmul.f32 %v3946, 0.02
    %v3979 = vmul.f32 %v3947, 0.02
    %v3980 = vmul.f32 %v3948, 0.02
    %v3981 = vmul.f32 %v3949, 0.02
    %v3982 = vmul.f32 %v3950, 0.02
    %v3983 = vmul.f32 %v3951, 0.02
    %v3984 = vmul.f32 %v3952, 0.02
    %v3985 = vmul.f32 %v3953, 0.02
    %v3986 = vmul.f32 %v3954, 0.02
    %v3987 = vmul.f32 %v3955, 0.02
    %v3988 = vmul.f32 %v3956, 0.02
    %v3989 = vmul.f32 %v3957, 0.02
    %v3990 = vmul.f32 %v3958, 0.02
    %v3991 = vmul.f32 %v3959, 0.02
    %v3992 = vmul.f32 %v3960, 0.02
    %v3993 = vmax.f32 %v3929, %v3961
    %v3994 = vmax.f32 %v3930, %v3962
    %v3995 = vmax.f32 %v3931, %v3963
    %v3996 = vmax.f32 %v3932, %v3964
    %v3997 = vmax.f32 %v3933, %v3965
    %v3998 = vmax.f32 %v3934, %v3966
    %v3999 = vmax.f32 %v3935, %v3967
    %v4000 = vmax.f32 %v3936, %v3968
    %v4001 = vmax.f32 %v3937, %v3969
    %v4002 = vmax.f32 %v3938, %v3970
    %v4003 = vmax.f32 %v3939, %v3971
    %v4004 = vmax.f32 %v3940, %v3972
    %v4005 = vmax.f32 %v3941, %v3973
    %v4006 = vmax.f32 %v3942, %v3974
    %v4007 = vmax.f32 %v3943, %v3975
    %v4008 = vmax.f32 %v3944, %v3976
    %v4009 = vmax.f32 %v3945, %v3977
    %v4010 = vmax.f32 %v3946, %v3978
    %v4011 = vmax.f32 %v3947, %v3979
    %v4012 = vmax.f32 %v3948, %v3980
    %v4013 = vmax.f32 %v3949, %v3981
    %v4014 = vmax.f32 %v3950, %v3982
    %v4015 = vmax.f32 %v3951, %v3983
    %v4016 = vmax.f32 %v3952, %v3984
    %v4017 = vmax.f32 %v3953, %v3985
    %v4018 = vmax.f32 %v3954, %v3986
    %v4019 = vmax.f32 %v3955, %v3987
    %v4020 = vmax.f32 %v3956, %v3988
    %v4021 = vmax.f32 %v3957, %v3989
    %v4022 = vmax.f32 %v3958, %v3990
    %v4023 = vmax.f32 %v3959, %v3991
    %v4024 = vmax.f32 %v3960, %v3992
    %s4025 = smul.u32 %s1569, 2
    %s4026 = sshll.u32 %s4025, 4
    %4027 = dma.done %s171, %s4026
    %v4028 = vpack.c.bf16 %v3997, %v3993
    %v4029 = vpack.c.bf16 %v3998, %v3994
    %v4030 = vpack.c.bf16 %v3999, %v3995
    %v4031 = vpack.c.bf16 %v4000, %v3996
    %v4032 = vpack.c.bf16 %v4005, %v4001
    %v4033 = vpack.c.bf16 %v4006, %v4002
    %v4034 = vpack.c.bf16 %v4007, %v4003
    %v4035 = vpack.c.bf16 %v4008, %v4004
    %v4036 = vpack.c.bf16 %v4013, %v4009
    %v4037 = vpack.c.bf16 %v4014, %v4010
    %v4038 = vpack.c.bf16 %v4015, %v4011
    %v4039 = vpack.c.bf16 %v4016, %v4012
    %v4040 = vpack.c.bf16 %v4021, %v4017
    %v4041 = vpack.c.bf16 %v4022, %v4018
    %v4042 = vpack.c.bf16 %v4023, %v4019
    %v4043 = vpack.c.bf16 %v4024, %v4020
    %v4044 = vld [vmem:[#allocation7] sm:$0xff]
    %v4045 = vld [vmem:[#allocation7 + $0x8] sm:$0xff]
    %v4046 = vld [vmem:[#allocation7 + $0x10] sm:$0xff]
    %v4047 = vld [vmem:[#allocation7 + $0x18] sm:$0xff]
    %v4048 = vld [vmem:[#allocation7 + $0x20] sm:$0xff]
    %v4049 = vld [vmem:[#allocation7 + $0x28] sm:$0xff]
    %v4050 = vld [vmem:[#allocation7 + $0x30] sm:$0xff]
    %v4051 = vld [vmem:[#allocation7 + $0x38] sm:$0xff]
    %v4052 = vld [vmem:[#allocation7 + $0x40] sm:$0xff]
    %v4053 = vld [vmem:[#allocation7 + $0x48] sm:$0xff]
    %v4054 = vld [vmem:[#allocation7 + $0x50] sm:$0xff]
    %v4055 = vld [vmem:[#allocation7 + $0x58] sm:$0xff]
    %v4056 = vld [vmem:[#allocation7 + $0x60] sm:$0xff]
    %v4057 = vld [vmem:[#allocation7 + $0x68] sm:$0xff]
    %v4058 = vld [vmem:[#allocation7 + $0x70] sm:$0xff]
    %v4059 = vld [vmem:[#allocation7 + $0x78] sm:$0xff]
    %v4060 = vld [vmem:[#allocation7 + $0x80] sm:$0xff]
    %v4061 = vld [vmem:[#allocation7 + $0x88] sm:$0xff]
    %v4062 = vld [vmem:[#allocation7 + $0x90] sm:$0xff]
    %v4063 = vld [vmem:[#allocation7 + $0x98] sm:$0xff]
    %v4064 = vld [vmem:[#allocation7 + $0xa0] sm:$0xff]
    %v4065 = vld [vmem:[#allocation7 + $0xa8] sm:$0xff]
    %v4066 = vld [vmem:[#allocation7 + $0xb0] sm:$0xff]
    %v4067 = vld [vmem:[#allocation7 + $0xb8] sm:$0xff]
    %v4068 = vld [vmem:[#allocation7 + $0xc0] sm:$0xff]
    %v4069 = vld [vmem:[#allocation7 + $0xc8] sm:$0xff]
    %v4070 = vld [vmem:[#allocation7 + $0xd0] sm:$0xff]
    %v4071 = vld [vmem:[#allocation7 + $0xd8] sm:$0xff]
    %v4072 = vld [vmem:[#allocation7 + $0xe0] sm:$0xff]
    %v4073 = vld [vmem:[#allocation7 + $0xe8] sm:$0xff]
    %v4074 = vld [vmem:[#allocation7 + $0xf0] sm:$0xff]
    %v4075 = vld [vmem:[#allocation7 + $0xf8] sm:$0xff]
    %v4076 = vld [vmem:[#allocation7 + $0x100] sm:$0xff]
    %v4077 = vld [vmem:[#allocation7 + $0x108] sm:$0xff]
    %v4078 = vld [vmem:[#allocation7 + $0x110] sm:$0xff]
    %v4079 = vld [vmem:[#allocation7 + $0x118] sm:$0xff]
    %v4080 = vld [vmem:[#allocation7 + $0x120] sm:$0xff]
    %v4081 = vld [vmem:[#allocation7 + $0x128] sm:$0xff]
    %v4082 = vld [vmem:[#allocation7 + $0x130] sm:$0xff]
    %v4083 = vld [vmem:[#allocation7 + $0x138] sm:$0xff]
    %v4084 = vld [vmem:[#allocation7 + $0x140] sm:$0xff]
    %v4085 = vld [vmem:[#allocation7 + $0x148] sm:$0xff]
    %v4086 = vld [vmem:[#allocation7 + $0x150] sm:$0xff]
    %v4087 = vld [vmem:[#allocation7 + $0x158] sm:$0xff]
    %v4088 = vld [vmem:[#allocation7 + $0x160] sm:$0xff]
    %v4089 = vld [vmem:[#allocation7 + $0x168] sm:$0xff]
    %v4090 = vld [vmem:[#allocation7 + $0x170] sm:$0xff]
    %v4091 = vld [vmem:[#allocation7 + $0x178] sm:$0xff]
    %v4092 = vld [vmem:[#allocation7 + $0x180] sm:$0xff]
    %v4093 = vld [vmem:[#allocation7 + $0x188] sm:$0xff]
    %v4094 = vld [vmem:[#allocation7 + $0x190] sm:$0xff]
    %v4095 = vld [vmem:[#allocation7 + $0x198] sm:$0xff]
    %v4096 = vld [vmem:[#allocation7 + $0x1a0] sm:$0xff]
    %v4097 = vld [vmem:[#allocation7 + $0x1a8] sm:$0xff]
    %v4098 = vld [vmem:[#allocation7 + $0x1b0] sm:$0xff]
    %v4099 = vld [vmem:[#allocation7 + $0x1b8] sm:$0xff]
    %v4100 = vld [vmem:[#allocation7 + $0x1c0] sm:$0xff]
    %v4101 = vld [vmem:[#allocation7 + $0x1c8] sm:$0xff]
    %v4102 = vld [vmem:[#allocation7 + $0x1d0] sm:$0xff]
    %v4103 = vld [vmem:[#allocation7 + $0x1d8] sm:$0xff]
    %v4104 = vld [vmem:[#allocation7 + $0x1e0] sm:$0xff]
    %v4105 = vld [vmem:[#allocation7 + $0x1e8] sm:$0xff]
    %v4106 = vld [vmem:[#allocation7 + $0x1f0] sm:$0xff]
    %v4107 = vld [vmem:[#allocation7 + $0x1f8] sm:$0xff]
    %4108 = vmatprep.subr.bf16.mxu0 %v4045
    %4109 = vmatpush1.bf16.msra.mxu0 %v4044
    %4110 = vmatprep.subr.bf16.mxu0 %v4047
    %4111 = vmatpush1.bf16.msra.mxu0 %v4046
    %4112 = vmatprep.subr.bf16.mxu0 %v4049
    %4113 = vmatpush1.bf16.msra.mxu0 %v4048
    %4114 = vmatprep.subr.bf16.mxu0 %v4051
    %4115 = vmatpush1.bf16.msra.mxu0 %v4050
    %4116 = vmatprep.subr.bf16.mxu0 %v4053
    %4117 = vmatpush1.bf16.msra.mxu0 %v4052
    %4118 = vmatprep.subr.bf16.mxu0 %v4055
    %4119 = vmatpush1.bf16.msra.mxu0 %v4054
    %4120 = vmatprep.subr.bf16.mxu0 %v4057
    %4121 = vmatpush1.bf16.msra.mxu0 %v4056
    %4122 = vmatprep.subr.bf16.mxu0 %v4059
    %4123 = vmatpush1.bf16.msra.mxu0 %v4058
    %4124 = vmatprep.subr.bf16.mxu0 %v4061
    %4125 = vmatpush1.bf16.msra.mxu0 %v4060
    %4126 = vmatprep.subr.bf16.mxu0 %v4063
    %4127 = vmatpush1.bf16.msra.mxu0 %v4062
    %4128 = vmatprep.subr.bf16.mxu0 %v4065
    %4129 = vmatpush1.bf16.msra.mxu0 %v4064
    %4130 = vmatprep.subr.bf16.mxu0 %v4067
    %4131 = vmatpush1.bf16.msra.mxu0 %v4066
    %4132 = vmatprep.subr.bf16.mxu0 %v4069
    %4133 = vmatpush1.bf16.msra.mxu0 %v4068
    %4134 = vmatprep.subr.bf16.mxu0 %v4071
    %4135 = vmatpush1.bf16.msra.mxu0 %v4070
    %4136 = vmatprep.subr.bf16.mxu0 %v4073
    %4137 = vmatpush1.bf16.msra.mxu0 %v4072
    %4138 = vmatprep.subr.bf16.mxu0 %v4075
    %4139 = vmatpush1.bf16.msra.mxu0 %v4074
    %4140 = vmatprep.mubr.bf16.mxu0 %v4029
    %4141 = vmatmul.mubr.bf16.gmra.mrb[0].mxu0 %v4028
    %v4142 = vpop.f32.mrb[0].mxu0
    %v4143 = vadd.f32 0.0, %v4142
    %v4144 = vpop.f32.mrb[0].mxu0
    %v4145 = vadd.f32 0.0, %v4144
    %v4146 = vpop.f32.mrb[0].mxu0
    %v4147 = vadd.f32 0.0, %v4146
    %v4148 = vpop.f32.mrb[0].mxu0
    %v4149 = vadd.f32 0.0, %v4148
    %4150 = vmatprep.mubr.bf16.mxu0 %v4033
    %4151 = vmatmul.mubr.bf16.gmra.mrb[0].mxu0 %v4032
    %v4152 = vpop.f32.mrb[0].mxu0
    %v4153 = vadd.f32 0.0, %v4152
    %v4154 = vpop.f32.mrb[0].mxu0
    %v4155 = vadd.f32 0.0, %v4154
    %v4156 = vpop.f32.mrb[0].mxu0
    %v4157 = vadd.f32 0.0, %v4156
    %v4158 = vpop.f32.mrb[0].mxu0
    %v4159 = vadd.f32 0.0, %v4158
    %4160 = vmatprep.mubr.bf16.mxu0 %v4037
    %4161 = vmatmul.mubr.bf16.gmra.mrb[0].mxu0 %v4036
    %v4162 = vpop.f32.mrb[0].mxu0
    %v4163 = vadd.f32 0.0, %v4162
    %v4164 = vpop.f32.mrb[0].mxu0
    %v4165 = vadd.f32 0.0, %v4164
    %v4166 = vpop.f32.mrb[0].mxu0
    %v4167 = vadd.f32 0.0, %v4166
    %v4168 = vpop.f32.mrb[0].mxu0
    %v4169 = vadd.f32 0.0, %v4168
    %4170 = vmatprep.mubr.bf16.mxu0 %v4041
    %4171 = vmatmul.mubr.bf16.gmra.mrb[0].mxu0 %v4040
    %v4172 = vpop.f32.mrb[0].mxu0
    %v4173 = vadd.f32 0.0, %v4172
    %v4174 = vpop.f32.mrb[0].mxu0
    %v4175 = vadd.f32 0.0, %v4174
    %v4176 = vpop.f32.mrb[0].mxu0
    %v4177 = vadd.f32 0.0, %v4176
    %v4178 = vpop.f32.mrb[0].mxu0
    %v4179 = vadd.f32 0.0, %v4178
    %4180 = vdwg.mxu0
    %4181 = vmatprep.subr.bf16.mxu0 %v4077
    %4182 = vmatpush1.bf16.msra.mxu0 %v4076
    %4183 = vmatprep.subr.bf16.mxu0 %v4079
    %4184 = vmatpush1.bf16.msra.mxu0 %v4078
    %4185 = vmatprep.subr.bf16.mxu0 %v4081
    %4186 = vmatpush1.bf16.msra.mxu0 %v4080
    %4187 = vmatprep.subr.bf16.mxu0 %v4083
    %4188 = vmatpush1.bf16.msra.mxu0 %v4082
    %4189 = vmatprep.subr.bf16.mxu0 %v4085
    %4190 = vmatpush1.bf16.msra.mxu0 %v4084
    %4191 = vmatprep.subr.bf16.mxu0 %v4087
    %4192 = vmatpush1.bf16.msra.mxu0 %v4086
    %4193 = vmatprep.subr.bf16.mxu0 %v4089
    %4194 = vmatpush1.bf16.msra.mxu0 %v4088
    %4195 = vmatprep.subr.bf16.mxu0 %v4091
    %4196 = vmatpush1.bf16.msra.mxu0 %v4090
    %4197 = vmatprep.subr.bf16.mxu0 %v4093
    %4198 = vmatpush1.bf16.msra.mxu0 %v4092
    %4199 = vmatprep.subr.bf16.mxu0 %v4095
    %4200 = vmatpush1.bf16.msra.mxu0 %v4094
    %4201 = vmatprep.subr.bf16.mxu0 %v4097
    %4202 = vmatpush1.bf16.msra.mxu0 %v4096
    %4203 = vmatprep.subr.bf16.mxu0 %v4099
    %4204 = vmatpush1.bf16.msra.mxu0 %v4098
    %4205 = vmatprep.subr.bf16.mxu0 %v4101
    %4206 = vmatpush1.bf16.msra.mxu0 %v4100
    %4207 = vmatprep.subr.bf16.mxu0 %v4103
    %4208 = vmatpush1.bf16.msra.mxu0 %v4102
    %4209 = vmatprep.subr.bf16.mxu0 %v4105
    %4210 = vmatpush1.bf16.msra.mxu0 %v4104
    %4211 = vmatprep.subr.bf16.mxu0 %v4107
    %4212 = vmatpush1.bf16.msra.mxu0 %v4106
    %4213 = vmatprep.mubr.bf16.mxu0 %v4031
    %4214 = vmatmul.mubr.bf16.gmra.mrb[0].mxu0 %v4030
    %v4215 = vpop.f32.mrb[0].mxu0
    %v4216 = vadd.f32 %v4143, %v4215
    %v4217 = vpop.f32.mrb[0].mxu0
    %v4218 = vadd.f32 %v4145, %v4217
    %v4219 = vpop.f32.mrb[0].mxu0
    %v4220 = vadd.f32 %v4147, %v4219
    %v4221 = vpop.f32.mrb[0].mxu0
    %v4222 = vadd.f32 %v4149, %v4221
    %4223 = vmatprep.mubr.bf16.mxu0 %v4035
    %4224 = vmatmul.mubr.bf16.gmra.mrb[0].mxu0 %v4034
    %v4225 = vpop.f32.mrb[0].mxu0
    %v4226 = vadd.f32 %v4153, %v4225
    %v4227 = vpop.f32.mrb[0].mxu0
    %v4228 = vadd.f32 %v4155, %v4227
    %v4229 = vpop.f32.mrb[0].mxu0
    %v4230 = vadd.f32 %v4157, %v4229
    %v4231 = vpop.f32.mrb[0].mxu0
    %v4232 = vadd.f32 %v4159, %v4231
    %4233 = vmatprep.mubr.bf16.mxu0 %v4039
    %4234 = vmatmul.mubr.bf16.gmra.mrb[0].mxu0 %v4038
    %v4235 = vpop.f32.mrb[0].mxu0
    %v4236 = vadd.f32 %v4163, %v4235
    %v4237 = vpop.f32.mrb[0].mxu0
    %v4238 = vadd.f32 %v4165, %v4237
    %v4239 = vpop.f32.mrb[0].mxu0
    %v4240 = vadd.f32 %v4167, %v4239
    %v4241 = vpop.f32.mrb[0].mxu0
    %v4242 = vadd.f32 %v4169, %v4241
    %4243 = vmatprep.mubr.bf16.mxu0 %v4043
    %4244 = vmatmul.mubr.bf16.gmra.mrb[0].mxu0 %v4042
    %v4245 = vpop.f32.mrb[0].mxu0
    %v4246 = vadd.f32 %v4173, %v4245
    %v4247 = vpop.f32.mrb[0].mxu0
    %v4248 = vadd.f32 %v4175, %v4247
    %v4249 = vpop.f32.mrb[0].mxu0
    %v4250 = vadd.f32 %v4177, %v4249
    %v4251 = vpop.f32.mrb[0].mxu0
    %v4252 = vadd.f32 %v4179, %v4251
    %4253 = vdwg.mxu0
    %v4254 = vadd.f32 %v4216, %v4220
    %v4255 = vadd.f32 %v4254, %v4226
    %v4256 = vadd.f32 %v4255, %v4230
    %v4257 = vadd.f32 %v4256, %v4236
    %v4258 = vadd.f32 %v4257, %v4240
    %v4259 = vadd.f32 %v4258, %v4246
    %v4260 = vadd.f32 %v4259, %v4250
    %v4261 = vrot.slane %v4260, 4
    %v4262 = vadd.f32 %v4260, %v4261
    %v4263 = vrot.slane %v4262, 2
    %v4264 = vadd.f32 %v4262, %v4263
    %v4265 = vrot.slane %v4264, 1
    %v4266 = vadd.f32 %v4264, %v4265
    %v4267 = vadd.f32 %v4218, %v4222
    %v4268 = vadd.f32 %v4267, %v4228
    %v4269 = vadd.f32 %v4268, %v4232
    %v4270 = vadd.f32 %v4269, %v4238
    %v4271 = vadd.f32 %v4270, %v4242
    %v4272 = vadd.f32 %v4271, %v4248
    %v4273 = vadd.f32 %v4272, %v4252
    %v4274 = vrot.slane %v4273, 4
    %v4275 = vadd.f32 %v4273, %v4274
    %v4276 = vrot.slane %v4275, 2
    %v4277 = vadd.f32 %v4275, %v4276
    %v4278 = vrot.slane %v4277, 1
    %v4279 = vadd.f32 %v4277, %v4278
    %v4280 = vmul.f32 %v4266, 0.015625
    %v4281 = vmul.f32 %v4279, 0.015625
    %v4282 = vmul.f32 %v4216, %v4216
    %v4283 = vmul.f32 %v4218, %v4218
    %v4284 = vmul.f32 %v4220, %v4220
    %v4285 = vmul.f32 %v4222, %v4222
    %v4286 = vmul.f32 %v4226, %v4226
    %v4287 = vmul.f32 %v4228, %v4228
    %v4288 = vmul.f32 %v4230, %v4230
    %v4289 = vmul.f32 %v4232, %v4232
    %v4290 = vmul.f32 %v4236, %v4236
    %v4291 = vmul.f32 %v4238, %v4238
    %v4292 = vmul.f32 %v4240, %v4240
    %v4293 = vmul.f32 %v4242, %v4242
    %v4294 = vmul.f32 %v4246, %v4246
    %v4295 = vmul.f32 %v4248, %v4248
    %v4296 = vmul.f32 %v4250, %v4250
    %v4297 = vmul.f32 %v4252, %v4252
    %v4298 = vadd.f32 %v4282, %v4284
    %v4299 = vadd.f32 %v4298, %v4286
    %v4300 = vadd.f32 %v4299, %v4288
    %v4301 = vadd.f32 %v4300, %v4290
    %v4302 = vadd.f32 %v4301, %v4292
    %v4303 = vadd.f32 %v4302, %v4294
    %v4304 = vadd.f32 %v4303, %v4296
    %v4305 = vrot.slane %v4304, 4
    %v4306 = vadd.f32 %v4304, %v4305
    %v4307 = vrot.slane %v4306, 2
    %v4308 = vadd.f32 %v4306, %v4307
    %v4309 = vrot.slane %v4308, 1
    %v4310 = vadd.f32 %v4308, %v4309
    %v4311 = vadd.f32 %v4283, %v4285
    %v4312 = vadd.f32 %v4311, %v4287
    %v4313 = vadd.f32 %v4312, %v4289
    %v4314 = vadd.f32 %v4313, %v4291
    %v4315 = vadd.f32 %v4314, %v4293
    %v4316 = vadd.f32 %v4315, %v4295
    %v4317 = vadd.f32 %v4316, %v4297
    %v4318 = vrot.slane %v4317, 4
    %v4319 = vadd.f32 %v4317, %v4318
    %v4320 = vrot.slane %v4319, 2
    %v4321 = vadd.f32 %v4319, %v4320
    %v4322 = vrot.slane %v4321, 1
    %v4323 = vadd.f32 %v4321, %v4322
    %v4324 = vmul.f32 %v4310, 0.015625
    %v4325 = vmul.f32 %v4323, 0.015625
    %v4326 = vmul.f32 %v4280, %v4280
    %v4327 = vmul.f32 %v4281, %v4281
    %v4328 = vsub.f32 %v4324, %v4326
    %v4329 = vsub.f32 %v4325, %v4327
    %v4330 = vadd.f32 %v4328, 1e-05
    %v4331 = vadd.f32 %v4329, 1e-05
    %v4332 = vrsqrt.pop %v4330
    %v4333 = vrsqrt.pop %v4331
    %v4336 = vcombine.low %v4332, %v4333
    %v4338 = vunpack.c.l.s4 1983009808
    %v4339 = vunpack.c.0.s8 %v4338
    %v4340 = vlaneseq
    %v4341 = vshrl.u32 %v4340, 7
    %v4342 = vsub.s32 %v4339, %v4341
    %v4343 = vrot.slane %v4336, %v4342
    %v4345 = vmul.f32 %v207, %v4343
    %v4346 = vsub.f32 %v4216, %v4280
    %v4347 = vsub.f32 %v4218, %v4281
    %v4348 = vsub.f32 %v4220, %v4280
    %v4349 = vsub.f32 %v4222, %v4281
    %v4350 = vsub.f32 %v4226, %v4280
    %v4351 = vsub.f32 %v4228, %v4281
    %v4352 = vsub.f32 %v4230, %v4280
    %v4353 = vsub.f32 %v4232, %v4281
    %v4354 = vsub.f32 %v4236, %v4280
    %v4355 = vsub.f32 %v4238, %v4281
    %v4356 = vsub.f32 %v4240, %v4280
    %v4357 = vsub.f32 %v4242, %v4281
    %v4358 = vsub.f32 %v4246, %v4280
    %v4359 = vsub.f32 %v4248, %v4281
    %v4360 = vsub.f32 %v4250, %v4280
    %v4361 = vsub.f32 %v4252, %v4281
    %v4363 = vlaneseq
    %v4364 = vshrl.u32 %v4363, 7
    %v4365 = vsub.s32 0, %v4364
    %v4366 = vrot.slane %v4345, %v4365
    %v4367 = vlaneseq
    %v4368 = vshrl.u32 %v4367, 7
    %v4369 = vsub.s32 2, %v4368
    %v4370 = vrot.slane %v4345, %v4369
    %v4373 = vlaneseq
    %v4374 = vshrl.u32 %v4373, 7
    %v4375 = vsub.s32 0, %v4374
    %v4376 = vrot.slane %v4366, %v4375
    %v4377 = vlaneseq
    %v4378 = vshrl.u32 %v4377, 7
    %v4379 = vsub.s32 0, %v4378
    %v4380 = vrot.slane %v4370, %v4379
    %v4381 = vmul.f32 %v4346, %v4376
    %v4382 = vmul.f32 %v4347, %v4380
    %v4383 = vmul.f32 %v4348, %v4376
    %v4384 = vmul.f32 %v4349, %v4380
    %v4385 = vmul.f32 %v4350, %v4376
    %v4386 = vmul.f32 %v4351, %v4380
    %v4387 = vmul.f32 %v4352, %v4376
    %v4388 = vmul.f32 %v4353, %v4380
    %v4389 = vmul.f32 %v4354, %v4376
    %v4390 = vmul.f32 %v4355, %v4380
    %v4391 = vmul.f32 %v4356, %v4376
    %v4392 = vmul.f32 %v4357, %v4380
    %v4393 = vmul.f32 %v4358, %v4376
    %v4394 = vmul.f32 %v4359, %v4380
    %v4395 = vmul.f32 %v4360, %v4376
    %v4396 = vmul.f32 %v4361, %v4380
    %v4398 = vlaneseq
    %v4399 = vshrl.u32 %v4398, 7
    %v4400 = vsub.s32 1, %v4399
    %v4401 = vrot.slane %v207, %v4400
    %v4402 = vlaneseq
    %v4403 = vshrl.u32 %v4402, 7
    %v4404 = vsub.s32 3, %v4403
    %v4405 = vrot.slane %v207, %v4404
    %v4408 = vlaneseq
    %v4409 = vshrl.u32 %v4408, 7
    %v4410 = vsub.s32 1, %v4409
    %v4411 = vrot.slane %v4401, %v4410
    %v4412 = vlaneseq
    %v4413 = vshrl.u32 %v4412, 7
    %v4414 = vsub.s32 1, %v4413
    %v4415 = vrot.slane %v4405, %v4414
    %v4416 = vadd.f32 %v4381, %v4411
    %v4417 = vadd.f32 %v4382, %v4415
    %v4418 = vadd.f32 %v4383, %v4411
    %v4419 = vadd.f32 %v4384, %v4415
    %v4420 = vadd.f32 %v4385, %v4411
    %v4421 = vadd.f32 %v4386, %v4415
    %v4422 = vadd.f32 %v4387, %v4411
    %v4423 = vadd.f32 %v4388, %v4415
    %v4424 = vadd.f32 %v4389, %v4411
    %v4425 = vadd.f32 %v4390, %v4415
    %v4426 = vadd.f32 %v4391, %v4411
    %v4427 = vadd.f32 %v4392, %v4415
    %v4428 = vadd.f32 %v4393, %v4411
    %v4429 = vadd.f32 %v4394, %v4415
    %v4430 = vadd.f32 %v4395, %v4411
    %v4431 = vadd.f32 %v4396, %v4415
    %v4432 = vmul.f32 %v4416, 0.02
    %v4433 = vmul.f32 %v4417, 0.02
    %v4434 = vmul.f32 %v4418, 0.02
    %v4435 = vmul.f32 %v4419, 0.02
    %v4436 = vmul.f32 %v4420, 0.02
    %v4437 = vmul.f32 %v4421, 0.02
    %v4438 = vmul.f32 %v4422, 0.02
    %v4439 = vmul.f32 %v4423, 0.02
    %v4440 = vmul.f32 %v4424, 0.02
    %v4441 = vmul.f32 %v4425, 0.02
    %v4442 = vmul.f32 %v4426, 0.02
    %v4443 = vmul.f32 %v4427, 0.02
    %v4444 = vmul.f32 %v4428, 0.02
    %v4445 = vmul.f32 %v4429, 0.02
    %v4446 = vmul.f32 %v4430, 0.02
    %v4447 = vmul.f32 %v4431, 0.02
    %v4448 = vmax.f32 %v4416, %v4432
    %v4449 = vmax.f32 %v4417, %v4433
    %v4450 = vmax.f32 %v4418, %v4434
    %v4451 = vmax.f32 %v4419, %v4435
    %v4452 = vmax.f32 %v4420, %v4436
    %v4453 = vmax.f32 %v4421, %v4437
    %v4454 = vmax.f32 %v4422, %v4438
    %v4455 = vmax.f32 %v4423, %v4439
    %v4456 = vmax.f32 %v4424, %v4440
    %v4457 = vmax.f32 %v4425, %v4441
    %v4458 = vmax.f32 %v4426, %v4442
    %v4459 = vmax.f32 %v4427, %v4443
    %v4460 = vmax.f32 %v4428, %v4444
    %v4461 = vmax.f32 %v4429, %v4445
    %v4462 = vmax.f32 %v4430, %v4446
    %v4463 = vmax.f32 %v4431, %v4447
    %4464 = vst [vmem:[%s8] sm:$0xff] %v4448
    %4465 = vst [vmem:[%s8 + $0x8] sm:$0xff] %v4449
    %4466 = vst [vmem:[%s8 + $0x10] sm:$0xff] %v4450
    %4467 = vst [vmem:[%s8 + $0x18] sm:$0xff] %v4451
    %4468 = vst [vmem:[%s8 + $0x20] sm:$0xff] %v4452
    %4469 = vst [vmem:[%s8 + $0x28] sm:$0xff] %v4453
    %4470 = vst [vmem:[%s8 + $0x30] sm:$0xff] %v4454
    %4471 = vst [vmem:[%s8 + $0x38] sm:$0xff] %v4455
    %4472 = vst [vmem:[%s8 + $0x40] sm:$0xff] %v4456
    %4473 = vst [vmem:[%s8 + $0x48] sm:$0xff] %v4457
    %4474 = vst [vmem:[%s8 + $0x50] sm:$0xff] %v4458
    %4475 = vst [vmem:[%s8 + $0x58] sm:$0xff] %v4459
    %4476 = vst [vmem:[%s8 + $0x60] sm:$0xff] %v4460
    %4477 = vst [vmem:[%s8 + $0x68] sm:$0xff] %v4461
    %4478 = vst [vmem:[%s8 + $0x70] sm:$0xff] %v4462
    %4479 = vst [vmem:[%s8 + $0x78] sm:$0xff] %v4463
    %v4480 = vmul.f32 %v4448, %v4448
    %v4481 = vmul.f32 %v4449, %v4449
    %v4482 = vmul.f32 %v4450, %v4450
    %v4483 = vmul.f32 %v4451, %v4451
    %v4484 = vmul.f32 %v4452, %v4452
    %v4485 = vmul.f32 %v4453, %v4453
    %v4486 = vmul.f32 %v4454, %v4454
    %v4487 = vmul.f32 %v4455, %v4455
    %v4488 = vmul.f32 %v4456, %v4456
    %v4489 = vmul.f32 %v4457, %v4457
    %v4490 = vmul.f32 %v4458, %v4458
    %v4491 = vmul.f32 %v4459, %v4459
    %v4492 = vmul.f32 %v4460, %v4460
    %v4493 = vmul.f32 %v4461, %v4461
    %v4494 = vmul.f32 %v4462, %v4462
    %v4495 = vmul.f32 %v4463, %v4463
    %v4496 = vadd.f32 %v4480, %v4481
    %4497 = vadd.xlane.f32.xlu0 %v4496
    %v4498 = vpop.xlane.xlu0 %4497
    %v4499 = vadd.f32 %v4482, %v4483
    %4500 = vadd.xlane.f32.xlu0 %v4499
    %v4501 = vpop.xlane.xlu0 %4500
    %v4502 = vadd.f32 %v4484, %v4485
    %4503 = vadd.xlane.f32.xlu0 %v4502
    %v4504 = vpop.xlane.xlu0 %4503
    %v4505 = vadd.f32 %v4486, %v4487
    %4506 = vadd.xlane.f32.xlu0 %v4505
    %v4507 = vpop.xlane.xlu0 %4506
    %v4508 = vadd.f32 %v4488, %v4489
    %4509 = vadd.xlane.f32.xlu0 %v4508
    %v4510 = vpop.xlane.xlu0 %4509
    %v4511 = vadd.f32 %v4490, %v4491
    %4512 = vadd.xlane.f32.xlu0 %v4511
    %v4513 = vpop.xlane.xlu0 %4512
    %v4514 = vadd.f32 %v4492, %v4493
    %4515 = vadd.xlane.f32.xlu0 %v4514
    %v4516 = vpop.xlane.xlu0 %4515
    %v4517 = vadd.f32 %v4494, %v4495
    %4518 = vadd.xlane.f32.xlu0 %v4517
    %v4519 = vpop.xlane.xlu0 %4518
    %v4520 = vrsqrt.pop %v4498
    %v4521 = vmul.f32 %v4498, %v4520
    %vm4522 = vcmp.eq.f32.partialorder %v4498, inf
    %v4523 = vsel %vm4522, %v4498, %v4521
    %vm4524 = vcmp.eq.f32.partialorder %v4498, 0.0
    %v4525 = vand.u32 %v4498, 2147483648
    %v4526 = vsel %vm4524, %v4525, %v4523
    %v4527 = vrsqrt.pop %v4501
    %v4528 = vmul.f32 %v4501, %v4527
    %vm4529 = vcmp.eq.f32.partialorder %v4501, inf
    %v4530 = vsel %vm4529, %v4501, %v4528
    %vm4531 = vcmp.eq.f32.partialorder %v4501, 0.0
    %v4532 = vand.u32 %v4501, 2147483648
    %v4533 = vsel %vm4531, %v4532, %v4530
    %v4534 = vrsqrt.pop %v4504
    %v4535 = vmul.f32 %v4504, %v4534
    %vm4536 = vcmp.eq.f32.partialorder %v4504, inf
    %v4537 = vsel %vm4536, %v4504, %v4535
    %vm4538 = vcmp.eq.f32.partialorder %v4504, 0.0
    %v4539 = vand.u32 %v4504, 2147483648
    %v4540 = vsel %vm4538, %v4539, %v4537
    %v4541 = vrsqrt.pop %v4507
    %v4542 = vmul.f32 %v4507, %v4541
    %vm4543 = vcmp.eq.f32.partialorder %v4507, inf
    %v4544 = vsel %vm4543, %v4507, %v4542
    %vm4545 = vcmp.eq.f32.partialorder %v4507, 0.0
    %v4546 = vand.u32 %v4507, 2147483648
    %v4547 = vsel %vm4545, %v4546, %v4544
    %v4548 = vrsqrt.pop %v4510
    %v4549 = vmul.f32 %v4510, %v4548
    %vm4550 = vcmp.eq.f32.partialorder %v4510, inf
    %v4551 = vsel %vm4550, %v4510, %v4549
    %vm4552 = vcmp.eq.f32.partialorder %v4510, 0.0
    %v4553 = vand.u32 %v4510, 2147483648
    %v4554 = vsel %vm4552, %v4553, %v4551
    %v4555 = vrsqrt.pop %v4513
    %v4556 = vmul.f32 %v4513, %v4555
    %vm4557 = vcmp.eq.f32.partialorder %v4513, inf
    %v4558 = vsel %vm4557, %v4513, %v4556
    %vm4559 = vcmp.eq.f32.partialorder %v4513, 0.0
    %v4560 = vand.u32 %v4513, 2147483648
    %v4561 = vsel %vm4559, %v4560, %v4558
    %v4562 = vrsqrt.pop %v4516
    %v4563 = vmul.f32 %v4516, %v4562
    %vm4564 = vcmp.eq.f32.partialorder %v4516, inf
    %v4565 = vsel %vm4564, %v4516, %v4563
    %vm4566 = vcmp.eq.f32.partialorder %v4516, 0.0
    %v4567 = vand.u32 %v4516, 2147483648
    %v4568 = vsel %vm4566, %v4567, %v4565
    %v4569 = vrsqrt.pop %v4519
    %v4570 = vmul.f32 %v4519, %v4569
    %vm4571 = vcmp.eq.f32.partialorder %v4519, inf
    %v4572 = vsel %vm4571, %v4519, %v4570
    %vm4573 = vcmp.eq.f32.partialorder %v4519, 0.0
    %v4574 = vand.u32 %v4519, 2147483648
    %v4575 = vsel %vm4573, %v4574, %v4572
    %v4584 = vlaneseq
    %v4585 = vand.u32 %v4584, 127
    %v4586 = vlaneseq
    %v4587 = vshrl.u32 %v4586, 7
    %v4588 = vsub.s32 %v4585, %v4587
    %v4589 = vrot.slane %v4526, %v4588
    %v4590 = vlaneseq
    %v4591 = vshrl.u32 %v4590, 7
    %v4592 = vsub.s32 %v4585, %v4591
    %v4593 = vrot.slane %v4533, %v4592
    %v4594 = vlaneseq
    %v4595 = vshrl.u32 %v4594, 7
    %v4596 = vsub.s32 %v4585, %v4595
    %v4597 = vrot.slane %v4540, %v4596
    %v4598 = vlaneseq
    %v4599 = vshrl.u32 %v4598, 7
    %v4600 = vsub.s32 %v4585, %v4599
    %v4601 = vrot.slane %v4547, %v4600
    %v4602 = vlaneseq
    %v4603 = vshrl.u32 %v4602, 7
    %v4604 = vsub.s32 %v4585, %v4603
    %v4605 = vrot.slane %v4554, %v4604
    %v4606 = vlaneseq
    %v4607 = vshrl.u32 %v4606, 7
    %v4608 = vsub.s32 %v4585, %v4607
    %v4609 = vrot.slane %v4561, %v4608
    %v4610 = vlaneseq
    %v4611 = vshrl.u32 %v4610, 7
    %v4612 = vsub.s32 %v4585, %v4611
    %v4613 = vrot.slane %v4568, %v4612
    %v4614 = vlaneseq
    %v4615 = vshrl.u32 %v4614, 7
    %v4616 = vsub.s32 %v4585, %v4615
    %v4617 = vrot.slane %v4575, %v4616
    %vm4618 = vcmask 1041409
    %v4619 = vsel %vm4618, %v4593, %v4589
    %vm4620 = vcmask 1042434
    %v4621 = vsel %vm4620, %v4597, %v4619
    %vm4622 = vcmask 1043459
    %v4623 = vsel %vm4622, %v4601, %v4621
    %vm4624 = vcmask 1044484
    %v4625 = vsel %vm4624, %v4605, %v4623
    %vm4626 = vcmask 1045509
    %v4627 = vsel %vm4626, %v4609, %v4625
    %vm4628 = vcmask 1046534
    %v4629 = vsel %vm4628, %v4613, %v4627
    %vm4630 = vcmask 1047559
    %v4631 = vsel %vm4630, %v4617, %v4629
    %vm4633 = vcmask 64512
    %v4634 = vsel %vm4633, %v4631, 0.0
    %4635 = vadd.xlane.f32.xlu0 %v4634
    %v4636 = vpop.xlane.xlu0 %4635
    %v4637 = vrcp.pop 8.0
    %v4638 = vmul.f32 %v4636, %v4637
    %vm4639 = vcmask 7168
    %4640 = vst.msk [vmem:[%s9] sm:$0xff] %vm4639, %v4638
    // Predicated region
    $region14: #{model_forward.2} parent=1 // pred_check
      _
    $region15: #{model_forward.2} parent=1 // pred_check_branch
      %4642 = sbr.rel (0) target = $region17
    $region16: #{model_forward.2} parent=1 // pred_region
      _
    $region17: #{model_forward.2} parent=1 // pred_fallthru
      _
    // Predicated region
    $region18: #{model_forward.2} parent=1 // pred_check
      _
    $region19: #{model_forward.2} parent=1 // pred_check_branch
      %4644 = sbr.rel (0) target = $region21
    $region20: #{model_forward.2} parent=1 // pred_region
      _
    $region21: #{model_forward.2} parent=1 // pred_fallthru
      _
    // Predicated region
    $region22: #{model_forward.2} parent=1 // pred_check
      _
    $region23: #{model_forward.2} parent=1 // pred_check_branch
      %4646 = sbr.rel (0) target = $region25
    $region24: #{model_forward.2} parent=1 // pred_region
      _
    $region25: #{model_forward.2} parent=1 // pred_fallthru
      _
    // Predicated region
    $region26: #{model_forward.2} parent=1 // pred_check
      _
    $region27: #{model_forward.2} parent=1 // pred_check_branch
      %4648 = sbr.rel (0) target = $region29
    $region28: #{model_forward.2} parent=1 // pred_region
      _
    $region29: #{model_forward.2} parent=1 // pred_fallthru
      _
  %4649 = vsyncmov [#allocation8]
  %s4650 = vpop.sfrf %4649
  %p4651 = scmp.eq.s32.totalorder %s4650, 0
  %p4652 = pneg %p4651
  %4654 = shalt.err (%p4652)
  %s4655 = scalar_lea.sflag [#allocation8], 1
  %4656 = vsyncmov %s4655
  %s4657 = vpop.sfrf %4656
  %p4658 = scmp.eq.s32.totalorder %s4657, 0
  %p4659 = pneg %p4658
  %4661 = shalt.err (%p4659)
  %s4662 = scalar_lea.sflag [#allocation8], 2
  %4663 = vsyncmov %s4662
  %s4664 = vpop.sfrf %4663
  %p4665 = scmp.eq.s32.totalorder %s4664, 0
  %p4666 = pneg %p4665
  %4668 = shalt.err (%p4666)
  %s4669 = scalar_lea.sflag [#allocation8], 3
  %4670 = vsyncmov %s4669
  %s4671 = vpop.sfrf %4670
  %p4672 = scmp.eq.s32.totalorder %s4671, 0
  %p4673 = pneg %p4672
  %4675 = shalt.err (%p4673)
  %s4676 = scalar_lea.sflag [#allocation8], 4
  %4677 = vsyncmov %s4676
  %s4678 = vpop.sfrf %4677
  %p4679 = scmp.eq.s32.totalorder %s4678, 0
  %p4680 = pneg %p4679
  %4682 = shalt.err (%p4680)
  %s4683 = scalar_lea.sflag [#allocation8], 5
  %4684 = vsyncmov %s4683
  %s4685 = vpop.sfrf %4684
  %p4686 = scmp.eq.s32.totalorder %s4685, 0
  %p4687 = pneg %p4686
  %4689 = shalt.err (%p4687)

</llo_original>
